<compile_context>
chip_gen: v5e
topology: v5e:2x2
jax: 0.10.0
libtpu: 0.0.40
codegen_flags: <defaults>
</compile_context>

<pallas_src>
import jax
import jax.numpy as jnp
from jax.experimental import pallas as pl
from jax.experimental.pallas import tpu as pltpu

EPS = 1e-5
_VMEM_LIMIT_BYTES = 48 * 1024 * 1024  # > 32 MiB scoped default, < 64 MiB v7x physical


def _round_up(x, m):
    return (x + m - 1) // m * m


def _pick_band_rows(H, W, target_rows=1024):
    """Rows per band so that TH*W (the matmul M per grid step) is ~1024."""
    th = max(8, (max(1, target_rows // W) // 8) * 8)
    th = min(th, _round_up(H, 8))
    return th


# ---------------------------------------------------------------------------
# Fused kernel: (optional input BN-affine+ReLU) -> in-VMEM im2col -> conv3x3
# (9 accumulating MXU matmuls, f32 acc) -> bf16 store + per-tile BN stats.
# ---------------------------------------------------------------------------
def _make_conv_bn_stats_kernel(TH, W, Cin, Cp, H, fuse_in_act, mask_rows):
    def kernel(*refs):
        if fuse_in_act:
            in_ss_ref, x_ref, halo_ref, w_ref, y_ref, stats_ref, band_ref = refs
        else:
            x_ref, halo_ref, w_ref, y_ref, stats_ref, band_ref = refs

        main = x_ref[0]                       # (TH, W, Cin) bf16, raw
        top = halo_ref[0, 0:1, :, :]          # (1, W, Cin) bf16 (pre-activated in XLA)
        bot = halo_ref[0, 1:2, :, :]          # (1, W, Cin)

        if fuse_in_act:
            # previous layer's folded BN affine + ReLU, applied while loading
            b = pl.program_id(1)
            sc = in_ss_ref[0:1, :][None]      # (1, 1, Cin) f32
            sh = in_ss_ref[1:2, :][None]
            act = jnp.maximum(main.astype(jnp.float32) * sc + sh, 0.0)
            if mask_rows:
                # rows >= H are outside the image -> keep them exactly zero
                row = jax.lax.broadcasted_iota(jnp.int32, (TH, 1, 1), 0) + b * TH
                act = jnp.where(row < H, act, 0.0)
            main = act.astype(jnp.bfloat16)

        # Assemble the zero-padded (TH+2, W+2, Cin) window in VMEM (in-kernel
        # im2col; the 9x patches tensor never exists in HBM).
        band_ref[...] = jnp.zeros((TH + 2, W + 2, Cin), jnp.bfloat16)
        band_ref[0:1, 1:W + 1, :] = top
        band_ref[1:TH + 1, 1:W + 1, :] = main
        band_ref[TH + 1:TH + 2, 1:W + 1, :] = bot

        # 9 accumulating MXU matmuls; contraction over the real Cin only.
        acc = jnp.zeros((TH * W, Cp), jnp.float32)
        for kh in range(3):
            for kw in range(3):
                # NOTE: most efficient when W % 8 == 0 (tile-aligned reshape).
                tap = band_ref[kh:kh + TH, kw:kw + W, :].reshape(TH * W, Cin)
                wk = w_ref[kh * 3 + kw]       # (Cin, Cp) bf16
                acc = acc + jnp.dot(tap, wk, preferred_element_type=jnp.float32)

        if mask_rows:
            # zero conv outputs of rows >= H so they don't pollute the stats
            b = pl.program_id(1)
            idx = jax.lax.broadcasted_iota(jnp.int32, (TH * W, 1), 0)
            nvalid = jnp.clip(H - b * TH, 0, TH) * W
            acc = jnp.where(idx < nvalid, acc, 0.0)

        # bf16 raw output (halves the store / next-pass load) ...
        y_ref[0] = acc.astype(y_ref.dtype)
        # ... but BN statistics come from the f32 accumulator.
        stats_ref[0] = jnp.zeros((8, Cp), jnp.float32)
        stats_ref[0, 0:1, :] = jnp.sum(acc, axis=0, keepdims=True)
        stats_ref[0, 1:2, :] = jnp.sum(acc * acc, axis=0, keepdims=True)

    return kernel


# ---------------------------------------------------------------------------
# Final streaming pass: folded BN affine + ReLU (only needed after the last
# conv layer; earlier layers have this fused into their consumer).
# ---------------------------------------------------------------------------
def _affine_relu_kernel(y_ref, ss_ref, o_ref):
    y = y_ref[0].astype(jnp.float32)          # (TM, Cp)
    scale = ss_ref[0:1, :]
    shift = ss_ref[1:2, :]
    o_ref[0] = jnp.maximum(y * scale + shift, 0.0).astype(o_ref.dtype)


def _prep_weight(w, cin_pad, cout_pad):
    """PyTorch (Cout, Cin, 3, 3) -> (9, cin_pad, cout_pad) bf16, tap-major."""
    cout, cin, kh, kw = w.shape
    wt = jnp.transpose(w, (2, 3, 1, 0)).reshape(kh * kw, cin, cout)
    wt = jnp.pad(wt, ((0, 0), (0, cin_pad - cin), (0, cout_pad - cout)))
    return wt.astype(jnp.bfloat16)


def _conv_bn_layer(x_sp, w3d, gamma, beta, *, H, TH, in_ss=None):
    """One conv3x3(pad=1) + train-mode BN-stat layer on an NHWC tensor.

    x_sp:  (N, Hp, W, Cin) bf16 spatial input.  If `in_ss` (scale, shift) is
           given, x_sp is the previous layer's RAW conv output and the folded
           BN affine + ReLU is applied inside the kernel (main band) / in XLA
           (tiny halo rows).
    Returns: y_raw (N*nH, TH*W, Cp) bf16 raw conv output, scale (Cp,), shift (Cp,)
    """
    N, Hp, W, Cin = x_sp.shape
    nH = Hp // TH
    T = N * nH
    _, _, Cp = w3d.shape
    Cout = gamma.shape[0]

    # --- tiny XLA-side halo: 2 rows per band (global rows b*TH-1, (b+1)*TH) ---
    zrow = jnp.zeros((N, 1, W, Cin), x_sp.dtype)
    tops_in = x_sp[:, TH - 1:Hp - 1:TH]        # (N, nH-1, W, Cin)
    bots_in = x_sp[:, TH:Hp:TH]                # (N, nH-1, W, Cin)
    if in_ss is not None:
        in_scale, in_shift = in_ss

        def _act(v):
            return jnp.maximum(v.astype(jnp.float32) * in_scale + in_shift,
                               0.0).astype(x_sp.dtype)

        tops_in = _act(tops_in)
        bots_in = _act(bots_in)
    tops = jnp.concatenate([zrow, tops_in], axis=1)           # (N, nH, W, Cin)
    bots = jnp.concatenate([bots_in, zrow], axis=1)
    halo = jnp.stack([tops, bots], axis=2).reshape(T, 2, W, Cin)

    kernel = _make_conv_bn_stats_kernel(TH, W, Cin, Cp, H,
                                        fuse_in_act=(in_ss is not None),
                                        mask_rows=(Hp > H))

    args = []
    in_specs = []
    if in_ss is not None:
        ss_arr = (jnp.zeros((8, Cin), jnp.float32)
                  .at[0].set(in_scale).at[1].set(in_shift))
        args.append(ss_arr)
        in_specs.append(pl.BlockSpec((8, Cin), lambda n, b: (0, 0)))
    args += [x_sp, halo, w3d]
    in_specs += [
        pl.BlockSpec((1, TH, W, Cin), lambda n, b: (n, b, 0, 0)),
        pl.BlockSpec((1, 2, W, Cin), lambda n, b: (n * nH + b, 0, 0, 0)),
        # constant index_map; could be single-buffered (pipeline_mode) to free VMEM
        pl.BlockSpec((9, Cin, Cp), lambda n, b: (0, 0, 0)),
    ]

    y_raw, stats = pl.pallas_call(
        kernel,
        out_shape=(jax.ShapeDtypeStruct((T, TH * W, Cp), jnp.bfloat16),
                   jax.ShapeDtypeStruct((T, 8, Cp), jnp.float32)),
        grid_spec=pltpu.PrefetchScalarGridSpec(
            num_scalar_prefetch=0,
            grid=(N, nH),
            in_specs=in_specs,
            out_specs=[pl.BlockSpec((1, TH * W, Cp), lambda n, b: (n * nH + b, 0, 0)),
                       pl.BlockSpec((1, 8, Cp), lambda n, b: (n * nH + b, 0, 0))],
            scratch_shapes=[pltpu.VMEM((TH + 2, W + 2, Cin), jnp.bfloat16)]),
        compiler_params=pltpu.CompilerParams(
            dimension_semantics=("parallel", "parallel"),
            vmem_limit_bytes=_VMEM_LIMIT_BYTES),
        cost_estimate=pl.CostEstimate(
            flops=2 * N * Hp * W * 9 * Cin * Cp,
            transcendentals=0,
            bytes_accessed=(N * Hp * W * Cin * 2 + T * 2 * W * Cin * 2
                            + 9 * Cin * Cp * 2 + T * TH * W * Cp * 2
                            + T * 8 * Cp * 4)),
    )(*args)

    # --- tiny reduction: fold BN (train-mode batch stats) into scale/shift ----
    # Denominator is the real element count; padded rows/channels contribute 0.
    M_true = N * H * W
    s = jnp.sum(stats[:, 0, :], axis=0)
    sq = jnp.sum(stats[:, 1, :], axis=0)
    mean = s / M_true
    # NOTE: single-pass E[y^2]-E[y]^2 in f32; use a shifted/two-pass variant if
    # bit-tight parity with PyTorch is needed for huge M / large means.
    var = jnp.maximum(sq / M_true - mean * mean, 0.0)
    inv = jax.lax.rsqrt(var + EPS)
    gamma_p = jnp.pad(gamma.astype(jnp.float32), (0, Cp - Cout))
    beta_p = jnp.pad(beta.astype(jnp.float32), (0, Cp - Cout))
    scale = gamma_p * inv
    shift = beta_p - mean * scale
    return y_raw, scale, shift


@jax.jit
def conv2d_bn_forward(x_nchw, params):
    N, Cin, H, W = x_nchw.shape
    Cout1 = params["g1"].shape[0]
    Cout2 = params["g2"].shape[0]
    # Lane padding of the channel axis.  128 keeps every store lane-dense;
    # use 256 for production channel counts on v6e/v7x (2x256 MXU).
    Cp1 = _round_up(Cout1, 128)
    Cp2 = _round_up(Cout2, 128)

    TH = _pick_band_rows(H, W)
    Hp = _round_up(H, TH)
    nH = Hp // TH
    T = N * nH
    TM = TH * W

    # Single NCHW -> NHWC conversion + bf16 cast at the boundary.
    x = jnp.transpose(x_nchw, (0, 2, 3, 1)).astype(jnp.bfloat16)
    if Hp > H:
        x = jnp.pad(x, ((0, 0), (0, Hp - H), (0, 0), (0, 0)))

    w1 = _prep_weight(params["w1"], Cin, Cp1)
    w2 = _prep_weight(params["w2"], Cp1, Cp2)

    # Layer 1: conv1 + batch stats (conv bias cancelled by train-mode BN mean).
    y1, sc1, sh1 = _conv_bn_layer(x, w1, params["g1"], params["be1"], H=H, TH=TH)

    # Layer 2: layer-1's BN affine + ReLU fused into the load, then conv2 + stats.
    y1_sp = y1.reshape(N, Hp, W, Cp1)
    y2, sc2, sh2 = _conv_bn_layer(y1_sp, w2, params["g2"], params["be2"],
                                  H=H, TH=TH, in_ss=(sc1, sh1))

    # Final folded BN affine + ReLU (streaming pass, f32 output).
    ss2 = jnp.zeros((8, Cp2), jnp.float32).at[0].set(sc2).at[1].set(sh2)
    out = pl.pallas_call(
        _affine_relu_kernel,
        out_shape=jax.ShapeDtypeStruct((T, TM, Cp2), jnp.float32),
        grid_spec=pltpu.PrefetchScalarGridSpec(
            num_scalar_prefetch=0,
            grid=(T,),
            in_specs=[pl.BlockSpec((1, TM, Cp2), lambda i: (i, 0, 0)),
                      pl.BlockSpec((8, Cp2), lambda i: (0, 0))],
            out_specs=pl.BlockSpec((1, TM, Cp2), lambda i: (i, 0, 0))),
        compiler_params=pltpu.CompilerParams(
            dimension_semantics=("parallel",),
            vmem_limit_bytes=_VMEM_LIMIT_BYTES),
    )(y2, ss2)

    out = out.reshape(N, Hp, W, Cp2)[:, :H, :, :Cout2]
    return jnp.transpose(out, (0, 3, 1, 2))


def init_params(key, in_channels, out_channels, kernel_size=3):
    k1, k2, k3, k4 = jax.random.split(key, 4)
    fan1 = in_channels * kernel_size * kernel_size
    fan2 = out_channels * kernel_size * kernel_size
    bound1 = 1.0 / jnp.sqrt(fan1)
    bound2 = 1.0 / jnp.sqrt(fan2)
    return {
        # Conv weights & biases (PyTorch-style uniform init).  The biases are
        # kept for module fidelity but are mathematically cancelled by the
        # train-mode BatchNorm mean subtraction, so the kernels omit them.
        "w1": jax.random.uniform(k1, (out_channels, in_channels, 3, 3),
                                 jnp.float32, -bound1, bound1),
        "b1": jax.random.uniform(k2, (out_channels,), jnp.float32, -bound1, bound1),
        "w2": jax.random.uniform(k3, (out_channels, out_channels, 3, 3),
                                 jnp.float32, -bound2, bound2),
        "b2": jax.random.uniform(k4, (out_channels,), jnp.float32, -bound2, bound2),
        # BatchNorm affine params (PyTorch default init: gamma=1, beta=0)
        "g1": jnp.ones((out_channels,), jnp.float32),
        "be1": jnp.zeros((out_channels,), jnp.float32),
        "g2": jnp.ones((out_channels,), jnp.float32),
        "be2": jnp.zeros((out_channels,), jnp.float32),
    }


def _reference_forward(x, params):
    """Pure-XLA f32 reference of the PyTorch module (with conv biases)."""
    def conv(x, w, b):
        y = jax.lax.conv_general_dilated(
            x, w, (1, 1), ((1, 1), (1, 1)),
            dimension_numbers=("NCHW", "OIHW", "NCHW"))
        return y + b[None, :, None, None]

    def bn_relu(y, g, be):
        mean = jnp.mean(y, axis=(0, 2, 3), keepdims=True)
        var = jnp.mean((y - mean) ** 2, axis=(0, 2, 3), keepdims=True)
        yn = (y - mean) * jax.lax.rsqrt(var + EPS)
        return jnp.maximum(yn * g[None, :, None, None] + be[None, :, None, None], 0.0)

    h = bn_relu(conv(x, params["w1"], params["b1"]), params["g1"], params["be1"])
    return bn_relu(conv(h, params["w2"], params["b2"]), params["g2"], params["be2"])


if __name__ == "__main__":
    key = jax.random.PRNGKey(0)
    kx, kp = jax.random.split(key)

    N, Cin, H, W = 2, 4, 16, 16
    Cout = 8

    x = jax.random.normal(kx, (N, Cin, H, W), dtype=jnp.float32)
    params = init_params(kp, Cin, Cout)

    out = jax.block_until_ready(conv2d_bn_forward(x, params))

    assert out.shape == (N, Cout, H, W), out.shape
    assert bool(jnp.all(out >= 0.0))                 # ReLU output
    assert bool(jnp.all(jnp.isfinite(out)))

    # bf16 MXU path vs. f32 XLA reference: tolerance check (not exact match).
    ref = jax.block_until_ready(_reference_forward(x, params))
    assert bool(jnp.allclose(out, ref, rtol=5e-2, atol=5e-2)), \
        float(jnp.max(jnp.abs(out - ref)))

    print("KERNEL_OK")
</pallas_src>

<mosaic_0001>
module attributes {stable_mosaic.version = 11 : i64} {
  func.func @kernel(%arg0: i32, %arg1: i32, %arg2: memref<1x16x16x4xbf16, #tpu.memory_space<vmem>>, %arg3: memref<1x2x16x4xbf16, #tpu.memory_space<vmem>>, %arg4: memref<9x4x128xbf16, #tpu.memory_space<vmem>>, %arg5: memref<1x256x128xbf16, #tpu.memory_space<vmem>>, %arg6: memref<1x8x128xf32, #tpu.memory_space<vmem>>, %arg7: memref<18x18x4xbf16, #tpu.memory_space<vmem>>) attributes {dimension_semantics = [#tpu.dimension_semantics<parallel>, #tpu.dimension_semantics<parallel>], iteration_bounds = array<i64: 2, 1>, scalar_prefetch = 0 : i64, scratch_operands = 1 : i64, tpu.core_type = #tpu.core_type<tc>, window_params = [{transform_indices = @transform_0, window_bounds = array<i64: 1, 16, 16, 4>}, {transform_indices = @transform_1, window_bounds = array<i64: 1, 2, 16, 4>}, {pipeline_mode = #tpu.pipeline_mode<synchronous>, transform_indices = @transform_2, window_bounds = array<i64: 9, 4, 128>}, {transform_indices = @transform_3, window_bounds = array<i64: 1, 256, 128>}, {transform_indices = @transform_4, window_bounds = array<i64: 1, 8, 128>}]} {
    %c0 = arith.constant 0 : index
    %c0_0 = arith.constant 0 : index
    %c0_1 = arith.constant 0 : index
    %c0_2 = arith.constant 0 : index
    %0 = vector.load %arg2[%c0, %c0_0, %c0_1, %c0_2] : memref<1x16x16x4xbf16, #tpu.memory_space<vmem>>, vector<1x16x16x4xbf16>
    %1 = vector.shape_cast %0 : vector<1x16x16x4xbf16> to vector<16x16x4xbf16>
    %c0_3 = arith.constant 0 : index
    %c0_4 = arith.constant 0 : index
    %c0_5 = arith.constant 0 : index
    %c0_6 = arith.constant 0 : index
    %2 = vector.load %arg3[%c0_3, %c0_4, %c0_5, %c0_6] : memref<1x2x16x4xbf16, #tpu.memory_space<vmem>>, vector<1x1x16x4xbf16>
    %3 = vector.shape_cast %2 : vector<1x1x16x4xbf16> to vector<1x16x4xbf16>
    %c0_7 = arith.constant 0 : index
    %c1 = arith.constant 1 : index
    %c0_8 = arith.constant 0 : index
    %c0_9 = arith.constant 0 : index
    %4 = vector.load %arg3[%c0_7, %c1, %c0_8, %c0_9] : memref<1x2x16x4xbf16, #tpu.memory_space<vmem>>, vector<1x1x16x4xbf16>
    %5 = vector.shape_cast %4 : vector<1x1x16x4xbf16> to vector<1x16x4xbf16>
    %cst = arith.constant 0.000000e+00 : bf16
    %6 = vector.broadcast %cst : bf16 to vector<18x18x4xbf16>
    %c0_10 = arith.constant 0 : index
    %c0_11 = arith.constant 0 : index
    %c0_12 = arith.constant 0 : index
    %7 = vector.load %arg7[%c0_10, %c0_11, %c0_12] : memref<18x18x4xbf16, #tpu.memory_space<vmem>>, vector<18x18x4xbf16>
    tpu.vector_store %arg7[%c0_10, %c0_11, %c0_12], %6 {strides = array<i32>} : memref<18x18x4xbf16, #tpu.memory_space<vmem>>, vector<18x18x4xbf16>,
    %c0_13 = arith.constant 0 : index
    %c1_14 = arith.constant 1 : index
    %c0_15 = arith.constant 0 : index
    %8 = vector.load %arg7[%c0_13, %c1_14, %c0_15] : memref<18x18x4xbf16, #tpu.memory_space<vmem>>, vector<1x16x4xbf16>
    tpu.vector_store %arg7[%c0_13, %c1_14, %c0_15], %3 {strides = array<i32>} : memref<18x18x4xbf16, #tpu.memory_space<vmem>>, vector<1x16x4xbf16>,
    %c1_16 = arith.constant 1 : index
    %c1_17 = arith.constant 1 : index
    %c0_18 = arith.constant 0 : index
    %9 = vector.load %arg7[%c1_16, %c1_17, %c0_18] : memref<18x18x4xbf16, #tpu.memory_space<vmem>>, vector<16x16x4xbf16>
    tpu.vector_store %arg7[%c1_16, %c1_17, %c0_18], %1 {strides = array<i32>} : memref<18x18x4xbf16, #tpu.memory_space<vmem>>, vector<16x16x4xbf16>,
    %c17 = arith.constant 17 : index
    %c1_19 = arith.constant 1 : index
    %c0_20 = arith.constant 0 : index
    %10 = vector.load %arg7[%c17, %c1_19, %c0_20] : memref<18x18x4xbf16, #tpu.memory_space<vmem>>, vector<1x16x4xbf16>
    tpu.vector_store %arg7[%c17, %c1_19, %c0_20], %5 {strides = array<i32>} : memref<18x18x4xbf16, #tpu.memory_space<vmem>>, vector<1x16x4xbf16>,
    %cst_21 = arith.constant 0.000000e+00 : f32
    %11 = vector.broadcast %cst_21 : f32 to vector<256x128xf32>
    %c0_22 = arith.constant 0 : index
    %c0_23 = arith.constant 0 : index
    %c0_24 = arith.constant 0 : index
    %12 = vector.load %arg7[%c0_22, %c0_23, %c0_24] : memref<18x18x4xbf16, #tpu.memory_space<vmem>>, vector<16x16x4xbf16>
    %13 = vector.shape_cast %12 : vector<16x16x4xbf16> to vector<256x4xbf16>
    %c0_25 = arith.constant 0 : index
    %c0_26 = arith.constant 0 : index
    %c0_27 = arith.constant 0 : index
    %14 = vector.load %arg4[%c0_25, %c0_26, %c0_27] : memref<9x4x128xbf16, #tpu.memory_space<vmem>>, vector<1x4x128xbf16>
    %15 = vector.shape_cast %14 : vector<1x4x128xbf16> to vector<4x128xbf16>
    %cst_28 = arith.constant dense<0.000000e+00> : vector<256x128xf32>
    %16 = tpu.matmul %13, %15, %cst_28 {dimension_numbers = #tpu.dot_dimension_numbers<[1], [0], [0], [1], [0, 0, 1, 1], [], []>} : vector<256x4xbf16>, vector<4x128xbf16>, vector<256x128xf32> -> vector<256x128xf32>
    %17 = arith.addf %11, %16 : vector<256x128xf32>
    %c0_29 = arith.constant 0 : index
    %c1_30 = arith.constant 1 : index
    %c0_31 = arith.constant 0 : index
    %18 = vector.load %arg7[%c0_29, %c1_30, %c0_31] : memref<18x18x4xbf16, #tpu.memory_space<vmem>>, vector<16x16x4xbf16>
    %19 = vector.shape_cast %18 : vector<16x16x4xbf16> to vector<256x4xbf16>
    %c1_32 = arith.constant 1 : index
    %c0_33 = arith.constant 0 : index
    %c0_34 = arith.constant 0 : index
    %20 = vector.load %arg4[%c1_32, %c0_33, %c0_34] : memref<9x4x128xbf16, #tpu.memory_space<vmem>>, vector<1x4x128xbf16>
    %21 = vector.shape_cast %20 : vector<1x4x128xbf16> to vector<4x128xbf16>
    %cst_35 = arith.constant dense<0.000000e+00> : vector<256x128xf32>
    %22 = tpu.matmul %19, %21, %cst_35 {dimension_numbers = #tpu.dot_dimension_numbers<[1], [0], [0], [1], [0, 0, 1, 1], [], []>} : vector<256x4xbf16>, vector<4x128xbf16>, vector<256x128xf32> -> vector<256x128xf32>
    %23 = arith.addf %17, %22 : vector<256x128xf32>
    %c0_36 = arith.constant 0 : index
    %c2 = arith.constant 2 : index
    %c0_37 = arith.constant 0 : index
    %24 = vector.load %arg7[%c0_36, %c2, %c0_37] : memref<18x18x4xbf16, #tpu.memory_space<vmem>>, vector<16x16x4xbf16>
    %25 = vector.shape_cast %24 : vector<16x16x4xbf16> to vector<256x4xbf16>
    %c2_38 = arith.constant 2 : index
    %c0_39 = arith.constant 0 : index
    %c0_40 = arith.constant 0 : index
    %26 = vector.load %arg4[%c2_38, %c0_39, %c0_40] : memref<9x4x128xbf16, #tpu.memory_space<vmem>>, vector<1x4x128xbf16>
    %27 = vector.shape_cast %26 : vector<1x4x128xbf16> to vector<4x128xbf16>
    %cst_41 = arith.constant dense<0.000000e+00> : vector<256x128xf32>
    %28 = tpu.matmul %25, %27, %cst_41 {dimension_numbers = #tpu.dot_dimension_numbers<[1], [0], [0], [1], [0, 0, 1, 1], [], []>} : vector<256x4xbf16>, vector<4x128xbf16>, vector<256x128xf32> -> vector<256x128xf32>
    %29 = arith.addf %23, %28 : vector<256x128xf32>
    %c1_42 = arith.constant 1 : index
    %c0_43 = arith.constant 0 : index
    %c0_44 = arith.constant 0 : index
    %30 = vector.load %arg7[%c1_42, %c0_43, %c0_44] : memref<18x18x4xbf16, #tpu.memory_space<vmem>>, vector<16x16x4xbf16>
    %31 = vector.shape_cast %30 : vector<16x16x4xbf16> to vector<256x4xbf16>
    %c3 = arith.constant 3 : index
    %c0_45 = arith.constant 0 : index
    %c0_46 = arith.constant 0 : index
    %32 = vector.load %arg4[%c3, %c0_45, %c0_46] : memref<9x4x128xbf16, #tpu.memory_space<vmem>>, vector<1x4x128xbf16>
    %33 = vector.shape_cast %32 : vector<1x4x128xbf16> to vector<4x128xbf16>
    %cst_47 = arith.constant dense<0.000000e+00> : vector<256x128xf32>
    %34 = tpu.matmul %31, %33, %cst_47 {dimension_numbers = #tpu.dot_dimension_numbers<[1], [0], [0], [1], [0, 0, 1, 1], [], []>} : vector<256x4xbf16>, vector<4x128xbf16>, vector<256x128xf32> -> vector<256x128xf32>
    %35 = arith.addf %29, %34 : vector<256x128xf32>
    %c1_48 = arith.constant 1 : index
    %c1_49 = arith.constant 1 : index
    %c0_50 = arith.constant 0 : index
    %36 = vector.load %arg7[%c1_48, %c1_49, %c0_50] : memref<18x18x4xbf16, #tpu.memory_space<vmem>>, vector<16x16x4xbf16>
    %37 = vector.shape_cast %36 : vector<16x16x4xbf16> to vector<256x4xbf16>
    %c4 = arith.constant 4 : index
    %c0_51 = arith.constant 0 : index
    %c0_52 = arith.constant 0 : index
    %38 = vector.load %arg4[%c4, %c0_51, %c0_52] : memref<9x4x128xbf16, #tpu.memory_space<vmem>>, vector<1x4x128xbf16>
    %39 = vector.shape_cast %38 : vector<1x4x128xbf16> to vector<4x128xbf16>
    %cst_53 = arith.constant dense<0.000000e+00> : vector<256x128xf32>
    %40 = tpu.matmul %37, %39, %cst_53 {dimension_numbers = #tpu.dot_dimension_numbers<[1], [0], [0], [1], [0, 0, 1, 1], [], []>} : vector<256x4xbf16>, vector<4x128xbf16>, vector<256x128xf32> -> vector<256x128xf32>
    %41 = arith.addf %35, %40 : vector<256x128xf32>
    %c1_54 = arith.constant 1 : index
    %c2_55 = arith.constant 2 : index
    %c0_56 = arith.constant 0 : index
    %42 = vector.load %arg7[%c1_54, %c2_55, %c0_56] : memref<18x18x4xbf16, #tpu.memory_space<vmem>>, vector<16x16x4xbf16>
    %43 = vector.shape_cast %42 : vector<16x16x4xbf16> to vector<256x4xbf16>
    %c5 = arith.constant 5 : index
    %c0_57 = arith.constant 0 : index
    %c0_58 = arith.constant 0 : index
    %44 = vector.load %arg4[%c5, %c0_57, %c0_58] : memref<9x4x128xbf16, #tpu.memory_space<vmem>>, vector<1x4x128xbf16>
    %45 = vector.shape_cast %44 : vector<1x4x128xbf16> to vector<4x128xbf16>
    %cst_59 = arith.constant dense<0.000000e+00> : vector<256x128xf32>
    %46 = tpu.matmul %43, %45, %cst_59 {dimension_numbers = #tpu.dot_dimension_numbers<[1], [0], [0], [1], [0, 0, 1, 1], [], []>} : vector<256x4xbf16>, vector<4x128xbf16>, vector<256x128xf32> -> vector<256x128xf32>
    %47 = arith.addf %41, %46 : vector<256x128xf32>
    %c2_60 = arith.constant 2 : index
    %c0_61 = arith.constant 0 : index
    %c0_62 = arith.constant 0 : index
    %48 = vector.load %arg7[%c2_60, %c0_61, %c0_62] : memref<18x18x4xbf16, #tpu.memory_space<vmem>>, vector<16x16x4xbf16>
    %49 = vector.shape_cast %48 : vector<16x16x4xbf16> to vector<256x4xbf16>
    %c6 = arith.constant 6 : index
    %c0_63 = arith.constant 0 : index
    %c0_64 = arith.constant 0 : index
    %50 = vector.load %arg4[%c6, %c0_63, %c0_64] : memref<9x4x128xbf16, #tpu.memory_space<vmem>>, vector<1x4x128xbf16>
    %51 = vector.shape_cast %50 : vector<1x4x128xbf16> to vector<4x128xbf16>
    %cst_65 = arith.constant dense<0.000000e+00> : vector<256x128xf32>
    %52 = tpu.matmul %49, %51, %cst_65 {dimension_numbers = #tpu.dot_dimension_numbers<[1], [0], [0], [1], [0, 0, 1, 1], [], []>} : vector<256x4xbf16>, vector<4x128xbf16>, vector<256x128xf32> -> vector<256x128xf32>
    %53 = arith.addf %47, %52 : vector<256x128xf32>
    %c2_66 = arith.constant 2 : index
    %c1_67 = arith.constant 1 : index
    %c0_68 = arith.constant 0 : index
    %54 = vector.load %arg7[%c2_66, %c1_67, %c0_68] : memref<18x18x4xbf16, #tpu.memory_space<vmem>>, vector<16x16x4xbf16>
    %55 = vector.shape_cast %54 : vector<16x16x4xbf16> to vector<256x4xbf16>
    %c7 = arith.constant 7 : index
    %c0_69 = arith.constant 0 : index
    %c0_70 = arith.constant 0 : index
    %56 = vector.load %arg4[%c7, %c0_69, %c0_70] : memref<9x4x128xbf16, #tpu.memory_space<vmem>>, vector<1x4x128xbf16>
    %57 = vector.shape_cast %56 : vector<1x4x128xbf16> to vector<4x128xbf16>
    %cst_71 = arith.constant dense<0.000000e+00> : vector<256x128xf32>
    %58 = tpu.matmul %55, %57, %cst_71 {dimension_numbers = #tpu.dot_dimension_numbers<[1], [0], [0], [1], [0, 0, 1, 1], [], []>} : vector<256x4xbf16>, vector<4x128xbf16>, vector<256x128xf32> -> vector<256x128xf32>
    %59 = arith.addf %53, %58 : vector<256x128xf32>
    %c2_72 = arith.constant 2 : index
    %c2_73 = arith.constant 2 : index
    %c0_74 = arith.constant 0 : index
    %60 = vector.load %arg7[%c2_72, %c2_73, %c0_74] : memref<18x18x4xbf16, #tpu.memory_space<vmem>>, vector<16x16x4xbf16>
    %61 = vector.shape_cast %60 : vector<16x16x4xbf16> to vector<256x4xbf16>
    %c8 = arith.constant 8 : index
    %c0_75 = arith.constant 0 : index
    %c0_76 = arith.constant 0 : index
    %62 = vector.load %arg4[%c8, %c0_75, %c0_76] : memref<9x4x128xbf16, #tpu.memory_space<vmem>>, vector<1x4x128xbf16>
    %63 = vector.shape_cast %62 : vector<1x4x128xbf16> to vector<4x128xbf16>
    %cst_77 = arith.constant dense<0.000000e+00> : vector<256x128xf32>
    %64 = tpu.matmul %61, %63, %cst_77 {dimension_numbers = #tpu.dot_dimension_numbers<[1], [0], [0], [1], [0, 0, 1, 1], [], []>} : vector<256x4xbf16>, vector<4x128xbf16>, vector<256x128xf32> -> vector<256x128xf32>
    %65 = arith.addf %59, %64 : vector<256x128xf32>
    %66 = arith.truncf %65 : vector<256x128xf32> to vector<256x128xbf16>
    %c0_78 = arith.constant 0 : index
    %c0_79 = arith.constant 0 : index
    %c0_80 = arith.constant 0 : index
    %67 = vector.load %arg5[%c0_78, %c0_79, %c0_80] : memref<1x256x128xbf16, #tpu.memory_space<vmem>>, vector<1x256x128xbf16>
    %68 = vector.shape_cast %67 : vector<1x256x128xbf16> to vector<256x128xbf16>
    %69 = vector.shape_cast %66 : vector<256x128xbf16> to vector<1x256x128xbf16>
    tpu.vector_store %arg5[%c0_78, %c0_79, %c0_80], %69 {strides = array<i32>} : memref<1x256x128xbf16, #tpu.memory_space<vmem>>, vector<1x256x128xbf16>,
    %cst_81 = arith.constant 0.000000e+00 : f32
    %70 = vector.broadcast %cst_81 : f32 to vector<8x128xf32>
    %c0_82 = arith.constant 0 : index
    %c0_83 = arith.constant 0 : index
    %c0_84 = arith.constant 0 : index
    %71 = vector.load %arg6[%c0_82, %c0_83, %c0_84] : memref<1x8x128xf32, #tpu.memory_space<vmem>>, vector<1x8x128xf32>
    %72 = vector.shape_cast %71 : vector<1x8x128xf32> to vector<8x128xf32>
    %73 = vector.shape_cast %70 : vector<8x128xf32> to vector<1x8x128xf32>
    tpu.vector_store %arg6[%c0_82, %c0_83, %c0_84], %73 {strides = array<i32>} : memref<1x8x128xf32, #tpu.memory_space<vmem>>, vector<1x8x128xf32>,
    %cst_85 = arith.constant dense<0.000000e+00> : vector<128xf32>
    %74 = vector.multi_reduction <add>, %65, %cst_85 [0] : vector<256x128xf32> to vector<128xf32>
    %75 = vector.shape_cast %74 : vector<128xf32> to vector<1x128xf32>
    %c0_86 = arith.constant 0 : index
    %c0_87 = arith.constant 0 : index
    %c0_88 = arith.constant 0 : index
    %76 = vector.load %arg6[%c0_86, %c0_87, %c0_88] : memref<1x8x128xf32, #tpu.memory_space<vmem>>, vector<1x1x128xf32>
    %77 = vector.shape_cast %76 : vector<1x1x128xf32> to vector<1x128xf32>
    %78 = vector.shape_cast %75 : vector<1x128xf32> to vector<1x1x128xf32>
    tpu.vector_store %arg6[%c0_86, %c0_87, %c0_88], %78 {strides = array<i32>} : memref<1x8x128xf32, #tpu.memory_space<vmem>>, vector<1x1x128xf32>,
    %79 = arith.mulf %65, %65 : vector<256x128xf32>
    %cst_89 = arith.constant dense<0.000000e+00> : vector<128xf32>
    %80 = vector.multi_reduction <add>, %79, %cst_89 [0] : vector<256x128xf32> to vector<128xf32>
    %81 = vector.shape_cast %80 : vector<128xf32> to vector<1x128xf32>
    %c0_90 = arith.constant 0 : index
    %c1_91 = arith.constant 1 : index
    %c0_92 = arith.constant 0 : index
    %82 = vector.load %arg6[%c0_90, %c1_91, %c0_92] : memref<1x8x128xf32, #tpu.memory_space<vmem>>, vector<1x1x128xf32>
    %83 = vector.shape_cast %82 : vector<1x1x128xf32> to vector<1x128xf32>
    %84 = vector.shape_cast %81 : vector<1x128xf32> to vector<1x1x128xf32>
    tpu.vector_store %arg6[%c0_90, %c1_91, %c0_92], %84 {strides = array<i32>} : memref<1x8x128xf32, #tpu.memory_space<vmem>>, vector<1x1x128xf32>,
    return
  }
  func.func @transform_0(%arg0: i32, %arg1: i32) -> (i32, i32, i32, i32) {
    %c0_i32 = arith.constant 0 : i32
    %c0_i32_0 = arith.constant 0 : i32
    %c0_i32_1 = arith.constant 0 : i32
    return %arg0, %arg1, %c0_i32, %c0_i32_0 : i32, i32, i32, i32
  }
  func.func @transform_1(%arg0: i32, %arg1: i32) -> (i32, i32, i32, i32) {
    %c1_i32 = arith.constant 1 : i32
    %0 = arith.muli %arg0, %c1_i32 : i32
    %1 = arith.addi %0, %arg1 : i32
    %c0_i32 = arith.constant 0 : i32
    %c0_i32_0 = arith.constant 0 : i32
    %c0_i32_1 = arith.constant 0 : i32
    %c0_i32_2 = arith.constant 0 : i32
    return %1, %c0_i32, %c0_i32_0, %c0_i32_1 : i32, i32, i32, i32
  }
  func.func @transform_2(%arg0: i32, %arg1: i32) -> (i32, i32, i32) {
    %c0_i32 = arith.constant 0 : i32
    %c0_i32_0 = arith.constant 0 : i32
    %c0_i32_1 = arith.constant 0 : i32
    %c0_i32_2 = arith.constant 0 : i32
    return %c0_i32, %c0_i32_0, %c0_i32_1 : i32, i32, i32
  }
  func.func @transform_3(%arg0: i32, %arg1: i32) -> (i32, i32, i32) {
    %c1_i32 = arith.constant 1 : i32
    %0 = arith.muli %arg0, %c1_i32 : i32
    %1 = arith.addi %0, %arg1 : i32
    %c0_i32 = arith.constant 0 : i32
    %c0_i32_0 = arith.constant 0 : i32
    %c0_i32_1 = arith.constant 0 : i32
    return %1, %c0_i32, %c0_i32_0 : i32, i32, i32
  }
  func.func @transform_4(%arg0: i32, %arg1: i32) -> (i32, i32, i32) {
    %c1_i32 = arith.constant 1 : i32
    %0 = arith.muli %arg0, %c1_i32 : i32
    %1 = arith.addi %0, %arg1 : i32
    %c0_i32 = arith.constant 0 : i32
    %c0_i32_0 = arith.constant 0 : i32
    %c0_i32_1 = arith.constant 0 : i32
    return %1, %c0_i32, %c0_i32_0 : i32, i32, i32
  }
}

module attributes {stable_mosaic.version = 11 : i64} {
  func.func @_affine_relu_kernel(%arg0: i32, %arg1: memref<1x256x128xbf16, #tpu.memory_space<vmem>>, %arg2: memref<8x128xf32, #tpu.memory_space<vmem>>, %arg3: memref<1x256x128xf32, #tpu.memory_space<vmem>>) attributes {dimension_semantics = [#tpu.dimension_semantics<parallel>], iteration_bounds = array<i64: 2>, scalar_prefetch = 0 : i64, scratch_operands = 0 : i64, tpu.core_type = #tpu.core_type<tc>, window_params = [{transform_indices = @transform_0, window_bounds = array<i64: 1, 256, 128>}, {pipeline_mode = #tpu.pipeline_mode<synchronous>, transform_indices = @transform_1, window_bounds = array<i64: 8, 128>}, {transform_indices = @transform_2, window_bounds = array<i64: 1, 256, 128>}]} {
    %c0 = arith.constant 0 : index
    %c0_0 = arith.constant 0 : index
    %c0_1 = arith.constant 0 : index
    %0 = vector.load %arg1[%c0, %c0_0, %c0_1] : memref<1x256x128xbf16, #tpu.memory_space<vmem>>, vector<1x256x128xbf16>
    %1 = vector.shape_cast %0 : vector<1x256x128xbf16> to vector<256x128xbf16>
    %2 = arith.extf %1 : vector<256x128xbf16> to vector<256x128xf32>
    %c0_2 = arith.constant 0 : index
    %c0_3 = arith.constant 0 : index
    %3 = vector.load %arg2[%c0_2, %c0_3] : memref<8x128xf32, #tpu.memory_space<vmem>>, vector<1x128xf32>
    %c1 = arith.constant 1 : index
    %c0_4 = arith.constant 0 : index
    %4 = vector.load %arg2[%c1, %c0_4] : memref<8x128xf32, #tpu.memory_space<vmem>>, vector<1x128xf32>
    %5 = vector.broadcast %3 : vector<1x128xf32> to vector<256x128xf32>
    %6 = arith.mulf %2, %5 : vector<256x128xf32>
    %7 = vector.broadcast %4 : vector<1x128xf32> to vector<256x128xf32>
    %8 = arith.addf %6, %7 : vector<256x128xf32>
    %cst = arith.constant 0.000000e+00 : f32
    %9 = vector.broadcast %cst : f32 to vector<256x128xf32>
    %10 = arith.maximumf %8, %9 : vector<256x128xf32>
    %c0_5 = arith.constant 0 : index
    %c0_6 = arith.constant 0 : index
    %c0_7 = arith.constant 0 : index
    %11 = vector.load %arg3[%c0_5, %c0_6, %c0_7] : memref<1x256x128xf32, #tpu.memory_space<vmem>>, vector<1x256x128xf32>
    %12 = vector.shape_cast %11 : vector<1x256x128xf32> to vector<256x128xf32>
    %13 = vector.shape_cast %10 : vector<256x128xf32> to vector<1x256x128xf32>
    tpu.vector_store %arg3[%c0_5, %c0_6, %c0_7], %13 {strides = array<i32>} : memref<1x256x128xf32, #tpu.memory_space<vmem>>, vector<1x256x128xf32>,
    return
  }
  func.func @transform_0(%arg0: i32) -> (i32, i32, i32) {
    %c0_i32 = arith.constant 0 : i32
    %c0_i32_0 = arith.constant 0 : i32
    %c0_i32_1 = arith.constant 0 : i32
    return %arg0, %c0_i32, %c0_i32_0 : i32, i32, i32
  }
  func.func @transform_1(%arg0: i32) -> (i32, i32) {
    %c0_i32 = arith.constant 0 : i32
    %c0_i32_0 = arith.constant 0 : i32
    %c0_i32_1 = arith.constant 0 : i32
    return %c0_i32, %c0_i32_0 : i32, i32
  }
  func.func @transform_2(%arg0: i32) -> (i32, i32, i32) {
    %c0_i32 = arith.constant 0 : i32
    %c0_i32_0 = arith.constant 0 : i32
    %c0_i32_1 = arith.constant 0 : i32
    return %arg0, %c0_i32, %c0_i32_0 : i32, i32, i32
  }
}

module attributes {stable_mosaic.version = 11 : i64} {
  func.func @kernel(%arg0: i32, %arg1: i32, %arg2: memref<8x128xf32, #tpu.memory_space<vmem>>, %arg3: memref<1x16x16x128xbf16, #tpu.memory_space<vmem>>, %arg4: memref<1x2x16x128xbf16, #tpu.memory_space<vmem>>, %arg5: memref<9x128x128xbf16, #tpu.memory_space<vmem>>, %arg6: memref<1x256x128xbf16, #tpu.memory_space<vmem>>, %arg7: memref<1x8x128xf32, #tpu.memory_space<vmem>>, %arg8: memref<18x18x128xbf16, #tpu.memory_space<vmem>>) attributes {dimension_semantics = [#tpu.dimension_semantics<parallel>, #tpu.dimension_semantics<parallel>], iteration_bounds = array<i64: 2, 1>, scalar_prefetch = 0 : i64, scratch_operands = 1 : i64, tpu.core_type = #tpu.core_type<tc>, window_params = [{pipeline_mode = #tpu.pipeline_mode<synchronous>, transform_indices = @transform_0, window_bounds = array<i64: 8, 128>}, {transform_indices = @transform_1, window_bounds = array<i64: 1, 16, 16, 128>}, {transform_indices = @transform_2, window_bounds = array<i64: 1, 2, 16, 128>}, {pipeline_mode = #tpu.pipeline_mode<synchronous>, transform_indices = @transform_3, window_bounds = array<i64: 9, 128, 128>}, {transform_indices = @transform_4, window_bounds = array<i64: 1, 256, 128>}, {transform_indices = @transform_5, window_bounds = array<i64: 1, 8, 128>}]} {
    %c0 = arith.constant 0 : index
    %c0_0 = arith.constant 0 : index
    %c0_1 = arith.constant 0 : index
    %c0_2 = arith.constant 0 : index
    %0 = vector.load %arg3[%c0, %c0_0, %c0_1, %c0_2] : memref<1x16x16x128xbf16, #tpu.memory_space<vmem>>, vector<1x16x16x128xbf16>
    %1 = vector.shape_cast %0 : vector<1x16x16x128xbf16> to vector<16x16x128xbf16>
    %c0_3 = arith.constant 0 : index
    %c0_4 = arith.constant 0 : index
    %c0_5 = arith.constant 0 : index
    %c0_6 = arith.constant 0 : index
    %2 = vector.load %arg4[%c0_3, %c0_4, %c0_5, %c0_6] : memref<1x2x16x128xbf16, #tpu.memory_space<vmem>>, vector<1x1x16x128xbf16>
    %3 = vector.shape_cast %2 : vector<1x1x16x128xbf16> to vector<1x16x128xbf16>
    %c0_7 = arith.constant 0 : index
    %c1 = arith.constant 1 : index
    %c0_8 = arith.constant 0 : index
    %c0_9 = arith.constant 0 : index
    %4 = vector.load %arg4[%c0_7, %c1, %c0_8, %c0_9] : memref<1x2x16x128xbf16, #tpu.memory_space<vmem>>, vector<1x1x16x128xbf16>
    %5 = vector.shape_cast %4 : vector<1x1x16x128xbf16> to vector<1x16x128xbf16>
    %c0_10 = arith.constant 0 : index
    %c0_11 = arith.constant 0 : index
    %6 = vector.load %arg2[%c0_10, %c0_11] : memref<8x128xf32, #tpu.memory_space<vmem>>, vector<1x128xf32>
    %7 = vector.shape_cast %6 : vector<1x128xf32> to vector<1x1x128xf32>
    %c1_12 = arith.constant 1 : index
    %c0_13 = arith.constant 0 : index
    %8 = vector.load %arg2[%c1_12, %c0_13] : memref<8x128xf32, #tpu.memory_space<vmem>>, vector<1x128xf32>
    %9 = vector.shape_cast %8 : vector<1x128xf32> to vector<1x1x128xf32>
    %10 = arith.extf %1 : vector<16x16x128xbf16> to vector<16x16x128xf32>
    %11 = vector.broadcast %7 : vector<1x1x128xf32> to vector<16x16x128xf32>
    %12 = arith.mulf %10, %11 : vector<16x16x128xf32>
    %13 = vector.broadcast %9 : vector<1x1x128xf32> to vector<16x16x128xf32>
    %14 = arith.addf %12, %13 : vector<16x16x128xf32>
    %cst = arith.constant 0.000000e+00 : f32
    %15 = vector.broadcast %cst : f32 to vector<16x16x128xf32>
    %16 = arith.maximumf %14, %15 : vector<16x16x128xf32>
    %17 = arith.truncf %16 : vector<16x16x128xf32> to vector<16x16x128xbf16>
    %cst_14 = arith.constant 0.000000e+00 : bf16
    %18 = vector.broadcast %cst_14 : bf16 to vector<18x18x128xbf16>
    %c0_15 = arith.constant 0 : index
    %c0_16 = arith.constant 0 : index
    %c0_17 = arith.constant 0 : index
    %19 = vector.load %arg8[%c0_15, %c0_16, %c0_17] : memref<18x18x128xbf16, #tpu.memory_space<vmem>>, vector<18x18x128xbf16>
    tpu.vector_store %arg8[%c0_15, %c0_16, %c0_17], %18 {strides = array<i32>} : memref<18x18x128xbf16, #tpu.memory_space<vmem>>, vector<18x18x128xbf16>,
    %c0_18 = arith.constant 0 : index
    %c1_19 = arith.constant 1 : index
    %c0_20 = arith.constant 0 : index
    %20 = vector.load %arg8[%c0_18, %c1_19, %c0_20] : memref<18x18x128xbf16, #tpu.memory_space<vmem>>, vector<1x16x128xbf16>
    tpu.vector_store %arg8[%c0_18, %c1_19, %c0_20], %3 {strides = array<i32>} : memref<18x18x128xbf16, #tpu.memory_space<vmem>>, vector<1x16x128xbf16>,
    %c1_21 = arith.constant 1 : index
    %c1_22 = arith.constant 1 : index
    %c0_23 = arith.constant 0 : index
    %21 = vector.load %arg8[%c1_21, %c1_22, %c0_23] : memref<18x18x128xbf16, #tpu.memory_space<vmem>>, vector<16x16x128xbf16>
    tpu.vector_store %arg8[%c1_21, %c1_22, %c0_23], %17 {strides = array<i32>} : memref<18x18x128xbf16, #tpu.memory_space<vmem>>, vector<16x16x128xbf16>,
    %c17 = arith.constant 17 : index
    %c1_24 = arith.constant 1 : index
    %c0_25 = arith.constant 0 : index
    %22 = vector.load %arg8[%c17, %c1_24, %c0_25] : memref<18x18x128xbf16, #tpu.memory_space<vmem>>, vector<1x16x128xbf16>
    tpu.vector_store %arg8[%c17, %c1_24, %c0_25], %5 {strides = array<i32>} : memref<18x18x128xbf16, #tpu.memory_space<vmem>>, vector<1x16x128xbf16>,
    %cst_26 = arith.constant 0.000000e+00 : f32
    %23 = vector.broadcast %cst_26 : f32 to vector<256x128xf32>
    %c0_27 = arith.constant 0 : index
    %c0_28 = arith.constant 0 : index
    %c0_29 = arith.constant 0 : index
    %24 = vector.load %arg8[%c0_27, %c0_28, %c0_29] : memref<18x18x128xbf16, #tpu.memory_space<vmem>>, vector<16x16x128xbf16>
    %25 = vector.shape_cast %24 : vector<16x16x128xbf16> to vector<256x128xbf16>
    %c0_30 = arith.constant 0 : index
    %c0_31 = arith.constant 0 : index
    %c0_32 = arith.constant 0 : index
    %26 = vector.load %arg5[%c0_30, %c0_31, %c0_32] : memref<9x128x128xbf16, #tpu.memory_space<vmem>>, vector<1x128x128xbf16>
    %27 = vector.shape_cast %26 : vector<1x128x128xbf16> to vector<128x128xbf16>
    %cst_33 = arith.constant dense<0.000000e+00> : vector<256x128xf32>
    %28 = tpu.matmul %25, %27, %cst_33 {dimension_numbers = #tpu.dot_dimension_numbers<[1], [0], [0], [1], [0, 0, 1, 1], [], []>} : vector<256x128xbf16>, vector<128x128xbf16>, vector<256x128xf32> -> vector<256x128xf32>
    %29 = arith.addf %23, %28 : vector<256x128xf32>
    %c0_34 = arith.constant 0 : index
    %c1_35 = arith.constant 1 : index
    %c0_36 = arith.constant 0 : index
    %30 = vector.load %arg8[%c0_34, %c1_35, %c0_36] : memref<18x18x128xbf16, #tpu.memory_space<vmem>>, vector<16x16x128xbf16>
    %31 = vector.shape_cast %30 : vector<16x16x128xbf16> to vector<256x128xbf16>
    %c1_37 = arith.constant 1 : index
    %c0_38 = arith.constant 0 : index
    %c0_39 = arith.constant 0 : index
    %32 = vector.load %arg5[%c1_37, %c0_38, %c0_39] : memref<9x128x128xbf16, #tpu.memory_space<vmem>>, vector<1x128x128xbf16>
    %33 = vector.shape_cast %32 : vector<1x128x128xbf16> to vector<128x128xbf16>
    %cst_40 = arith.constant dense<0.000000e+00> : vector<256x128xf32>
    %34 = tpu.matmul %31, %33, %cst_40 {dimension_numbers = #tpu.dot_dimension_numbers<[1], [0], [0], [1], [0, 0, 1, 1], [], []>} : vector<256x128xbf16>, vector<128x128xbf16>, vector<256x128xf32> -> vector<256x128xf32>
    %35 = arith.addf %29, %34 : vector<256x128xf32>
    %c0_41 = arith.constant 0 : index
    %c2 = arith.constant 2 : index
    %c0_42 = arith.constant 0 : index
    %36 = vector.load %arg8[%c0_41, %c2, %c0_42] : memref<18x18x128xbf16, #tpu.memory_space<vmem>>, vector<16x16x128xbf16>
    %37 = vector.shape_cast %36 : vector<16x16x128xbf16> to vector<256x128xbf16>
    %c2_43 = arith.constant 2 : index
    %c0_44 = arith.constant 0 : index
    %c0_45 = arith.constant 0 : index
    %38 = vector.load %arg5[%c2_43, %c0_44, %c0_45] : memref<9x128x128xbf16, #tpu.memory_space<vmem>>, vector<1x128x128xbf16>
    %39 = vector.shape_cast %38 : vector<1x128x128xbf16> to vector<128x128xbf16>
    %cst_46 = arith.constant dense<0.000000e+00> : vector<256x128xf32>
    %40 = tpu.matmul %37, %39, %cst_46 {dimension_numbers = #tpu.dot_dimension_numbers<[1], [0], [0], [1], [0, 0, 1, 1], [], []>} : vector<256x128xbf16>, vector<128x128xbf16>, vector<256x128xf32> -> vector<256x128xf32>
    %41 = arith.addf %35, %40 : vector<256x128xf32>
    %c1_47 = arith.constant 1 : index
    %c0_48 = arith.constant 0 : index
    %c0_49 = arith.constant 0 : index
    %42 = vector.load %arg8[%c1_47, %c0_48, %c0_49] : memref<18x18x128xbf16, #tpu.memory_space<vmem>>, vector<16x16x128xbf16>
    %43 = vector.shape_cast %42 : vector<16x16x128xbf16> to vector<256x128xbf16>
    %c3 = arith.constant 3 : index
    %c0_50 = arith.constant 0 : index
    %c0_51 = arith.constant 0 : index
    %44 = vector.load %arg5[%c3, %c0_50, %c0_51] : memref<9x128x128xbf16, #tpu.memory_space<vmem>>, vector<1x128x128xbf16>
    %45 = vector.shape_cast %44 : vector<1x128x128xbf16> to vector<128x128xbf16>
    %cst_52 = arith.constant dense<0.000000e+00> : vector<256x128xf32>
    %46 = tpu.matmul %43, %45, %cst_52 {dimension_numbers = #tpu.dot_dimension_numbers<[1], [0], [0], [1], [0, 0, 1, 1], [], []>} : vector<256x128xbf16>, vector<128x128xbf16>, vector<256x128xf32> -> vector<256x128xf32>
    %47 = arith.addf %41, %46 : vector<256x128xf32>
    %c1_53 = arith.constant 1 : index
    %c1_54 = arith.constant 1 : index
    %c0_55 = arith.constant 0 : index
    %48 = vector.load %arg8[%c1_53, %c1_54, %c0_55] : memref<18x18x128xbf16, #tpu.memory_space<vmem>>, vector<16x16x128xbf16>
    %49 = vector.shape_cast %48 : vector<16x16x128xbf16> to vector<256x128xbf16>
    %c4 = arith.constant 4 : index
    %c0_56 = arith.constant 0 : index
    %c0_57 = arith.constant 0 : index
    %50 = vector.load %arg5[%c4, %c0_56, %c0_57] : memref<9x128x128xbf16, #tpu.memory_space<vmem>>, vector<1x128x128xbf16>
    %51 = vector.shape_cast %50 : vector<1x128x128xbf16> to vector<128x128xbf16>
    %cst_58 = arith.constant dense<0.000000e+00> : vector<256x128xf32>
    %52 = tpu.matmul %49, %51, %cst_58 {dimension_numbers = #tpu.dot_dimension_numbers<[1], [0], [0], [1], [0, 0, 1, 1], [], []>} : vector<256x128xbf16>, vector<128x128xbf16>, vector<256x128xf32> -> vector<256x128xf32>
    %53 = arith.addf %47, %52 : vector<256x128xf32>
    %c1_59 = arith.constant 1 : index
    %c2_60 = arith.constant 2 : index
    %c0_61 = arith.constant 0 : index
    %54 = vector.load %arg8[%c1_59, %c2_60, %c0_61] : memref<18x18x128xbf16, #tpu.memory_space<vmem>>, vector<16x16x128xbf16>
    %55 = vector.shape_cast %54 : vector<16x16x128xbf16> to vector<256x128xbf16>
    %c5 = arith.constant 5 : index
    %c0_62 = arith.constant 0 : index
    %c0_63 = arith.constant 0 : index
    %56 = vector.load %arg5[%c5, %c0_62, %c0_63] : memref<9x128x128xbf16, #tpu.memory_space<vmem>>, vector<1x128x128xbf16>
    %57 = vector.shape_cast %56 : vector<1x128x128xbf16> to vector<128x128xbf16>
    %cst_64 = arith.constant dense<0.000000e+00> : vector<256x128xf32>
    %58 = tpu.matmul %55, %57, %cst_64 {dimension_numbers = #tpu.dot_dimension_numbers<[1], [0], [0], [1], [0, 0, 1, 1], [], []>} : vector<256x128xbf16>, vector<128x128xbf16>, vector<256x128xf32> -> vector<256x128xf32>
    %59 = arith.addf %53, %58 : vector<256x128xf32>
    %c2_65 = arith.constant 2 : index
    %c0_66 = arith.constant 0 : index
    %c0_67 = arith.constant 0 : index
    %60 = vector.load %arg8[%c2_65, %c0_66, %c0_67] : memref<18x18x128xbf16, #tpu.memory_space<vmem>>, vector<16x16x128xbf16>
    %61 = vector.shape_cast %60 : vector<16x16x128xbf16> to vector<256x128xbf16>
    %c6 = arith.constant 6 : index
    %c0_68 = arith.constant 0 : index
    %c0_69 = arith.constant 0 : index
    %62 = vector.load %arg5[%c6, %c0_68, %c0_69] : memref<9x128x128xbf16, #tpu.memory_space<vmem>>, vector<1x128x128xbf16>
    %63 = vector.shape_cast %62 : vector<1x128x128xbf16> to vector<128x128xbf16>
    %cst_70 = arith.constant dense<0.000000e+00> : vector<256x128xf32>
    %64 = tpu.matmul %61, %63, %cst_70 {dimension_numbers = #tpu.dot_dimension_numbers<[1], [0], [0], [1], [0, 0, 1, 1], [], []>} : vector<256x128xbf16>, vector<128x128xbf16>, vector<256x128xf32> -> vector<256x128xf32>
    %65 = arith.addf %59, %64 : vector<256x128xf32>
    %c2_71 = arith.constant 2 : index
    %c1_72 = arith.constant 1 : index
    %c0_73 = arith.constant 0 : index
    %66 = vector.load %arg8[%c2_71, %c1_72, %c0_73] : memref<18x18x128xbf16, #tpu.memory_space<vmem>>, vector<16x16x128xbf16>
    %67 = vector.shape_cast %66 : vector<16x16x128xbf16> to vector<256x128xbf16>
    %c7 = arith.constant 7 : index
    %c0_74 = arith.constant 0 : index
    %c0_75 = arith.constant 0 : index
    %68 = vector.load %arg5[%c7, %c0_74, %c0_75] : memref<9x128x128xbf16, #tpu.memory_space<vmem>>, vector<1x128x128xbf16>
    %69 = vector.shape_cast %68 : vector<1x128x128xbf16> to vector<128x128xbf16>
    %cst_76 = arith.constant dense<0.000000e+00> : vector<256x128xf32>
    %70 = tpu.matmul %67, %69, %cst_76 {dimension_numbers = #tpu.dot_dimension_numbers<[1], [0], [0], [1], [0, 0, 1, 1], [], []>} : vector<256x128xbf16>, vector<128x128xbf16>, vector<256x128xf32> -> vector<256x128xf32>
    %71 = arith.addf %65, %70 : vector<256x128xf32>
    %c2_77 = arith.constant 2 : index
    %c2_78 = arith.constant 2 : index
    %c0_79 = arith.constant 0 : index
    %72 = vector.load %arg8[%c2_77, %c2_78, %c0_79] : memref<18x18x128xbf16, #tpu.memory_space<vmem>>, vector<16x16x128xbf16>
    %73 = vector.shape_cast %72 : vector<16x16x128xbf16> to vector<256x128xbf16>
    %c8 = arith.constant 8 : index
    %c0_80 = arith.constant 0 : index
    %c0_81 = arith.constant 0 : index
    %74 = vector.load %arg5[%c8, %c0_80, %c0_81] : memref<9x128x128xbf16, #tpu.memory_space<vmem>>, vector<1x128x128xbf16>
    %75 = vector.shape_cast %74 : vector<1x128x128xbf16> to vector<128x128xbf16>
    %cst_82 = arith.constant dense<0.000000e+00> : vector<256x128xf32>
    %76 = tpu.matmul %73, %75, %cst_82 {dimension_numbers = #tpu.dot_dimension_numbers<[1], [0], [0], [1], [0, 0, 1, 1], [], []>} : vector<256x128xbf16>, vector<128x128xbf16>, vector<256x128xf32> -> vector<256x128xf32>
    %77 = arith.addf %71, %76 : vector<256x128xf32>
    %78 = arith.truncf %77 : vector<256x128xf32> to vector<256x128xbf16>
    %c0_83 = arith.constant 0 : index
    %c0_84 = arith.constant 0 : index
    %c0_85 = arith.constant 0 : index
    %79 = vector.load %arg6[%c0_83, %c0_84, %c0_85] : memref<1x256x128xbf16, #tpu.memory_space<vmem>>, vector<1x256x128xbf16>
    %80 = vector.shape_cast %79 : vector<1x256x128xbf16> to vector<256x128xbf16>
    %81 = vector.shape_cast %78 : vector<256x128xbf16> to vector<1x256x128xbf16>
    tpu.vector_store %arg6[%c0_83, %c0_84, %c0_85], %81 {strides = array<i32>} : memref<1x256x128xbf16, #tpu.memory_space<vmem>>, vector<1x256x128xbf16>,
    %cst_86 = arith.constant 0.000000e+00 : f32
    %82 = vector.broadcast %cst_86 : f32 to vector<8x128xf32>
    %c0_87 = arith.constant 0 : index
    %c0_88 = arith.constant 0 : index
    %c0_89 = arith.constant 0 : index
    %83 = vector.load %arg7[%c0_87, %c0_88, %c0_89] : memref<1x8x128xf32, #tpu.memory_space<vmem>>, vector<1x8x128xf32>
    %84 = vector.shape_cast %83 : vector<1x8x128xf32> to vector<8x128xf32>
    %85 = vector.shape_cast %82 : vector<8x128xf32> to vector<1x8x128xf32>
    tpu.vector_store %arg7[%c0_87, %c0_88, %c0_89], %85 {strides = array<i32>} : memref<1x8x128xf32, #tpu.memory_space<vmem>>, vector<1x8x128xf32>,
    %cst_90 = arith.constant dense<0.000000e+00> : vector<128xf32>
    %86 = vector.multi_reduction <add>, %77, %cst_90 [0] : vector<256x128xf32> to vector<128xf32>
    %87 = vector.shape_cast %86 : vector<128xf32> to vector<1x128xf32>
    %c0_91 = arith.constant 0 : index
    %c0_92 = arith.constant 0 : index
    %c0_93 = arith.constant 0 : index
    %88 = vector.load %arg7[%c0_91, %c0_92, %c0_93] : memref<1x8x128xf32, #tpu.memory_space<vmem>>, vector<1x1x128xf32>
    %89 = vector.shape_cast %88 : vector<1x1x128xf32> to vector<1x128xf32>
    %90 = vector.shape_cast %87 : vector<1x128xf32> to vector<1x1x128xf32>
    tpu.vector_store %arg7[%c0_91, %c0_92, %c0_93], %90 {strides = array<i32>} : memref<1x8x128xf32, #tpu.memory_space<vmem>>, vector<1x1x128xf32>,
    %91 = arith.mulf %77, %77 : vector<256x128xf32>
    %cst_94 = arith.constant dense<0.000000e+00> : vector<128xf32>
    %92 = vector.multi_reduction <add>, %91, %cst_94 [0] : vector<256x128xf32> to vector<128xf32>
    %93 = vector.shape_cast %92 : vector<128xf32> to vector<1x128xf32>
    %c0_95 = arith.constant 0 : index
    %c1_96 = arith.constant 1 : index
    %c0_97 = arith.constant 0 : index
    %94 = vector.load %arg7[%c0_95, %c1_96, %c0_97] : memref<1x8x128xf32, #tpu.memory_space<vmem>>, vector<1x1x128xf32>
    %95 = vector.shape_cast %94 : vector<1x1x128xf32> to vector<1x128xf32>
    %96 = vector.shape_cast %93 : vector<1x128xf32> to vector<1x1x128xf32>
    tpu.vector_store %arg7[%c0_95, %c1_96, %c0_97], %96 {strides = array<i32>} : memref<1x8x128xf32, #tpu.memory_space<vmem>>, vector<1x1x128xf32>,
    return
  }
  func.func @transform_0(%arg0: i32, %arg1: i32) -> (i32, i32) {
    %c0_i32 = arith.constant 0 : i32
    %c0_i32_0 = arith.constant 0 : i32
    %c0_i32_1 = arith.constant 0 : i32
    return %c0_i32, %c0_i32_0 : i32, i32
  }
  func.func @transform_1(%arg0: i32, %arg1: i32) -> (i32, i32, i32, i32) {
    %c0_i32 = arith.constant 0 : i32
    %c0_i32_0 = arith.constant 0 : i32
    %c0_i32_1 = arith.constant 0 : i32
    return %arg0, %arg1, %c0_i32, %c0_i32_0 : i32, i32, i32, i32
  }
  func.func @transform_2(%arg0: i32, %arg1: i32) -> (i32, i32, i32, i32) {
    %c1_i32 = arith.constant 1 : i32
    %0 = arith.muli %arg0, %c1_i32 : i32
    %1 = arith.addi %0, %arg1 : i32
    %c0_i32 = arith.constant 0 : i32
    %c0_i32_0 = arith.constant 0 : i32
    %c0_i32_1 = arith.constant 0 : i32
    %c0_i32_2 = arith.constant 0 : i32
    return %1, %c0_i32, %c0_i32_0, %c0_i32_1 : i32, i32, i32, i32
  }
  func.func @transform_3(%arg0: i32, %arg1: i32) -> (i32, i32, i32) {
    %c0_i32 = arith.constant 0 : i32
    %c0_i32_0 = arith.constant 0 : i32
    %c0_i32_1 = arith.constant 0 : i32
    %c0_i32_2 = arith.constant 0 : i32
    return %c0_i32, %c0_i32_0, %c0_i32_1 : i32, i32, i32
  }
  func.func @transform_4(%arg0: i32, %arg1: i32) -> (i32, i32, i32) {
    %c1_i32 = arith.constant 1 : i32
    %0 = arith.muli %arg0, %c1_i32 : i32
    %1 = arith.addi %0, %arg1 : i32
    %c0_i32 = arith.constant 0 : i32
    %c0_i32_0 = arith.constant 0 : i32
    %c0_i32_1 = arith.constant 0 : i32
    return %1, %c0_i32, %c0_i32_0 : i32, i32, i32
  }
  func.func @transform_5(%arg0: i32, %arg1: i32) -> (i32, i32, i32) {
    %c1_i32 = arith.constant 1 : i32
    %0 = arith.muli %arg0, %c1_i32 : i32
    %1 = arith.addi %0, %arg1 : i32
    %c0_i32 = arith.constant 0 : i32
    %c0_i32_0 = arith.constant 0 : i32
    %c0_i32_1 = arith.constant 0 : i32
    return %1, %c0_i32, %c0_i32_0 : i32, i32, i32
  }
}

</mosaic_0001>

<llo_original>
// kernel: conv2d_bn_forward.5
$region0: #{conv2d_bn_forward.5}
  #allocation0 [shape = 'u32[]', space=smem, size = 0x4, offset = 0x4, fixed_abs, tag = 'smem constant byte address 0x4 - core index']
  #allocation1 [shape = 'u32[72,128]{1,0:T(1,128)}', space=vmem, size = 0x9000, scoped, tag = 'internal scratch']
  %s0 = inlined_call_operand.vmem [shape: bf16[2,256,128], index: 0, kind: input, shape index: {}]
  %s1 = inlined_call_operand.vmem [shape: f32[8,128], index: 1, kind: input, shape index: {}]
  %s2 = inlined_call_operand.vmem [shape: f32[2,256,128], index: 2, kind: output, shape index: {}]
  %s3 = sld [smem:[#allocation0]]
  $region41: #{conv2d_bn_forward.5} parent=0
    _
  %s5 = ssub.s32 1, %s3
  %s6 = scalar_select 0, %s5, %s3
  loop: start=0, step=1, limit=4
  $region2: #{conv2d_bn_forward.5} parent=0 // loop_pre_header
    _
  $region3: #{conv2d_bn_forward.5} parent=0 // loop_header
    %s8 = sphi 0, %s12
    %p9 = scmp.ge.s32.totalorder %s8, 4
    %s18 = sphi 0, %s20
    %s21 = sphi 0, %s18
    %s22 = sphi 0, %s21
    %s38 = sphi 0, %s22
    %s42 = sphi 0, %s42
    %s44 = sphi 0, %s42
    %s45 = sphi 0, %s44
    %s59 = sphi 0, %s45
    %s65 = sphi 0, %s67
    %s68 = sphi 0, %s65
    %s69 = sphi 0, %s68
    %s85 = sphi 0, %s69
  $region4: #{conv2d_bn_forward.5} parent=0 // loop_header_branch
    %11 = sbr.rel (%p9) target = $region8
  $region5: #{conv2d_bn_forward.5} parent=0 // loop_body
    %s13 = ssub.s32 %s8, 1
    %s14 = ssub.s32 %s8, 2
    %s15 = sadd.s32 %s8, 1
    %s16 = ssub.s32 %s8, %s15
    %p17 = scmp.eq.s32.totalorder %s16, 0
    %s19 = sadd.s32 %s18, 1
    %s20 = scalar_select %p17, %s18, %s19
    %p23 = pneg %p17
    %p24 = scmp.eq.s32.totalorder %s8, 1
    %p25 = por %p23, %p24
    %p26 = scmp.ne.s32.totalorder %s18, %s21
    %p27 = scmp.eq.s32.totalorder %s8, 0
    %p28 = por %p26, %p27
    %p29 = scmp.ne.s32.totalorder %s18, %s21
    %p30 = scmp.eq.s32.totalorder %s13, 1
    %p31 = por %p29, %p30
    %p32 = scmp.ne.s32.totalorder %s21, %s22
    %p33 = scmp.eq.s32.totalorder %s13, 0
    %p34 = por %p32, %p33
    %p35 = scmp.ne.s32.totalorder %s21, %s22
    %p36 = scmp.eq.s32.totalorder %s14, 1
    %p37 = por %p35, %p36
    %p39 = scmp.ne.s32.totalorder %s22, %s38
    %p40 = scmp.eq.s32.totalorder %s14, 0
    %p41 = por %p39, %p40
    %s43 = sadd.s32 %s42, 1
    %p46 = scmp.eq.s32.totalorder %s8, 1
    %p47 = scmp.ne.s32.totalorder %s42, %s44
    %p48 = scmp.eq.s32.totalorder %s8, 0
    %p49 = por %p47, %p48
    %p50 = scmp.ne.s32.totalorder %s42, %s44
    %p51 = scmp.eq.s32.totalorder %s13, 1
    %p52 = por %p50, %p51
    %p53 = scmp.ne.s32.totalorder %s44, %s45
    %p54 = scmp.eq.s32.totalorder %s13, 0
    %p55 = por %p53, %p54
    %p56 = scmp.ne.s32.totalorder %s44, %s45
    %p57 = scmp.eq.s32.totalorder %s14, 1
    %p58 = por %p56, %p57
    %p60 = scmp.ne.s32.totalorder %s45, %s59
    %p61 = scmp.eq.s32.totalorder %s14, 0
    %p62 = por %p60, %p61
    %s63 = ssub.s32 %s8, %s15
    %p64 = scmp.eq.s32.totalorder %s63, 0
    %s66 = sadd.s32 %s65, 1
    %s67 = scalar_select %p64, %s65, %s66
    %p70 = pneg %p64
    %p71 = scmp.eq.s32.totalorder %s8, 1
    %p72 = por %p70, %p71
    %p73 = scmp.ne.s32.totalorder %s65, %s68
    %p74 = scmp.eq.s32.totalorder %s8, 0
    %p75 = por %p73, %p74
    %p76 = scmp.ne.s32.totalorder %s65, %s68
    %p77 = scmp.eq.s32.totalorder %s13, 1
    %p78 = por %p76, %p77
    %p79 = scmp.ne.s32.totalorder %s68, %s69
    %p80 = scmp.eq.s32.totalorder %s13, 0
    %p81 = por %p79, %p80
    %p82 = scmp.ne.s32.totalorder %s68, %s69
    %p83 = scmp.eq.s32.totalorder %s14, 1
    %p84 = por %p82, %p83
    %p86 = scmp.ne.s32.totalorder %s69, %s85
    %p87 = scmp.eq.s32.totalorder %s14, 0
    %p88 = por %p86, %p87
    %p89 = scmp.le.s32.totalorder 1, %s8
    %p90 = scmp.lt.s32.totalorder %s8, 3
    %p91 = pnand %p89, %p90
    %p92 = pneg %p91
    // Predicated region
    $region9: #{conv2d_bn_forward.5} parent=5 // pred_check
      _
    $region10: #{conv2d_bn_forward.5} parent=5 // pred_check_branch
      %94 = sbr.rel (%p91) target = $region12
    $region11: #{conv2d_bn_forward.5} parent=5 // pred_region
      %s95 = ssub.s32 %s8, 1
      // Predicated region
      $region13: #{conv2d_bn_forward.5} parent=11 // pred_check
        %p96 = pneg %p55
      $region14: #{conv2d_bn_forward.5} parent=11 // pred_check_branch
        %98 = sbr.rel (%p96) target = $region16
      $region15: #{conv2d_bn_forward.5} parent=11 // pred_region
        _
      $region16: #{conv2d_bn_forward.5} parent=11 // pred_fallthru
        _
    $region12: #{conv2d_bn_forward.5} parent=5 // pred_fallthru
      _
    %p99 = scmp.lt.s32.totalorder %s8, 2
    // Predicated region
    $region17: #{conv2d_bn_forward.5} parent=5 // pred_check
      %p100 = pneg %p99
    $region18: #{conv2d_bn_forward.5} parent=5 // pred_check_branch
      %102 = sbr.rel (%p100) target = $region20
    $region19: #{conv2d_bn_forward.5} parent=5 // pred_region
      // Predicated region
      $region21: #{conv2d_bn_forward.5} parent=19 // pred_check
        %p103 = pneg %p28
      $region22: #{conv2d_bn_forward.5} parent=19 // pred_check_branch
        %105 = sbr.rel (%p103) target = $region24
      $region23: #{conv2d_bn_forward.5} parent=19 // pred_region
        %p106 = scmp.lt.s32.totalorder %s8, 1
        %s107 = scalar_select %p106, %s8, 1
        %s108 = smul.addr %s107, 32
        %s109 = smul.addr %s108, 4
        %s110 = scalar_lea.vmem %s0, %s109
      $region24: #{conv2d_bn_forward.5} parent=19 // pred_fallthru
        _
    $region20: #{conv2d_bn_forward.5} parent=5 // pred_fallthru
      _
    %p111 = scmp.le.s32.totalorder 1, %s8
    %p112 = scmp.lt.s32.totalorder %s8, 3
    %p113 = pnand %p111, %p112
    %p114 = pneg %p113
    // Predicated region
    $region25: #{conv2d_bn_forward.5} parent=5 // pred_check
      _
    $region26: #{conv2d_bn_forward.5} parent=5 // pred_check_branch
      %116 = sbr.rel (%p113) target = $region28
    $region27: #{conv2d_bn_forward.5} parent=5 // pred_region
      %s117 = ssub.s32 %s8, 1
      %p118 = scmp.lt.s32.totalorder %s13, 1
      %s119 = scalar_select %p118, %s13, 1
      %s120 = smul.addr %s119, 32
      %s121 = smul.addr %s120, 4
      %s122 = scalar_lea.vmem %s0, %s121
      %p123 = pneg %p34
      %p124 = pneg %p31
      %p125 = pneg %p55
      %p126 = pneg %p52
      %p127 = pneg %p81
      %p128 = pneg %p78
      %p129 = scmp.lt.s32.totalorder %s13, 1
      %s130 = scalar_select %p129, %s13, 1
      %s131 = smul.addr %s130, 32
      %s132 = smul.addr %s131, 8
      %s133 = scalar_lea.vmem %s2, %s132
      %p134 = scmp.lt.s32.totalorder %s13, 1
      %s135 = scalar_select %p134, %s13, 1
      %s136 = smul.addr %s135, 32
      %s137 = smul.addr %s136, 4
      %s138 = scalar_lea.vmem %s0, %s137
      %p139 = scmp.lt.s32.totalorder %s13, 1
      %s140 = scalar_select %p139, %s13, 1
      %s141 = smul.addr %s140, 32
      %s142 = smul.addr %s141, 8
      %s143 = scalar_lea.vmem %s2, %s142
      %v144 = vld [vmem:[%s138] sm:$0xf]
      %v145 = vld [vmem:[%s138 + $0x4] sm:$0xf]
      %v146 = vld [vmem:[%s138 + $0x8] sm:$0xf]
      %v147 = vld [vmem:[%s138 + $0xc] sm:$0xf]
      %v148 = vld [vmem:[%s138 + $0x10] sm:$0xf]
      %v149 = vld [vmem:[%s138 + $0x14] sm:$0xf]
      %v150 = vld [vmem:[%s138 + $0x18] sm:$0xf]
      %v151 = vld [vmem:[%s138 + $0x1c] sm:$0xf]
      %v152 = vld [vmem:[%s138 + $0x20] sm:$0xf]
      %v153 = vld [vmem:[%s138 + $0x24] sm:$0xf]
      %v154 = vld [vmem:[%s138 + $0x28] sm:$0xf]
      %v155 = vld [vmem:[%s138 + $0x2c] sm:$0xf]
      %v156 = vld [vmem:[%s138 + $0x30] sm:$0xf]
      %v157 = vld [vmem:[%s138 + $0x34] sm:$0xf]
      %v158 = vld [vmem:[%s138 + $0x38] sm:$0xf]
      %v159 = vld [vmem:[%s138 + $0x3c] sm:$0xf]
      %v160 = vld [vmem:[%s138 + $0x40] sm:$0xf]
      %v161 = vld [vmem:[%s138 + $0x44] sm:$0xf]
      %v162 = vld [vmem:[%s138 + $0x48] sm:$0xf]
      %v163 = vld [vmem:[%s138 + $0x4c] sm:$0xf]
      %v164 = vld [vmem:[%s138 + $0x50] sm:$0xf]
      %v165 = vld [vmem:[%s138 + $0x54] sm:$0xf]
      %v166 = vld [vmem:[%s138 + $0x58] sm:$0xf]
      %v167 = vld [vmem:[%s138 + $0x5c] sm:$0xf]
      %v168 = vld [vmem:[%s138 + $0x60] sm:$0xf]
      %v169 = vld [vmem:[%s138 + $0x64] sm:$0xf]
      %v170 = vld [vmem:[%s138 + $0x68] sm:$0xf]
      %v171 = vld [vmem:[%s138 + $0x6c] sm:$0xf]
      %v172 = vld [vmem:[%s138 + $0x70] sm:$0xf]
      %v173 = vld [vmem:[%s138 + $0x74] sm:$0xf]
      %v174 = vld [vmem:[%s138 + $0x78] sm:$0xf]
      %v175 = vld [vmem:[%s138 + $0x7c] sm:$0xf]
      %v176 = vunpack.c.l.bf16 %v144
      %v177 = vunpack.c.l.bf16 %v145
      %v178 = vunpack.c.l.bf16 %v146
      %v179 = vunpack.c.l.bf16 %v147
      %v180 = vunpack.c.l.bf16 %v148
      %v181 = vunpack.c.l.bf16 %v149
      %v182 = vunpack.c.l.bf16 %v150
      %v183 = vunpack.c.l.bf16 %v151
      %v184 = vunpack.c.l.bf16 %v152
      %v185 = vunpack.c.l.bf16 %v153
      %v186 = vunpack.c.l.bf16 %v154
      %v187 = vunpack.c.l.bf16 %v155
      %v188 = vunpack.c.l.bf16 %v156
      %v189 = vunpack.c.l.bf16 %v157
      %v190 = vunpack.c.l.bf16 %v158
      %v191 = vunpack.c.l.bf16 %v159
      %v192 = vunpack.c.l.bf16 %v160
      %v193 = vunpack.c.l.bf16 %v161
      %v194 = vunpack.c.l.bf16 %v162
      %v195 = vunpack.c.l.bf16 %v163
      %v196 = vunpack.c.l.bf16 %v164
      %v197 = vunpack.c.l.bf16 %v165
      %v198 = vunpack.c.l.bf16 %v166
      %v199 = vunpack.c.l.bf16 %v167
      %v200 = vunpack.c.l.bf16 %v168
      %v201 = vunpack.c.l.bf16 %v169
      %v202 = vunpack.c.l.bf16 %v170
      %v203 = vunpack.c.l.bf16 %v171
      %v204 = vunpack.c.l.bf16 %v172
      %v205 = vunpack.c.l.bf16 %v173
      %v206 = vunpack.c.l.bf16 %v174
      %v207 = vunpack.c.l.bf16 %v175
      %v208 = vld [vmem:[%s1] sm:$0x1]
      %v209 = vld [vmem:[%s1 + $0x1] sm:$0x1]
      %v210 = vperm.slane %v208, 0
      %v211 = vmul.f32 %v176, %v210
      %v212 = vmul.f32 %v177, %v210
      %v213 = vmul.f32 %v178, %v210
      %v214 = vmul.f32 %v179, %v210
      %v215 = vmul.f32 %v180, %v210
      %v216 = vmul.f32 %v181, %v210
      %v217 = vmul.f32 %v182, %v210
      %v218 = vmul.f32 %v183, %v210
      %v219 = vmul.f32 %v184, %v210
      %v220 = vmul.f32 %v185, %v210
      %v221 = vmul.f32 %v186, %v210
      %v222 = vmul.f32 %v187, %v210
      %v223 = vmul.f32 %v188, %v210
      %v224 = vmul.f32 %v189, %v210
      %v225 = vmul.f32 %v190, %v210
      %v226 = vmul.f32 %v191, %v210
      %v227 = vmul.f32 %v192, %v210
      %v228 = vmul.f32 %v193, %v210
      %v229 = vmul.f32 %v194, %v210
      %v230 = vmul.f32 %v195, %v210
      %v231 = vmul.f32 %v196, %v210
      %v232 = vmul.f32 %v197, %v210
      %v233 = vmul.f32 %v198, %v210
      %v234 = vmul.f32 %v199, %v210
      %v235 = vmul.f32 %v200, %v210
      %v236 = vmul.f32 %v201, %v210
      %v237 = vmul.f32 %v202, %v210
      %v238 = vmul.f32 %v203, %v210
      %v239 = vmul.f32 %v204, %v210
      %v240 = vmul.f32 %v205, %v210
      %v241 = vmul.f32 %v206, %v210
      %v242 = vmul.f32 %v207, %v210
      %v243 = vperm.slane %v209, 0
      %v244 = vadd.f32 %v211, %v243
      %v245 = vadd.f32 %v212, %v243
      %v246 = vadd.f32 %v213, %v243
      %v247 = vadd.f32 %v214, %v243
      %v248 = vadd.f32 %v215, %v243
      %v249 = vadd.f32 %v216, %v243
      %v250 = vadd.f32 %v217, %v243
      %v251 = vadd.f32 %v218, %v243
      %v252 = vadd.f32 %v219, %v243
      %v253 = vadd.f32 %v220, %v243
      %v254 = vadd.f32 %v221, %v243
      %v255 = vadd.f32 %v222, %v243
      %v256 = vadd.f32 %v223, %v243
      %v257 = vadd.f32 %v224, %v243
      %v258 = vadd.f32 %v225, %v243
      %v259 = vadd.f32 %v226, %v243
      %v260 = vadd.f32 %v227, %v243
      %v261 = vadd.f32 %v228, %v243
      %v262 = vadd.f32 %v229, %v243
      %v263 = vadd.f32 %v230, %v243
      %v264 = vadd.f32 %v231, %v243
      %v265 = vadd.f32 %v232, %v243
      %v266 = vadd.f32 %v233, %v243
      %v267 = vadd.f32 %v234, %v243
      %v268 = vadd.f32 %v235, %v243
      %v269 = vadd.f32 %v236, %v243
      %v270 = vadd.f32 %v237, %v243
      %v271 = vadd.f32 %v238, %v243
      %v272 = vadd.f32 %v239, %v243
      %v273 = vadd.f32 %v240, %v243
      %v274 = vadd.f32 %v241, %v243
      %v275 = vadd.f32 %v242, %v243
      %v276 = vmax.f32 %v244, 0.0
      %v277 = vmax.f32 %v245, 0.0
      %v278 = vmax.f32 %v246, 0.0
      %v279 = vmax.f32 %v247, 0.0
      %v280 = vmax.f32 %v248, 0.0
      %v281 = vmax.f32 %v249, 0.0
      %v282 = vmax.f32 %v250, 0.0
      %v283 = vmax.f32 %v251, 0.0
      %v284 = vmax.f32 %v252, 0.0
      %v285 = vmax.f32 %v253, 0.0
      %v286 = vmax.f32 %v254, 0.0
      %v287 = vmax.f32 %v255, 0.0
      %v288 = vmax.f32 %v256, 0.0
      %v289 = vmax.f32 %v257, 0.0
      %v290 = vmax.f32 %v258, 0.0
      %v291 = vmax.f32 %v259, 0.0
      %v292 = vmax.f32 %v260, 0.0
      %v293 = vmax.f32 %v261, 0.0
      %v294 = vmax.f32 %v262, 0.0
      %v295 = vmax.f32 %v263, 0.0
      %v296 = vmax.f32 %v264, 0.0
      %v297 = vmax.f32 %v265, 0.0
      %v298 = vmax.f32 %v266, 0.0
      %v299 = vmax.f32 %v267, 0.0
      %v300 = vmax.f32 %v268, 0.0
      %v301 = vmax.f32 %v269, 0.0
      %v302 = vmax.f32 %v270, 0.0
      %v303 = vmax.f32 %v271, 0.0
      %v304 = vmax.f32 %v272, 0.0
      %v305 = vmax.f32 %v273, 0.0
      %v306 = vmax.f32 %v274, 0.0
      %v307 = vmax.f32 %v275, 0.0
      %308 = vst [vmem:[%s143] sm:$0xff] %v276
      %309 = vst [vmem:[%s143 + $0x8] sm:$0xff] %v277
      %310 = vst [vmem:[%s143 + $0x10] sm:$0xff] %v278
      %311 = vst [vmem:[%s143 + $0x18] sm:$0xff] %v279
      %312 = vst [vmem:[%s143 + $0x20] sm:$0xff] %v280
      %313 = vst [vmem:[%s143 + $0x28] sm:$0xff] %v281
      %314 = vst [vmem:[%s143 + $0x30] sm:$0xff] %v282
      %315 = vst [vmem:[%s143 + $0x38] sm:$0xff] %v283
      %316 = vst [vmem:[%s143 + $0x40] sm:$0xff] %v284
      %317 = vst [vmem:[%s143 + $0x48] sm:$0xff] %v285
      %318 = vst [vmem:[%s143 + $0x50] sm:$0xff] %v286
      %319 = vst [vmem:[%s143 + $0x58] sm:$0xff] %v287
      %320 = vst [vmem:[%s143 + $0x60] sm:$0xff] %v288
      %321 = vst [vmem:[%s143 + $0x68] sm:$0xff] %v289
      %322 = vst [vmem:[%s143 + $0x70] sm:$0xff] %v290
      %323 = vst [vmem:[%s143 + $0x78] sm:$0xff] %v291
      %324 = vst [vmem:[%s143 + $0x80] sm:$0xff] %v292
      %325 = vst [vmem:[%s143 + $0x88] sm:$0xff] %v293
      %326 = vst [vmem:[%s143 + $0x90] sm:$0xff] %v294
      %327 = vst [vmem:[%s143 + $0x98] sm:$0xff] %v295
      %328 = vst [vmem:[%s143 + $0xa0] sm:$0xff] %v296
      %329 = vst [vmem:[%s143 + $0xa8] sm:$0xff] %v297
      %330 = vst [vmem:[%s143 + $0xb0] sm:$0xff] %v298
      %331 = vst [vmem:[%s143 + $0xb8] sm:$0xff] %v299
      %332 = vst [vmem:[%s143 + $0xc0] sm:$0xff] %v300
      %333 = vst [vmem:[%s143 + $0xc8] sm:$0xff] %v301
      %334 = vst [vmem:[%s143 + $0xd0] sm:$0xff] %v302
      %335 = vst [vmem:[%s143 + $0xd8] sm:$0xff] %v303
      %336 = vst [vmem:[%s143 + $0xe0] sm:$0xff] %v304
      %337 = vst [vmem:[%s143 + $0xe8] sm:$0xff] %v305
      %338 = vst [vmem:[%s143 + $0xf0] sm:$0xff] %v306
      %339 = vst [vmem:[%s143 + $0xf8] sm:$0xff] %v307
      %p340 = scmp.lt.s32.totalorder %s13, 1
      %s341 = scalar_select %p340, %s13, 1
      %s342 = smul.addr %s341, 32
      %s343 = smul.addr %s342, 8
      %s344 = scalar_lea.vmem %s2, %s343
      // Predicated region
      $region29: #{conv2d_bn_forward.5} parent=27 // pred_check
        %p345 = pneg %p78
      $region30: #{conv2d_bn_forward.5} parent=27 // pred_check_branch
        %347 = sbr.rel (%p345) target = $region32
      $region31: #{conv2d_bn_forward.5} parent=27 // pred_region
        _
      $region32: #{conv2d_bn_forward.5} parent=27 // pred_fallthru
        _
    $region28: #{conv2d_bn_forward.5} parent=5 // pred_fallthru
      _
    %p348 = scmp.le.s32.totalorder 2, %s8
    // Predicated region
    $region33: #{conv2d_bn_forward.5} parent=5 // pred_check
      %p349 = pneg %p348
    $region34: #{conv2d_bn_forward.5} parent=5 // pred_check_branch
      %351 = sbr.rel (%p349) target = $region36
    $region35: #{conv2d_bn_forward.5} parent=5 // pred_region
      %s352 = ssub.s32 %s8, 2
      // Predicated region
      $region37: #{conv2d_bn_forward.5} parent=35 // pred_check
        %p353 = pneg %p84
      $region38: #{conv2d_bn_forward.5} parent=35 // pred_check_branch
        %355 = sbr.rel (%p353) target = $region40
      $region39: #{conv2d_bn_forward.5} parent=35 // pred_region
        %p356 = scmp.lt.s32.totalorder %s14, 1
        %s357 = scalar_select %p356, %s14, 1
        %s358 = smul.addr %s357, 32
        %s359 = smul.addr %s358, 8
        %s360 = scalar_lea.vmem %s2, %s359
      $region40: #{conv2d_bn_forward.5} parent=35 // pred_fallthru
        _
    $region36: #{conv2d_bn_forward.5} parent=5 // pred_fallthru
      _
  $region6: #{conv2d_bn_forward.5} parent=0 // loop_footer
    %s12 = sadd.s32 1, %s8
  $region7: #{conv2d_bn_forward.5} parent=0 // loop_footer_branch
    %7 = sbr.rel target = $region3
  $region8: #{conv2d_bn_forward.5} parent=0 // loop_exit
    _

// kernel: conv2d_bn_forward.3
$region0: #{conv2d_bn_forward.3}
  #allocation0 [shape = 'u32[]', space=smem, size = 0x4, offset = 0x4, fixed_abs, tag = 'smem constant byte address 0x4 - core index']
  #allocation1 [shape = 'u32[72,128]{1,0:T(1,128)}', space=vmem, size = 0x9000, scoped, tag = 'internal scratch']
  #allocation2 [shape = 'bf16[18,18,4]{2,1,0:T(8,128)(2,1)}', space=vmem, size = 0x1b000, scoped, tag = 'scratch operand']
  %s0 = inlined_call_operand.vmem [shape: bf16[2,16,16,4], index: 0, kind: input, shape index: {}]
  %s1 = inlined_call_operand.vmem [shape: bf16[2,2,16,4], index: 1, kind: input, shape index: {}]
  %s2 = inlined_call_operand.vmem [shape: bf16[9,4,128], index: 2, kind: input, shape index: {}]
  %s3 = inlined_call_operand.vmem [shape: bf16[2,256,128], index: 3, kind: output, shape index: {0}]
  %s4 = inlined_call_operand.vmem [shape: f32[2,8,128], index: 4, kind: output, shape index: {1}]
  %5 = xla_tuple %s3, %s4
  %s6 = sld [smem:[#allocation0]]
  $region53: #{conv2d_bn_forward.3} parent=0
    _
  %s8 = ssub.s32 1, %s6
  %s9 = scalar_select 0, %s8, %s6
  loop: start=0, step=1, limit=4
  $region2: #{conv2d_bn_forward.3} parent=0 // loop_pre_header
    _
  $region3: #{conv2d_bn_forward.3} parent=0 // loop_header
    %s11 = sphi 0, %s15
    %p12 = scmp.ge.s32.totalorder %s11, 4
    %s18 = sphi 0, %s30
    %s19 = sphi 0, %s26
    %s20 = sphi 0, %s18
    %s21 = sphi 0, %s19
    %s22 = sphi 0, %s20
    %s23 = sphi 0, %s21
    %s35 = sphi 0, %s37
    %s38 = sphi 0, %s35
    %s39 = sphi 0, %s38
    %s55 = sphi 0, %s39
    %s63 = sphi 0, %s65
    %s66 = sphi 0, %s63
    %s67 = sphi 0, %s66
    %s83 = sphi 0, %s67
    %s87 = sphi 0, %s87
    %s89 = sphi 0, %s87
    %s90 = sphi 0, %s89
    %s104 = sphi 0, %s90
    %s112 = sphi 0, %s114
    %s115 = sphi 0, %s112
    %s116 = sphi 0, %s115
    %s132 = sphi 0, %s116
    %s140 = sphi 0, %s142
    %s143 = sphi 0, %s140
    %s144 = sphi 0, %s143
    %s160 = sphi 0, %s144
  $region4: #{conv2d_bn_forward.3} parent=0 // loop_header_branch
    %14 = sbr.rel (%p12) target = $region8
  $region5: #{conv2d_bn_forward.3} parent=0 // loop_body
    %s16 = ssub.s32 %s11, 1
    %s17 = ssub.s32 %s11, 2
    %s24 = sadd.s32 1, %s19
    %p25 = scmp.ge.s32.totalorder %s24, 1
    %s26 = scalar_select %p25, 0, %s24
    %s27 = sadd.s32 1, %s18
    %s28 = scalar_select %p25, %s27, %s18
    %p29 = scmp.ge.s32.totalorder %s28, 2
    %s30 = scalar_select %p29, 0, %s28
    %s31 = ssub.s32 %s18, %s30
    %s32 = ssub.s32 %s19, %s26
    %s33 = sor.u32 %s31, %s32
    %p34 = scmp.eq.s32.totalorder %s33, 0
    %s36 = sadd.s32 %s35, 1
    %s37 = scalar_select %p34, %s35, %s36
    %p40 = pneg %p34
    %p41 = scmp.eq.s32.totalorder %s11, 1
    %p42 = por %p40, %p41
    %p43 = scmp.ne.s32.totalorder %s35, %s38
    %p44 = scmp.eq.s32.totalorder %s11, 0
    %p45 = por %p43, %p44
    %p46 = scmp.ne.s32.totalorder %s35, %s38
    %p47 = scmp.eq.s32.totalorder %s16, 1
    %p48 = por %p46, %p47
    %p49 = scmp.ne.s32.totalorder %s38, %s39
    %p50 = scmp.eq.s32.totalorder %s16, 0
    %p51 = por %p49, %p50
    %p52 = scmp.ne.s32.totalorder %s38, %s39
    %p53 = scmp.eq.s32.totalorder %s17, 1
    %p54 = por %p52, %p53
    %p56 = scmp.ne.s32.totalorder %s39, %s55
    %p57 = scmp.eq.s32.totalorder %s17, 0
    %p58 = por %p56, %p57
    %s59 = sadd.s32 %s18, %s19
    %s60 = sadd.s32 %s30, %s26
    %s61 = ssub.s32 %s59, %s60
    %p62 = scmp.eq.s32.totalorder %s61, 0
    %s64 = sadd.s32 %s63, 1
    %s65 = scalar_select %p62, %s63, %s64
    %p68 = pneg %p62
    %p69 = scmp.eq.s32.totalorder %s11, 1
    %p70 = por %p68, %p69
    %p71 = scmp.ne.s32.totalorder %s63, %s66
    %p72 = scmp.eq.s32.totalorder %s11, 0
    %p73 = por %p71, %p72
    %p74 = scmp.ne.s32.totalorder %s63, %s66
    %p75 = scmp.eq.s32.totalorder %s16, 1
    %p76 = por %p74, %p75
    %p77 = scmp.ne.s32.totalorder %s66, %s67
    %p78 = scmp.eq.s32.totalorder %s16, 0
    %p79 = por %p77, %p78
    %p80 = scmp.ne.s32.totalorder %s66, %s67
    %p81 = scmp.eq.s32.totalorder %s17, 1
    %p82 = por %p80, %p81
    %p84 = scmp.ne.s32.totalorder %s67, %s83
    %p85 = scmp.eq.s32.totalorder %s17, 0
    %p86 = por %p84, %p85
    %s88 = sadd.s32 %s87, 1
    %p91 = scmp.eq.s32.totalorder %s11, 1
    %p92 = scmp.ne.s32.totalorder %s87, %s89
    %p93 = scmp.eq.s32.totalorder %s11, 0
    %p94 = por %p92, %p93
    %p95 = scmp.ne.s32.totalorder %s87, %s89
    %p96 = scmp.eq.s32.totalorder %s16, 1
    %p97 = por %p95, %p96
    %p98 = scmp.ne.s32.totalorder %s89, %s90
    %p99 = scmp.eq.s32.totalorder %s16, 0
    %p100 = por %p98, %p99
    %p101 = scmp.ne.s32.totalorder %s89, %s90
    %p102 = scmp.eq.s32.totalorder %s17, 1
    %p103 = por %p101, %p102
    %p105 = scmp.ne.s32.totalorder %s90, %s104
    %p106 = scmp.eq.s32.totalorder %s17, 0
    %p107 = por %p105, %p106
    %s108 = sadd.s32 %s18, %s19
    %s109 = sadd.s32 %s30, %s26
    %s110 = ssub.s32 %s108, %s109
    %p111 = scmp.eq.s32.totalorder %s110, 0
    %s113 = sadd.s32 %s112, 1
    %s114 = scalar_select %p111, %s112, %s113
    %p117 = pneg %p111
    %p118 = scmp.eq.s32.totalorder %s11, 1
    %p119 = por %p117, %p118
    %p120 = scmp.ne.s32.totalorder %s112, %s115
    %p121 = scmp.eq.s32.totalorder %s11, 0
    %p122 = por %p120, %p121
    %p123 = scmp.ne.s32.totalorder %s112, %s115
    %p124 = scmp.eq.s32.totalorder %s16, 1
    %p125 = por %p123, %p124
    %p126 = scmp.ne.s32.totalorder %s115, %s116
    %p127 = scmp.eq.s32.totalorder %s16, 0
    %p128 = por %p126, %p127
    %p129 = scmp.ne.s32.totalorder %s115, %s116
    %p130 = scmp.eq.s32.totalorder %s17, 1
    %p131 = por %p129, %p130
    %p133 = scmp.ne.s32.totalorder %s116, %s132
    %p134 = scmp.eq.s32.totalorder %s17, 0
    %p135 = por %p133, %p134
    %s136 = sadd.s32 %s18, %s19
    %s137 = sadd.s32 %s30, %s26
    %s138 = ssub.s32 %s136, %s137
    %p139 = scmp.eq.s32.totalorder %s138, 0
    %s141 = sadd.s32 %s140, 1
    %s142 = scalar_select %p139, %s140, %s141
    %p145 = pneg %p139
    %p146 = scmp.eq.s32.totalorder %s11, 1
    %p147 = por %p145, %p146
    %p148 = scmp.ne.s32.totalorder %s140, %s143
    %p149 = scmp.eq.s32.totalorder %s11, 0
    %p150 = por %p148, %p149
    %p151 = scmp.ne.s32.totalorder %s140, %s143
    %p152 = scmp.eq.s32.totalorder %s16, 1
    %p153 = por %p151, %p152
    %p154 = scmp.ne.s32.totalorder %s143, %s144
    %p155 = scmp.eq.s32.totalorder %s16, 0
    %p156 = por %p154, %p155
    %p157 = scmp.ne.s32.totalorder %s143, %s144
    %p158 = scmp.eq.s32.totalorder %s17, 1
    %p159 = por %p157, %p158
    %p161 = scmp.ne.s32.totalorder %s144, %s160
    %p162 = scmp.eq.s32.totalorder %s17, 0
    %p163 = por %p161, %p162
    %p164 = scmp.le.s32.totalorder 1, %s11
    %p165 = scmp.lt.s32.totalorder %s11, 3
    %p166 = pnand %p164, %p165
    %p167 = pneg %p166
    // Predicated region
    $region9: #{conv2d_bn_forward.3} parent=5 // pred_check
      _
    $region10: #{conv2d_bn_forward.3} parent=5 // pred_check_branch
      %169 = sbr.rel (%p166) target = $region12
    $region11: #{conv2d_bn_forward.3} parent=5 // pred_region
      %s170 = ssub.s32 %s11, 1
      // Predicated region
      $region13: #{conv2d_bn_forward.3} parent=11 // pred_check
        %p171 = pneg %p100
      $region14: #{conv2d_bn_forward.3} parent=11 // pred_check_branch
        %173 = sbr.rel (%p171) target = $region16
      $region15: #{conv2d_bn_forward.3} parent=11 // pred_region
        _
      $region16: #{conv2d_bn_forward.3} parent=11 // pred_fallthru
        _
    $region12: #{conv2d_bn_forward.3} parent=5 // pred_fallthru
      _
    %p174 = scmp.lt.s32.totalorder %s11, 2
    // Predicated region
    $region17: #{conv2d_bn_forward.3} parent=5 // pred_check
      %p175 = pneg %p174
    $region18: #{conv2d_bn_forward.3} parent=5 // pred_check_branch
      %177 = sbr.rel (%p175) target = $region20
    $region19: #{conv2d_bn_forward.3} parent=5 // pred_region
      // Predicated region
      $region21: #{conv2d_bn_forward.3} parent=19 // pred_check
        %p178 = pneg %p45
      $region22: #{conv2d_bn_forward.3} parent=19 // pred_check_branch
        %180 = sbr.rel (%p178) target = $region24
      $region23: #{conv2d_bn_forward.3} parent=19 // pred_region
        %s181 = smul.u32 16, %s19
        %p182 = scmp.lt.s32.totalorder %s18, 1
        %s183 = scalar_select %p182, %s18, 1
        %p184 = scmp.lt.s32.totalorder %s181, 15
        %s185 = scalar_select %p184, %s181, 15
        %s186 = smul.addr %s185, 2
        %s187 = smul.addr %s183, 32
        %s188 = sadd.s32 %s186, %s187
        %s189 = smul.addr %s188, 4
        %s190 = scalar_lea.vmem %s0, %s189
        %s191 = smul.u32 16, %s19
      $region24: #{conv2d_bn_forward.3} parent=19 // pred_fallthru
        _
      // Predicated region
      $region25: #{conv2d_bn_forward.3} parent=19 // pred_check
        %p192 = pneg %p73
      $region26: #{conv2d_bn_forward.3} parent=19 // pred_check_branch
        %194 = sbr.rel (%p192) target = $region28
      $region27: #{conv2d_bn_forward.3} parent=19 // pred_region
        %s195 = sadd.s32 %s18, %s19
        %p196 = scmp.lt.s32.totalorder %s195, 1
        %s197 = scalar_select %p196, %s195, 1
        %s198 = smul.addr %s197, 4
        %s199 = smul.addr %s198, 4
        %s200 = scalar_lea.vmem %s1, %s199
        %s201 = sadd.s32 %s18, %s19
      $region28: #{conv2d_bn_forward.3} parent=19 // pred_fallthru
        _
    $region20: #{conv2d_bn_forward.3} parent=5 // pred_fallthru
      _
    %p202 = scmp.le.s32.totalorder 1, %s11
    %p203 = scmp.lt.s32.totalorder %s11, 3
    %p204 = pnand %p202, %p203
    %p205 = pneg %p204
    // Predicated region
    $region29: #{conv2d_bn_forward.3} parent=5 // pred_check
      _
    $region30: #{conv2d_bn_forward.3} parent=5 // pred_check_branch
      %207 = sbr.rel (%p204) target = $region32
    $region31: #{conv2d_bn_forward.3} parent=5 // pred_region
      %s208 = ssub.s32 %s11, 1
      %s209 = smul.u32 16, %s21
      %p210 = scmp.lt.s32.totalorder %s20, 1
      %s211 = scalar_select %p210, %s20, 1
      %p212 = scmp.lt.s32.totalorder %s209, 15
      %s213 = scalar_select %p212, %s209, 15
      %s214 = smul.addr %s213, 2
      %s215 = smul.addr %s211, 32
      %s216 = sadd.s32 %s214, %s215
      %s217 = smul.addr %s216, 4
      %s218 = scalar_lea.vmem %s0, %s217
      %p219 = pneg %p51
      %p220 = pneg %p48
      %s221 = sadd.s32 %s20, %s21
      %p222 = scmp.lt.s32.totalorder %s221, 1
      %s223 = scalar_select %p222, %s221, 1
      %s224 = smul.addr %s223, 4
      %s225 = smul.addr %s224, 4
      %s226 = scalar_lea.vmem %s1, %s225
      %p227 = pneg %p79
      %p228 = pneg %p76
      %p229 = pneg %p100
      %p230 = pneg %p97
      %p231 = pneg %p128
      %p232 = pneg %p125
      %s233 = sadd.s32 %s20, %s21
      %p234 = scmp.lt.s32.totalorder %s233, 1
      %s235 = scalar_select %p234, %s233, 1
      %s236 = smul.addr %s235, 32
      %s237 = smul.addr %s236, 4
      %s238 = scalar_lea.vmem %s3, %s237
      %p239 = pneg %p156
      %p240 = pneg %p153
      %s241 = sadd.s32 %s20, %s21
      %p242 = scmp.lt.s32.totalorder %s241, 1
      %s243 = scalar_select %p242, %s241, 1
      %s244 = smul.addr %s243, 8
      %s245 = scalar_lea.vmem %s4, %s244
      %s246 = smul.u32 16, %s21
      %p247 = scmp.lt.s32.totalorder %s20, 1
      %s248 = scalar_select %p247, %s20, 1
      %p249 = scmp.lt.s32.totalorder %s246, 15
      %s250 = scalar_select %p249, %s246, 15
      %s251 = smul.addr %s250, 2
      %s252 = smul.addr %s248, 32
      %s253 = sadd.s32 %s251, %s252
      %s254 = smul.addr %s253, 4
      %s255 = scalar_lea.vmem %s0, %s254
      %s256 = smul.u32 16, %s21
      %s257 = sadd.s32 %s20, %s21
      %p258 = scmp.lt.s32.totalorder %s257, 1
      %s259 = scalar_select %p258, %s257, 1
      %s260 = smul.addr %s259, 4
      %s261 = smul.addr %s260, 4
      %s262 = scalar_lea.vmem %s1, %s261
      %s263 = sadd.s32 %s20, %s21
      %s264 = sadd.s32 %s20, %s21
      %p265 = scmp.lt.s32.totalorder %s264, 1
      %s266 = scalar_select %p265, %s264, 1
      %s267 = smul.addr %s266, 32
      %s268 = smul.addr %s267, 4
      %s269 = scalar_lea.vmem %s3, %s268
      %s270 = sadd.s32 %s20, %s21
      %s271 = sadd.s32 %s20, %s21
      %p272 = scmp.lt.s32.totalorder %s271, 1
      %s273 = scalar_select %p272, %s271, 1
      %s274 = smul.addr %s273, 8
      %s275 = scalar_lea.vmem %s4, %s274
      %s276 = sadd.s32 %s20, %s21
      %v278 = vld [vmem:[%s255] sm:$0xf]
      %v279 = vld [vmem:[%s255 + $0x4] sm:$0xf]
      %v280 = vld [vmem:[%s255 + $0x8] sm:$0xf]
      %v281 = vld [vmem:[%s255 + $0xc] sm:$0xf]
      %v282 = vld [vmem:[%s255 + $0x10] sm:$0xf]
      %v283 = vld [vmem:[%s255 + $0x14] sm:$0xf]
      %v284 = vld [vmem:[%s255 + $0x18] sm:$0xf]
      %v285 = vld [vmem:[%s255 + $0x1c] sm:$0xf]
      %v286 = vld [vmem:[%s255 + $0x20] sm:$0xf]
      %v287 = vld [vmem:[%s255 + $0x24] sm:$0xf]
      %v288 = vld [vmem:[%s255 + $0x28] sm:$0xf]
      %v289 = vld [vmem:[%s255 + $0x2c] sm:$0xf]
      %v290 = vld [vmem:[%s255 + $0x30] sm:$0xf]
      %v291 = vld [vmem:[%s255 + $0x34] sm:$0xf]
      %v292 = vld [vmem:[%s255 + $0x38] sm:$0xf]
      %v293 = vld [vmem:[%s255 + $0x3c] sm:$0xf]
      %v294 = vld [vmem:[%s255 + $0x40] sm:$0xf]
      %v295 = vld [vmem:[%s255 + $0x44] sm:$0xf]
      %v296 = vld [vmem:[%s255 + $0x48] sm:$0xf]
      %v297 = vld [vmem:[%s255 + $0x4c] sm:$0xf]
      %v298 = vld [vmem:[%s255 + $0x50] sm:$0xf]
      %v299 = vld [vmem:[%s255 + $0x54] sm:$0xf]
      %v300 = vld [vmem:[%s255 + $0x58] sm:$0xf]
      %v301 = vld [vmem:[%s255 + $0x5c] sm:$0xf]
      %v302 = vld [vmem:[%s255 + $0x60] sm:$0xf]
      %v303 = vld [vmem:[%s255 + $0x64] sm:$0xf]
      %v304 = vld [vmem:[%s255 + $0x68] sm:$0xf]
      %v305 = vld [vmem:[%s255 + $0x6c] sm:$0xf]
      %v306 = vld [vmem:[%s255 + $0x70] sm:$0xf]
      %v307 = vld [vmem:[%s255 + $0x74] sm:$0xf]
      %v308 = vld [vmem:[%s255 + $0x78] sm:$0xf]
      %v309 = vld [vmem:[%s255 + $0x7c] sm:$0xf]
      %v310 = vld [vmem:[%s262] sm:$0xf]
      %v311 = vld [vmem:[%s262 + $0x4] sm:$0xf]
      %s312 = scalar_lea.vmem %s262, 8
      %v313 = vld [vmem:[%s312] sm:$0xf]
      %v314 = vld [vmem:[%s312 + $0x4] sm:$0xf]
      %vm315 = vcmask 27648
      %316 = vst.msk [vmem:[#allocation2] sm:$0xf] %vm315, 0
      %317 = vst.msk [vmem:[#allocation2 + $0x4] sm:$0xf] %vm315, 0
      %vm318 = vcmask 24576
      %319 = vst.msk [vmem:[#allocation2 + $0x8] sm:$0x1] %vm318, 0
      %320 = vst.msk [vmem:[#allocation2 + $0xc] sm:$0xf] %vm315, 0
      %321 = vst.msk [vmem:[#allocation2 + $0x10] sm:$0xf] %vm315, 0
      %322 = vst.msk [vmem:[#allocation2 + $0x14] sm:$0x1] %vm318, 0
      %323 = vst.msk [vmem:[#allocation2 + $0x18] sm:$0xf] %vm315, 0
      %324 = vst.msk [vmem:[#allocation2 + $0x1c] sm:$0xf] %vm315, 0
      %325 = vst.msk [vmem:[#allocation2 + $0x20] sm:$0x1] %vm318, 0
      %326 = vst.msk [vmem:[#allocation2 + $0x24] sm:$0xf] %vm315, 0
      %327 = vst.msk [vmem:[#allocation2 + $0x28] sm:$0xf] %vm315, 0
      %328 = vst.msk [vmem:[#allocation2 + $0x2c] sm:$0x1] %vm318, 0
      %329 = vst.msk [vmem:[#allocation2 + $0x30] sm:$0xf] %vm315, 0
      %330 = vst.msk [vmem:[#allocation2 + $0x34] sm:$0xf] %vm315, 0
      %331 = vst.msk [vmem:[#allocation2 + $0x38] sm:$0x1] %vm318, 0
      %332 = vst.msk [vmem:[#allocation2 + $0x3c] sm:$0xf] %vm315, 0
      %333 = vst.msk [vmem:[#allocation2 + $0x40] sm:$0xf] %vm315, 0
      %334 = vst.msk [vmem:[#allocation2 + $0x44] sm:$0x1] %vm318, 0
      %335 = vst.msk [vmem:[#allocation2 + $0x48] sm:$0xf] %vm315, 0
      %336 = vst.msk [vmem:[#allocation2 + $0x4c] sm:$0xf] %vm315, 0
      %337 = vst.msk [vmem:[#allocation2 + $0x50] sm:$0x1] %vm318, 0
      %338 = vst.msk [vmem:[#allocation2 + $0x54] sm:$0xf] %vm315, 0
      %339 = vst.msk [vmem:[#allocation2 + $0x58] sm:$0xf] %vm315, 0
      %340 = vst.msk [vmem:[#allocation2 + $0x5c] sm:$0x1] %vm318, 0
      %341 = vst.msk [vmem:[#allocation2 + $0x60] sm:$0xf] %vm315, 0
      %342 = vst.msk [vmem:[#allocation2 + $0x64] sm:$0xf] %vm315, 0
      %343 = vst.msk [vmem:[#allocation2 + $0x68] sm:$0x1] %vm318, 0
      %344 = vst.msk [vmem:[#allocation2 + $0x6c] sm:$0xf] %vm315, 0
      %345 = vst.msk [vmem:[#allocation2 + $0x70] sm:$0xf] %vm315, 0
      %346 = vst.msk [vmem:[#allocation2 + $0x74] sm:$0x1] %vm318, 0
      %347 = vst.msk [vmem:[#allocation2 + $0x78] sm:$0xf] %vm315, 0
      %348 = vst.msk [vmem:[#allocation2 + $0x7c] sm:$0xf] %vm315, 0
      %349 = vst.msk [vmem:[#allocation2 + $0x80] sm:$0x1] %vm318, 0
      %350 = vst.msk [vmem:[#allocation2 + $0x84] sm:$0xf] %vm315, 0
      %351 = vst.msk [vmem:[#allocation2 + $0x88] sm:$0xf] %vm315, 0
      %352 = vst.msk [vmem:[#allocation2 + $0x8c] sm:$0x1] %vm318, 0
      %353 = vst.msk [vmem:[#allocation2 + $0x90] sm:$0xf] %vm315, 0
      %354 = vst.msk [vmem:[#allocation2 + $0x94] sm:$0xf] %vm315, 0
      %355 = vst.msk [vmem:[#allocation2 + $0x98] sm:$0x1] %vm318, 0
      %356 = vst.msk [vmem:[#allocation2 + $0x9c] sm:$0xf] %vm315, 0
      %357 = vst.msk [vmem:[#allocation2 + $0xa0] sm:$0xf] %vm315, 0
      %358 = vst.msk [vmem:[#allocation2 + $0xa4] sm:$0x1] %vm318, 0
      %359 = vst.msk [vmem:[#allocation2 + $0xa8] sm:$0xf] %vm315, 0
      %360 = vst.msk [vmem:[#allocation2 + $0xac] sm:$0xf] %vm315, 0
      %361 = vst.msk [vmem:[#allocation2 + $0xb0] sm:$0x1] %vm318, 0
      %362 = vst.msk [vmem:[#allocation2 + $0xb4] sm:$0xf] %vm315, 0
      %363 = vst.msk [vmem:[#allocation2 + $0xb8] sm:$0xf] %vm315, 0
      %364 = vst.msk [vmem:[#allocation2 + $0xbc] sm:$0x1] %vm318, 0
      %365 = vst.msk [vmem:[#allocation2 + $0xc0] sm:$0xf] %vm315, 0
      %366 = vst.msk [vmem:[#allocation2 + $0xc4] sm:$0xf] %vm315, 0
      %367 = vst.msk [vmem:[#allocation2 + $0xc8] sm:$0x1] %vm318, 0
      %368 = vst.msk [vmem:[#allocation2 + $0xcc] sm:$0xf] %vm315, 0
      %369 = vst.msk [vmem:[#allocation2 + $0xd0] sm:$0xf] %vm315, 0
      %370 = vst.msk [vmem:[#allocation2 + $0xd4] sm:$0x1] %vm318, 0
      %vm371 = vsmask.f32 256
      %vm372 = vsmask.f32 4368
      %vm373 = vmor %vm371, %vm372
      %v375 = vshrl.u32 %v310, 16
      %v377 = vrot.slane %v375, 7
      %v378 = vshll.u32 %v310, 16
      %v380 = vor.u32 %v377, %v378
      %v381 = vrot.slane %v377, 4
      %v383 = vshrl.u32 %v311, 16
      %v385 = vrot.slane %v383, 7
      %v386 = vshll.u32 %v311, 16
      %v388 = vor.u32 %v385, %v386
      %v389 = vsel %vm373, %v381, %v388
      %v390 = vrot.slane %v385, 4
      %vm394 = vcmask 27648
      %vm395 = vsmask.f32 7938
      %vm396 = vmand %vm394, %vm395
      %v397 = vld [vmem:[#allocation2] sm:$0xf]
      %v398 = vsel %vm396, %v380, %v397
      %399 = vst [vmem:[#allocation2] sm:$0xf] %v398
      %400 = vst.msk [vmem:[#allocation2 + $0x4] sm:$0xf] %vm315, %v389
      %vm401 = vcmask 24576
      %vm402 = vmand %vm401, %vm371
      %v403 = vld [vmem:[#allocation2 + $0x8] sm:$0x1]
      %v404 = vsel %vm402, %v390, %v403
      %405 = vst [vmem:[#allocation2 + $0x8] sm:$0x1] %v404
      %v407 = vshrl.u32 %v278, 16
      %v409 = vrot.slane %v407, 7
      %v410 = vshll.u32 %v278, 16
      %v412 = vor.u32 %v409, %v410
      %v413 = vrot.slane %v409, 4
      %v415 = vshrl.u32 %v279, 16
      %v417 = vrot.slane %v415, 7
      %v418 = vshll.u32 %v279, 16
      %v420 = vor.u32 %v417, %v418
      %v421 = vsel %vm373, %v413, %v420
      %v422 = vrot.slane %v417, 4
      %v424 = vshrl.u32 %v280, 16
      %v426 = vrot.slane %v424, 7
      %v427 = vshll.u32 %v280, 16
      %v429 = vor.u32 %v426, %v427
      %v430 = vrot.slane %v426, 4
      %v432 = vshrl.u32 %v281, 16
      %v434 = vrot.slane %v432, 7
      %v435 = vshll.u32 %v281, 16
      %v437 = vor.u32 %v434, %v435
      %v438 = vsel %vm373, %v430, %v437
      %v439 = vrot.slane %v434, 4
      %v441 = vshrl.u32 %v282, 16
      %v443 = vrot.slane %v441, 7
      %v444 = vshll.u32 %v282, 16
      %v446 = vor.u32 %v443, %v444
      %v447 = vrot.slane %v443, 4
      %v449 = vshrl.u32 %v283, 16
      %v451 = vrot.slane %v449, 7
      %v452 = vshll.u32 %v283, 16
      %v454 = vor.u32 %v451, %v452
      %v455 = vsel %vm373, %v447, %v454
      %v456 = vrot.slane %v451, 4
      %v458 = vshrl.u32 %v284, 16
      %v460 = vrot.slane %v458, 7
      %v461 = vshll.u32 %v284, 16
      %v463 = vor.u32 %v460, %v461
      %v464 = vrot.slane %v460, 4
      %v466 = vshrl.u32 %v285, 16
      %v468 = vrot.slane %v466, 7
      %v469 = vshll.u32 %v285, 16
      %v471 = vor.u32 %v468, %v469
      %v472 = vsel %vm373, %v464, %v471
      %v473 = vrot.slane %v468, 4
      %v475 = vshrl.u32 %v286, 16
      %v477 = vrot.slane %v475, 7
      %v478 = vshll.u32 %v286, 16
      %v480 = vor.u32 %v477, %v478
      %v481 = vrot.slane %v477, 4
      %v483 = vshrl.u32 %v287, 16
      %v485 = vrot.slane %v483, 7
      %v486 = vshll.u32 %v287, 16
      %v488 = vor.u32 %v485, %v486
      %v489 = vsel %vm373, %v481, %v488
      %v490 = vrot.slane %v485, 4
      %v492 = vshrl.u32 %v288, 16
      %v494 = vrot.slane %v492, 7
      %v495 = vshll.u32 %v288, 16
      %v497 = vor.u32 %v494, %v495
      %v498 = vrot.slane %v494, 4
      %v500 = vshrl.u32 %v289, 16
      %v502 = vrot.slane %v500, 7
      %v503 = vshll.u32 %v289, 16
      %v505 = vor.u32 %v502, %v503
      %v506 = vsel %vm373, %v498, %v505
      %v507 = vrot.slane %v502, 4
      %v509 = vshrl.u32 %v290, 16
      %v511 = vrot.slane %v509, 7
      %v512 = vshll.u32 %v290, 16
      %v514 = vor.u32 %v511, %v512
      %v515 = vrot.slane %v511, 4
      %v517 = vshrl.u32 %v291, 16
      %v519 = vrot.slane %v517, 7
      %v520 = vshll.u32 %v291, 16
      %v522 = vor.u32 %v519, %v520
      %v523 = vsel %vm373, %v515, %v522
      %v524 = vrot.slane %v519, 4
      %v526 = vshrl.u32 %v292, 16
      %v528 = vrot.slane %v526, 7
      %v529 = vshll.u32 %v292, 16
      %v531 = vor.u32 %v528, %v529
      %v532 = vrot.slane %v528, 4
      %v534 = vshrl.u32 %v293, 16
      %v536 = vrot.slane %v534, 7
      %v537 = vshll.u32 %v293, 16
      %v539 = vor.u32 %v536, %v537
      %v540 = vsel %vm373, %v532, %v539
      %v541 = vrot.slane %v536, 4
      %v543 = vshrl.u32 %v294, 16
      %v545 = vrot.slane %v543, 7
      %v546 = vshll.u32 %v294, 16
      %v548 = vor.u32 %v545, %v546
      %v549 = vrot.slane %v545, 4
      %v551 = vshrl.u32 %v295, 16
      %v553 = vrot.slane %v551, 7
      %v554 = vshll.u32 %v295, 16
      %v556 = vor.u32 %v553, %v554
      %v557 = vsel %vm373, %v549, %v556
      %v558 = vrot.slane %v553, 4
      %v560 = vshrl.u32 %v296, 16
      %v562 = vrot.slane %v560, 7
      %v563 = vshll.u32 %v296, 16
      %v565 = vor.u32 %v562, %v563
      %v566 = vrot.slane %v562, 4
      %v568 = vshrl.u32 %v297, 16
      %v570 = vrot.slane %v568, 7
      %v571 = vshll.u32 %v297, 16
      %v573 = vor.u32 %v570, %v571
      %v574 = vsel %vm373, %v566, %v573
      %v575 = vrot.slane %v570, 4
      %v577 = vshrl.u32 %v298, 16
      %v579 = vrot.slane %v577, 7
      %v580 = vshll.u32 %v298, 16
      %v582 = vor.u32 %v579, %v580
      %v583 = vrot.slane %v579, 4
      %v585 = vshrl.u32 %v299, 16
      %v587 = vrot.slane %v585, 7
      %v588 = vshll.u32 %v299, 16
      %v590 = vor.u32 %v587, %v588
      %v591 = vsel %vm373, %v583, %v590
      %v592 = vrot.slane %v587, 4
      %v594 = vshrl.u32 %v300, 16
      %v596 = vrot.slane %v594, 7
      %v597 = vshll.u32 %v300, 16
      %v599 = vor.u32 %v596, %v597
      %v600 = vrot.slane %v596, 4
      %v602 = vshrl.u32 %v301, 16
      %v604 = vrot.slane %v602, 7
      %v605 = vshll.u32 %v301, 16
      %v607 = vor.u32 %v604, %v605
      %v608 = vsel %vm373, %v600, %v607
      %v609 = vrot.slane %v604, 4
      %v611 = vshrl.u32 %v302, 16
      %v613 = vrot.slane %v611, 7
      %v614 = vshll.u32 %v302, 16
      %v616 = vor.u32 %v613, %v614
      %v617 = vrot.slane %v613, 4
      %v619 = vshrl.u32 %v303, 16
      %v621 = vrot.slane %v619, 7
      %v622 = vshll.u32 %v303, 16
      %v624 = vor.u32 %v621, %v622
      %v625 = vsel %vm373, %v617, %v624
      %v626 = vrot.slane %v621, 4
      %v628 = vshrl.u32 %v304, 16
      %v630 = vrot.slane %v628, 7
      %v631 = vshll.u32 %v304, 16
      %v633 = vor.u32 %v630, %v631
      %v634 = vrot.slane %v630, 4
      %v636 = vshrl.u32 %v305, 16
      %v638 = vrot.slane %v636, 7
      %v639 = vshll.u32 %v305, 16
      %v641 = vor.u32 %v638, %v639
      %v642 = vsel %vm373, %v634, %v641
      %v643 = vrot.slane %v638, 4
      %v645 = vshrl.u32 %v306, 16
      %v647 = vrot.slane %v645, 7
      %v648 = vshll.u32 %v306, 16
      %v650 = vor.u32 %v647, %v648
      %v651 = vrot.slane %v647, 4
      %v653 = vshrl.u32 %v307, 16
      %v655 = vrot.slane %v653, 7
      %v656 = vshll.u32 %v307, 16
      %v658 = vor.u32 %v655, %v656
      %v659 = vsel %vm373, %v651, %v658
      %v660 = vrot.slane %v655, 4
      %v662 = vshrl.u32 %v308, 16
      %v664 = vrot.slane %v662, 7
      %v665 = vshll.u32 %v308, 16
      %v667 = vor.u32 %v664, %v665
      %v668 = vrot.slane %v664, 4
      %v670 = vshrl.u32 %v309, 16
      %v672 = vrot.slane %v670, 7
      %v673 = vshll.u32 %v309, 16
      %v675 = vor.u32 %v672, %v673
      %v676 = vsel %vm373, %v668, %v675
      %v677 = vrot.slane %v672, 4
      %s726 = scalar_lea.vmem [#allocation2], 12
      %v727 = vld [vmem:[%s726] sm:$0xf]
      %v728 = vsel %vm396, %v412, %v727
      %729 = vst [vmem:[%s726] sm:$0xf] %v728
      %730 = vst.msk [vmem:[%s726 + $0x4] sm:$0xf] %vm315, %v421
      %v731 = vld [vmem:[%s726 + $0x8] sm:$0x1]
      %v732 = vsel %vm402, %v422, %v731
      %733 = vst [vmem:[%s726 + $0x8] sm:$0x1] %v732
      %v734 = vld [vmem:[%s726 + $0xc] sm:$0xf]
      %v735 = vsel %vm396, %v429, %v734
      %736 = vst [vmem:[%s726 + $0xc] sm:$0xf] %v735
      %737 = vst.msk [vmem:[%s726 + $0x10] sm:$0xf] %vm315, %v438
      %v738 = vld [vmem:[%s726 + $0x14] sm:$0x1]
      %v739 = vsel %vm402, %v439, %v738
      %740 = vst [vmem:[%s726 + $0x14] sm:$0x1] %v739
      %v741 = vld [vmem:[%s726 + $0x18] sm:$0xf]
      %v742 = vsel %vm396, %v446, %v741
      %743 = vst [vmem:[%s726 + $0x18] sm:$0xf] %v742
      %744 = vst.msk [vmem:[%s726 + $0x1c] sm:$0xf] %vm315, %v455
      %v745 = vld [vmem:[%s726 + $0x20] sm:$0x1]
      %v746 = vsel %vm402, %v456, %v745
      %747 = vst [vmem:[%s726 + $0x20] sm:$0x1] %v746
      %v748 = vld [vmem:[%s726 + $0x24] sm:$0xf]
      %v749 = vsel %vm396, %v463, %v748
      %750 = vst [vmem:[%s726 + $0x24] sm:$0xf] %v749
      %751 = vst.msk [vmem:[%s726 + $0x28] sm:$0xf] %vm315, %v472
      %v752 = vld [vmem:[%s726 + $0x2c] sm:$0x1]
      %v753 = vsel %vm402, %v473, %v752
      %754 = vst [vmem:[%s726 + $0x2c] sm:$0x1] %v753
      %v755 = vld [vmem:[%s726 + $0x30] sm:$0xf]
      %v756 = vsel %vm396, %v480, %v755
      %757 = vst [vmem:[%s726 + $0x30] sm:$0xf] %v756
      %758 = vst.msk [vmem:[%s726 + $0x34] sm:$0xf] %vm315, %v489
      %v759 = vld [vmem:[%s726 + $0x38] sm:$0x1]
      %v760 = vsel %vm402, %v490, %v759
      %761 = vst [vmem:[%s726 + $0x38] sm:$0x1] %v760
      %v762 = vld [vmem:[%s726 + $0x3c] sm:$0xf]
      %v763 = vsel %vm396, %v497, %v762
      %764 = vst [vmem:[%s726 + $0x3c] sm:$0xf] %v763
      %765 = vst.msk [vmem:[%s726 + $0x40] sm:$0xf] %vm315, %v506
      %v766 = vld [vmem:[%s726 + $0x44] sm:$0x1]
      %v767 = vsel %vm402, %v507, %v766
      %768 = vst [vmem:[%s726 + $0x44] sm:$0x1] %v767
      %v769 = vld [vmem:[%s726 + $0x48] sm:$0xf]
      %v770 = vsel %vm396, %v514, %v769
      %771 = vst [vmem:[%s726 + $0x48] sm:$0xf] %v770
      %772 = vst.msk [vmem:[%s726 + $0x4c] sm:$0xf] %vm315, %v523
      %v773 = vld [vmem:[%s726 + $0x50] sm:$0x1]
      %v774 = vsel %vm402, %v524, %v773
      %775 = vst [vmem:[%s726 + $0x50] sm:$0x1] %v774
      %v776 = vld [vmem:[%s726 + $0x54] sm:$0xf]
      %v777 = vsel %vm396, %v531, %v776
      %778 = vst [vmem:[%s726 + $0x54] sm:$0xf] %v777
      %779 = vst.msk [vmem:[%s726 + $0x58] sm:$0xf] %vm315, %v540
      %v780 = vld [vmem:[%s726 + $0x5c] sm:$0x1]
      %v781 = vsel %vm402, %v541, %v780
      %782 = vst [vmem:[%s726 + $0x5c] sm:$0x1] %v781
      %v783 = vld [vmem:[%s726 + $0x60] sm:$0xf]
      %v784 = vsel %vm396, %v548, %v783
      %785 = vst [vmem:[%s726 + $0x60] sm:$0xf] %v784
      %786 = vst.msk [vmem:[%s726 + $0x64] sm:$0xf] %vm315, %v557
      %v787 = vld [vmem:[%s726 + $0x68] sm:$0x1]
      %v788 = vsel %vm402, %v558, %v787
      %789 = vst [vmem:[%s726 + $0x68] sm:$0x1] %v788
      %v790 = vld [vmem:[%s726 + $0x6c] sm:$0xf]
      %v791 = vsel %vm396, %v565, %v790
      %792 = vst [vmem:[%s726 + $0x6c] sm:$0xf] %v791
      %793 = vst.msk [vmem:[%s726 + $0x70] sm:$0xf] %vm315, %v574
      %v794 = vld [vmem:[%s726 + $0x74] sm:$0x1]
      %v795 = vsel %vm402, %v575, %v794
      %796 = vst [vmem:[%s726 + $0x74] sm:$0x1] %v795
      %v797 = vld [vmem:[%s726 + $0x78] sm:$0xf]
      %v798 = vsel %vm396, %v582, %v797
      %799 = vst [vmem:[%s726 + $0x78] sm:$0xf] %v798
      %800 = vst.msk [vmem:[%s726 + $0x7c] sm:$0xf] %vm315, %v591
      %v801 = vld [vmem:[%s726 + $0x80] sm:$0x1]
      %v802 = vsel %vm402, %v592, %v801
      %803 = vst [vmem:[%s726 + $0x80] sm:$0x1] %v802
      %v804 = vld [vmem:[%s726 + $0x84] sm:$0xf]
      %v805 = vsel %vm396, %v599, %v804
      %806 = vst [vmem:[%s726 + $0x84] sm:$0xf] %v805
      %807 = vst.msk [vmem:[%s726 + $0x88] sm:$0xf] %vm315, %v608
      %v808 = vld [vmem:[%s726 + $0x8c] sm:$0x1]
      %v809 = vsel %vm402, %v609, %v808
      %810 = vst [vmem:[%s726 + $0x8c] sm:$0x1] %v809
      %v811 = vld [vmem:[%s726 + $0x90] sm:$0xf]
      %v812 = vsel %vm396, %v616, %v811
      %813 = vst [vmem:[%s726 + $0x90] sm:$0xf] %v812
      %814 = vst.msk [vmem:[%s726 + $0x94] sm:$0xf] %vm315, %v625
      %v815 = vld [vmem:[%s726 + $0x98] sm:$0x1]
      %v816 = vsel %vm402, %v626, %v815
      %817 = vst [vmem:[%s726 + $0x98] sm:$0x1] %v816
      %v818 = vld [vmem:[%s726 + $0x9c] sm:$0xf]
      %v819 = vsel %vm396, %v633, %v818
      %820 = vst [vmem:[%s726 + $0x9c] sm:$0xf] %v819
      %821 = vst.msk [vmem:[%s726 + $0xa0] sm:$0xf] %vm315, %v642
      %v822 = vld [vmem:[%s726 + $0xa4] sm:$0x1]
      %v823 = vsel %vm402, %v643, %v822
      %824 = vst [vmem:[%s726 + $0xa4] sm:$0x1] %v823
      %v825 = vld [vmem:[%s726 + $0xa8] sm:$0xf]
      %v826 = vsel %vm396, %v650, %v825
      %827 = vst [vmem:[%s726 + $0xa8] sm:$0xf] %v826
      %828 = vst.msk [vmem:[%s726 + $0xac] sm:$0xf] %vm315, %v659
      %v829 = vld [vmem:[%s726 + $0xb0] sm:$0x1]
      %v830 = vsel %vm402, %v660, %v829
      %831 = vst [vmem:[%s726 + $0xb0] sm:$0x1] %v830
      %v832 = vld [vmem:[%s726 + $0xb4] sm:$0xf]
      %v833 = vsel %vm396, %v667, %v832
      %834 = vst [vmem:[%s726 + $0xb4] sm:$0xf] %v833
      %835 = vst.msk [vmem:[%s726 + $0xb8] sm:$0xf] %vm315, %v676
      %v836 = vld [vmem:[%s726 + $0xbc] sm:$0x1]
      %v837 = vsel %vm402, %v677, %v836
      %838 = vst [vmem:[%s726 + $0xbc] sm:$0x1] %v837
      %v840 = vshrl.u32 %v313, 16
      %v842 = vrot.slane %v840, 7
      %v843 = vshll.u32 %v313, 16
      %v845 = vor.u32 %v842, %v843
      %v846 = vrot.slane %v842, 4
      %v848 = vshrl.u32 %v314, 16
      %v850 = vrot.slane %v848, 7
      %v851 = vshll.u32 %v314, 16
      %v853 = vor.u32 %v850, %v851
      %v854 = vsel %vm373, %v846, %v853
      %v855 = vrot.slane %v850, 4
      %s859 = scalar_lea.vmem [#allocation2], 204
      %v860 = vld [vmem:[%s859] sm:$0xf]
      %v861 = vsel %vm396, %v845, %v860
      %862 = vst [vmem:[%s859] sm:$0xf] %v861
      %863 = vst.msk [vmem:[%s859 + $0x4] sm:$0xf] %vm315, %v854
      %v864 = vld [vmem:[%s859 + $0x8] sm:$0x1]
      %v865 = vsel %vm402, %v855, %v864
      %866 = vst [vmem:[%s859 + $0x8] sm:$0x1] %v865
      %v867 = vld [vmem:[#allocation2] sm:$0xf]
      %v868 = vld [vmem:[#allocation2 + $0x4] sm:$0xf]
      %v869 = vld [vmem:[#allocation2 + $0xc] sm:$0xf]
      %v870 = vld [vmem:[#allocation2 + $0x10] sm:$0xf]
      %v871 = vld [vmem:[#allocation2 + $0x18] sm:$0xf]
      %v872 = vld [vmem:[#allocation2 + $0x1c] sm:$0xf]
      %v873 = vld [vmem:[#allocation2 + $0x24] sm:$0xf]
      %v874 = vld [vmem:[#allocation2 + $0x28] sm:$0xf]
      %v875 = vld [vmem:[#allocation2 + $0x30] sm:$0xf]
      %v876 = vld [vmem:[#allocation2 + $0x34] sm:$0xf]
      %v877 = vld [vmem:[#allocation2 + $0x3c] sm:$0xf]
      %v878 = vld [vmem:[#allocation2 + $0x40] sm:$0xf]
      %v879 = vld [vmem:[#allocation2 + $0x48] sm:$0xf]
      %v880 = vld [vmem:[#allocation2 + $0x4c] sm:$0xf]
      %v881 = vld [vmem:[#allocation2 + $0x54] sm:$0xf]
      %v882 = vld [vmem:[#allocation2 + $0x58] sm:$0xf]
      %v883 = vld [vmem:[#allocation2 + $0x60] sm:$0xf]
      %v884 = vld [vmem:[#allocation2 + $0x64] sm:$0xf]
      %v885 = vld [vmem:[#allocation2 + $0x6c] sm:$0xf]
      %v886 = vld [vmem:[#allocation2 + $0x70] sm:$0xf]
      %v887 = vld [vmem:[#allocation2 + $0x78] sm:$0xf]
      %v888 = vld [vmem:[#allocation2 + $0x7c] sm:$0xf]
      %v889 = vld [vmem:[#allocation2 + $0x84] sm:$0xf]
      %v890 = vld [vmem:[#allocation2 + $0x88] sm:$0xf]
      %v891 = vld [vmem:[#allocation2 + $0x90] sm:$0xf]
      %v892 = vld [vmem:[#allocation2 + $0x94] sm:$0xf]
      %v893 = vld [vmem:[#allocation2 + $0x9c] sm:$0xf]
      %v894 = vld [vmem:[#allocation2 + $0xa0] sm:$0xf]
      %v895 = vld [vmem:[#allocation2 + $0xa8] sm:$0xf]
      %v896 = vld [vmem:[#allocation2 + $0xac] sm:$0xf]
      %v897 = vld [vmem:[#allocation2 + $0xb4] sm:$0xf]
      %v898 = vld [vmem:[#allocation2 + $0xb8] sm:$0xf]
      %v899 = vld [vmem:[%s2] sm:$0x3]
      %v900 = vld [vmem:[#allocation2 + $0x8] sm:$0x1]
      %v901 = vld [vmem:[#allocation2 + $0x14] sm:$0x1]
      %v902 = vld [vmem:[#allocation2 + $0x20] sm:$0x1]
      %v903 = vld [vmem:[#allocation2 + $0x2c] sm:$0x1]
      %v904 = vld [vmem:[#allocation2 + $0x38] sm:$0x1]
      %v905 = vld [vmem:[#allocation2 + $0x44] sm:$0x1]
      %v906 = vld [vmem:[#allocation2 + $0x50] sm:$0x1]
      %v907 = vld [vmem:[#allocation2 + $0x5c] sm:$0x1]
      %v908 = vld [vmem:[#allocation2 + $0x68] sm:$0x1]
      %v909 = vld [vmem:[#allocation2 + $0x74] sm:$0x1]
      %v910 = vld [vmem:[#allocation2 + $0x80] sm:$0x1]
      %v911 = vld [vmem:[#allocation2 + $0x8c] sm:$0x1]
      %v912 = vld [vmem:[#allocation2 + $0x98] sm:$0x1]
      %v913 = vld [vmem:[#allocation2 + $0xa4] sm:$0x1]
      %v914 = vld [vmem:[#allocation2 + $0xb0] sm:$0x1]
      %v915 = vld [vmem:[#allocation2 + $0xbc] sm:$0x1]
      %vm916 = vsmask.f32 3328
      %vm917 = vsmask.f32 7440
      %vm918 = vmor %vm916, %vm917
      %v920 = vshrl.u32 %v867, 16
      %v922 = vrot.slane %v920, 4
      %v923 = vshll.u32 %v867, 16
      %v925 = vrot.slane %v923, 5
      %v926 = vor.u32 %v922, %v925
      %v927 = vrot.slane %v926, 4
      %v929 = vshll.u32 %v868, 16
      %v931 = vrot.slane %v929, 5
      %v932 = vsel %vm918, %v927, %v931
      %v933 = vshrl.u32 %v868, 16
      %v935 = vrot.slane %v933, 4
      %v936 = vor.u32 %v935, %v931
      %v937 = vrot.slane %v936, 4
      %v939 = vshll.u32 %v900, 16
      %v941 = vrot.slane %v939, 5
      %v942 = vsel %vm918, %v937, %v941
      %v944 = vshrl.u32 %v869, 16
      %v946 = vrot.slane %v944, 4
      %v947 = vshll.u32 %v869, 16
      %v949 = vrot.slane %v947, 5
      %v950 = vor.u32 %v946, %v949
      %v951 = vrot.slane %v950, 4
      %v953 = vshll.u32 %v870, 16
      %v955 = vrot.slane %v953, 5
      %v956 = vsel %vm918, %v951, %v955
      %v957 = vshrl.u32 %v870, 16
      %v959 = vrot.slane %v957, 4
      %v960 = vor.u32 %v959, %v955
      %v961 = vrot.slane %v960, 4
      %v963 = vshll.u32 %v901, 16
      %v965 = vrot.slane %v963, 5
      %v966 = vsel %vm918, %v961, %v965
      %v968 = vshrl.u32 %v871, 16
      %v970 = vrot.slane %v968, 4
      %v971 = vshll.u32 %v871, 16
      %v973 = vrot.slane %v971, 5
      %v974 = vor.u32 %v970, %v973
      %v975 = vrot.slane %v974, 4
      %v977 = vshll.u32 %v872, 16
      %v979 = vrot.slane %v977, 5
      %v980 = vsel %vm918, %v975, %v979
      %v981 = vshrl.u32 %v872, 16
      %v983 = vrot.slane %v981, 4
      %v984 = vor.u32 %v983, %v979
      %v985 = vrot.slane %v984, 4
      %v987 = vshll.u32 %v902, 16
      %v989 = vrot.slane %v987, 5
      %v990 = vsel %vm918, %v985, %v989
      %v992 = vshrl.u32 %v873, 16
      %v994 = vrot.slane %v992, 4
      %v995 = vshll.u32 %v873, 16
      %v997 = vrot.slane %v995, 5
      %v998 = vor.u32 %v994, %v997
      %v999 = vrot.slane %v998, 4
      %v1001 = vshll.u32 %v874, 16
      %v1003 = vrot.slane %v1001, 5
      %v1004 = vsel %vm918, %v999, %v1003
      %v1005 = vshrl.u32 %v874, 16
      %v1007 = vrot.slane %v1005, 4
      %v1008 = vor.u32 %v1007, %v1003
      %v1009 = vrot.slane %v1008, 4
      %v1011 = vshll.u32 %v903, 16
      %v1013 = vrot.slane %v1011, 5
      %v1014 = vsel %vm918, %v1009, %v1013
      %v1016 = vshrl.u32 %v875, 16
      %v1018 = vrot.slane %v1016, 4
      %v1019 = vshll.u32 %v875, 16
      %v1021 = vrot.slane %v1019, 5
      %v1022 = vor.u32 %v1018, %v1021
      %v1023 = vrot.slane %v1022, 4
      %v1025 = vshll.u32 %v876, 16
      %v1027 = vrot.slane %v1025, 5
      %v1028 = vsel %vm918, %v1023, %v1027
      %v1029 = vshrl.u32 %v876, 16
      %v1031 = vrot.slane %v1029, 4
      %v1032 = vor.u32 %v1031, %v1027
      %v1033 = vrot.slane %v1032, 4
      %v1035 = vshll.u32 %v904, 16
      %v1037 = vrot.slane %v1035, 5
      %v1038 = vsel %vm918, %v1033, %v1037
      %v1040 = vshrl.u32 %v877, 16
      %v1042 = vrot.slane %v1040, 4
      %v1043 = vshll.u32 %v877, 16
      %v1045 = vrot.slane %v1043, 5
      %v1046 = vor.u32 %v1042, %v1045
      %v1047 = vrot.slane %v1046, 4
      %v1049 = vshll.u32 %v878, 16
      %v1051 = vrot.slane %v1049, 5
      %v1052 = vsel %vm918, %v1047, %v1051
      %v1053 = vshrl.u32 %v878, 16
      %v1055 = vrot.slane %v1053, 4
      %v1056 = vor.u32 %v1055, %v1051
      %v1057 = vrot.slane %v1056, 4
      %v1059 = vshll.u32 %v905, 16
      %v1061 = vrot.slane %v1059, 5
      %v1062 = vsel %vm918, %v1057, %v1061
      %v1064 = vshrl.u32 %v879, 16
      %v1066 = vrot.slane %v1064, 4
      %v1067 = vshll.u32 %v879, 16
      %v1069 = vrot.slane %v1067, 5
      %v1070 = vor.u32 %v1066, %v1069
      %v1071 = vrot.slane %v1070, 4
      %v1073 = vshll.u32 %v880, 16
      %v1075 = vrot.slane %v1073, 5
      %v1076 = vsel %vm918, %v1071, %v1075
      %v1077 = vshrl.u32 %v880, 16
      %v1079 = vrot.slane %v1077, 4
      %v1080 = vor.u32 %v1079, %v1075
      %v1081 = vrot.slane %v1080, 4
      %v1083 = vshll.u32 %v906, 16
      %v1085 = vrot.slane %v1083, 5
      %v1086 = vsel %vm918, %v1081, %v1085
      %v1088 = vshrl.u32 %v881, 16
      %v1090 = vrot.slane %v1088, 4
      %v1091 = vshll.u32 %v881, 16
      %v1093 = vrot.slane %v1091, 5
      %v1094 = vor.u32 %v1090, %v1093
      %v1095 = vrot.slane %v1094, 4
      %v1097 = vshll.u32 %v882, 16
      %v1099 = vrot.slane %v1097, 5
      %v1100 = vsel %vm918, %v1095, %v1099
      %v1101 = vshrl.u32 %v882, 16
      %v1103 = vrot.slane %v1101, 4
      %v1104 = vor.u32 %v1103, %v1099
      %v1105 = vrot.slane %v1104, 4
      %v1107 = vshll.u32 %v907, 16
      %v1109 = vrot.slane %v1107, 5
      %v1110 = vsel %vm918, %v1105, %v1109
      %v1112 = vshrl.u32 %v883, 16
      %v1114 = vrot.slane %v1112, 4
      %v1115 = vshll.u32 %v883, 16
      %v1117 = vrot.slane %v1115, 5
      %v1118 = vor.u32 %v1114, %v1117
      %v1119 = vrot.slane %v1118, 4
      %v1121 = vshll.u32 %v884, 16
      %v1123 = vrot.slane %v1121, 5
      %v1124 = vsel %vm918, %v1119, %v1123
      %v1125 = vshrl.u32 %v884, 16
      %v1127 = vrot.slane %v1125, 4
      %v1128 = vor.u32 %v1127, %v1123
      %v1129 = vrot.slane %v1128, 4
      %v1131 = vshll.u32 %v908, 16
      %v1133 = vrot.slane %v1131, 5
      %v1134 = vsel %vm918, %v1129, %v1133
      %v1136 = vshrl.u32 %v885, 16
      %v1138 = vrot.slane %v1136, 4
      %v1139 = vshll.u32 %v885, 16
      %v1141 = vrot.slane %v1139, 5
      %v1142 = vor.u32 %v1138, %v1141
      %v1143 = vrot.slane %v1142, 4
      %v1145 = vshll.u32 %v886, 16
      %v1147 = vrot.slane %v1145, 5
      %v1148 = vsel %vm918, %v1143, %v1147
      %v1149 = vshrl.u32 %v886, 16
      %v1151 = vrot.slane %v1149, 4
      %v1152 = vor.u32 %v1151, %v1147
      %v1153 = vrot.slane %v1152, 4
      %v1155 = vshll.u32 %v909, 16
      %v1157 = vrot.slane %v1155, 5
      %v1158 = vsel %vm918, %v1153, %v1157
      %v1160 = vshrl.u32 %v887, 16
      %v1162 = vrot.slane %v1160, 4
      %v1163 = vshll.u32 %v887, 16
      %v1165 = vrot.slane %v1163, 5
      %v1166 = vor.u32 %v1162, %v1165
      %v1167 = vrot.slane %v1166, 4
      %v1169 = vshll.u32 %v888, 16
      %v1171 = vrot.slane %v1169, 5
      %v1172 = vsel %vm918, %v1167, %v1171
      %v1173 = vshrl.u32 %v888, 16
      %v1175 = vrot.slane %v1173, 4
      %v1176 = vor.u32 %v1175, %v1171
      %v1177 = vrot.slane %v1176, 4
      %v1179 = vshll.u32 %v910, 16
      %v1181 = vrot.slane %v1179, 5
      %v1182 = vsel %vm918, %v1177, %v1181
      %v1184 = vshrl.u32 %v889, 16
      %v1186 = vrot.slane %v1184, 4
      %v1187 = vshll.u32 %v889, 16
      %v1189 = vrot.slane %v1187, 5
      %v1190 = vor.u32 %v1186, %v1189
      %v1191 = vrot.slane %v1190, 4
      %v1193 = vshll.u32 %v890, 16
      %v1195 = vrot.slane %v1193, 5
      %v1196 = vsel %vm918, %v1191, %v1195
      %v1197 = vshrl.u32 %v890, 16
      %v1199 = vrot.slane %v1197, 4
      %v1200 = vor.u32 %v1199, %v1195
      %v1201 = vrot.slane %v1200, 4
      %v1203 = vshll.u32 %v911, 16
      %v1205 = vrot.slane %v1203, 5
      %v1206 = vsel %vm918, %v1201, %v1205
      %v1208 = vshrl.u32 %v891, 16
      %v1210 = vrot.slane %v1208, 4
      %v1211 = vshll.u32 %v891, 16
      %v1213 = vrot.slane %v1211, 5
      %v1214 = vor.u32 %v1210, %v1213
      %v1215 = vrot.slane %v1214, 4
      %v1217 = vshll.u32 %v892, 16
      %v1219 = vrot.slane %v1217, 5
      %v1220 = vsel %vm918, %v1215, %v1219
      %v1221 = vshrl.u32 %v892, 16
      %v1223 = vrot.slane %v1221, 4
      %v1224 = vor.u32 %v1223, %v1219
      %v1225 = vrot.slane %v1224, 4
      %v1227 = vshll.u32 %v912, 16
      %v1229 = vrot.slane %v1227, 5
      %v1230 = vsel %vm918, %v1225, %v1229
      %v1232 = vshrl.u32 %v893, 16
      %v1234 = vrot.slane %v1232, 4
      %v1235 = vshll.u32 %v893, 16
      %v1237 = vrot.slane %v1235, 5
      %v1238 = vor.u32 %v1234, %v1237
      %v1239 = vrot.slane %v1238, 4
      %v1241 = vshll.u32 %v894, 16
      %v1243 = vrot.slane %v1241, 5
      %v1244 = vsel %vm918, %v1239, %v1243
      %v1245 = vshrl.u32 %v894, 16
      %v1247 = vrot.slane %v1245, 4
      %v1248 = vor.u32 %v1247, %v1243
      %v1249 = vrot.slane %v1248, 4
      %v1251 = vshll.u32 %v913, 16
      %v1253 = vrot.slane %v1251, 5
      %v1254 = vsel %vm918, %v1249, %v1253
      %v1256 = vshrl.u32 %v895, 16
      %v1258 = vrot.slane %v1256, 4
      %v1259 = vshll.u32 %v895, 16
      %v1261 = vrot.slane %v1259, 5
      %v1262 = vor.u32 %v1258, %v1261
      %v1263 = vrot.slane %v1262, 4
      %v1265 = vshll.u32 %v896, 16
      %v1267 = vrot.slane %v1265, 5
      %v1268 = vsel %vm918, %v1263, %v1267
      %v1269 = vshrl.u32 %v896, 16
      %v1271 = vrot.slane %v1269, 4
      %v1272 = vor.u32 %v1271, %v1267
      %v1273 = vrot.slane %v1272, 4
      %v1275 = vshll.u32 %v914, 16
      %v1277 = vrot.slane %v1275, 5
      %v1278 = vsel %vm918, %v1273, %v1277
      %v1280 = vshrl.u32 %v897, 16
      %v1282 = vrot.slane %v1280, 4
      %v1283 = vshll.u32 %v897, 16
      %v1285 = vrot.slane %v1283, 5
      %v1286 = vor.u32 %v1282, %v1285
      %v1287 = vrot.slane %v1286, 4
      %v1289 = vshll.u32 %v898, 16
      %v1291 = vrot.slane %v1289, 5
      %v1292 = vsel %vm918, %v1287, %v1291
      %v1293 = vshrl.u32 %v898, 16
      %v1295 = vrot.slane %v1293, 4
      %v1296 = vor.u32 %v1295, %v1291
      %v1297 = vrot.slane %v1296, 4
      %v1299 = vshll.u32 %v915, 16
      %v1301 = vrot.slane %v1299, 5
      %v1302 = vsel %vm918, %v1297, %v1301
      %s1303 = scalar_lea.vmem %s2, 2
      %v1304 = vld [vmem:[%s1303] sm:$0x3]
      %v1305 = vunpack.c.l.b16 %v932
      %v1306 = vunpack.c.l.b16 %v942
      %v1307 = vunpack.c.l.b16 %v956
      %v1308 = vunpack.c.l.b16 %v966
      %v1309 = vunpack.c.l.b16 %v980
      %v1310 = vunpack.c.l.b16 %v990
      %v1311 = vunpack.c.l.b16 %v1004
      %v1312 = vunpack.c.l.b16 %v1014
      %v1313 = vunpack.c.l.b16 %v1028
      %v1314 = vunpack.c.l.b16 %v1038
      %v1315 = vunpack.c.l.b16 %v1052
      %v1316 = vunpack.c.l.b16 %v1062
      %v1317 = vunpack.c.l.b16 %v1076
      %v1318 = vunpack.c.l.b16 %v1086
      %v1319 = vunpack.c.l.b16 %v1100
      %v1320 = vunpack.c.l.b16 %v1110
      %v1321 = vunpack.c.l.b16 %v1124
      %v1322 = vunpack.c.l.b16 %v1134
      %v1323 = vunpack.c.l.b16 %v1148
      %v1324 = vunpack.c.l.b16 %v1158
      %v1325 = vunpack.c.l.b16 %v1172
      %v1326 = vunpack.c.l.b16 %v1182
      %v1327 = vunpack.c.l.b16 %v1196
      %v1328 = vunpack.c.l.b16 %v1206
      %v1329 = vunpack.c.l.b16 %v1220
      %v1330 = vunpack.c.l.b16 %v1230
      %v1331 = vunpack.c.l.b16 %v1244
      %v1332 = vunpack.c.l.b16 %v1254
      %v1333 = vunpack.c.l.b16 %v1268
      %v1334 = vunpack.c.l.b16 %v1278
      %v1335 = vunpack.c.l.b16 %v1292
      %v1336 = vunpack.c.l.b16 %v1302
      %v1337 = vpack.c.b16 %v1306, %v1305
      %v1338 = vpack.c.b16 %v1308, %v1307
      %v1339 = vpack.c.b16 %v1310, %v1309
      %v1340 = vpack.c.b16 %v1312, %v1311
      %v1341 = vpack.c.b16 %v1314, %v1313
      %v1342 = vpack.c.b16 %v1316, %v1315
      %v1343 = vpack.c.b16 %v1318, %v1317
      %v1344 = vpack.c.b16 %v1320, %v1319
      %v1345 = vpack.c.b16 %v1322, %v1321
      %v1346 = vpack.c.b16 %v1324, %v1323
      %v1347 = vpack.c.b16 %v1326, %v1325
      %v1348 = vpack.c.b16 %v1328, %v1327
      %v1349 = vpack.c.b16 %v1330, %v1329
      %v1350 = vpack.c.b16 %v1332, %v1331
      %v1351 = vpack.c.b16 %v1334, %v1333
      %v1352 = vpack.c.b16 %v1336, %v1335
      %vm1353 = vcmask 31744
      %v1355 = vsel %vm1353, %v1337, 0
      %v1358 = vsel %vm1353, %v1338, 0
      %v1361 = vsel %vm1353, %v1339, 0
      %v1364 = vsel %vm1353, %v1340, 0
      %v1367 = vsel %vm1353, %v1341, 0
      %v1370 = vsel %vm1353, %v1342, 0
      %v1373 = vsel %vm1353, %v1343, 0
      %v1376 = vsel %vm1353, %v1344, 0
      %v1379 = vsel %vm1353, %v1345, 0
      %v1382 = vsel %vm1353, %v1346, 0
      %v1385 = vsel %vm1353, %v1347, 0
      %v1388 = vsel %vm1353, %v1348, 0
      %v1391 = vsel %vm1353, %v1349, 0
      %v1394 = vsel %vm1353, %v1350, 0
      %v1397 = vsel %vm1353, %v1351, 0
      %v1400 = vsel %vm1353, %v1352, 0
      %vm1402 = vcmask 1041408
      %v1404 = vsel %vm1402, %v1304, 0
      %1406 = vmatpush.bf16.msra.mxu0 0
      %1407 = vmatpush.bf16.msra.mxu0 0
      %1408 = vmatpush.bf16.msra.mxu0 0
      %1409 = vmatpush.bf16.msra.mxu0 0
      %1410 = vmatpush.bf16.msra.mxu0 0
      %1411 = vmatpush.bf16.msra.mxu0 0
      %1412 = vmatpush.bf16.msra.mxu0 0
      %1413 = vmatpush.bf16.msra.mxu0 %v1404
      %1414 = vmatmul.bf16.gmra.mxu0 %v1355
      %v1415 = vpop.f32.mrf.mxu0
      %v1416 = vadd.f32 0.0, %v1415
      %v1417 = vpop.f32.mrf.mxu0
      %v1418 = vadd.f32 0.0, %v1417
      %1419 = vmatmul.bf16.gmra.mxu0 %v1358
      %v1420 = vpop.f32.mrf.mxu0
      %v1421 = vadd.f32 0.0, %v1420
      %v1422 = vpop.f32.mrf.mxu0
      %v1423 = vadd.f32 0.0, %v1422
      %1424 = vmatmul.bf16.gmra.mxu0 %v1361
      %v1425 = vpop.f32.mrf.mxu0
      %v1426 = vadd.f32 0.0, %v1425
      %v1427 = vpop.f32.mrf.mxu0
      %v1428 = vadd.f32 0.0, %v1427
      %1429 = vmatmul.bf16.gmra.mxu0 %v1364
      %v1430 = vpop.f32.mrf.mxu0
      %v1431 = vadd.f32 0.0, %v1430
      %v1432 = vpop.f32.mrf.mxu0
      %v1433 = vadd.f32 0.0, %v1432
      %1434 = vmatmul.bf16.gmra.mxu0 %v1367
      %v1435 = vpop.f32.mrf.mxu0
      %v1436 = vadd.f32 0.0, %v1435
      %v1437 = vpop.f32.mrf.mxu0
      %v1438 = vadd.f32 0.0, %v1437
      %1439 = vmatmul.bf16.gmra.mxu0 %v1370
      %v1440 = vpop.f32.mrf.mxu0
      %v1441 = vadd.f32 0.0, %v1440
      %v1442 = vpop.f32.mrf.mxu0
      %v1443 = vadd.f32 0.0, %v1442
      %1444 = vmatmul.bf16.gmra.mxu0 %v1373
      %v1445 = vpop.f32.mrf.mxu0
      %v1446 = vadd.f32 0.0, %v1445
      %v1447 = vpop.f32.mrf.mxu0
      %v1448 = vadd.f32 0.0, %v1447
      %1449 = vmatmul.bf16.gmra.mxu0 %v1376
      %v1450 = vpop.f32.mrf.mxu0
      %v1451 = vadd.f32 0.0, %v1450
      %v1452 = vpop.f32.mrf.mxu0
      %v1453 = vadd.f32 0.0, %v1452
      %1454 = vmatmul.bf16.gmra.mxu0 %v1379
      %v1455 = vpop.f32.mrf.mxu0
      %v1456 = vadd.f32 0.0, %v1455
      %v1457 = vpop.f32.mrf.mxu0
      %v1458 = vadd.f32 0.0, %v1457
      %1459 = vmatmul.bf16.gmra.mxu0 %v1382
      %v1460 = vpop.f32.mrf.mxu0
      %v1461 = vadd.f32 0.0, %v1460
      %v1462 = vpop.f32.mrf.mxu0
      %v1463 = vadd.f32 0.0, %v1462
      %1464 = vmatmul.bf16.gmra.mxu0 %v1385
      %v1465 = vpop.f32.mrf.mxu0
      %v1466 = vadd.f32 0.0, %v1465
      %v1467 = vpop.f32.mrf.mxu0
      %v1468 = vadd.f32 0.0, %v1467
      %1469 = vmatmul.bf16.gmra.mxu0 %v1388
      %v1470 = vpop.f32.mrf.mxu0
      %v1471 = vadd.f32 0.0, %v1470
      %v1472 = vpop.f32.mrf.mxu0
      %v1473 = vadd.f32 0.0, %v1472
      %1474 = vmatmul.bf16.gmra.mxu0 %v1391
      %v1475 = vpop.f32.mrf.mxu0
      %v1476 = vadd.f32 0.0, %v1475
      %v1477 = vpop.f32.mrf.mxu0
      %v1478 = vadd.f32 0.0, %v1477
      %1479 = vmatmul.bf16.gmra.mxu0 %v1394
      %v1480 = vpop.f32.mrf.mxu0
      %v1481 = vadd.f32 0.0, %v1480
      %v1482 = vpop.f32.mrf.mxu0
      %v1483 = vadd.f32 0.0, %v1482
      %1484 = vmatmul.bf16.gmra.mxu0 %v1397
      %v1485 = vpop.f32.mrf.mxu0
      %v1486 = vadd.f32 0.0, %v1485
      %v1487 = vpop.f32.mrf.mxu0
      %v1488 = vadd.f32 0.0, %v1487
      %1489 = vmatmul.bf16.gmra.mxu0 %v1400
      %v1490 = vpop.f32.mrf.mxu0
      %v1491 = vadd.f32 0.0, %v1490
      %v1492 = vpop.f32.mrf.mxu0
      %v1493 = vadd.f32 0.0, %v1492
      %1494 = vdwg.mxu0
      %v1527 = vunpack.c.l.b16 %v867
      %v1528 = vunpack.c.l.b16 %v868
      %v1529 = vunpack.c.l.b16 %v869
      %v1530 = vunpack.c.l.b16 %v870
      %v1531 = vunpack.c.l.b16 %v871
      %v1532 = vunpack.c.l.b16 %v872
      %v1533 = vunpack.c.l.b16 %v873
      %v1534 = vunpack.c.l.b16 %v874
      %v1535 = vunpack.c.l.b16 %v875
      %v1536 = vunpack.c.l.b16 %v876
      %v1537 = vunpack.c.l.b16 %v877
      %v1538 = vunpack.c.l.b16 %v878
      %v1539 = vunpack.c.l.b16 %v879
      %v1540 = vunpack.c.l.b16 %v880
      %v1541 = vunpack.c.l.b16 %v881
      %v1542 = vunpack.c.l.b16 %v882
      %v1543 = vunpack.c.l.b16 %v883
      %v1544 = vunpack.c.l.b16 %v884
      %v1545 = vunpack.c.l.b16 %v885
      %v1546 = vunpack.c.l.b16 %v886
      %v1547 = vunpack.c.l.b16 %v887
      %v1548 = vunpack.c.l.b16 %v888
      %v1549 = vunpack.c.l.b16 %v889
      %v1550 = vunpack.c.l.b16 %v890
      %v1551 = vunpack.c.l.b16 %v891
      %v1552 = vunpack.c.l.b16 %v892
      %v1553 = vunpack.c.l.b16 %v893
      %v1554 = vunpack.c.l.b16 %v894
      %v1555 = vunpack.c.l.b16 %v895
      %v1556 = vunpack.c.l.b16 %v896
      %v1557 = vunpack.c.l.b16 %v897
      %v1558 = vunpack.c.l.b16 %v898
      %v1559 = vpack.c.b16 %v1528, %v1527
      %v1560 = vpack.c.b16 %v1530, %v1529
      %v1561 = vpack.c.b16 %v1532, %v1531
      %v1562 = vpack.c.b16 %v1534, %v1533
      %v1563 = vpack.c.b16 %v1536, %v1535
      %v1564 = vpack.c.b16 %v1538, %v1537
      %v1565 = vpack.c.b16 %v1540, %v1539
      %v1566 = vpack.c.b16 %v1542, %v1541
      %v1567 = vpack.c.b16 %v1544, %v1543
      %v1568 = vpack.c.b16 %v1546, %v1545
      %v1569 = vpack.c.b16 %v1548, %v1547
      %v1570 = vpack.c.b16 %v1550, %v1549
      %v1571 = vpack.c.b16 %v1552, %v1551
      %v1572 = vpack.c.b16 %v1554, %v1553
      %v1573 = vpack.c.b16 %v1556, %v1555
      %v1574 = vpack.c.b16 %v1558, %v1557
      %v1576 = vsel %vm1353, %v1559, 0
      %v1579 = vsel %vm1353, %v1560, 0
      %v1582 = vsel %vm1353, %v1561, 0
      %v1585 = vsel %vm1353, %v1562, 0
      %v1588 = vsel %vm1353, %v1563, 0
      %v1591 = vsel %vm1353, %v1564, 0
      %v1594 = vsel %vm1353, %v1565, 0
      %v1597 = vsel %vm1353, %v1566, 0
      %v1600 = vsel %vm1353, %v1567, 0
      %v1603 = vsel %vm1353, %v1568, 0
      %v1606 = vsel %vm1353, %v1569, 0
      %v1609 = vsel %vm1353, %v1570, 0
      %v1612 = vsel %vm1353, %v1571, 0
      %v1615 = vsel %vm1353, %v1572, 0
      %v1618 = vsel %vm1353, %v1573, 0
      %v1621 = vsel %vm1353, %v1574, 0
      %v1624 = vsel %vm1402, %v899, 0
      %1626 = vmatpush.bf16.msra.mxu0 0
      %1627 = vmatpush.bf16.msra.mxu0 0
      %1628 = vmatpush.bf16.msra.mxu0 0
      %1629 = vmatpush.bf16.msra.mxu0 0
      %1630 = vmatpush.bf16.msra.mxu0 0
      %1631 = vmatpush.bf16.msra.mxu0 0
      %1632 = vmatpush.bf16.msra.mxu0 0
      %1633 = vmatpush.bf16.msra.mxu0 %v1624
      %1634 = vmatmul.bf16.gmra.mxu0 %v1576
      %v1635 = vpop.f32.mrf.mxu0
      %v1636 = vadd.f32 %v1416, %v1635
      %v1637 = vpop.f32.mrf.mxu0
      %v1638 = vadd.f32 %v1418, %v1637
      %1639 = vmatmul.bf16.gmra.mxu0 %v1579
      %v1640 = vpop.f32.mrf.mxu0
      %v1641 = vadd.f32 %v1421, %v1640
      %v1642 = vpop.f32.mrf.mxu0
      %v1643 = vadd.f32 %v1423, %v1642
      %1644 = vmatmul.bf16.gmra.mxu0 %v1582
      %v1645 = vpop.f32.mrf.mxu0
      %v1646 = vadd.f32 %v1426, %v1645
      %v1647 = vpop.f32.mrf.mxu0
      %v1648 = vadd.f32 %v1428, %v1647
      %1649 = vmatmul.bf16.gmra.mxu0 %v1585
      %v1650 = vpop.f32.mrf.mxu0
      %v1651 = vadd.f32 %v1431, %v1650
      %v1652 = vpop.f32.mrf.mxu0
      %v1653 = vadd.f32 %v1433, %v1652
      %1654 = vmatmul.bf16.gmra.mxu0 %v1588
      %v1655 = vpop.f32.mrf.mxu0
      %v1656 = vadd.f32 %v1436, %v1655
      %v1657 = vpop.f32.mrf.mxu0
      %v1658 = vadd.f32 %v1438, %v1657
      %1659 = vmatmul.bf16.gmra.mxu0 %v1591
      %v1660 = vpop.f32.mrf.mxu0
      %v1661 = vadd.f32 %v1441, %v1660
      %v1662 = vpop.f32.mrf.mxu0
      %v1663 = vadd.f32 %v1443, %v1662
      %1664 = vmatmul.bf16.gmra.mxu0 %v1594
      %v1665 = vpop.f32.mrf.mxu0
      %v1666 = vadd.f32 %v1446, %v1665
      %v1667 = vpop.f32.mrf.mxu0
      %v1668 = vadd.f32 %v1448, %v1667
      %1669 = vmatmul.bf16.gmra.mxu0 %v1597
      %v1670 = vpop.f32.mrf.mxu0
      %v1671 = vadd.f32 %v1451, %v1670
      %v1672 = vpop.f32.mrf.mxu0
      %v1673 = vadd.f32 %v1453, %v1672
      %1674 = vmatmul.bf16.gmra.mxu0 %v1600
      %v1675 = vpop.f32.mrf.mxu0
      %v1676 = vadd.f32 %v1456, %v1675
      %v1677 = vpop.f32.mrf.mxu0
      %v1678 = vadd.f32 %v1458, %v1677
      %1679 = vmatmul.bf16.gmra.mxu0 %v1603
      %v1680 = vpop.f32.mrf.mxu0
      %v1681 = vadd.f32 %v1461, %v1680
      %v1682 = vpop.f32.mrf.mxu0
      %v1683 = vadd.f32 %v1463, %v1682
      %1684 = vmatmul.bf16.gmra.mxu0 %v1606
      %v1685 = vpop.f32.mrf.mxu0
      %v1686 = vadd.f32 %v1466, %v1685
      %v1687 = vpop.f32.mrf.mxu0
      %v1688 = vadd.f32 %v1468, %v1687
      %1689 = vmatmul.bf16.gmra.mxu0 %v1609
      %v1690 = vpop.f32.mrf.mxu0
      %v1691 = vadd.f32 %v1471, %v1690
      %v1692 = vpop.f32.mrf.mxu0
      %v1693 = vadd.f32 %v1473, %v1692
      %1694 = vmatmul.bf16.gmra.mxu0 %v1612
      %v1695 = vpop.f32.mrf.mxu0
      %v1696 = vadd.f32 %v1476, %v1695
      %v1697 = vpop.f32.mrf.mxu0
      %v1698 = vadd.f32 %v1478, %v1697
      %1699 = vmatmul.bf16.gmra.mxu0 %v1615
      %v1700 = vpop.f32.mrf.mxu0
      %v1701 = vadd.f32 %v1481, %v1700
      %v1702 = vpop.f32.mrf.mxu0
      %v1703 = vadd.f32 %v1483, %v1702
      %1704 = vmatmul.bf16.gmra.mxu0 %v1618
      %v1705 = vpop.f32.mrf.mxu0
      %v1706 = vadd.f32 %v1486, %v1705
      %v1707 = vpop.f32.mrf.mxu0
      %v1708 = vadd.f32 %v1488, %v1707
      %1709 = vmatmul.bf16.gmra.mxu0 %v1621
      %v1710 = vpop.f32.mrf.mxu0
      %v1711 = vadd.f32 %v1491, %v1710
      %v1712 = vpop.f32.mrf.mxu0
      %v1713 = vadd.f32 %v1493, %v1712
      %1714 = vdwg.mxu0
      %v1715 = vld [vmem:[#allocation2] sm:$0xe]
      %v1716 = vld [vmem:[#allocation2 + $0xc] sm:$0xe]
      %v1717 = vld [vmem:[#allocation2 + $0x18] sm:$0xe]
      %v1718 = vld [vmem:[#allocation2 + $0x24] sm:$0xe]
      %v1719 = vld [vmem:[#allocation2 + $0x30] sm:$0xe]
      %v1720 = vld [vmem:[#allocation2 + $0x3c] sm:$0xe]
      %v1721 = vld [vmem:[#allocation2 + $0x48] sm:$0xe]
      %v1722 = vld [vmem:[#allocation2 + $0x54] sm:$0xe]
      %v1723 = vld [vmem:[#allocation2 + $0x60] sm:$0xe]
      %v1724 = vld [vmem:[#allocation2 + $0x6c] sm:$0xe]
      %v1725 = vld [vmem:[#allocation2 + $0x78] sm:$0xe]
      %v1726 = vld [vmem:[#allocation2 + $0x84] sm:$0xe]
      %v1727 = vld [vmem:[#allocation2 + $0x90] sm:$0xe]
      %v1728 = vld [vmem:[#allocation2 + $0x9c] sm:$0xe]
      %v1729 = vld [vmem:[#allocation2 + $0xa8] sm:$0xe]
      %v1730 = vld [vmem:[#allocation2 + $0xb4] sm:$0xe]
      %vm1763 = vcmask 1042432
      %vm1764 = vcmask 1046532
      %vm1765 = vmor %vm1763, %vm1764
      %v1766 = vrot.slane %v1715, 5
      %v1767 = vrot.slane %v1766, 4
      %v1768 = vrot.slane %v868, 5
      %v1769 = vsel %vm1765, %v1767, %v1768
      %v1770 = vrot.slane %v1768, 4
      %v1771 = vrot.slane %v900, 5
      %v1772 = vsel %vm1765, %v1770, %v1771
      %v1773 = vrot.slane %v1716, 5
      %v1774 = vrot.slane %v1773, 4
      %v1775 = vrot.slane %v870, 5
      %v1776 = vsel %vm1765, %v1774, %v1775
      %v1777 = vrot.slane %v1775, 4
      %v1778 = vrot.slane %v901, 5
      %v1779 = vsel %vm1765, %v1777, %v1778
      %v1780 = vrot.slane %v1717, 5
      %v1781 = vrot.slane %v1780, 4
      %v1782 = vrot.slane %v872, 5
      %v1783 = vsel %vm1765, %v1781, %v1782
      %v1784 = vrot.slane %v1782, 4
      %v1785 = vrot.slane %v902, 5
      %v1786 = vsel %vm1765, %v1784, %v1785
      %v1787 = vrot.slane %v1718, 5
      %v1788 = vrot.slane %v1787, 4
      %v1789 = vrot.slane %v874, 5
      %v1790 = vsel %vm1765, %v1788, %v1789
      %v1791 = vrot.slane %v1789, 4
      %v1792 = vrot.slane %v903, 5
      %v1793 = vsel %vm1765, %v1791, %v1792
      %v1794 = vrot.slane %v1719, 5
      %v1795 = vrot.slane %v1794, 4
      %v1796 = vrot.slane %v876, 5
      %v1797 = vsel %vm1765, %v1795, %v1796
      %v1798 = vrot.slane %v1796, 4
      %v1799 = vrot.slane %v904, 5
      %v1800 = vsel %vm1765, %v1798, %v1799
      %v1801 = vrot.slane %v1720, 5
      %v1802 = vrot.slane %v1801, 4
      %v1803 = vrot.slane %v878, 5
      %v1804 = vsel %vm1765, %v1802, %v1803
      %v1805 = vrot.slane %v1803, 4
      %v1806 = vrot.slane %v905, 5
      %v1807 = vsel %vm1765, %v1805, %v1806
      %v1808 = vrot.slane %v1721, 5
      %v1809 = vrot.slane %v1808, 4
      %v1810 = vrot.slane %v880, 5
      %v1811 = vsel %vm1765, %v1809, %v1810
      %v1812 = vrot.slane %v1810, 4
      %v1813 = vrot.slane %v906, 5
      %v1814 = vsel %vm1765, %v1812, %v1813
      %v1815 = vrot.slane %v1722, 5
      %v1816 = vrot.slane %v1815, 4
      %v1817 = vrot.slane %v882, 5
      %v1818 = vsel %vm1765, %v1816, %v1817
      %v1819 = vrot.slane %v1817, 4
      %v1820 = vrot.slane %v907, 5
      %v1821 = vsel %vm1765, %v1819, %v1820
      %v1822 = vrot.slane %v1723, 5
      %v1823 = vrot.slane %v1822, 4
      %v1824 = vrot.slane %v884, 5
      %v1825 = vsel %vm1765, %v1823, %v1824
      %v1826 = vrot.slane %v1824, 4
      %v1827 = vrot.slane %v908, 5
      %v1828 = vsel %vm1765, %v1826, %v1827
      %v1829 = vrot.slane %v1724, 5
      %v1830 = vrot.slane %v1829, 4
      %v1831 = vrot.slane %v886, 5
      %v1832 = vsel %vm1765, %v1830, %v1831
      %v1833 = vrot.slane %v1831, 4
      %v1834 = vrot.slane %v909, 5
      %v1835 = vsel %vm1765, %v1833, %v1834
      %v1836 = vrot.slane %v1725, 5
      %v1837 = vrot.slane %v1836, 4
      %v1838 = vrot.slane %v888, 5
      %v1839 = vsel %vm1765, %v1837, %v1838
      %v1840 = vrot.slane %v1838, 4
      %v1841 = vrot.slane %v910, 5
      %v1842 = vsel %vm1765, %v1840, %v1841
      %v1843 = vrot.slane %v1726, 5
      %v1844 = vrot.slane %v1843, 4
      %v1845 = vrot.slane %v890, 5
      %v1846 = vsel %vm1765, %v1844, %v1845
      %v1847 = vrot.slane %v1845, 4
      %v1848 = vrot.slane %v911, 5
      %v1849 = vsel %vm1765, %v1847, %v1848
      %v1850 = vrot.slane %v1727, 5
      %v1851 = vrot.slane %v1850, 4
      %v1852 = vrot.slane %v892, 5
      %v1853 = vsel %vm1765, %v1851, %v1852
      %v1854 = vrot.slane %v1852, 4
      %v1855 = vrot.slane %v912, 5
      %v1856 = vsel %vm1765, %v1854, %v1855
      %v1857 = vrot.slane %v1728, 5
      %v1858 = vrot.slane %v1857, 4
      %v1859 = vrot.slane %v894, 5
      %v1860 = vsel %vm1765, %v1858, %v1859
      %v1861 = vrot.slane %v1859, 4
      %v1862 = vrot.slane %v913, 5
      %v1863 = vsel %vm1765, %v1861, %v1862
      %v1864 = vrot.slane %v1729, 5
      %v1865 = vrot.slane %v1864, 4
      %v1866 = vrot.slane %v896, 5
      %v1867 = vsel %vm1765, %v1865, %v1866
      %v1868 = vrot.slane %v1866, 4
      %v1869 = vrot.slane %v914, 5
      %v1870 = vsel %vm1765, %v1868, %v1869
      %v1871 = vrot.slane %v1730, 5
      %v1872 = vrot.slane %v1871, 4
      %v1873 = vrot.slane %v898, 5
      %v1874 = vsel %vm1765, %v1872, %v1873
      %v1875 = vrot.slane %v1873, 4
      %v1876 = vrot.slane %v915, 5
      %v1877 = vsel %vm1765, %v1875, %v1876
      %s1878 = scalar_lea.vmem %s2, 4
      %v1879 = vld [vmem:[%s1878] sm:$0x3]
      %v1880 = vunpack.c.l.b16 %v1769
      %v1881 = vunpack.c.l.b16 %v1772
      %v1882 = vunpack.c.l.b16 %v1776
      %v1883 = vunpack.c.l.b16 %v1779
      %v1884 = vunpack.c.l.b16 %v1783
      %v1885 = vunpack.c.l.b16 %v1786
      %v1886 = vunpack.c.l.b16 %v1790
      %v1887 = vunpack.c.l.b16 %v1793
      %v1888 = vunpack.c.l.b16 %v1797
      %v1889 = vunpack.c.l.b16 %v1800
      %v1890 = vunpack.c.l.b16 %v1804
      %v1891 = vunpack.c.l.b16 %v1807
      %v1892 = vunpack.c.l.b16 %v1811
      %v1893 = vunpack.c.l.b16 %v1814
      %v1894 = vunpack.c.l.b16 %v1818
      %v1895 = vunpack.c.l.b16 %v1821
      %v1896 = vunpack.c.l.b16 %v1825
      %v1897 = vunpack.c.l.b16 %v1828
      %v1898 = vunpack.c.l.b16 %v1832
      %v1899 = vunpack.c.l.b16 %v1835
      %v1900 = vunpack.c.l.b16 %v1839
      %v1901 = vunpack.c.l.b16 %v1842
      %v1902 = vunpack.c.l.b16 %v1846
      %v1903 = vunpack.c.l.b16 %v1849
      %v1904 = vunpack.c.l.b16 %v1853
      %v1905 = vunpack.c.l.b16 %v1856
      %v1906 = vunpack.c.l.b16 %v1860
      %v1907 = vunpack.c.l.b16 %v1863
      %v1908 = vunpack.c.l.b16 %v1867
      %v1909 = vunpack.c.l.b16 %v1870
      %v1910 = vunpack.c.l.b16 %v1874
      %v1911 = vunpack.c.l.b16 %v1877
      %v1912 = vpack.c.b16 %v1881, %v1880
      %v1913 = vpack.c.b16 %v1883, %v1882
      %v1914 = vpack.c.b16 %v1885, %v1884
      %v1915 = vpack.c.b16 %v1887, %v1886
      %v1916 = vpack.c.b16 %v1889, %v1888
      %v1917 = vpack.c.b16 %v1891, %v1890
      %v1918 = vpack.c.b16 %v1893, %v1892
      %v1919 = vpack.c.b16 %v1895, %v1894
      %v1920 = vpack.c.b16 %v1897, %v1896
      %v1921 = vpack.c.b16 %v1899, %v1898
      %v1922 = vpack.c.b16 %v1901, %v1900
      %v1923 = vpack.c.b16 %v1903, %v1902
      %v1924 = vpack.c.b16 %v1905, %v1904
      %v1925 = vpack.c.b16 %v1907, %v1906
      %v1926 = vpack.c.b16 %v1909, %v1908
      %v1927 = vpack.c.b16 %v1911, %v1910
      %v1929 = vsel %vm1353, %v1912, 0
      %v1932 = vsel %vm1353, %v1913, 0
      %v1935 = vsel %vm1353, %v1914, 0
      %v1938 = vsel %vm1353, %v1915, 0
      %v1941 = vsel %vm1353, %v1916, 0
      %v1944 = vsel %vm1353, %v1917, 0
      %v1947 = vsel %vm1353, %v1918, 0
      %v1950 = vsel %vm1353, %v1919, 0
      %v1953 = vsel %vm1353, %v1920, 0
      %v1956 = vsel %vm1353, %v1921, 0
      %v1959 = vsel %vm1353, %v1922, 0
      %v1962 = vsel %vm1353, %v1923, 0
      %v1965 = vsel %vm1353, %v1924, 0
      %v1968 = vsel %vm1353, %v1925, 0
      %v1971 = vsel %vm1353, %v1926, 0
      %v1974 = vsel %vm1353, %v1927, 0
      %v1977 = vsel %vm1402, %v1879, 0
      %1979 = vmatpush.bf16.msra.mxu0 0
      %1980 = vmatpush.bf16.msra.mxu0 0
      %1981 = vmatpush.bf16.msra.mxu0 0
      %1982 = vmatpush.bf16.msra.mxu0 0
      %1983 = vmatpush.bf16.msra.mxu0 0
      %1984 = vmatpush.bf16.msra.mxu0 0
      %1985 = vmatpush.bf16.msra.mxu0 0
      %1986 = vmatpush.bf16.msra.mxu0 %v1977
      %1987 = vmatmul.bf16.gmra.mxu0 %v1929
      %v1988 = vpop.f32.mrf.mxu0
      %v1989 = vadd.f32 0.0, %v1988
      %v1990 = vpop.f32.mrf.mxu0
      %v1991 = vadd.f32 0.0, %v1990
      %1992 = vmatmul.bf16.gmra.mxu0 %v1932
      %v1993 = vpop.f32.mrf.mxu0
      %v1994 = vadd.f32 0.0, %v1993
      %v1995 = vpop.f32.mrf.mxu0
      %v1996 = vadd.f32 0.0, %v1995
      %1997 = vmatmul.bf16.gmra.mxu0 %v1935
      %v1998 = vpop.f32.mrf.mxu0
      %v1999 = vadd.f32 0.0, %v1998
      %v2000 = vpop.f32.mrf.mxu0
      %v2001 = vadd.f32 0.0, %v2000
      %2002 = vmatmul.bf16.gmra.mxu0 %v1938
      %v2003 = vpop.f32.mrf.mxu0
      %v2004 = vadd.f32 0.0, %v2003
      %v2005 = vpop.f32.mrf.mxu0
      %v2006 = vadd.f32 0.0, %v2005
      %2007 = vmatmul.bf16.gmra.mxu0 %v1941
      %v2008 = vpop.f32.mrf.mxu0
      %v2009 = vadd.f32 0.0, %v2008
      %v2010 = vpop.f32.mrf.mxu0
      %v2011 = vadd.f32 0.0, %v2010
      %2012 = vmatmul.bf16.gmra.mxu0 %v1944
      %v2013 = vpop.f32.mrf.mxu0
      %v2014 = vadd.f32 0.0, %v2013
      %v2015 = vpop.f32.mrf.mxu0
      %v2016 = vadd.f32 0.0, %v2015
      %2017 = vmatmul.bf16.gmra.mxu0 %v1947
      %v2018 = vpop.f32.mrf.mxu0
      %v2019 = vadd.f32 0.0, %v2018
      %v2020 = vpop.f32.mrf.mxu0
      %v2021 = vadd.f32 0.0, %v2020
      %2022 = vmatmul.bf16.gmra.mxu0 %v1950
      %v2023 = vpop.f32.mrf.mxu0
      %v2024 = vadd.f32 0.0, %v2023
      %v2025 = vpop.f32.mrf.mxu0
      %v2026 = vadd.f32 0.0, %v2025
      %2027 = vmatmul.bf16.gmra.mxu0 %v1953
      %v2028 = vpop.f32.mrf.mxu0
      %v2029 = vadd.f32 0.0, %v2028
      %v2030 = vpop.f32.mrf.mxu0
      %v2031 = vadd.f32 0.0, %v2030
      %2032 = vmatmul.bf16.gmra.mxu0 %v1956
      %v2033 = vpop.f32.mrf.mxu0
      %v2034 = vadd.f32 0.0, %v2033
      %v2035 = vpop.f32.mrf.mxu0
      %v2036 = vadd.f32 0.0, %v2035
      %2037 = vmatmul.bf16.gmra.mxu0 %v1959
      %v2038 = vpop.f32.mrf.mxu0
      %v2039 = vadd.f32 0.0, %v2038
      %v2040 = vpop.f32.mrf.mxu0
      %v2041 = vadd.f32 0.0, %v2040
      %2042 = vmatmul.bf16.gmra.mxu0 %v1962
      %v2043 = vpop.f32.mrf.mxu0
      %v2044 = vadd.f32 0.0, %v2043
      %v2045 = vpop.f32.mrf.mxu0
      %v2046 = vadd.f32 0.0, %v2045
      %2047 = vmatmul.bf16.gmra.mxu0 %v1965
      %v2048 = vpop.f32.mrf.mxu0
      %v2049 = vadd.f32 0.0, %v2048
      %v2050 = vpop.f32.mrf.mxu0
      %v2051 = vadd.f32 0.0, %v2050
      %2052 = vmatmul.bf16.gmra.mxu0 %v1968
      %v2053 = vpop.f32.mrf.mxu0
      %v2054 = vadd.f32 0.0, %v2053
      %v2055 = vpop.f32.mrf.mxu0
      %v2056 = vadd.f32 0.0, %v2055
      %2057 = vmatmul.bf16.gmra.mxu0 %v1971
      %v2058 = vpop.f32.mrf.mxu0
      %v2059 = vadd.f32 0.0, %v2058
      %v2060 = vpop.f32.mrf.mxu0
      %v2061 = vadd.f32 0.0, %v2060
      %2062 = vmatmul.bf16.gmra.mxu0 %v1974
      %v2063 = vpop.f32.mrf.mxu0
      %v2064 = vadd.f32 0.0, %v2063
      %v2065 = vpop.f32.mrf.mxu0
      %v2066 = vadd.f32 0.0, %v2065
      %2067 = vdwg.mxu0
      %v2068 = vadd.f32 %v1636, %v1989
      %v2069 = vadd.f32 %v1638, %v1991
      %v2070 = vadd.f32 %v1641, %v1994
      %v2071 = vadd.f32 %v1643, %v1996
      %v2072 = vadd.f32 %v1646, %v1999
      %v2073 = vadd.f32 %v1648, %v2001
      %v2074 = vadd.f32 %v1651, %v2004
      %v2075 = vadd.f32 %v1653, %v2006
      %v2076 = vadd.f32 %v1656, %v2009
      %v2077 = vadd.f32 %v1658, %v2011
      %v2078 = vadd.f32 %v1661, %v2014
      %v2079 = vadd.f32 %v1663, %v2016
      %v2080 = vadd.f32 %v1666, %v2019
      %v2081 = vadd.f32 %v1668, %v2021
      %v2082 = vadd.f32 %v1671, %v2024
      %v2083 = vadd.f32 %v1673, %v2026
      %v2084 = vadd.f32 %v1676, %v2029
      %v2085 = vadd.f32 %v1678, %v2031
      %v2086 = vadd.f32 %v1681, %v2034
      %v2087 = vadd.f32 %v1683, %v2036
      %v2088 = vadd.f32 %v1686, %v2039
      %v2089 = vadd.f32 %v1688, %v2041
      %v2090 = vadd.f32 %v1691, %v2044
      %v2091 = vadd.f32 %v1693, %v2046
      %v2092 = vadd.f32 %v1696, %v2049
      %v2093 = vadd.f32 %v1698, %v2051
      %v2094 = vadd.f32 %v1701, %v2054
      %v2095 = vadd.f32 %v1703, %v2056
      %v2096 = vadd.f32 %v1706, %v2059
      %v2097 = vadd.f32 %v1708, %v2061
      %v2098 = vadd.f32 %v1711, %v2064
      %v2099 = vadd.f32 %v1713, %v2066
      %v2100 = vld [vmem:[%s726] sm:$0xf]
      %v2101 = vld [vmem:[%s726 + $0x4] sm:$0xf]
      %v2102 = vld [vmem:[%s726 + $0xc] sm:$0xf]
      %v2103 = vld [vmem:[%s726 + $0x10] sm:$0xf]
      %v2104 = vld [vmem:[%s726 + $0x18] sm:$0xf]
      %v2105 = vld [vmem:[%s726 + $0x1c] sm:$0xf]
      %v2106 = vld [vmem:[%s726 + $0x24] sm:$0xf]
      %v2107 = vld [vmem:[%s726 + $0x28] sm:$0xf]
      %v2108 = vld [vmem:[%s726 + $0x30] sm:$0xf]
      %v2109 = vld [vmem:[%s726 + $0x34] sm:$0xf]
      %v2110 = vld [vmem:[%s726 + $0x3c] sm:$0xf]
      %v2111 = vld [vmem:[%s726 + $0x40] sm:$0xf]
      %v2112 = vld [vmem:[%s726 + $0x48] sm:$0xf]
      %v2113 = vld [vmem:[%s726 + $0x4c] sm:$0xf]
      %v2114 = vld [vmem:[%s726 + $0x54] sm:$0xf]
      %v2115 = vld [vmem:[%s726 + $0x58] sm:$0xf]
      %v2116 = vld [vmem:[%s726 + $0x60] sm:$0xf]
      %v2117 = vld [vmem:[%s726 + $0x64] sm:$0xf]
      %v2118 = vld [vmem:[%s726 + $0x6c] sm:$0xf]
      %v2119 = vld [vmem:[%s726 + $0x70] sm:$0xf]
      %v2120 = vld [vmem:[%s726 + $0x78] sm:$0xf]
      %v2121 = vld [vmem:[%s726 + $0x7c] sm:$0xf]
      %v2122 = vld [vmem:[%s726 + $0x84] sm:$0xf]
      %v2123 = vld [vmem:[%s726 + $0x88] sm:$0xf]
      %v2124 = vld [vmem:[%s726 + $0x90] sm:$0xf]
      %v2125 = vld [vmem:[%s726 + $0x94] sm:$0xf]
      %v2126 = vld [vmem:[%s726 + $0x9c] sm:$0xf]
      %v2127 = vld [vmem:[%s726 + $0xa0] sm:$0xf]
      %v2128 = vld [vmem:[%s726 + $0xa8] sm:$0xf]
      %v2129 = vld [vmem:[%s726 + $0xac] sm:$0xf]
      %v2130 = vld [vmem:[%s726 + $0xb4] sm:$0xf]
      %v2131 = vld [vmem:[%s726 + $0xb8] sm:$0xf]
      %s2132 = scalar_lea.vmem %s2, 6
      %v2133 = vld [vmem:[%s2132] sm:$0x3]
      %v2166 = vunpack.c.l.b16 %v2100
      %v2167 = vunpack.c.l.b16 %v2101
      %v2168 = vunpack.c.l.b16 %v2102
      %v2169 = vunpack.c.l.b16 %v2103
      %v2170 = vunpack.c.l.b16 %v2104
      %v2171 = vunpack.c.l.b16 %v2105
      %v2172 = vunpack.c.l.b16 %v2106
      %v2173 = vunpack.c.l.b16 %v2107
      %v2174 = vunpack.c.l.b16 %v2108
      %v2175 = vunpack.c.l.b16 %v2109
      %v2176 = vunpack.c.l.b16 %v2110
      %v2177 = vunpack.c.l.b16 %v2111
      %v2178 = vunpack.c.l.b16 %v2112
      %v2179 = vunpack.c.l.b16 %v2113
      %v2180 = vunpack.c.l.b16 %v2114
      %v2181 = vunpack.c.l.b16 %v2115
      %v2182 = vunpack.c.l.b16 %v2116
      %v2183 = vunpack.c.l.b16 %v2117
      %v2184 = vunpack.c.l.b16 %v2118
      %v2185 = vunpack.c.l.b16 %v2119
      %v2186 = vunpack.c.l.b16 %v2120
      %v2187 = vunpack.c.l.b16 %v2121
      %v2188 = vunpack.c.l.b16 %v2122
      %v2189 = vunpack.c.l.b16 %v2123
      %v2190 = vunpack.c.l.b16 %v2124
      %v2191 = vunpack.c.l.b16 %v2125
      %v2192 = vunpack.c.l.b16 %v2126
      %v2193 = vunpack.c.l.b16 %v2127
      %v2194 = vunpack.c.l.b16 %v2128
      %v2195 = vunpack.c.l.b16 %v2129
      %v2196 = vunpack.c.l.b16 %v2130
      %v2197 = vunpack.c.l.b16 %v2131
      %v2198 = vpack.c.b16 %v2167, %v2166
      %v2199 = vpack.c.b16 %v2169, %v2168
      %v2200 = vpack.c.b16 %v2171, %v2170
      %v2201 = vpack.c.b16 %v2173, %v2172
      %v2202 = vpack.c.b16 %v2175, %v2174
      %v2203 = vpack.c.b16 %v2177, %v2176
      %v2204 = vpack.c.b16 %v2179, %v2178
      %v2205 = vpack.c.b16 %v2181, %v2180
      %v2206 = vpack.c.b16 %v2183, %v2182
      %v2207 = vpack.c.b16 %v2185, %v2184
      %v2208 = vpack.c.b16 %v2187, %v2186
      %v2209 = vpack.c.b16 %v2189, %v2188
      %v2210 = vpack.c.b16 %v2191, %v2190
      %v2211 = vpack.c.b16 %v2193, %v2192
      %v2212 = vpack.c.b16 %v2195, %v2194
      %v2213 = vpack.c.b16 %v2197, %v2196
      %v2215 = vsel %vm1353, %v2198, 0
      %v2218 = vsel %vm1353, %v2199, 0
      %v2221 = vsel %vm1353, %v2200, 0
      %v2224 = vsel %vm1353, %v2201, 0
      %v2227 = vsel %vm1353, %v2202, 0
      %v2230 = vsel %vm1353, %v2203, 0
      %v2233 = vsel %vm1353, %v2204, 0
      %v2236 = vsel %vm1353, %v2205, 0
      %v2239 = vsel %vm1353, %v2206, 0
      %v2242 = vsel %vm1353, %v2207, 0
      %v2245 = vsel %vm1353, %v2208, 0
      %v2248 = vsel %vm1353, %v2209, 0
      %v2251 = vsel %vm1353, %v2210, 0
      %v2254 = vsel %vm1353, %v2211, 0
      %v2257 = vsel %vm1353, %v2212, 0
      %v2260 = vsel %vm1353, %v2213, 0
      %v2263 = vsel %vm1402, %v2133, 0
      %2265 = vmatpush.bf16.msra.mxu0 0
      %2266 = vmatpush.bf16.msra.mxu0 0
      %2267 = vmatpush.bf16.msra.mxu0 0
      %2268 = vmatpush.bf16.msra.mxu0 0
      %2269 = vmatpush.bf16.msra.mxu0 0
      %2270 = vmatpush.bf16.msra.mxu0 0
      %2271 = vmatpush.bf16.msra.mxu0 0
      %2272 = vmatpush.bf16.msra.mxu0 %v2263
      %2273 = vmatmul.bf16.gmra.mxu0 %v2215
      %v2274 = vpop.f32.mrf.mxu0
      %v2275 = vadd.f32 0.0, %v2274
      %v2276 = vpop.f32.mrf.mxu0
      %v2277 = vadd.f32 0.0, %v2276
      %2278 = vmatmul.bf16.gmra.mxu0 %v2218
      %v2279 = vpop.f32.mrf.mxu0
      %v2280 = vadd.f32 0.0, %v2279
      %v2281 = vpop.f32.mrf.mxu0
      %v2282 = vadd.f32 0.0, %v2281
      %2283 = vmatmul.bf16.gmra.mxu0 %v2221
      %v2284 = vpop.f32.mrf.mxu0
      %v2285 = vadd.f32 0.0, %v2284
      %v2286 = vpop.f32.mrf.mxu0
      %v2287 = vadd.f32 0.0, %v2286
      %2288 = vmatmul.bf16.gmra.mxu0 %v2224
      %v2289 = vpop.f32.mrf.mxu0
      %v2290 = vadd.f32 0.0, %v2289
      %v2291 = vpop.f32.mrf.mxu0
      %v2292 = vadd.f32 0.0, %v2291
      %2293 = vmatmul.bf16.gmra.mxu0 %v2227
      %v2294 = vpop.f32.mrf.mxu0
      %v2295 = vadd.f32 0.0, %v2294
      %v2296 = vpop.f32.mrf.mxu0
      %v2297 = vadd.f32 0.0, %v2296
      %2298 = vmatmul.bf16.gmra.mxu0 %v2230
      %v2299 = vpop.f32.mrf.mxu0
      %v2300 = vadd.f32 0.0, %v2299
      %v2301 = vpop.f32.mrf.mxu0
      %v2302 = vadd.f32 0.0, %v2301
      %2303 = vmatmul.bf16.gmra.mxu0 %v2233
      %v2304 = vpop.f32.mrf.mxu0
      %v2305 = vadd.f32 0.0, %v2304
      %v2306 = vpop.f32.mrf.mxu0
      %v2307 = vadd.f32 0.0, %v2306
      %2308 = vmatmul.bf16.gmra.mxu0 %v2236
      %v2309 = vpop.f32.mrf.mxu0
      %v2310 = vadd.f32 0.0, %v2309
      %v2311 = vpop.f32.mrf.mxu0
      %v2312 = vadd.f32 0.0, %v2311
      %2313 = vmatmul.bf16.gmra.mxu0 %v2239
      %v2314 = vpop.f32.mrf.mxu0
      %v2315 = vadd.f32 0.0, %v2314
      %v2316 = vpop.f32.mrf.mxu0
      %v2317 = vadd.f32 0.0, %v2316
      %2318 = vmatmul.bf16.gmra.mxu0 %v2242
      %v2319 = vpop.f32.mrf.mxu0
      %v2320 = vadd.f32 0.0, %v2319
      %v2321 = vpop.f32.mrf.mxu0
      %v2322 = vadd.f32 0.0, %v2321
      %2323 = vmatmul.bf16.gmra.mxu0 %v2245
      %v2324 = vpop.f32.mrf.mxu0
      %v2325 = vadd.f32 0.0, %v2324
      %v2326 = vpop.f32.mrf.mxu0
      %v2327 = vadd.f32 0.0, %v2326
      %2328 = vmatmul.bf16.gmra.mxu0 %v2248
      %v2329 = vpop.f32.mrf.mxu0
      %v2330 = vadd.f32 0.0, %v2329
      %v2331 = vpop.f32.mrf.mxu0
      %v2332 = vadd.f32 0.0, %v2331
      %2333 = vmatmul.bf16.gmra.mxu0 %v2251
      %v2334 = vpop.f32.mrf.mxu0
      %v2335 = vadd.f32 0.0, %v2334
      %v2336 = vpop.f32.mrf.mxu0
      %v2337 = vadd.f32 0.0, %v2336
      %2338 = vmatmul.bf16.gmra.mxu0 %v2254
      %v2339 = vpop.f32.mrf.mxu0
      %v2340 = vadd.f32 0.0, %v2339
      %v2341 = vpop.f32.mrf.mxu0
      %v2342 = vadd.f32 0.0, %v2341
      %2343 = vmatmul.bf16.gmra.mxu0 %v2257
      %v2344 = vpop.f32.mrf.mxu0
      %v2345 = vadd.f32 0.0, %v2344
      %v2346 = vpop.f32.mrf.mxu0
      %v2347 = vadd.f32 0.0, %v2346
      %2348 = vmatmul.bf16.gmra.mxu0 %v2260
      %v2349 = vpop.f32.mrf.mxu0
      %v2350 = vadd.f32 0.0, %v2349
      %v2351 = vpop.f32.mrf.mxu0
      %v2352 = vadd.f32 0.0, %v2351
      %2353 = vdwg.mxu0
      %v2354 = vadd.f32 %v2068, %v2275
      %v2355 = vadd.f32 %v2069, %v2277
      %v2356 = vadd.f32 %v2070, %v2280
      %v2357 = vadd.f32 %v2071, %v2282
      %v2358 = vadd.f32 %v2072, %v2285
      %v2359 = vadd.f32 %v2073, %v2287
      %v2360 = vadd.f32 %v2074, %v2290
      %v2361 = vadd.f32 %v2075, %v2292
      %v2362 = vadd.f32 %v2076, %v2295
      %v2363 = vadd.f32 %v2077, %v2297
      %v2364 = vadd.f32 %v2078, %v2300
      %v2365 = vadd.f32 %v2079, %v2302
      %v2366 = vadd.f32 %v2080, %v2305
      %v2367 = vadd.f32 %v2081, %v2307
      %v2368 = vadd.f32 %v2082, %v2310
      %v2369 = vadd.f32 %v2083, %v2312
      %v2370 = vadd.f32 %v2084, %v2315
      %v2371 = vadd.f32 %v2085, %v2317
      %v2372 = vadd.f32 %v2086, %v2320
      %v2373 = vadd.f32 %v2087, %v2322
      %v2374 = vadd.f32 %v2088, %v2325
      %v2375 = vadd.f32 %v2089, %v2327
      %v2376 = vadd.f32 %v2090, %v2330
      %v2377 = vadd.f32 %v2091, %v2332
      %v2378 = vadd.f32 %v2092, %v2335
      %v2379 = vadd.f32 %v2093, %v2337
      %v2380 = vadd.f32 %v2094, %v2340
      %v2381 = vadd.f32 %v2095, %v2342
      %v2382 = vadd.f32 %v2096, %v2345
      %v2383 = vadd.f32 %v2097, %v2347
      %v2384 = vadd.f32 %v2098, %v2350
      %v2385 = vadd.f32 %v2099, %v2352
      %v2386 = vld [vmem:[%s726] sm:$0xf]
      %v2387 = vld [vmem:[%s726 + $0x4] sm:$0xf]
      %v2388 = vld [vmem:[%s726 + $0x8] sm:$0x1]
      %v2389 = vld [vmem:[%s726 + $0xc] sm:$0xf]
      %v2390 = vld [vmem:[%s726 + $0x10] sm:$0xf]
      %v2391 = vld [vmem:[%s726 + $0x14] sm:$0x1]
      %v2392 = vld [vmem:[%s726 + $0x18] sm:$0xf]
      %v2393 = vld [vmem:[%s726 + $0x1c] sm:$0xf]
      %v2394 = vld [vmem:[%s726 + $0x20] sm:$0x1]
      %v2395 = vld [vmem:[%s726 + $0x24] sm:$0xf]
      %v2396 = vld [vmem:[%s726 + $0x28] sm:$0xf]
      %v2397 = vld [vmem:[%s726 + $0x2c] sm:$0x1]
      %v2398 = vld [vmem:[%s726 + $0x30] sm:$0xf]
      %v2399 = vld [vmem:[%s726 + $0x34] sm:$0xf]
      %v2400 = vld [vmem:[%s726 + $0x38] sm:$0x1]
      %v2401 = vld [vmem:[%s726 + $0x3c] sm:$0xf]
      %v2402 = vld [vmem:[%s726 + $0x40] sm:$0xf]
      %v2403 = vld [vmem:[%s726 + $0x44] sm:$0x1]
      %v2404 = vld [vmem:[%s726 + $0x48] sm:$0xf]
      %v2405 = vld [vmem:[%s726 + $0x4c] sm:$0xf]
      %v2406 = vld [vmem:[%s726 + $0x50] sm:$0x1]
      %v2407 = vld [vmem:[%s726 + $0x54] sm:$0xf]
      %v2408 = vld [vmem:[%s726 + $0x58] sm:$0xf]
      %v2409 = vld [vmem:[%s726 + $0x5c] sm:$0x1]
      %v2410 = vld [vmem:[%s726 + $0x60] sm:$0xf]
      %v2411 = vld [vmem:[%s726 + $0x64] sm:$0xf]
      %v2412 = vld [vmem:[%s726 + $0x68] sm:$0x1]
      %v2413 = vld [vmem:[%s726 + $0x6c] sm:$0xf]
      %v2414 = vld [vmem:[%s726 + $0x70] sm:$0xf]
      %v2415 = vld [vmem:[%s726 + $0x74] sm:$0x1]
      %v2416 = vld [vmem:[%s726 + $0x78] sm:$0xf]
      %v2417 = vld [vmem:[%s726 + $0x7c] sm:$0xf]
      %v2418 = vld [vmem:[%s726 + $0x80] sm:$0x1]
      %v2419 = vld [vmem:[%s726 + $0x84] sm:$0xf]
      %v2420 = vld [vmem:[%s726 + $0x88] sm:$0xf]
      %v2421 = vld [vmem:[%s726 + $0x8c] sm:$0x1]
      %v2422 = vld [vmem:[%s726 + $0x90] sm:$0xf]
      %v2423 = vld [vmem:[%s726 + $0x94] sm:$0xf]
      %v2424 = vld [vmem:[%s726 + $0x98] sm:$0x1]
      %v2425 = vld [vmem:[%s726 + $0x9c] sm:$0xf]
      %v2426 = vld [vmem:[%s726 + $0xa0] sm:$0xf]
      %v2427 = vld [vmem:[%s726 + $0xa4] sm:$0x1]
      %v2428 = vld [vmem:[%s726 + $0xa8] sm:$0xf]
      %v2429 = vld [vmem:[%s726 + $0xac] sm:$0xf]
      %v2430 = vld [vmem:[%s726 + $0xb0] sm:$0x1]
      %v2431 = vld [vmem:[%s726 + $0xb4] sm:$0xf]
      %v2432 = vld [vmem:[%s726 + $0xb8] sm:$0xf]
      %v2433 = vld [vmem:[%s726 + $0xbc] sm:$0x1]
      %v2435 = vshrl.u32 %v2386, 16
      %v2437 = vrot.slane %v2435, 4
      %v2438 = vshll.u32 %v2386, 16
      %v2440 = vrot.slane %v2438, 5
      %v2441 = vor.u32 %v2437, %v2440
      %v2442 = vrot.slane %v2441, 4
      %v2444 = vshll.u32 %v2387, 16
      %v2446 = vrot.slane %v2444, 5
      %v2447 = vsel %vm918, %v2442, %v2446
      %v2448 = vshrl.u32 %v2387, 16
      %v2450 = vrot.slane %v2448, 4
      %v2451 = vor.u32 %v2450, %v2446
      %v2452 = vrot.slane %v2451, 4
      %v2454 = vshll.u32 %v2388, 16
      %v2456 = vrot.slane %v2454, 5
      %v2457 = vsel %vm918, %v2452, %v2456
      %v2459 = vshrl.u32 %v2389, 16
      %v2461 = vrot.slane %v2459, 4
      %v2462 = vshll.u32 %v2389, 16
      %v2464 = vrot.slane %v2462, 5
      %v2465 = vor.u32 %v2461, %v2464
      %v2466 = vrot.slane %v2465, 4
      %v2468 = vshll.u32 %v2390, 16
      %v2470 = vrot.slane %v2468, 5
      %v2471 = vsel %vm918, %v2466, %v2470
      %v2472 = vshrl.u32 %v2390, 16
      %v2474 = vrot.slane %v2472, 4
      %v2475 = vor.u32 %v2474, %v2470
      %v2476 = vrot.slane %v2475, 4
      %v2478 = vshll.u32 %v2391, 16
      %v2480 = vrot.slane %v2478, 5
      %v2481 = vsel %vm918, %v2476, %v2480
      %v2483 = vshrl.u32 %v2392, 16
      %v2485 = vrot.slane %v2483, 4
      %v2486 = vshll.u32 %v2392, 16
      %v2488 = vrot.slane %v2486, 5
      %v2489 = vor.u32 %v2485, %v2488
      %v2490 = vrot.slane %v2489, 4
      %v2492 = vshll.u32 %v2393, 16
      %v2494 = vrot.slane %v2492, 5
      %v2495 = vsel %vm918, %v2490, %v2494
      %v2496 = vshrl.u32 %v2393, 16
      %v2498 = vrot.slane %v2496, 4
      %v2499 = vor.u32 %v2498, %v2494
      %v2500 = vrot.slane %v2499, 4
      %v2502 = vshll.u32 %v2394, 16
      %v2504 = vrot.slane %v2502, 5
      %v2505 = vsel %vm918, %v2500, %v2504
      %v2507 = vshrl.u32 %v2395, 16
      %v2509 = vrot.slane %v2507, 4
      %v2510 = vshll.u32 %v2395, 16
      %v2512 = vrot.slane %v2510, 5
      %v2513 = vor.u32 %v2509, %v2512
      %v2514 = vrot.slane %v2513, 4
      %v2516 = vshll.u32 %v2396, 16
      %v2518 = vrot.slane %v2516, 5
      %v2519 = vsel %vm918, %v2514, %v2518
      %v2520 = vshrl.u32 %v2396, 16
      %v2522 = vrot.slane %v2520, 4
      %v2523 = vor.u32 %v2522, %v2518
      %v2524 = vrot.slane %v2523, 4
      %v2526 = vshll.u32 %v2397, 16
      %v2528 = vrot.slane %v2526, 5
      %v2529 = vsel %vm918, %v2524, %v2528
      %v2531 = vshrl.u32 %v2398, 16
      %v2533 = vrot.slane %v2531, 4
      %v2534 = vshll.u32 %v2398, 16
      %v2536 = vrot.slane %v2534, 5
      %v2537 = vor.u32 %v2533, %v2536
      %v2538 = vrot.slane %v2537, 4
      %v2540 = vshll.u32 %v2399, 16
      %v2542 = vrot.slane %v2540, 5
      %v2543 = vsel %vm918, %v2538, %v2542
      %v2544 = vshrl.u32 %v2399, 16
      %v2546 = vrot.slane %v2544, 4
      %v2547 = vor.u32 %v2546, %v2542
      %v2548 = vrot.slane %v2547, 4
      %v2550 = vshll.u32 %v2400, 16
      %v2552 = vrot.slane %v2550, 5
      %v2553 = vsel %vm918, %v2548, %v2552
      %v2555 = vshrl.u32 %v2401, 16
      %v2557 = vrot.slane %v2555, 4
      %v2558 = vshll.u32 %v2401, 16
      %v2560 = vrot.slane %v2558, 5
      %v2561 = vor.u32 %v2557, %v2560
      %v2562 = vrot.slane %v2561, 4
      %v2564 = vshll.u32 %v2402, 16
      %v2566 = vrot.slane %v2564, 5
      %v2567 = vsel %vm918, %v2562, %v2566
      %v2568 = vshrl.u32 %v2402, 16
      %v2570 = vrot.slane %v2568, 4
      %v2571 = vor.u32 %v2570, %v2566
      %v2572 = vrot.slane %v2571, 4
      %v2574 = vshll.u32 %v2403, 16
      %v2576 = vrot.slane %v2574, 5
      %v2577 = vsel %vm918, %v2572, %v2576
      %v2579 = vshrl.u32 %v2404, 16
      %v2581 = vrot.slane %v2579, 4
      %v2582 = vshll.u32 %v2404, 16
      %v2584 = vrot.slane %v2582, 5
      %v2585 = vor.u32 %v2581, %v2584
      %v2586 = vrot.slane %v2585, 4
      %v2588 = vshll.u32 %v2405, 16
      %v2590 = vrot.slane %v2588, 5
      %v2591 = vsel %vm918, %v2586, %v2590
      %v2592 = vshrl.u32 %v2405, 16
      %v2594 = vrot.slane %v2592, 4
      %v2595 = vor.u32 %v2594, %v2590
      %v2596 = vrot.slane %v2595, 4
      %v2598 = vshll.u32 %v2406, 16
      %v2600 = vrot.slane %v2598, 5
      %v2601 = vsel %vm918, %v2596, %v2600
      %v2603 = vshrl.u32 %v2407, 16
      %v2605 = vrot.slane %v2603, 4
      %v2606 = vshll.u32 %v2407, 16
      %v2608 = vrot.slane %v2606, 5
      %v2609 = vor.u32 %v2605, %v2608
      %v2610 = vrot.slane %v2609, 4
      %v2612 = vshll.u32 %v2408, 16
      %v2614 = vrot.slane %v2612, 5
      %v2615 = vsel %vm918, %v2610, %v2614
      %v2616 = vshrl.u32 %v2408, 16
      %v2618 = vrot.slane %v2616, 4
      %v2619 = vor.u32 %v2618, %v2614
      %v2620 = vrot.slane %v2619, 4
      %v2622 = vshll.u32 %v2409, 16
      %v2624 = vrot.slane %v2622, 5
      %v2625 = vsel %vm918, %v2620, %v2624
      %v2627 = vshrl.u32 %v2410, 16
      %v2629 = vrot.slane %v2627, 4
      %v2630 = vshll.u32 %v2410, 16
      %v2632 = vrot.slane %v2630, 5
      %v2633 = vor.u32 %v2629, %v2632
      %v2634 = vrot.slane %v2633, 4
      %v2636 = vshll.u32 %v2411, 16
      %v2638 = vrot.slane %v2636, 5
      %v2639 = vsel %vm918, %v2634, %v2638
      %v2640 = vshrl.u32 %v2411, 16
      %v2642 = vrot.slane %v2640, 4
      %v2643 = vor.u32 %v2642, %v2638
      %v2644 = vrot.slane %v2643, 4
      %v2646 = vshll.u32 %v2412, 16
      %v2648 = vrot.slane %v2646, 5
      %v2649 = vsel %vm918, %v2644, %v2648
      %v2651 = vshrl.u32 %v2413, 16
      %v2653 = vrot.slane %v2651, 4
      %v2654 = vshll.u32 %v2413, 16
      %v2656 = vrot.slane %v2654, 5
      %v2657 = vor.u32 %v2653, %v2656
      %v2658 = vrot.slane %v2657, 4
      %v2660 = vshll.u32 %v2414, 16
      %v2662 = vrot.slane %v2660, 5
      %v2663 = vsel %vm918, %v2658, %v2662
      %v2664 = vshrl.u32 %v2414, 16
      %v2666 = vrot.slane %v2664, 4
      %v2667 = vor.u32 %v2666, %v2662
      %v2668 = vrot.slane %v2667, 4
      %v2670 = vshll.u32 %v2415, 16
      %v2672 = vrot.slane %v2670, 5
      %v2673 = vsel %vm918, %v2668, %v2672
      %v2675 = vshrl.u32 %v2416, 16
      %v2677 = vrot.slane %v2675, 4
      %v2678 = vshll.u32 %v2416, 16
      %v2680 = vrot.slane %v2678, 5
      %v2681 = vor.u32 %v2677, %v2680
      %v2682 = vrot.slane %v2681, 4
      %v2684 = vshll.u32 %v2417, 16
      %v2686 = vrot.slane %v2684, 5
      %v2687 = vsel %vm918, %v2682, %v2686
      %v2688 = vshrl.u32 %v2417, 16
      %v2690 = vrot.slane %v2688, 4
      %v2691 = vor.u32 %v2690, %v2686
      %v2692 = vrot.slane %v2691, 4
      %v2694 = vshll.u32 %v2418, 16
      %v2696 = vrot.slane %v2694, 5
      %v2697 = vsel %vm918, %v2692, %v2696
      %v2699 = vshrl.u32 %v2419, 16
      %v2701 = vrot.slane %v2699, 4
      %v2702 = vshll.u32 %v2419, 16
      %v2704 = vrot.slane %v2702, 5
      %v2705 = vor.u32 %v2701, %v2704
      %v2706 = vrot.slane %v2705, 4
      %v2708 = vshll.u32 %v2420, 16
      %v2710 = vrot.slane %v2708, 5
      %v2711 = vsel %vm918, %v2706, %v2710
      %v2712 = vshrl.u32 %v2420, 16
      %v2714 = vrot.slane %v2712, 4
      %v2715 = vor.u32 %v2714, %v2710
      %v2716 = vrot.slane %v2715, 4
      %v2718 = vshll.u32 %v2421, 16
      %v2720 = vrot.slane %v2718, 5
      %v2721 = vsel %vm918, %v2716, %v2720
      %v2723 = vshrl.u32 %v2422, 16
      %v2725 = vrot.slane %v2723, 4
      %v2726 = vshll.u32 %v2422, 16
      %v2728 = vrot.slane %v2726, 5
      %v2729 = vor.u32 %v2725, %v2728
      %v2730 = vrot.slane %v2729, 4
      %v2732 = vshll.u32 %v2423, 16
      %v2734 = vrot.slane %v2732, 5
      %v2735 = vsel %vm918, %v2730, %v2734
      %v2736 = vshrl.u32 %v2423, 16
      %v2738 = vrot.slane %v2736, 4
      %v2739 = vor.u32 %v2738, %v2734
      %v2740 = vrot.slane %v2739, 4
      %v2742 = vshll.u32 %v2424, 16
      %v2744 = vrot.slane %v2742, 5
      %v2745 = vsel %vm918, %v2740, %v2744
      %v2747 = vshrl.u32 %v2425, 16
      %v2749 = vrot.slane %v2747, 4
      %v2750 = vshll.u32 %v2425, 16
      %v2752 = vrot.slane %v2750, 5
      %v2753 = vor.u32 %v2749, %v2752
      %v2754 = vrot.slane %v2753, 4
      %v2756 = vshll.u32 %v2426, 16
      %v2758 = vrot.slane %v2756, 5
      %v2759 = vsel %vm918, %v2754, %v2758
      %v2760 = vshrl.u32 %v2426, 16
      %v2762 = vrot.slane %v2760, 4
      %v2763 = vor.u32 %v2762, %v2758
      %v2764 = vrot.slane %v2763, 4
      %v2766 = vshll.u32 %v2427, 16
      %v2768 = vrot.slane %v2766, 5
      %v2769 = vsel %vm918, %v2764, %v2768
      %v2771 = vshrl.u32 %v2428, 16
      %v2773 = vrot.slane %v2771, 4
      %v2774 = vshll.u32 %v2428, 16
      %v2776 = vrot.slane %v2774, 5
      %v2777 = vor.u32 %v2773, %v2776
      %v2778 = vrot.slane %v2777, 4
      %v2780 = vshll.u32 %v2429, 16
      %v2782 = vrot.slane %v2780, 5
      %v2783 = vsel %vm918, %v2778, %v2782
      %v2784 = vshrl.u32 %v2429, 16
      %v2786 = vrot.slane %v2784, 4
      %v2787 = vor.u32 %v2786, %v2782
      %v2788 = vrot.slane %v2787, 4
      %v2790 = vshll.u32 %v2430, 16
      %v2792 = vrot.slane %v2790, 5
      %v2793 = vsel %vm918, %v2788, %v2792
      %v2795 = vshrl.u32 %v2431, 16
      %v2797 = vrot.slane %v2795, 4
      %v2798 = vshll.u32 %v2431, 16
      %v2800 = vrot.slane %v2798, 5
      %v2801 = vor.u32 %v2797, %v2800
      %v2802 = vrot.slane %v2801, 4
      %v2804 = vshll.u32 %v2432, 16
      %v2806 = vrot.slane %v2804, 5
      %v2807 = vsel %vm918, %v2802, %v2806
      %v2808 = vshrl.u32 %v2432, 16
      %v2810 = vrot.slane %v2808, 4
      %v2811 = vor.u32 %v2810, %v2806
      %v2812 = vrot.slane %v2811, 4
      %v2814 = vshll.u32 %v2433, 16
      %v2816 = vrot.slane %v2814, 5
      %v2817 = vsel %vm918, %v2812, %v2816
      %s2818 = scalar_lea.vmem %s2, 8
      %v2819 = vld [vmem:[%s2818] sm:$0x3]
      %v2820 = vunpack.c.l.b16 %v2447
      %v2821 = vunpack.c.l.b16 %v2457
      %v2822 = vunpack.c.l.b16 %v2471
      %v2823 = vunpack.c.l.b16 %v2481
      %v2824 = vunpack.c.l.b16 %v2495
      %v2825 = vunpack.c.l.b16 %v2505
      %v2826 = vunpack.c.l.b16 %v2519
      %v2827 = vunpack.c.l.b16 %v2529
      %v2828 = vunpack.c.l.b16 %v2543
      %v2829 = vunpack.c.l.b16 %v2553
      %v2830 = vunpack.c.l.b16 %v2567
      %v2831 = vunpack.c.l.b16 %v2577
      %v2832 = vunpack.c.l.b16 %v2591
      %v2833 = vunpack.c.l.b16 %v2601
      %v2834 = vunpack.c.l.b16 %v2615
      %v2835 = vunpack.c.l.b16 %v2625
      %v2836 = vunpack.c.l.b16 %v2639
      %v2837 = vunpack.c.l.b16 %v2649
      %v2838 = vunpack.c.l.b16 %v2663
      %v2839 = vunpack.c.l.b16 %v2673
      %v2840 = vunpack.c.l.b16 %v2687
      %v2841 = vunpack.c.l.b16 %v2697
      %v2842 = vunpack.c.l.b16 %v2711
      %v2843 = vunpack.c.l.b16 %v2721
      %v2844 = vunpack.c.l.b16 %v2735
      %v2845 = vunpack.c.l.b16 %v2745
      %v2846 = vunpack.c.l.b16 %v2759
      %v2847 = vunpack.c.l.b16 %v2769
      %v2848 = vunpack.c.l.b16 %v2783
      %v2849 = vunpack.c.l.b16 %v2793
      %v2850 = vunpack.c.l.b16 %v2807
      %v2851 = vunpack.c.l.b16 %v2817
      %v2852 = vpack.c.b16 %v2821, %v2820
      %v2853 = vpack.c.b16 %v2823, %v2822
      %v2854 = vpack.c.b16 %v2825, %v2824
      %v2855 = vpack.c.b16 %v2827, %v2826
      %v2856 = vpack.c.b16 %v2829, %v2828
      %v2857 = vpack.c.b16 %v2831, %v2830
      %v2858 = vpack.c.b16 %v2833, %v2832
      %v2859 = vpack.c.b16 %v2835, %v2834
      %v2860 = vpack.c.b16 %v2837, %v2836
      %v2861 = vpack.c.b16 %v2839, %v2838
      %v2862 = vpack.c.b16 %v2841, %v2840
      %v2863 = vpack.c.b16 %v2843, %v2842
      %v2864 = vpack.c.b16 %v2845, %v2844
      %v2865 = vpack.c.b16 %v2847, %v2846
      %v2866 = vpack.c.b16 %v2849, %v2848
      %v2867 = vpack.c.b16 %v2851, %v2850
      %v2869 = vsel %vm1353, %v2852, 0
      %v2872 = vsel %vm1353, %v2853, 0
      %v2875 = vsel %vm1353, %v2854, 0
      %v2878 = vsel %vm1353, %v2855, 0
      %v2881 = vsel %vm1353, %v2856, 0
      %v2884 = vsel %vm1353, %v2857, 0
      %v2887 = vsel %vm1353, %v2858, 0
      %v2890 = vsel %vm1353, %v2859, 0
      %v2893 = vsel %vm1353, %v2860, 0
      %v2896 = vsel %vm1353, %v2861, 0
      %v2899 = vsel %vm1353, %v2862, 0
      %v2902 = vsel %vm1353, %v2863, 0
      %v2905 = vsel %vm1353, %v2864, 0
      %v2908 = vsel %vm1353, %v2865, 0
      %v2911 = vsel %vm1353, %v2866, 0
      %v2914 = vsel %vm1353, %v2867, 0
      %v2917 = vsel %vm1402, %v2819, 0
      %2919 = vmatpush.bf16.msra.mxu0 0
      %2920 = vmatpush.bf16.msra.mxu0 0
      %2921 = vmatpush.bf16.msra.mxu0 0
      %2922 = vmatpush.bf16.msra.mxu0 0
      %2923 = vmatpush.bf16.msra.mxu0 0
      %2924 = vmatpush.bf16.msra.mxu0 0
      %2925 = vmatpush.bf16.msra.mxu0 0
      %2926 = vmatpush.bf16.msra.mxu0 %v2917
      %2927 = vmatmul.bf16.gmra.mxu0 %v2869
      %v2928 = vpop.f32.mrf.mxu0
      %v2929 = vadd.f32 0.0, %v2928
      %v2930 = vpop.f32.mrf.mxu0
      %v2931 = vadd.f32 0.0, %v2930
      %2932 = vmatmul.bf16.gmra.mxu0 %v2872
      %v2933 = vpop.f32.mrf.mxu0
      %v2934 = vadd.f32 0.0, %v2933
      %v2935 = vpop.f32.mrf.mxu0
      %v2936 = vadd.f32 0.0, %v2935
      %2937 = vmatmul.bf16.gmra.mxu0 %v2875
      %v2938 = vpop.f32.mrf.mxu0
      %v2939 = vadd.f32 0.0, %v2938
      %v2940 = vpop.f32.mrf.mxu0
      %v2941 = vadd.f32 0.0, %v2940
      %2942 = vmatmul.bf16.gmra.mxu0 %v2878
      %v2943 = vpop.f32.mrf.mxu0
      %v2944 = vadd.f32 0.0, %v2943
      %v2945 = vpop.f32.mrf.mxu0
      %v2946 = vadd.f32 0.0, %v2945
      %2947 = vmatmul.bf16.gmra.mxu0 %v2881
      %v2948 = vpop.f32.mrf.mxu0
      %v2949 = vadd.f32 0.0, %v2948
      %v2950 = vpop.f32.mrf.mxu0
      %v2951 = vadd.f32 0.0, %v2950
      %2952 = vmatmul.bf16.gmra.mxu0 %v2884
      %v2953 = vpop.f32.mrf.mxu0
      %v2954 = vadd.f32 0.0, %v2953
      %v2955 = vpop.f32.mrf.mxu0
      %v2956 = vadd.f32 0.0, %v2955
      %2957 = vmatmul.bf16.gmra.mxu0 %v2887
      %v2958 = vpop.f32.mrf.mxu0
      %v2959 = vadd.f32 0.0, %v2958
      %v2960 = vpop.f32.mrf.mxu0
      %v2961 = vadd.f32 0.0, %v2960
      %2962 = vmatmul.bf16.gmra.mxu0 %v2890
      %v2963 = vpop.f32.mrf.mxu0
      %v2964 = vadd.f32 0.0, %v2963
      %v2965 = vpop.f32.mrf.mxu0
      %v2966 = vadd.f32 0.0, %v2965
      %2967 = vmatmul.bf16.gmra.mxu0 %v2893
      %v2968 = vpop.f32.mrf.mxu0
      %v2969 = vadd.f32 0.0, %v2968
      %v2970 = vpop.f32.mrf.mxu0
      %v2971 = vadd.f32 0.0, %v2970
      %2972 = vmatmul.bf16.gmra.mxu0 %v2896
      %v2973 = vpop.f32.mrf.mxu0
      %v2974 = vadd.f32 0.0, %v2973
      %v2975 = vpop.f32.mrf.mxu0
      %v2976 = vadd.f32 0.0, %v2975
      %2977 = vmatmul.bf16.gmra.mxu0 %v2899
      %v2978 = vpop.f32.mrf.mxu0
      %v2979 = vadd.f32 0.0, %v2978
      %v2980 = vpop.f32.mrf.mxu0
      %v2981 = vadd.f32 0.0, %v2980
      %2982 = vmatmul.bf16.gmra.mxu0 %v2902
      %v2983 = vpop.f32.mrf.mxu0
      %v2984 = vadd.f32 0.0, %v2983
      %v2985 = vpop.f32.mrf.mxu0
      %v2986 = vadd.f32 0.0, %v2985
      %2987 = vmatmul.bf16.gmra.mxu0 %v2905
      %v2988 = vpop.f32.mrf.mxu0
      %v2989 = vadd.f32 0.0, %v2988
      %v2990 = vpop.f32.mrf.mxu0
      %v2991 = vadd.f32 0.0, %v2990
      %2992 = vmatmul.bf16.gmra.mxu0 %v2908
      %v2993 = vpop.f32.mrf.mxu0
      %v2994 = vadd.f32 0.0, %v2993
      %v2995 = vpop.f32.mrf.mxu0
      %v2996 = vadd.f32 0.0, %v2995
      %2997 = vmatmul.bf16.gmra.mxu0 %v2911
      %v2998 = vpop.f32.mrf.mxu0
      %v2999 = vadd.f32 0.0, %v2998
      %v3000 = vpop.f32.mrf.mxu0
      %v3001 = vadd.f32 0.0, %v3000
      %3002 = vmatmul.bf16.gmra.mxu0 %v2914
      %v3003 = vpop.f32.mrf.mxu0
      %v3004 = vadd.f32 0.0, %v3003
      %v3005 = vpop.f32.mrf.mxu0
      %v3006 = vadd.f32 0.0, %v3005
      %3007 = vdwg.mxu0
      %v3008 = vadd.f32 %v2354, %v2929
      %v3009 = vadd.f32 %v2355, %v2931
      %v3010 = vadd.f32 %v2356, %v2934
      %v3011 = vadd.f32 %v2357, %v2936
      %v3012 = vadd.f32 %v2358, %v2939
      %v3013 = vadd.f32 %v2359, %v2941
      %v3014 = vadd.f32 %v2360, %v2944
      %v3015 = vadd.f32 %v2361, %v2946
      %v3016 = vadd.f32 %v2362, %v2949
      %v3017 = vadd.f32 %v2363, %v2951
      %v3018 = vadd.f32 %v2364, %v2954
      %v3019 = vadd.f32 %v2365, %v2956
      %v3020 = vadd.f32 %v2366, %v2959
      %v3021 = vadd.f32 %v2367, %v2961
      %v3022 = vadd.f32 %v2368, %v2964
      %v3023 = vadd.f32 %v2369, %v2966
      %v3024 = vadd.f32 %v2370, %v2969
      %v3025 = vadd.f32 %v2371, %v2971
      %v3026 = vadd.f32 %v2372, %v2974
      %v3027 = vadd.f32 %v2373, %v2976
      %v3028 = vadd.f32 %v2374, %v2979
      %v3029 = vadd.f32 %v2375, %v2981
      %v3030 = vadd.f32 %v2376, %v2984
      %v3031 = vadd.f32 %v2377, %v2986
      %v3032 = vadd.f32 %v2378, %v2989
      %v3033 = vadd.f32 %v2379, %v2991
      %v3034 = vadd.f32 %v2380, %v2994
      %v3035 = vadd.f32 %v2381, %v2996
      %v3036 = vadd.f32 %v2382, %v2999
      %v3037 = vadd.f32 %v2383, %v3001
      %v3038 = vadd.f32 %v2384, %v3004
      %v3039 = vadd.f32 %v2385, %v3006
      %v3040 = vld [vmem:[%s726] sm:$0xe]
      %v3041 = vld [vmem:[%s726 + $0xc] sm:$0xe]
      %v3042 = vld [vmem:[%s726 + $0x18] sm:$0xe]
      %v3043 = vld [vmem:[%s726 + $0x24] sm:$0xe]
      %v3044 = vld [vmem:[%s726 + $0x30] sm:$0xe]
      %v3045 = vld [vmem:[%s726 + $0x3c] sm:$0xe]
      %v3046 = vld [vmem:[%s726 + $0x48] sm:$0xe]
      %v3047 = vld [vmem:[%s726 + $0x54] sm:$0xe]
      %v3048 = vld [vmem:[%s726 + $0x60] sm:$0xe]
      %v3049 = vld [vmem:[%s726 + $0x6c] sm:$0xe]
      %v3050 = vld [vmem:[%s726 + $0x78] sm:$0xe]
      %v3051 = vld [vmem:[%s726 + $0x84] sm:$0xe]
      %v3052 = vld [vmem:[%s726 + $0x90] sm:$0xe]
      %v3053 = vld [vmem:[%s726 + $0x9c] sm:$0xe]
      %v3054 = vld [vmem:[%s726 + $0xa8] sm:$0xe]
      %v3055 = vld [vmem:[%s726 + $0xb4] sm:$0xe]
      %v3104 = vrot.slane %v3040, 5
      %v3105 = vrot.slane %v3104, 4
      %v3106 = vrot.slane %v2387, 5
      %v3107 = vsel %vm1765, %v3105, %v3106
      %v3108 = vrot.slane %v3106, 4
      %v3109 = vrot.slane %v2388, 5
      %v3110 = vsel %vm1765, %v3108, %v3109
      %v3111 = vrot.slane %v3041, 5
      %v3112 = vrot.slane %v3111, 4
      %v3113 = vrot.slane %v2390, 5
      %v3114 = vsel %vm1765, %v3112, %v3113
      %v3115 = vrot.slane %v3113, 4
      %v3116 = vrot.slane %v2391, 5
      %v3117 = vsel %vm1765, %v3115, %v3116
      %v3118 = vrot.slane %v3042, 5
      %v3119 = vrot.slane %v3118, 4
      %v3120 = vrot.slane %v2393, 5
      %v3121 = vsel %vm1765, %v3119, %v3120
      %v3122 = vrot.slane %v3120, 4
      %v3123 = vrot.slane %v2394, 5
      %v3124 = vsel %vm1765, %v3122, %v3123
      %v3125 = vrot.slane %v3043, 5
      %v3126 = vrot.slane %v3125, 4
      %v3127 = vrot.slane %v2396, 5
      %v3128 = vsel %vm1765, %v3126, %v3127
      %v3129 = vrot.slane %v3127, 4
      %v3130 = vrot.slane %v2397, 5
      %v3131 = vsel %vm1765, %v3129, %v3130
      %v3132 = vrot.slane %v3044, 5
      %v3133 = vrot.slane %v3132, 4
      %v3134 = vrot.slane %v2399, 5
      %v3135 = vsel %vm1765, %v3133, %v3134
      %v3136 = vrot.slane %v3134, 4
      %v3137 = vrot.slane %v2400, 5
      %v3138 = vsel %vm1765, %v3136, %v3137
      %v3139 = vrot.slane %v3045, 5
      %v3140 = vrot.slane %v3139, 4
      %v3141 = vrot.slane %v2402, 5
      %v3142 = vsel %vm1765, %v3140, %v3141
      %v3143 = vrot.slane %v3141, 4
      %v3144 = vrot.slane %v2403, 5
      %v3145 = vsel %vm1765, %v3143, %v3144
      %v3146 = vrot.slane %v3046, 5
      %v3147 = vrot.slane %v3146, 4
      %v3148 = vrot.slane %v2405, 5
      %v3149 = vsel %vm1765, %v3147, %v3148
      %v3150 = vrot.slane %v3148, 4
      %v3151 = vrot.slane %v2406, 5
      %v3152 = vsel %vm1765, %v3150, %v3151
      %v3153 = vrot.slane %v3047, 5
      %v3154 = vrot.slane %v3153, 4
      %v3155 = vrot.slane %v2408, 5
      %v3156 = vsel %vm1765, %v3154, %v3155
      %v3157 = vrot.slane %v3155, 4
      %v3158 = vrot.slane %v2409, 5
      %v3159 = vsel %vm1765, %v3157, %v3158
      %v3160 = vrot.slane %v3048, 5
      %v3161 = vrot.slane %v3160, 4
      %v3162 = vrot.slane %v2411, 5
      %v3163 = vsel %vm1765, %v3161, %v3162
      %v3164 = vrot.slane %v3162, 4
      %v3165 = vrot.slane %v2412, 5
      %v3166 = vsel %vm1765, %v3164, %v3165
      %v3167 = vrot.slane %v3049, 5
      %v3168 = vrot.slane %v3167, 4
      %v3169 = vrot.slane %v2414, 5
      %v3170 = vsel %vm1765, %v3168, %v3169
      %v3171 = vrot.slane %v3169, 4
      %v3172 = vrot.slane %v2415, 5
      %v3173 = vsel %vm1765, %v3171, %v3172
      %v3174 = vrot.slane %v3050, 5
      %v3175 = vrot.slane %v3174, 4
      %v3176 = vrot.slane %v2417, 5
      %v3177 = vsel %vm1765, %v3175, %v3176
      %v3178 = vrot.slane %v3176, 4
      %v3179 = vrot.slane %v2418, 5
      %v3180 = vsel %vm1765, %v3178, %v3179
      %v3181 = vrot.slane %v3051, 5
      %v3182 = vrot.slane %v3181, 4
      %v3183 = vrot.slane %v2420, 5
      %v3184 = vsel %vm1765, %v3182, %v3183
      %v3185 = vrot.slane %v3183, 4
      %v3186 = vrot.slane %v2421, 5
      %v3187 = vsel %vm1765, %v3185, %v3186
      %v3188 = vrot.slane %v3052, 5
      %v3189 = vrot.slane %v3188, 4
      %v3190 = vrot.slane %v2423, 5
      %v3191 = vsel %vm1765, %v3189, %v3190
      %v3192 = vrot.slane %v3190, 4
      %v3193 = vrot.slane %v2424, 5
      %v3194 = vsel %vm1765, %v3192, %v3193
      %v3195 = vrot.slane %v3053, 5
      %v3196 = vrot.slane %v3195, 4
      %v3197 = vrot.slane %v2426, 5
      %v3198 = vsel %vm1765, %v3196, %v3197
      %v3199 = vrot.slane %v3197, 4
      %v3200 = vrot.slane %v2427, 5
      %v3201 = vsel %vm1765, %v3199, %v3200
      %v3202 = vrot.slane %v3054, 5
      %v3203 = vrot.slane %v3202, 4
      %v3204 = vrot.slane %v2429, 5
      %v3205 = vsel %vm1765, %v3203, %v3204
      %v3206 = vrot.slane %v3204, 4
      %v3207 = vrot.slane %v2430, 5
      %v3208 = vsel %vm1765, %v3206, %v3207
      %v3209 = vrot.slane %v3055, 5
      %v3210 = vrot.slane %v3209, 4
      %v3211 = vrot.slane %v2432, 5
      %v3212 = vsel %vm1765, %v3210, %v3211
      %v3213 = vrot.slane %v3211, 4
      %v3214 = vrot.slane %v2433, 5
      %v3215 = vsel %vm1765, %v3213, %v3214
      %s3216 = scalar_lea.vmem %s2, 10
      %v3217 = vld [vmem:[%s3216] sm:$0x3]
      %v3218 = vunpack.c.l.b16 %v3107
      %v3219 = vunpack.c.l.b16 %v3110
      %v3220 = vunpack.c.l.b16 %v3114
      %v3221 = vunpack.c.l.b16 %v3117
      %v3222 = vunpack.c.l.b16 %v3121
      %v3223 = vunpack.c.l.b16 %v3124
      %v3224 = vunpack.c.l.b16 %v3128
      %v3225 = vunpack.c.l.b16 %v3131
      %v3226 = vunpack.c.l.b16 %v3135
      %v3227 = vunpack.c.l.b16 %v3138
      %v3228 = vunpack.c.l.b16 %v3142
      %v3229 = vunpack.c.l.b16 %v3145
      %v3230 = vunpack.c.l.b16 %v3149
      %v3231 = vunpack.c.l.b16 %v3152
      %v3232 = vunpack.c.l.b16 %v3156
      %v3233 = vunpack.c.l.b16 %v3159
      %v3234 = vunpack.c.l.b16 %v3163
      %v3235 = vunpack.c.l.b16 %v3166
      %v3236 = vunpack.c.l.b16 %v3170
      %v3237 = vunpack.c.l.b16 %v3173
      %v3238 = vunpack.c.l.b16 %v3177
      %v3239 = vunpack.c.l.b16 %v3180
      %v3240 = vunpack.c.l.b16 %v3184
      %v3241 = vunpack.c.l.b16 %v3187
      %v3242 = vunpack.c.l.b16 %v3191
      %v3243 = vunpack.c.l.b16 %v3194
      %v3244 = vunpack.c.l.b16 %v3198
      %v3245 = vunpack.c.l.b16 %v3201
      %v3246 = vunpack.c.l.b16 %v3205
      %v3247 = vunpack.c.l.b16 %v3208
      %v3248 = vunpack.c.l.b16 %v3212
      %v3249 = vunpack.c.l.b16 %v3215
      %v3250 = vpack.c.b16 %v3219, %v3218
      %v3251 = vpack.c.b16 %v3221, %v3220
      %v3252 = vpack.c.b16 %v3223, %v3222
      %v3253 = vpack.c.b16 %v3225, %v3224
      %v3254 = vpack.c.b16 %v3227, %v3226
      %v3255 = vpack.c.b16 %v3229, %v3228
      %v3256 = vpack.c.b16 %v3231, %v3230
      %v3257 = vpack.c.b16 %v3233, %v3232
      %v3258 = vpack.c.b16 %v3235, %v3234
      %v3259 = vpack.c.b16 %v3237, %v3236
      %v3260 = vpack.c.b16 %v3239, %v3238
      %v3261 = vpack.c.b16 %v3241, %v3240
      %v3262 = vpack.c.b16 %v3243, %v3242
      %v3263 = vpack.c.b16 %v3245, %v3244
      %v3264 = vpack.c.b16 %v3247, %v3246
      %v3265 = vpack.c.b16 %v3249, %v3248
      %v3267 = vsel %vm1353, %v3250, 0
      %v3270 = vsel %vm1353, %v3251, 0
      %v3273 = vsel %vm1353, %v3252, 0
      %v3276 = vsel %vm1353, %v3253, 0
      %v3279 = vsel %vm1353, %v3254, 0
      %v3282 = vsel %vm1353, %v3255, 0
      %v3285 = vsel %vm1353, %v3256, 0
      %v3288 = vsel %vm1353, %v3257, 0
      %v3291 = vsel %vm1353, %v3258, 0
      %v3294 = vsel %vm1353, %v3259, 0
      %v3297 = vsel %vm1353, %v3260, 0
      %v3300 = vsel %vm1353, %v3261, 0
      %v3303 = vsel %vm1353, %v3262, 0
      %v3306 = vsel %vm1353, %v3263, 0
      %v3309 = vsel %vm1353, %v3264, 0
      %v3312 = vsel %vm1353, %v3265, 0
      %v3315 = vsel %vm1402, %v3217, 0
      %3317 = vmatpush.bf16.msra.mxu0 0
      %3318 = vmatpush.bf16.msra.mxu0 0
      %3319 = vmatpush.bf16.msra.mxu0 0
      %3320 = vmatpush.bf16.msra.mxu0 0
      %3321 = vmatpush.bf16.msra.mxu0 0
      %3322 = vmatpush.bf16.msra.mxu0 0
      %3323 = vmatpush.bf16.msra.mxu0 0
      %3324 = vmatpush.bf16.msra.mxu0 %v3315
      %3325 = vmatmul.bf16.gmra.mxu0 %v3267
      %v3326 = vpop.f32.mrf.mxu0
      %v3327 = vadd.f32 0.0, %v3326
      %v3328 = vpop.f32.mrf.mxu0
      %v3329 = vadd.f32 0.0, %v3328
      %3330 = vmatmul.bf16.gmra.mxu0 %v3270
      %v3331 = vpop.f32.mrf.mxu0
      %v3332 = vadd.f32 0.0, %v3331
      %v3333 = vpop.f32.mrf.mxu0
      %v3334 = vadd.f32 0.0, %v3333
      %3335 = vmatmul.bf16.gmra.mxu0 %v3273
      %v3336 = vpop.f32.mrf.mxu0
      %v3337 = vadd.f32 0.0, %v3336
      %v3338 = vpop.f32.mrf.mxu0
      %v3339 = vadd.f32 0.0, %v3338
      %3340 = vmatmul.bf16.gmra.mxu0 %v3276
      %v3341 = vpop.f32.mrf.mxu0
      %v3342 = vadd.f32 0.0, %v3341
      %v3343 = vpop.f32.mrf.mxu0
      %v3344 = vadd.f32 0.0, %v3343
      %3345 = vmatmul.bf16.gmra.mxu0 %v3279
      %v3346 = vpop.f32.mrf.mxu0
      %v3347 = vadd.f32 0.0, %v3346
      %v3348 = vpop.f32.mrf.mxu0
      %v3349 = vadd.f32 0.0, %v3348
      %3350 = vmatmul.bf16.gmra.mxu0 %v3282
      %v3351 = vpop.f32.mrf.mxu0
      %v3352 = vadd.f32 0.0, %v3351
      %v3353 = vpop.f32.mrf.mxu0
      %v3354 = vadd.f32 0.0, %v3353
      %3355 = vmatmul.bf16.gmra.mxu0 %v3285
      %v3356 = vpop.f32.mrf.mxu0
      %v3357 = vadd.f32 0.0, %v3356
      %v3358 = vpop.f32.mrf.mxu0
      %v3359 = vadd.f32 0.0, %v3358
      %3360 = vmatmul.bf16.gmra.mxu0 %v3288
      %v3361 = vpop.f32.mrf.mxu0
      %v3362 = vadd.f32 0.0, %v3361
      %v3363 = vpop.f32.mrf.mxu0
      %v3364 = vadd.f32 0.0, %v3363
      %3365 = vmatmul.bf16.gmra.mxu0 %v3291
      %v3366 = vpop.f32.mrf.mxu0
      %v3367 = vadd.f32 0.0, %v3366
      %v3368 = vpop.f32.mrf.mxu0
      %v3369 = vadd.f32 0.0, %v3368
      %3370 = vmatmul.bf16.gmra.mxu0 %v3294
      %v3371 = vpop.f32.mrf.mxu0
      %v3372 = vadd.f32 0.0, %v3371
      %v3373 = vpop.f32.mrf.mxu0
      %v3374 = vadd.f32 0.0, %v3373
      %3375 = vmatmul.bf16.gmra.mxu0 %v3297
      %v3376 = vpop.f32.mrf.mxu0
      %v3377 = vadd.f32 0.0, %v3376
      %v3378 = vpop.f32.mrf.mxu0
      %v3379 = vadd.f32 0.0, %v3378
      %3380 = vmatmul.bf16.gmra.mxu0 %v3300
      %v3381 = vpop.f32.mrf.mxu0
      %v3382 = vadd.f32 0.0, %v3381
      %v3383 = vpop.f32.mrf.mxu0
      %v3384 = vadd.f32 0.0, %v3383
      %3385 = vmatmul.bf16.gmra.mxu0 %v3303
      %v3386 = vpop.f32.mrf.mxu0
      %v3387 = vadd.f32 0.0, %v3386
      %v3388 = vpop.f32.mrf.mxu0
      %v3389 = vadd.f32 0.0, %v3388
      %3390 = vmatmul.bf16.gmra.mxu0 %v3306
      %v3391 = vpop.f32.mrf.mxu0
      %v3392 = vadd.f32 0.0, %v3391
      %v3393 = vpop.f32.mrf.mxu0
      %v3394 = vadd.f32 0.0, %v3393
      %3395 = vmatmul.bf16.gmra.mxu0 %v3309
      %v3396 = vpop.f32.mrf.mxu0
      %v3397 = vadd.f32 0.0, %v3396
      %v3398 = vpop.f32.mrf.mxu0
      %v3399 = vadd.f32 0.0, %v3398
      %3400 = vmatmul.bf16.gmra.mxu0 %v3312
      %v3401 = vpop.f32.mrf.mxu0
      %v3402 = vadd.f32 0.0, %v3401
      %v3403 = vpop.f32.mrf.mxu0
      %v3404 = vadd.f32 0.0, %v3403
      %3405 = vdwg.mxu0
      %v3406 = vadd.f32 %v3008, %v3327
      %v3407 = vadd.f32 %v3009, %v3329
      %v3408 = vadd.f32 %v3010, %v3332
      %v3409 = vadd.f32 %v3011, %v3334
      %v3410 = vadd.f32 %v3012, %v3337
      %v3411 = vadd.f32 %v3013, %v3339
      %v3412 = vadd.f32 %v3014, %v3342
      %v3413 = vadd.f32 %v3015, %v3344
      %v3414 = vadd.f32 %v3016, %v3347
      %v3415 = vadd.f32 %v3017, %v3349
      %v3416 = vadd.f32 %v3018, %v3352
      %v3417 = vadd.f32 %v3019, %v3354
      %v3418 = vadd.f32 %v3020, %v3357
      %v3419 = vadd.f32 %v3021, %v3359
      %v3420 = vadd.f32 %v3022, %v3362
      %v3421 = vadd.f32 %v3023, %v3364
      %v3422 = vadd.f32 %v3024, %v3367
      %v3423 = vadd.f32 %v3025, %v3369
      %v3424 = vadd.f32 %v3026, %v3372
      %v3425 = vadd.f32 %v3027, %v3374
      %v3426 = vadd.f32 %v3028, %v3377
      %v3427 = vadd.f32 %v3029, %v3379
      %v3428 = vadd.f32 %v3030, %v3382
      %v3429 = vadd.f32 %v3031, %v3384
      %v3430 = vadd.f32 %v3032, %v3387
      %v3431 = vadd.f32 %v3033, %v3389
      %v3432 = vadd.f32 %v3034, %v3392
      %v3433 = vadd.f32 %v3035, %v3394
      %v3434 = vadd.f32 %v3036, %v3397
      %v3435 = vadd.f32 %v3037, %v3399
      %v3436 = vadd.f32 %v3038, %v3402
      %v3437 = vadd.f32 %v3039, %v3404
      %s3438 = scalar_lea.vmem [#allocation2], 24
      %v3439 = vld [vmem:[%s3438] sm:$0xf]
      %v3440 = vld [vmem:[%s3438 + $0x4] sm:$0xf]
      %v3441 = vld [vmem:[%s3438 + $0xc] sm:$0xf]
      %v3442 = vld [vmem:[%s3438 + $0x10] sm:$0xf]
      %v3443 = vld [vmem:[%s3438 + $0x18] sm:$0xf]
      %v3444 = vld [vmem:[%s3438 + $0x1c] sm:$0xf]
      %v3445 = vld [vmem:[%s3438 + $0x24] sm:$0xf]
      %v3446 = vld [vmem:[%s3438 + $0x28] sm:$0xf]
      %v3447 = vld [vmem:[%s3438 + $0x30] sm:$0xf]
      %v3448 = vld [vmem:[%s3438 + $0x34] sm:$0xf]
      %v3449 = vld [vmem:[%s3438 + $0x3c] sm:$0xf]
      %v3450 = vld [vmem:[%s3438 + $0x40] sm:$0xf]
      %v3451 = vld [vmem:[%s3438 + $0x48] sm:$0xf]
      %v3452 = vld [vmem:[%s3438 + $0x4c] sm:$0xf]
      %v3453 = vld [vmem:[%s3438 + $0x54] sm:$0xf]
      %v3454 = vld [vmem:[%s3438 + $0x58] sm:$0xf]
      %v3455 = vld [vmem:[%s3438 + $0x60] sm:$0xf]
      %v3456 = vld [vmem:[%s3438 + $0x64] sm:$0xf]
      %v3457 = vld [vmem:[%s3438 + $0x6c] sm:$0xf]
      %v3458 = vld [vmem:[%s3438 + $0x70] sm:$0xf]
      %v3459 = vld [vmem:[%s3438 + $0x78] sm:$0xf]
      %v3460 = vld [vmem:[%s3438 + $0x7c] sm:$0xf]
      %v3461 = vld [vmem:[%s3438 + $0x84] sm:$0xf]
      %v3462 = vld [vmem:[%s3438 + $0x88] sm:$0xf]
      %v3463 = vld [vmem:[%s3438 + $0x90] sm:$0xf]
      %v3464 = vld [vmem:[%s3438 + $0x94] sm:$0xf]
      %v3465 = vld [vmem:[%s3438 + $0x9c] sm:$0xf]
      %v3466 = vld [vmem:[%s3438 + $0xa0] sm:$0xf]
      %v3467 = vld [vmem:[%s3438 + $0xa8] sm:$0xf]
      %v3468 = vld [vmem:[%s3438 + $0xac] sm:$0xf]
      %v3469 = vld [vmem:[%s3438 + $0xb4] sm:$0xf]
      %v3470 = vld [vmem:[%s3438 + $0xb8] sm:$0xf]
      %s3471 = scalar_lea.vmem %s2, 12
      %v3472 = vld [vmem:[%s3471] sm:$0x3]
      %v3505 = vunpack.c.l.b16 %v3439
      %v3506 = vunpack.c.l.b16 %v3440
      %v3507 = vunpack.c.l.b16 %v3441
      %v3508 = vunpack.c.l.b16 %v3442
      %v3509 = vunpack.c.l.b16 %v3443
      %v3510 = vunpack.c.l.b16 %v3444
      %v3511 = vunpack.c.l.b16 %v3445
      %v3512 = vunpack.c.l.b16 %v3446
      %v3513 = vunpack.c.l.b16 %v3447
      %v3514 = vunpack.c.l.b16 %v3448
      %v3515 = vunpack.c.l.b16 %v3449
      %v3516 = vunpack.c.l.b16 %v3450
      %v3517 = vunpack.c.l.b16 %v3451
      %v3518 = vunpack.c.l.b16 %v3452
      %v3519 = vunpack.c.l.b16 %v3453
      %v3520 = vunpack.c.l.b16 %v3454
      %v3521 = vunpack.c.l.b16 %v3455
      %v3522 = vunpack.c.l.b16 %v3456
      %v3523 = vunpack.c.l.b16 %v3457
      %v3524 = vunpack.c.l.b16 %v3458
      %v3525 = vunpack.c.l.b16 %v3459
      %v3526 = vunpack.c.l.b16 %v3460
      %v3527 = vunpack.c.l.b16 %v3461
      %v3528 = vunpack.c.l.b16 %v3462
      %v3529 = vunpack.c.l.b16 %v3463
      %v3530 = vunpack.c.l.b16 %v3464
      %v3531 = vunpack.c.l.b16 %v3465
      %v3532 = vunpack.c.l.b16 %v3466
      %v3533 = vunpack.c.l.b16 %v3467
      %v3534 = vunpack.c.l.b16 %v3468
      %v3535 = vunpack.c.l.b16 %v3469
      %v3536 = vunpack.c.l.b16 %v3470
      %v3537 = vpack.c.b16 %v3506, %v3505
      %v3538 = vpack.c.b16 %v3508, %v3507
      %v3539 = vpack.c.b16 %v3510, %v3509
      %v3540 = vpack.c.b16 %v3512, %v3511
      %v3541 = vpack.c.b16 %v3514, %v3513
      %v3542 = vpack.c.b16 %v3516, %v3515
      %v3543 = vpack.c.b16 %v3518, %v3517
      %v3544 = vpack.c.b16 %v3520, %v3519
      %v3545 = vpack.c.b16 %v3522, %v3521
      %v3546 = vpack.c.b16 %v3524, %v3523
      %v3547 = vpack.c.b16 %v3526, %v3525
      %v3548 = vpack.c.b16 %v3528, %v3527
      %v3549 = vpack.c.b16 %v3530, %v3529
      %v3550 = vpack.c.b16 %v3532, %v3531
      %v3551 = vpack.c.b16 %v3534, %v3533
      %v3552 = vpack.c.b16 %v3536, %v3535
      %v3554 = vsel %vm1353, %v3537, 0
      %v3557 = vsel %vm1353, %v3538, 0
      %v3560 = vsel %vm1353, %v3539, 0
      %v3563 = vsel %vm1353, %v3540, 0
      %v3566 = vsel %vm1353, %v3541, 0
      %v3569 = vsel %vm1353, %v3542, 0
      %v3572 = vsel %vm1353, %v3543, 0
      %v3575 = vsel %vm1353, %v3544, 0
      %v3578 = vsel %vm1353, %v3545, 0
      %v3581 = vsel %vm1353, %v3546, 0
      %v3584 = vsel %vm1353, %v3547, 0
      %v3587 = vsel %vm1353, %v3548, 0
      %v3590 = vsel %vm1353, %v3549, 0
      %v3593 = vsel %vm1353, %v3550, 0
      %v3596 = vsel %vm1353, %v3551, 0
      %v3599 = vsel %vm1353, %v3552, 0
      %v3602 = vsel %vm1402, %v3472, 0
      %3604 = vmatpush.bf16.msra.mxu0 0
      %3605 = vmatpush.bf16.msra.mxu0 0
      %3606 = vmatpush.bf16.msra.mxu0 0
      %3607 = vmatpush.bf16.msra.mxu0 0
      %3608 = vmatpush.bf16.msra.mxu0 0
      %3609 = vmatpush.bf16.msra.mxu0 0
      %3610 = vmatpush.bf16.msra.mxu0 0
      %3611 = vmatpush.bf16.msra.mxu0 %v3602
      %3612 = vmatmul.bf16.gmra.mxu0 %v3554
      %v3613 = vpop.f32.mrf.mxu0
      %v3614 = vadd.f32 0.0, %v3613
      %v3615 = vpop.f32.mrf.mxu0
      %v3616 = vadd.f32 0.0, %v3615
      %3617 = vmatmul.bf16.gmra.mxu0 %v3557
      %v3618 = vpop.f32.mrf.mxu0
      %v3619 = vadd.f32 0.0, %v3618
      %v3620 = vpop.f32.mrf.mxu0
      %v3621 = vadd.f32 0.0, %v3620
      %3622 = vmatmul.bf16.gmra.mxu0 %v3560
      %v3623 = vpop.f32.mrf.mxu0
      %v3624 = vadd.f32 0.0, %v3623
      %v3625 = vpop.f32.mrf.mxu0
      %v3626 = vadd.f32 0.0, %v3625
      %3627 = vmatmul.bf16.gmra.mxu0 %v3563
      %v3628 = vpop.f32.mrf.mxu0
      %v3629 = vadd.f32 0.0, %v3628
      %v3630 = vpop.f32.mrf.mxu0
      %v3631 = vadd.f32 0.0, %v3630
      %3632 = vmatmul.bf16.gmra.mxu0 %v3566
      %v3633 = vpop.f32.mrf.mxu0
      %v3634 = vadd.f32 0.0, %v3633
      %v3635 = vpop.f32.mrf.mxu0
      %v3636 = vadd.f32 0.0, %v3635
      %3637 = vmatmul.bf16.gmra.mxu0 %v3569
      %v3638 = vpop.f32.mrf.mxu0
      %v3639 = vadd.f32 0.0, %v3638
      %v3640 = vpop.f32.mrf.mxu0
      %v3641 = vadd.f32 0.0, %v3640
      %3642 = vmatmul.bf16.gmra.mxu0 %v3572
      %v3643 = vpop.f32.mrf.mxu0
      %v3644 = vadd.f32 0.0, %v3643
      %v3645 = vpop.f32.mrf.mxu0
      %v3646 = vadd.f32 0.0, %v3645
      %3647 = vmatmul.bf16.gmra.mxu0 %v3575
      %v3648 = vpop.f32.mrf.mxu0
      %v3649 = vadd.f32 0.0, %v3648
      %v3650 = vpop.f32.mrf.mxu0
      %v3651 = vadd.f32 0.0, %v3650
      %3652 = vmatmul.bf16.gmra.mxu0 %v3578
      %v3653 = vpop.f32.mrf.mxu0
      %v3654 = vadd.f32 0.0, %v3653
      %v3655 = vpop.f32.mrf.mxu0
      %v3656 = vadd.f32 0.0, %v3655
      %3657 = vmatmul.bf16.gmra.mxu0 %v3581
      %v3658 = vpop.f32.mrf.mxu0
      %v3659 = vadd.f32 0.0, %v3658
      %v3660 = vpop.f32.mrf.mxu0
      %v3661 = vadd.f32 0.0, %v3660
      %3662 = vmatmul.bf16.gmra.mxu0 %v3584
      %v3663 = vpop.f32.mrf.mxu0
      %v3664 = vadd.f32 0.0, %v3663
      %v3665 = vpop.f32.mrf.mxu0
      %v3666 = vadd.f32 0.0, %v3665
      %3667 = vmatmul.bf16.gmra.mxu0 %v3587
      %v3668 = vpop.f32.mrf.mxu0
      %v3669 = vadd.f32 0.0, %v3668
      %v3670 = vpop.f32.mrf.mxu0
      %v3671 = vadd.f32 0.0, %v3670
      %3672 = vmatmul.bf16.gmra.mxu0 %v3590
      %v3673 = vpop.f32.mrf.mxu0
      %v3674 = vadd.f32 0.0, %v3673
      %v3675 = vpop.f32.mrf.mxu0
      %v3676 = vadd.f32 0.0, %v3675
      %3677 = vmatmul.bf16.gmra.mxu0 %v3593
      %v3678 = vpop.f32.mrf.mxu0
      %v3679 = vadd.f32 0.0, %v3678
      %v3680 = vpop.f32.mrf.mxu0
      %v3681 = vadd.f32 0.0, %v3680
      %3682 = vmatmul.bf16.gmra.mxu0 %v3596
      %v3683 = vpop.f32.mrf.mxu0
      %v3684 = vadd.f32 0.0, %v3683
      %v3685 = vpop.f32.mrf.mxu0
      %v3686 = vadd.f32 0.0, %v3685
      %3687 = vmatmul.bf16.gmra.mxu0 %v3599
      %v3688 = vpop.f32.mrf.mxu0
      %v3689 = vadd.f32 0.0, %v3688
      %v3690 = vpop.f32.mrf.mxu0
      %v3691 = vadd.f32 0.0, %v3690
      %3692 = vdwg.mxu0
      %v3693 = vadd.f32 %v3406, %v3614
      %v3694 = vadd.f32 %v3407, %v3616
      %v3695 = vadd.f32 %v3408, %v3619
      %v3696 = vadd.f32 %v3409, %v3621
      %v3697 = vadd.f32 %v3410, %v3624
      %v3698 = vadd.f32 %v3411, %v3626
      %v3699 = vadd.f32 %v3412, %v3629
      %v3700 = vadd.f32 %v3413, %v3631
      %v3701 = vadd.f32 %v3414, %v3634
      %v3702 = vadd.f32 %v3415, %v3636
      %v3703 = vadd.f32 %v3416, %v3639
      %v3704 = vadd.f32 %v3417, %v3641
      %v3705 = vadd.f32 %v3418, %v3644
      %v3706 = vadd.f32 %v3419, %v3646
      %v3707 = vadd.f32 %v3420, %v3649
      %v3708 = vadd.f32 %v3421, %v3651
      %v3709 = vadd.f32 %v3422, %v3654
      %v3710 = vadd.f32 %v3423, %v3656
      %v3711 = vadd.f32 %v3424, %v3659
      %v3712 = vadd.f32 %v3425, %v3661
      %v3713 = vadd.f32 %v3426, %v3664
      %v3714 = vadd.f32 %v3427, %v3666
      %v3715 = vadd.f32 %v3428, %v3669
      %v3716 = vadd.f32 %v3429, %v3671
      %v3717 = vadd.f32 %v3430, %v3674
      %v3718 = vadd.f32 %v3431, %v3676
      %v3719 = vadd.f32 %v3432, %v3679
      %v3720 = vadd.f32 %v3433, %v3681
      %v3721 = vadd.f32 %v3434, %v3684
      %v3722 = vadd.f32 %v3435, %v3686
      %v3723 = vadd.f32 %v3436, %v3689
      %v3724 = vadd.f32 %v3437, %v3691
      %v3725 = vld [vmem:[%s3438] sm:$0xf]
      %v3726 = vld [vmem:[%s3438 + $0x4] sm:$0xf]
      %v3727 = vld [vmem:[%s3438 + $0x8] sm:$0x1]
      %v3728 = vld [vmem:[%s3438 + $0xc] sm:$0xf]
      %v3729 = vld [vmem:[%s3438 + $0x10] sm:$0xf]
      %v3730 = vld [vmem:[%s3438 + $0x14] sm:$0x1]
      %v3731 = vld [vmem:[%s3438 + $0x18] sm:$0xf]
      %v3732 = vld [vmem:[%s3438 + $0x1c] sm:$0xf]
      %v3733 = vld [vmem:[%s3438 + $0x20] sm:$0x1]
      %v3734 = vld [vmem:[%s3438 + $0x24] sm:$0xf]
      %v3735 = vld [vmem:[%s3438 + $0x28] sm:$0xf]
      %v3736 = vld [vmem:[%s3438 + $0x2c] sm:$0x1]
      %v3737 = vld [vmem:[%s3438 + $0x30] sm:$0xf]
      %v3738 = vld [vmem:[%s3438 + $0x34] sm:$0xf]
      %v3739 = vld [vmem:[%s3438 + $0x38] sm:$0x1]
      %v3740 = vld [vmem:[%s3438 + $0x3c] sm:$0xf]
      %v3741 = vld [vmem:[%s3438 + $0x40] sm:$0xf]
      %v3742 = vld [vmem:[%s3438 + $0x44] sm:$0x1]
      %v3743 = vld [vmem:[%s3438 + $0x48] sm:$0xf]
      %v3744 = vld [vmem:[%s3438 + $0x4c] sm:$0xf]
      %v3745 = vld [vmem:[%s3438 + $0x50] sm:$0x1]
      %v3746 = vld [vmem:[%s3438 + $0x54] sm:$0xf]
      %v3747 = vld [vmem:[%s3438 + $0x58] sm:$0xf]
      %v3748 = vld [vmem:[%s3438 + $0x5c] sm:$0x1]
      %v3749 = vld [vmem:[%s3438 + $0x60] sm:$0xf]
      %v3750 = vld [vmem:[%s3438 + $0x64] sm:$0xf]
      %v3751 = vld [vmem:[%s3438 + $0x68] sm:$0x1]
      %v3752 = vld [vmem:[%s3438 + $0x6c] sm:$0xf]
      %v3753 = vld [vmem:[%s3438 + $0x70] sm:$0xf]
      %v3754 = vld [vmem:[%s3438 + $0x74] sm:$0x1]
      %v3755 = vld [vmem:[%s3438 + $0x78] sm:$0xf]
      %v3756 = vld [vmem:[%s3438 + $0x7c] sm:$0xf]
      %v3757 = vld [vmem:[%s3438 + $0x80] sm:$0x1]
      %v3758 = vld [vmem:[%s3438 + $0x84] sm:$0xf]
      %v3759 = vld [vmem:[%s3438 + $0x88] sm:$0xf]
      %v3760 = vld [vmem:[%s3438 + $0x8c] sm:$0x1]
      %v3761 = vld [vmem:[%s3438 + $0x90] sm:$0xf]
      %v3762 = vld [vmem:[%s3438 + $0x94] sm:$0xf]
      %v3763 = vld [vmem:[%s3438 + $0x98] sm:$0x1]
      %v3764 = vld [vmem:[%s3438 + $0x9c] sm:$0xf]
      %v3765 = vld [vmem:[%s3438 + $0xa0] sm:$0xf]
      %v3766 = vld [vmem:[%s3438 + $0xa4] sm:$0x1]
      %v3767 = vld [vmem:[%s3438 + $0xa8] sm:$0xf]
      %v3768 = vld [vmem:[%s3438 + $0xac] sm:$0xf]
      %v3769 = vld [vmem:[%s3438 + $0xb0] sm:$0x1]
      %v3770 = vld [vmem:[%s3438 + $0xb4] sm:$0xf]
      %v3771 = vld [vmem:[%s3438 + $0xb8] sm:$0xf]
      %v3772 = vld [vmem:[%s3438 + $0xbc] sm:$0x1]
      %v3774 = vshrl.u32 %v3725, 16
      %v3776 = vrot.slane %v3774, 4
      %v3777 = vshll.u32 %v3725, 16
      %v3779 = vrot.slane %v3777, 5
      %v3780 = vor.u32 %v3776, %v3779
      %v3781 = vrot.slane %v3780, 4
      %v3783 = vshll.u32 %v3726, 16
      %v3785 = vrot.slane %v3783, 5
      %v3786 = vsel %vm918, %v3781, %v3785
      %v3787 = vshrl.u32 %v3726, 16
      %v3789 = vrot.slane %v3787, 4
      %v3790 = vor.u32 %v3789, %v3785
      %v3791 = vrot.slane %v3790, 4
      %v3793 = vshll.u32 %v3727, 16
      %v3795 = vrot.slane %v3793, 5
      %v3796 = vsel %vm918, %v3791, %v3795
      %v3798 = vshrl.u32 %v3728, 16
      %v3800 = vrot.slane %v3798, 4
      %v3801 = vshll.u32 %v3728, 16
      %v3803 = vrot.slane %v3801, 5
      %v3804 = vor.u32 %v3800, %v3803
      %v3805 = vrot.slane %v3804, 4
      %v3807 = vshll.u32 %v3729, 16
      %v3809 = vrot.slane %v3807, 5
      %v3810 = vsel %vm918, %v3805, %v3809
      %v3811 = vshrl.u32 %v3729, 16
      %v3813 = vrot.slane %v3811, 4
      %v3814 = vor.u32 %v3813, %v3809
      %v3815 = vrot.slane %v3814, 4
      %v3817 = vshll.u32 %v3730, 16
      %v3819 = vrot.slane %v3817, 5
      %v3820 = vsel %vm918, %v3815, %v3819
      %v3822 = vshrl.u32 %v3731, 16
      %v3824 = vrot.slane %v3822, 4
      %v3825 = vshll.u32 %v3731, 16
      %v3827 = vrot.slane %v3825, 5
      %v3828 = vor.u32 %v3824, %v3827
      %v3829 = vrot.slane %v3828, 4
      %v3831 = vshll.u32 %v3732, 16
      %v3833 = vrot.slane %v3831, 5
      %v3834 = vsel %vm918, %v3829, %v3833
      %v3835 = vshrl.u32 %v3732, 16
      %v3837 = vrot.slane %v3835, 4
      %v3838 = vor.u32 %v3837, %v3833
      %v3839 = vrot.slane %v3838, 4
      %v3841 = vshll.u32 %v3733, 16
      %v3843 = vrot.slane %v3841, 5
      %v3844 = vsel %vm918, %v3839, %v3843
      %v3846 = vshrl.u32 %v3734, 16
      %v3848 = vrot.slane %v3846, 4
      %v3849 = vshll.u32 %v3734, 16
      %v3851 = vrot.slane %v3849, 5
      %v3852 = vor.u32 %v3848, %v3851
      %v3853 = vrot.slane %v3852, 4
      %v3855 = vshll.u32 %v3735, 16
      %v3857 = vrot.slane %v3855, 5
      %v3858 = vsel %vm918, %v3853, %v3857
      %v3859 = vshrl.u32 %v3735, 16
      %v3861 = vrot.slane %v3859, 4
      %v3862 = vor.u32 %v3861, %v3857
      %v3863 = vrot.slane %v3862, 4
      %v3865 = vshll.u32 %v3736, 16
      %v3867 = vrot.slane %v3865, 5
      %v3868 = vsel %vm918, %v3863, %v3867
      %v3870 = vshrl.u32 %v3737, 16
      %v3872 = vrot.slane %v3870, 4
      %v3873 = vshll.u32 %v3737, 16
      %v3875 = vrot.slane %v3873, 5
      %v3876 = vor.u32 %v3872, %v3875
      %v3877 = vrot.slane %v3876, 4
      %v3879 = vshll.u32 %v3738, 16
      %v3881 = vrot.slane %v3879, 5
      %v3882 = vsel %vm918, %v3877, %v3881
      %v3883 = vshrl.u32 %v3738, 16
      %v3885 = vrot.slane %v3883, 4
      %v3886 = vor.u32 %v3885, %v3881
      %v3887 = vrot.slane %v3886, 4
      %v3889 = vshll.u32 %v3739, 16
      %v3891 = vrot.slane %v3889, 5
      %v3892 = vsel %vm918, %v3887, %v3891
      %v3894 = vshrl.u32 %v3740, 16
      %v3896 = vrot.slane %v3894, 4
      %v3897 = vshll.u32 %v3740, 16
      %v3899 = vrot.slane %v3897, 5
      %v3900 = vor.u32 %v3896, %v3899
      %v3901 = vrot.slane %v3900, 4
      %v3903 = vshll.u32 %v3741, 16
      %v3905 = vrot.slane %v3903, 5
      %v3906 = vsel %vm918, %v3901, %v3905
      %v3907 = vshrl.u32 %v3741, 16
      %v3909 = vrot.slane %v3907, 4
      %v3910 = vor.u32 %v3909, %v3905
      %v3911 = vrot.slane %v3910, 4
      %v3913 = vshll.u32 %v3742, 16
      %v3915 = vrot.slane %v3913, 5
      %v3916 = vsel %vm918, %v3911, %v3915
      %v3918 = vshrl.u32 %v3743, 16
      %v3920 = vrot.slane %v3918, 4
      %v3921 = vshll.u32 %v3743, 16
      %v3923 = vrot.slane %v3921, 5
      %v3924 = vor.u32 %v3920, %v3923
      %v3925 = vrot.slane %v3924, 4
      %v3927 = vshll.u32 %v3744, 16
      %v3929 = vrot.slane %v3927, 5
      %v3930 = vsel %vm918, %v3925, %v3929
      %v3931 = vshrl.u32 %v3744, 16
      %v3933 = vrot.slane %v3931, 4
      %v3934 = vor.u32 %v3933, %v3929
      %v3935 = vrot.slane %v3934, 4
      %v3937 = vshll.u32 %v3745, 16
      %v3939 = vrot.slane %v3937, 5
      %v3940 = vsel %vm918, %v3935, %v3939
      %v3942 = vshrl.u32 %v3746, 16
      %v3944 = vrot.slane %v3942, 4
      %v3945 = vshll.u32 %v3746, 16
      %v3947 = vrot.slane %v3945, 5
      %v3948 = vor.u32 %v3944, %v3947
      %v3949 = vrot.slane %v3948, 4
      %v3951 = vshll.u32 %v3747, 16
      %v3953 = vrot.slane %v3951, 5
      %v3954 = vsel %vm918, %v3949, %v3953
      %v3955 = vshrl.u32 %v3747, 16
      %v3957 = vrot.slane %v3955, 4
      %v3958 = vor.u32 %v3957, %v3953
      %v3959 = vrot.slane %v3958, 4
      %v3961 = vshll.u32 %v3748, 16
      %v3963 = vrot.slane %v3961, 5
      %v3964 = vsel %vm918, %v3959, %v3963
      %v3966 = vshrl.u32 %v3749, 16
      %v3968 = vrot.slane %v3966, 4
      %v3969 = vshll.u32 %v3749, 16
      %v3971 = vrot.slane %v3969, 5
      %v3972 = vor.u32 %v3968, %v3971
      %v3973 = vrot.slane %v3972, 4
      %v3975 = vshll.u32 %v3750, 16
      %v3977 = vrot.slane %v3975, 5
      %v3978 = vsel %vm918, %v3973, %v3977
      %v3979 = vshrl.u32 %v3750, 16
      %v3981 = vrot.slane %v3979, 4
      %v3982 = vor.u32 %v3981, %v3977
      %v3983 = vrot.slane %v3982, 4
      %v3985 = vshll.u32 %v3751, 16
      %v3987 = vrot.slane %v3985, 5
      %v3988 = vsel %vm918, %v3983, %v3987
      %v3990 = vshrl.u32 %v3752, 16
      %v3992 = vrot.slane %v3990, 4
      %v3993 = vshll.u32 %v3752, 16
      %v3995 = vrot.slane %v3993, 5
      %v3996 = vor.u32 %v3992, %v3995
      %v3997 = vrot.slane %v3996, 4
      %v3999 = vshll.u32 %v3753, 16
      %v4001 = vrot.slane %v3999, 5
      %v4002 = vsel %vm918, %v3997, %v4001
      %v4003 = vshrl.u32 %v3753, 16
      %v4005 = vrot.slane %v4003, 4
      %v4006 = vor.u32 %v4005, %v4001
      %v4007 = vrot.slane %v4006, 4
      %v4009 = vshll.u32 %v3754, 16
      %v4011 = vrot.slane %v4009, 5
      %v4012 = vsel %vm918, %v4007, %v4011
      %v4014 = vshrl.u32 %v3755, 16
      %v4016 = vrot.slane %v4014, 4
      %v4017 = vshll.u32 %v3755, 16
      %v4019 = vrot.slane %v4017, 5
      %v4020 = vor.u32 %v4016, %v4019
      %v4021 = vrot.slane %v4020, 4
      %v4023 = vshll.u32 %v3756, 16
      %v4025 = vrot.slane %v4023, 5
      %v4026 = vsel %vm918, %v4021, %v4025
      %v4027 = vshrl.u32 %v3756, 16
      %v4029 = vrot.slane %v4027, 4
      %v4030 = vor.u32 %v4029, %v4025
      %v4031 = vrot.slane %v4030, 4
      %v4033 = vshll.u32 %v3757, 16
      %v4035 = vrot.slane %v4033, 5
      %v4036 = vsel %vm918, %v4031, %v4035
      %v4038 = vshrl.u32 %v3758, 16
      %v4040 = vrot.slane %v4038, 4
      %v4041 = vshll.u32 %v3758, 16
      %v4043 = vrot.slane %v4041, 5
      %v4044 = vor.u32 %v4040, %v4043
      %v4045 = vrot.slane %v4044, 4
      %v4047 = vshll.u32 %v3759, 16
      %v4049 = vrot.slane %v4047, 5
      %v4050 = vsel %vm918, %v4045, %v4049
      %v4051 = vshrl.u32 %v3759, 16
      %v4053 = vrot.slane %v4051, 4
      %v4054 = vor.u32 %v4053, %v4049
      %v4055 = vrot.slane %v4054, 4
      %v4057 = vshll.u32 %v3760, 16
      %v4059 = vrot.slane %v4057, 5
      %v4060 = vsel %vm918, %v4055, %v4059
      %v4062 = vshrl.u32 %v3761, 16
      %v4064 = vrot.slane %v4062, 4
      %v4065 = vshll.u32 %v3761, 16
      %v4067 = vrot.slane %v4065, 5
      %v4068 = vor.u32 %v4064, %v4067
      %v4069 = vrot.slane %v4068, 4
      %v4071 = vshll.u32 %v3762, 16
      %v4073 = vrot.slane %v4071, 5
      %v4074 = vsel %vm918, %v4069, %v4073
      %v4075 = vshrl.u32 %v3762, 16
      %v4077 = vrot.slane %v4075, 4
      %v4078 = vor.u32 %v4077, %v4073
      %v4079 = vrot.slane %v4078, 4
      %v4081 = vshll.u32 %v3763, 16
      %v4083 = vrot.slane %v4081, 5
      %v4084 = vsel %vm918, %v4079, %v4083
      %v4086 = vshrl.u32 %v3764, 16
      %v4088 = vrot.slane %v4086, 4
      %v4089 = vshll.u32 %v3764, 16
      %v4091 = vrot.slane %v4089, 5
      %v4092 = vor.u32 %v4088, %v4091
      %v4093 = vrot.slane %v4092, 4
      %v4095 = vshll.u32 %v3765, 16
      %v4097 = vrot.slane %v4095, 5
      %v4098 = vsel %vm918, %v4093, %v4097
      %v4099 = vshrl.u32 %v3765, 16
      %v4101 = vrot.slane %v4099, 4
      %v4102 = vor.u32 %v4101, %v4097
      %v4103 = vrot.slane %v4102, 4
      %v4105 = vshll.u32 %v3766, 16
      %v4107 = vrot.slane %v4105, 5
      %v4108 = vsel %vm918, %v4103, %v4107
      %v4110 = vshrl.u32 %v3767, 16
      %v4112 = vrot.slane %v4110, 4
      %v4113 = vshll.u32 %v3767, 16
      %v4115 = vrot.slane %v4113, 5
      %v4116 = vor.u32 %v4112, %v4115
      %v4117 = vrot.slane %v4116, 4
      %v4119 = vshll.u32 %v3768, 16
      %v4121 = vrot.slane %v4119, 5
      %v4122 = vsel %vm918, %v4117, %v4121
      %v4123 = vshrl.u32 %v3768, 16
      %v4125 = vrot.slane %v4123, 4
      %v4126 = vor.u32 %v4125, %v4121
      %v4127 = vrot.slane %v4126, 4
      %v4129 = vshll.u32 %v3769, 16
      %v4131 = vrot.slane %v4129, 5
      %v4132 = vsel %vm918, %v4127, %v4131
      %v4134 = vshrl.u32 %v3770, 16
      %v4136 = vrot.slane %v4134, 4
      %v4137 = vshll.u32 %v3770, 16
      %v4139 = vrot.slane %v4137, 5
      %v4140 = vor.u32 %v4136, %v4139
      %v4141 = vrot.slane %v4140, 4
      %v4143 = vshll.u32 %v3771, 16
      %v4145 = vrot.slane %v4143, 5
      %v4146 = vsel %vm918, %v4141, %v4145
      %v4147 = vshrl.u32 %v3771, 16
      %v4149 = vrot.slane %v4147, 4
      %v4150 = vor.u32 %v4149, %v4145
      %v4151 = vrot.slane %v4150, 4
      %v4153 = vshll.u32 %v3772, 16
      %v4155 = vrot.slane %v4153, 5
      %v4156 = vsel %vm918, %v4151, %v4155
      %s4157 = scalar_lea.vmem %s2, 14
      %v4158 = vld [vmem:[%s4157] sm:$0x3]
      %v4159 = vunpack.c.l.b16 %v3786
      %v4160 = vunpack.c.l.b16 %v3796
      %v4161 = vunpack.c.l.b16 %v3810
      %v4162 = vunpack.c.l.b16 %v3820
      %v4163 = vunpack.c.l.b16 %v3834
      %v4164 = vunpack.c.l.b16 %v3844
      %v4165 = vunpack.c.l.b16 %v3858
      %v4166 = vunpack.c.l.b16 %v3868
      %v4167 = vunpack.c.l.b16 %v3882
      %v4168 = vunpack.c.l.b16 %v3892
      %v4169 = vunpack.c.l.b16 %v3906
      %v4170 = vunpack.c.l.b16 %v3916
      %v4171 = vunpack.c.l.b16 %v3930
      %v4172 = vunpack.c.l.b16 %v3940
      %v4173 = vunpack.c.l.b16 %v3954
      %v4174 = vunpack.c.l.b16 %v3964
      %v4175 = vunpack.c.l.b16 %v3978
      %v4176 = vunpack.c.l.b16 %v3988
      %v4177 = vunpack.c.l.b16 %v4002
      %v4178 = vunpack.c.l.b16 %v4012
      %v4179 = vunpack.c.l.b16 %v4026
      %v4180 = vunpack.c.l.b16 %v4036
      %v4181 = vunpack.c.l.b16 %v4050
      %v4182 = vunpack.c.l.b16 %v4060
      %v4183 = vunpack.c.l.b16 %v4074
      %v4184 = vunpack.c.l.b16 %v4084
      %v4185 = vunpack.c.l.b16 %v4098
      %v4186 = vunpack.c.l.b16 %v4108
      %v4187 = vunpack.c.l.b16 %v4122
      %v4188 = vunpack.c.l.b16 %v4132
      %v4189 = vunpack.c.l.b16 %v4146
      %v4190 = vunpack.c.l.b16 %v4156
      %v4191 = vpack.c.b16 %v4160, %v4159
      %v4192 = vpack.c.b16 %v4162, %v4161
      %v4193 = vpack.c.b16 %v4164, %v4163
      %v4194 = vpack.c.b16 %v4166, %v4165
      %v4195 = vpack.c.b16 %v4168, %v4167
      %v4196 = vpack.c.b16 %v4170, %v4169
      %v4197 = vpack.c.b16 %v4172, %v4171
      %v4198 = vpack.c.b16 %v4174, %v4173
      %v4199 = vpack.c.b16 %v4176, %v4175
      %v4200 = vpack.c.b16 %v4178, %v4177
      %v4201 = vpack.c.b16 %v4180, %v4179
      %v4202 = vpack.c.b16 %v4182, %v4181
      %v4203 = vpack.c.b16 %v4184, %v4183
      %v4204 = vpack.c.b16 %v4186, %v4185
      %v4205 = vpack.c.b16 %v4188, %v4187
      %v4206 = vpack.c.b16 %v4190, %v4189
      %v4208 = vsel %vm1353, %v4191, 0
      %v4211 = vsel %vm1353, %v4192, 0
      %v4214 = vsel %vm1353, %v4193, 0
      %v4217 = vsel %vm1353, %v4194, 0
      %v4220 = vsel %vm1353, %v4195, 0
      %v4223 = vsel %vm1353, %v4196, 0
      %v4226 = vsel %vm1353, %v4197, 0
      %v4229 = vsel %vm1353, %v4198, 0
      %v4232 = vsel %vm1353, %v4199, 0
      %v4235 = vsel %vm1353, %v4200, 0
      %v4238 = vsel %vm1353, %v4201, 0
      %v4241 = vsel %vm1353, %v4202, 0
      %v4244 = vsel %vm1353, %v4203, 0
      %v4247 = vsel %vm1353, %v4204, 0
      %v4250 = vsel %vm1353, %v4205, 0
      %v4253 = vsel %vm1353, %v4206, 0
      %v4256 = vsel %vm1402, %v4158, 0
      %4258 = vmatpush.bf16.msra.mxu0 0
      %4259 = vmatpush.bf16.msra.mxu0 0
      %4260 = vmatpush.bf16.msra.mxu0 0
      %4261 = vmatpush.bf16.msra.mxu0 0
      %4262 = vmatpush.bf16.msra.mxu0 0
      %4263 = vmatpush.bf16.msra.mxu0 0
      %4264 = vmatpush.bf16.msra.mxu0 0
      %4265 = vmatpush.bf16.msra.mxu0 %v4256
      %4266 = vmatmul.bf16.gmra.mxu0 %v4208
      %v4267 = vpop.f32.mrf.mxu0
      %v4268 = vadd.f32 0.0, %v4267
      %v4269 = vpop.f32.mrf.mxu0
      %v4270 = vadd.f32 0.0, %v4269
      %4271 = vmatmul.bf16.gmra.mxu0 %v4211
      %v4272 = vpop.f32.mrf.mxu0
      %v4273 = vadd.f32 0.0, %v4272
      %v4274 = vpop.f32.mrf.mxu0
      %v4275 = vadd.f32 0.0, %v4274
      %4276 = vmatmul.bf16.gmra.mxu0 %v4214
      %v4277 = vpop.f32.mrf.mxu0
      %v4278 = vadd.f32 0.0, %v4277
      %v4279 = vpop.f32.mrf.mxu0
      %v4280 = vadd.f32 0.0, %v4279
      %4281 = vmatmul.bf16.gmra.mxu0 %v4217
      %v4282 = vpop.f32.mrf.mxu0
      %v4283 = vadd.f32 0.0, %v4282
      %v4284 = vpop.f32.mrf.mxu0
      %v4285 = vadd.f32 0.0, %v4284
      %4286 = vmatmul.bf16.gmra.mxu0 %v4220
      %v4287 = vpop.f32.mrf.mxu0
      %v4288 = vadd.f32 0.0, %v4287
      %v4289 = vpop.f32.mrf.mxu0
      %v4290 = vadd.f32 0.0, %v4289
      %4291 = vmatmul.bf16.gmra.mxu0 %v4223
      %v4292 = vpop.f32.mrf.mxu0
      %v4293 = vadd.f32 0.0, %v4292
      %v4294 = vpop.f32.mrf.mxu0
      %v4295 = vadd.f32 0.0, %v4294
      %4296 = vmatmul.bf16.gmra.mxu0 %v4226
      %v4297 = vpop.f32.mrf.mxu0
      %v4298 = vadd.f32 0.0, %v4297
      %v4299 = vpop.f32.mrf.mxu0
      %v4300 = vadd.f32 0.0, %v4299
      %4301 = vmatmul.bf16.gmra.mxu0 %v4229
      %v4302 = vpop.f32.mrf.mxu0
      %v4303 = vadd.f32 0.0, %v4302
      %v4304 = vpop.f32.mrf.mxu0
      %v4305 = vadd.f32 0.0, %v4304
      %4306 = vmatmul.bf16.gmra.mxu0 %v4232
      %v4307 = vpop.f32.mrf.mxu0
      %v4308 = vadd.f32 0.0, %v4307
      %v4309 = vpop.f32.mrf.mxu0
      %v4310 = vadd.f32 0.0, %v4309
      %4311 = vmatmul.bf16.gmra.mxu0 %v4235
      %v4312 = vpop.f32.mrf.mxu0
      %v4313 = vadd.f32 0.0, %v4312
      %v4314 = vpop.f32.mrf.mxu0
      %v4315 = vadd.f32 0.0, %v4314
      %4316 = vmatmul.bf16.gmra.mxu0 %v4238
      %v4317 = vpop.f32.mrf.mxu0
      %v4318 = vadd.f32 0.0, %v4317
      %v4319 = vpop.f32.mrf.mxu0
      %v4320 = vadd.f32 0.0, %v4319
      %4321 = vmatmul.bf16.gmra.mxu0 %v4241
      %v4322 = vpop.f32.mrf.mxu0
      %v4323 = vadd.f32 0.0, %v4322
      %v4324 = vpop.f32.mrf.mxu0
      %v4325 = vadd.f32 0.0, %v4324
      %4326 = vmatmul.bf16.gmra.mxu0 %v4244
      %v4327 = vpop.f32.mrf.mxu0
      %v4328 = vadd.f32 0.0, %v4327
      %v4329 = vpop.f32.mrf.mxu0
      %v4330 = vadd.f32 0.0, %v4329
      %4331 = vmatmul.bf16.gmra.mxu0 %v4247
      %v4332 = vpop.f32.mrf.mxu0
      %v4333 = vadd.f32 0.0, %v4332
      %v4334 = vpop.f32.mrf.mxu0
      %v4335 = vadd.f32 0.0, %v4334
      %4336 = vmatmul.bf16.gmra.mxu0 %v4250
      %v4337 = vpop.f32.mrf.mxu0
      %v4338 = vadd.f32 0.0, %v4337
      %v4339 = vpop.f32.mrf.mxu0
      %v4340 = vadd.f32 0.0, %v4339
      %4341 = vmatmul.bf16.gmra.mxu0 %v4253
      %v4342 = vpop.f32.mrf.mxu0
      %v4343 = vadd.f32 0.0, %v4342
      %v4344 = vpop.f32.mrf.mxu0
      %v4345 = vadd.f32 0.0, %v4344
      %4346 = vdwg.mxu0
      %v4347 = vadd.f32 %v3693, %v4268
      %v4348 = vadd.f32 %v3694, %v4270
      %v4349 = vadd.f32 %v3695, %v4273
      %v4350 = vadd.f32 %v3696, %v4275
      %v4351 = vadd.f32 %v3697, %v4278
      %v4352 = vadd.f32 %v3698, %v4280
      %v4353 = vadd.f32 %v3699, %v4283
      %v4354 = vadd.f32 %v3700, %v4285
      %v4355 = vadd.f32 %v3701, %v4288
      %v4356 = vadd.f32 %v3702, %v4290
      %v4357 = vadd.f32 %v3703, %v4293
      %v4358 = vadd.f32 %v3704, %v4295
      %v4359 = vadd.f32 %v3705, %v4298
      %v4360 = vadd.f32 %v3706, %v4300
      %v4361 = vadd.f32 %v3707, %v4303
      %v4362 = vadd.f32 %v3708, %v4305
      %v4363 = vadd.f32 %v3709, %v4308
      %v4364 = vadd.f32 %v3710, %v4310
      %v4365 = vadd.f32 %v3711, %v4313
      %v4366 = vadd.f32 %v3712, %v4315
      %v4367 = vadd.f32 %v3713, %v4318
      %v4368 = vadd.f32 %v3714, %v4320
      %v4369 = vadd.f32 %v3715, %v4323
      %v4370 = vadd.f32 %v3716, %v4325
      %v4371 = vadd.f32 %v3717, %v4328
      %v4372 = vadd.f32 %v3718, %v4330
      %v4373 = vadd.f32 %v3719, %v4333
      %v4374 = vadd.f32 %v3720, %v4335
      %v4375 = vadd.f32 %v3721, %v4338
      %v4376 = vadd.f32 %v3722, %v4340
      %v4377 = vadd.f32 %v3723, %v4343
      %v4378 = vadd.f32 %v3724, %v4345
      %v4379 = vld [vmem:[%s3438] sm:$0xe]
      %v4380 = vld [vmem:[%s3438 + $0xc] sm:$0xe]
      %v4381 = vld [vmem:[%s3438 + $0x18] sm:$0xe]
      %v4382 = vld [vmem:[%s3438 + $0x24] sm:$0xe]
      %v4383 = vld [vmem:[%s3438 + $0x30] sm:$0xe]
      %v4384 = vld [vmem:[%s3438 + $0x3c] sm:$0xe]
      %v4385 = vld [vmem:[%s3438 + $0x48] sm:$0xe]
      %v4386 = vld [vmem:[%s3438 + $0x54] sm:$0xe]
      %v4387 = vld [vmem:[%s3438 + $0x60] sm:$0xe]
      %v4388 = vld [vmem:[%s3438 + $0x6c] sm:$0xe]
      %v4389 = vld [vmem:[%s3438 + $0x78] sm:$0xe]
      %v4390 = vld [vmem:[%s3438 + $0x84] sm:$0xe]
      %v4391 = vld [vmem:[%s3438 + $0x90] sm:$0xe]
      %v4392 = vld [vmem:[%s3438 + $0x9c] sm:$0xe]
      %v4393 = vld [vmem:[%s3438 + $0xa8] sm:$0xe]
      %v4394 = vld [vmem:[%s3438 + $0xb4] sm:$0xe]
      %v4443 = vrot.slane %v4379, 5
      %v4444 = vrot.slane %v4443, 4
      %v4445 = vrot.slane %v3726, 5
      %v4446 = vsel %vm1765, %v4444, %v4445
      %v4447 = vrot.slane %v4445, 4
      %v4448 = vrot.slane %v3727, 5
      %v4449 = vsel %vm1765, %v4447, %v4448
      %v4450 = vrot.slane %v4380, 5
      %v4451 = vrot.slane %v4450, 4
      %v4452 = vrot.slane %v3729, 5
      %v4453 = vsel %vm1765, %v4451, %v4452
      %v4454 = vrot.slane %v4452, 4
      %v4455 = vrot.slane %v3730, 5
      %v4456 = vsel %vm1765, %v4454, %v4455
      %v4457 = vrot.slane %v4381, 5
      %v4458 = vrot.slane %v4457, 4
      %v4459 = vrot.slane %v3732, 5
      %v4460 = vsel %vm1765, %v4458, %v4459
      %v4461 = vrot.slane %v4459, 4
      %v4462 = vrot.slane %v3733, 5
      %v4463 = vsel %vm1765, %v4461, %v4462
      %v4464 = vrot.slane %v4382, 5
      %v4465 = vrot.slane %v4464, 4
      %v4466 = vrot.slane %v3735, 5
      %v4467 = vsel %vm1765, %v4465, %v4466
      %v4468 = vrot.slane %v4466, 4
      %v4469 = vrot.slane %v3736, 5
      %v4470 = vsel %vm1765, %v4468, %v4469
      %v4471 = vrot.slane %v4383, 5
      %v4472 = vrot.slane %v4471, 4
      %v4473 = vrot.slane %v3738, 5
      %v4474 = vsel %vm1765, %v4472, %v4473
      %v4475 = vrot.slane %v4473, 4
      %v4476 = vrot.slane %v3739, 5
      %v4477 = vsel %vm1765, %v4475, %v4476
      %v4478 = vrot.slane %v4384, 5
      %v4479 = vrot.slane %v4478, 4
      %v4480 = vrot.slane %v3741, 5
      %v4481 = vsel %vm1765, %v4479, %v4480
      %v4482 = vrot.slane %v4480, 4
      %v4483 = vrot.slane %v3742, 5
      %v4484 = vsel %vm1765, %v4482, %v4483
      %v4485 = vrot.slane %v4385, 5
      %v4486 = vrot.slane %v4485, 4
      %v4487 = vrot.slane %v3744, 5
      %v4488 = vsel %vm1765, %v4486, %v4487
      %v4489 = vrot.slane %v4487, 4
      %v4490 = vrot.slane %v3745, 5
      %v4491 = vsel %vm1765, %v4489, %v4490
      %v4492 = vrot.slane %v4386, 5
      %v4493 = vrot.slane %v4492, 4
      %v4494 = vrot.slane %v3747, 5
      %v4495 = vsel %vm1765, %v4493, %v4494
      %v4496 = vrot.slane %v4494, 4
      %v4497 = vrot.slane %v3748, 5
      %v4498 = vsel %vm1765, %v4496, %v4497
      %v4499 = vrot.slane %v4387, 5
      %v4500 = vrot.slane %v4499, 4
      %v4501 = vrot.slane %v3750, 5
      %v4502 = vsel %vm1765, %v4500, %v4501
      %v4503 = vrot.slane %v4501, 4
      %v4504 = vrot.slane %v3751, 5
      %v4505 = vsel %vm1765, %v4503, %v4504
      %v4506 = vrot.slane %v4388, 5
      %v4507 = vrot.slane %v4506, 4
      %v4508 = vrot.slane %v3753, 5
      %v4509 = vsel %vm1765, %v4507, %v4508
      %v4510 = vrot.slane %v4508, 4
      %v4511 = vrot.slane %v3754, 5
      %v4512 = vsel %vm1765, %v4510, %v4511
      %v4513 = vrot.slane %v4389, 5
      %v4514 = vrot.slane %v4513, 4
      %v4515 = vrot.slane %v3756, 5
      %v4516 = vsel %vm1765, %v4514, %v4515
      %v4517 = vrot.slane %v4515, 4
      %v4518 = vrot.slane %v3757, 5
      %v4519 = vsel %vm1765, %v4517, %v4518
      %v4520 = vrot.slane %v4390, 5
      %v4521 = vrot.slane %v4520, 4
      %v4522 = vrot.slane %v3759, 5
      %v4523 = vsel %vm1765, %v4521, %v4522
      %v4524 = vrot.slane %v4522, 4
      %v4525 = vrot.slane %v3760, 5
      %v4526 = vsel %vm1765, %v4524, %v4525
      %v4527 = vrot.slane %v4391, 5
      %v4528 = vrot.slane %v4527, 4
      %v4529 = vrot.slane %v3762, 5
      %v4530 = vsel %vm1765, %v4528, %v4529
      %v4531 = vrot.slane %v4529, 4
      %v4532 = vrot.slane %v3763, 5
      %v4533 = vsel %vm1765, %v4531, %v4532
      %v4534 = vrot.slane %v4392, 5
      %v4535 = vrot.slane %v4534, 4
      %v4536 = vrot.slane %v3765, 5
      %v4537 = vsel %vm1765, %v4535, %v4536
      %v4538 = vrot.slane %v4536, 4
      %v4539 = vrot.slane %v3766, 5
      %v4540 = vsel %vm1765, %v4538, %v4539
      %v4541 = vrot.slane %v4393, 5
      %v4542 = vrot.slane %v4541, 4
      %v4543 = vrot.slane %v3768, 5
      %v4544 = vsel %vm1765, %v4542, %v4543
      %v4545 = vrot.slane %v4543, 4
      %v4546 = vrot.slane %v3769, 5
      %v4547 = vsel %vm1765, %v4545, %v4546
      %v4548 = vrot.slane %v4394, 5
      %v4549 = vrot.slane %v4548, 4
      %v4550 = vrot.slane %v3771, 5
      %v4551 = vsel %vm1765, %v4549, %v4550
      %v4552 = vrot.slane %v4550, 4
      %v4553 = vrot.slane %v3772, 5
      %v4554 = vsel %vm1765, %v4552, %v4553
      %s4555 = scalar_lea.vmem %s2, 16
      %v4556 = vld [vmem:[%s4555] sm:$0x3]
      %v4557 = vunpack.c.l.b16 %v4446
      %v4558 = vunpack.c.l.b16 %v4449
      %v4559 = vunpack.c.l.b16 %v4453
      %v4560 = vunpack.c.l.b16 %v4456
      %v4561 = vunpack.c.l.b16 %v4460
      %v4562 = vunpack.c.l.b16 %v4463
      %v4563 = vunpack.c.l.b16 %v4467
      %v4564 = vunpack.c.l.b16 %v4470
      %v4565 = vunpack.c.l.b16 %v4474
      %v4566 = vunpack.c.l.b16 %v4477
      %v4567 = vunpack.c.l.b16 %v4481
      %v4568 = vunpack.c.l.b16 %v4484
      %v4569 = vunpack.c.l.b16 %v4488
      %v4570 = vunpack.c.l.b16 %v4491
      %v4571 = vunpack.c.l.b16 %v4495
      %v4572 = vunpack.c.l.b16 %v4498
      %v4573 = vunpack.c.l.b16 %v4502
      %v4574 = vunpack.c.l.b16 %v4505
      %v4575 = vunpack.c.l.b16 %v4509
      %v4576 = vunpack.c.l.b16 %v4512
      %v4577 = vunpack.c.l.b16 %v4516
      %v4578 = vunpack.c.l.b16 %v4519
      %v4579 = vunpack.c.l.b16 %v4523
      %v4580 = vunpack.c.l.b16 %v4526
      %v4581 = vunpack.c.l.b16 %v4530
      %v4582 = vunpack.c.l.b16 %v4533
      %v4583 = vunpack.c.l.b16 %v4537
      %v4584 = vunpack.c.l.b16 %v4540
      %v4585 = vunpack.c.l.b16 %v4544
      %v4586 = vunpack.c.l.b16 %v4547
      %v4587 = vunpack.c.l.b16 %v4551
      %v4588 = vunpack.c.l.b16 %v4554
      %v4589 = vpack.c.b16 %v4558, %v4557
      %v4590 = vpack.c.b16 %v4560, %v4559
      %v4591 = vpack.c.b16 %v4562, %v4561
      %v4592 = vpack.c.b16 %v4564, %v4563
      %v4593 = vpack.c.b16 %v4566, %v4565
      %v4594 = vpack.c.b16 %v4568, %v4567
      %v4595 = vpack.c.b16 %v4570, %v4569
      %v4596 = vpack.c.b16 %v4572, %v4571
      %v4597 = vpack.c.b16 %v4574, %v4573
      %v4598 = vpack.c.b16 %v4576, %v4575
      %v4599 = vpack.c.b16 %v4578, %v4577
      %v4600 = vpack.c.b16 %v4580, %v4579
      %v4601 = vpack.c.b16 %v4582, %v4581
      %v4602 = vpack.c.b16 %v4584, %v4583
      %v4603 = vpack.c.b16 %v4586, %v4585
      %v4604 = vpack.c.b16 %v4588, %v4587
      %v4606 = vsel %vm1353, %v4589, 0
      %v4609 = vsel %vm1353, %v4590, 0
      %v4612 = vsel %vm1353, %v4591, 0
      %v4615 = vsel %vm1353, %v4592, 0
      %v4618 = vsel %vm1353, %v4593, 0
      %v4621 = vsel %vm1353, %v4594, 0
      %v4624 = vsel %vm1353, %v4595, 0
      %v4627 = vsel %vm1353, %v4596, 0
      %v4630 = vsel %vm1353, %v4597, 0
      %v4633 = vsel %vm1353, %v4598, 0
      %v4636 = vsel %vm1353, %v4599, 0
      %v4639 = vsel %vm1353, %v4600, 0
      %v4642 = vsel %vm1353, %v4601, 0
      %v4645 = vsel %vm1353, %v4602, 0
      %v4648 = vsel %vm1353, %v4603, 0
      %v4651 = vsel %vm1353, %v4604, 0
      %v4654 = vsel %vm1402, %v4556, 0
      %4656 = vmatpush.bf16.msra.mxu0 0
      %4657 = vmatpush.bf16.msra.mxu0 0
      %4658 = vmatpush.bf16.msra.mxu0 0
      %4659 = vmatpush.bf16.msra.mxu0 0
      %4660 = vmatpush.bf16.msra.mxu0 0
      %4661 = vmatpush.bf16.msra.mxu0 0
      %4662 = vmatpush.bf16.msra.mxu0 0
      %4663 = vmatpush.bf16.msra.mxu0 %v4654
      %4664 = vmatmul.bf16.gmra.mxu0 %v4606
      %v4665 = vpop.f32.mrf.mxu0
      %v4666 = vadd.f32 0.0, %v4665
      %v4667 = vpop.f32.mrf.mxu0
      %v4668 = vadd.f32 0.0, %v4667
      %4669 = vmatmul.bf16.gmra.mxu0 %v4609
      %v4670 = vpop.f32.mrf.mxu0
      %v4671 = vadd.f32 0.0, %v4670
      %v4672 = vpop.f32.mrf.mxu0
      %v4673 = vadd.f32 0.0, %v4672
      %4674 = vmatmul.bf16.gmra.mxu0 %v4612
      %v4675 = vpop.f32.mrf.mxu0
      %v4676 = vadd.f32 0.0, %v4675
      %v4677 = vpop.f32.mrf.mxu0
      %v4678 = vadd.f32 0.0, %v4677
      %4679 = vmatmul.bf16.gmra.mxu0 %v4615
      %v4680 = vpop.f32.mrf.mxu0
      %v4681 = vadd.f32 0.0, %v4680
      %v4682 = vpop.f32.mrf.mxu0
      %v4683 = vadd.f32 0.0, %v4682
      %4684 = vmatmul.bf16.gmra.mxu0 %v4618
      %v4685 = vpop.f32.mrf.mxu0
      %v4686 = vadd.f32 0.0, %v4685
      %v4687 = vpop.f32.mrf.mxu0
      %v4688 = vadd.f32 0.0, %v4687
      %4689 = vmatmul.bf16.gmra.mxu0 %v4621
      %v4690 = vpop.f32.mrf.mxu0
      %v4691 = vadd.f32 0.0, %v4690
      %v4692 = vpop.f32.mrf.mxu0
      %v4693 = vadd.f32 0.0, %v4692
      %4694 = vmatmul.bf16.gmra.mxu0 %v4624
      %v4695 = vpop.f32.mrf.mxu0
      %v4696 = vadd.f32 0.0, %v4695
      %v4697 = vpop.f32.mrf.mxu0
      %v4698 = vadd.f32 0.0, %v4697
      %4699 = vmatmul.bf16.gmra.mxu0 %v4627
      %v4700 = vpop.f32.mrf.mxu0
      %v4701 = vadd.f32 0.0, %v4700
      %v4702 = vpop.f32.mrf.mxu0
      %v4703 = vadd.f32 0.0, %v4702
      %4704 = vmatmul.bf16.gmra.mxu0 %v4630
      %v4705 = vpop.f32.mrf.mxu0
      %v4706 = vadd.f32 0.0, %v4705
      %v4707 = vpop.f32.mrf.mxu0
      %v4708 = vadd.f32 0.0, %v4707
      %4709 = vmatmul.bf16.gmra.mxu0 %v4633
      %v4710 = vpop.f32.mrf.mxu0
      %v4711 = vadd.f32 0.0, %v4710
      %v4712 = vpop.f32.mrf.mxu0
      %v4713 = vadd.f32 0.0, %v4712
      %4714 = vmatmul.bf16.gmra.mxu0 %v4636
      %v4715 = vpop.f32.mrf.mxu0
      %v4716 = vadd.f32 0.0, %v4715
      %v4717 = vpop.f32.mrf.mxu0
      %v4718 = vadd.f32 0.0, %v4717
      %4719 = vmatmul.bf16.gmra.mxu0 %v4639
      %v4720 = vpop.f32.mrf.mxu0
      %v4721 = vadd.f32 0.0, %v4720
      %v4722 = vpop.f32.mrf.mxu0
      %v4723 = vadd.f32 0.0, %v4722
      %4724 = vmatmul.bf16.gmra.mxu0 %v4642
      %v4725 = vpop.f32.mrf.mxu0
      %v4726 = vadd.f32 0.0, %v4725
      %v4727 = vpop.f32.mrf.mxu0
      %v4728 = vadd.f32 0.0, %v4727
      %4729 = vmatmul.bf16.gmra.mxu0 %v4645
      %v4730 = vpop.f32.mrf.mxu0
      %v4731 = vadd.f32 0.0, %v4730
      %v4732 = vpop.f32.mrf.mxu0
      %v4733 = vadd.f32 0.0, %v4732
      %4734 = vmatmul.bf16.gmra.mxu0 %v4648
      %v4735 = vpop.f32.mrf.mxu0
      %v4736 = vadd.f32 0.0, %v4735
      %v4737 = vpop.f32.mrf.mxu0
      %v4738 = vadd.f32 0.0, %v4737
      %4739 = vmatmul.bf16.gmra.mxu0 %v4651
      %v4740 = vpop.f32.mrf.mxu0
      %v4741 = vadd.f32 0.0, %v4740
      %v4742 = vpop.f32.mrf.mxu0
      %v4743 = vadd.f32 0.0, %v4742
      %4744 = vdwg.mxu0
      %v4745 = vadd.f32 %v4347, %v4666
      %v4746 = vadd.f32 %v4348, %v4668
      %v4747 = vadd.f32 %v4349, %v4671
      %v4748 = vadd.f32 %v4350, %v4673
      %v4749 = vadd.f32 %v4351, %v4676
      %v4750 = vadd.f32 %v4352, %v4678
      %v4751 = vadd.f32 %v4353, %v4681
      %v4752 = vadd.f32 %v4354, %v4683
      %v4753 = vadd.f32 %v4355, %v4686
      %v4754 = vadd.f32 %v4356, %v4688
      %v4755 = vadd.f32 %v4357, %v4691
      %v4756 = vadd.f32 %v4358, %v4693
      %v4757 = vadd.f32 %v4359, %v4696
      %v4758 = vadd.f32 %v4360, %v4698
      %v4759 = vadd.f32 %v4361, %v4701
      %v4760 = vadd.f32 %v4362, %v4703
      %v4761 = vadd.f32 %v4363, %v4706
      %v4762 = vadd.f32 %v4364, %v4708
      %v4763 = vadd.f32 %v4365, %v4711
      %v4764 = vadd.f32 %v4366, %v4713
      %v4765 = vadd.f32 %v4367, %v4716
      %v4766 = vadd.f32 %v4368, %v4718
      %v4767 = vadd.f32 %v4369, %v4721
      %v4768 = vadd.f32 %v4370, %v4723
      %v4769 = vadd.f32 %v4371, %v4726
      %v4770 = vadd.f32 %v4372, %v4728
      %v4771 = vadd.f32 %v4373, %v4731
      %v4772 = vadd.f32 %v4374, %v4733
      %v4773 = vadd.f32 %v4375, %v4736
      %v4774 = vadd.f32 %v4376, %v4738
      %v4775 = vadd.f32 %v4377, %v4741
      %v4776 = vadd.f32 %v4378, %v4743
      %v4777 = vpack.c.bf16 %v4745, %v4745
      %v4778 = vpack.c.bf16 %v4746, %v4746
      %v4779 = vpack.c.bf16 %v4747, %v4747
      %v4780 = vpack.c.bf16 %v4748, %v4748
      %v4781 = vpack.c.bf16 %v4749, %v4749
      %v4782 = vpack.c.bf16 %v4750, %v4750
      %v4783 = vpack.c.bf16 %v4751, %v4751
      %v4784 = vpack.c.bf16 %v4752, %v4752
      %v4785 = vpack.c.bf16 %v4753, %v4753
      %v4786 = vpack.c.bf16 %v4754, %v4754
      %v4787 = vpack.c.bf16 %v4755, %v4755
      %v4788 = vpack.c.bf16 %v4756, %v4756
      %v4789 = vpack.c.bf16 %v4757, %v4757
      %v4790 = vpack.c.bf16 %v4758, %v4758
      %v4791 = vpack.c.bf16 %v4759, %v4759
      %v4792 = vpack.c.bf16 %v4760, %v4760
      %v4793 = vpack.c.bf16 %v4761, %v4761
      %v4794 = vpack.c.bf16 %v4762, %v4762
      %v4795 = vpack.c.bf16 %v4763, %v4763
      %v4796 = vpack.c.bf16 %v4764, %v4764
      %v4797 = vpack.c.bf16 %v4765, %v4765
      %v4798 = vpack.c.bf16 %v4766, %v4766
      %v4799 = vpack.c.bf16 %v4767, %v4767
      %v4800 = vpack.c.bf16 %v4768, %v4768
      %v4801 = vpack.c.bf16 %v4769, %v4769
      %v4802 = vpack.c.bf16 %v4770, %v4770
      %v4803 = vpack.c.bf16 %v4771, %v4771
      %v4804 = vpack.c.bf16 %v4772, %v4772
      %v4805 = vpack.c.bf16 %v4773, %v4773
      %v4806 = vpack.c.bf16 %v4774, %v4774
      %v4807 = vpack.c.bf16 %v4775, %v4775
      %v4808 = vpack.c.bf16 %v4776, %v4776
      %4809 = vst [vmem:[%s269] sm:$0xf] %v4777
      %4810 = vst [vmem:[%s269 + $0x4] sm:$0xf] %v4778
      %4811 = vst [vmem:[%s269 + $0x8] sm:$0xf] %v4779
      %4812 = vst [vmem:[%s269 + $0xc] sm:$0xf] %v4780
      %4813 = vst [vmem:[%s269 + $0x10] sm:$0xf] %v4781
      %4814 = vst [vmem:[%s269 + $0x14] sm:$0xf] %v4782
      %4815 = vst [vmem:[%s269 + $0x18] sm:$0xf] %v4783
      %4816 = vst [vmem:[%s269 + $0x1c] sm:$0xf] %v4784
      %4817 = vst [vmem:[%s269 + $0x20] sm:$0xf] %v4785
      %4818 = vst [vmem:[%s269 + $0x24] sm:$0xf] %v4786
      %4819 = vst [vmem:[%s269 + $0x28] sm:$0xf] %v4787
      %4820 = vst [vmem:[%s269 + $0x2c] sm:$0xf] %v4788
      %4821 = vst [vmem:[%s269 + $0x30] sm:$0xf] %v4789
      %4822 = vst [vmem:[%s269 + $0x34] sm:$0xf] %v4790
      %4823 = vst [vmem:[%s269 + $0x38] sm:$0xf] %v4791
      %4824 = vst [vmem:[%s269 + $0x3c] sm:$0xf] %v4792
      %4825 = vst [vmem:[%s269 + $0x40] sm:$0xf] %v4793
      %4826 = vst [vmem:[%s269 + $0x44] sm:$0xf] %v4794
      %4827 = vst [vmem:[%s269 + $0x48] sm:$0xf] %v4795
      %4828 = vst [vmem:[%s269 + $0x4c] sm:$0xf] %v4796
      %4829 = vst [vmem:[%s269 + $0x50] sm:$0xf] %v4797
      %4830 = vst [vmem:[%s269 + $0x54] sm:$0xf] %v4798
      %4831 = vst [vmem:[%s269 + $0x58] sm:$0xf] %v4799
      %4832 = vst [vmem:[%s269 + $0x5c] sm:$0xf] %v4800
      %4833 = vst [vmem:[%s269 + $0x60] sm:$0xf] %v4801
      %4834 = vst [vmem:[%s269 + $0x64] sm:$0xf] %v4802
      %4835 = vst [vmem:[%s269 + $0x68] sm:$0xf] %v4803
      %4836 = vst [vmem:[%s269 + $0x6c] sm:$0xf] %v4804
      %4837 = vst [vmem:[%s269 + $0x70] sm:$0xf] %v4805
      %4838 = vst [vmem:[%s269 + $0x74] sm:$0xf] %v4806
      %4839 = vst [vmem:[%s269 + $0x78] sm:$0xf] %v4807
      %4840 = vst [vmem:[%s269 + $0x7c] sm:$0xf] %v4808
      %4841 = vst [vmem:[%s275] sm:$0xff] 0.0
      %v4842 = vadd.f32 %v4745, %v4746
      %v4843 = vadd.f32 %v4842, %v4747
      %v4844 = vadd.f32 %v4843, %v4748
      %v4845 = vadd.f32 %v4844, %v4749
      %v4846 = vadd.f32 %v4845, %v4750
      %v4847 = vadd.f32 %v4846, %v4751
      %v4848 = vadd.f32 %v4847, %v4752
      %v4849 = vadd.f32 %v4848, %v4753
      %v4850 = vadd.f32 %v4849, %v4754
      %v4851 = vadd.f32 %v4850, %v4755
      %v4852 = vadd.f32 %v4851, %v4756
      %v4853 = vadd.f32 %v4852, %v4757
      %v4854 = vadd.f32 %v4853, %v4758
      %v4855 = vadd.f32 %v4854, %v4759
      %v4856 = vadd.f32 %v4855, %v4760
      %v4857 = vadd.f32 %v4856, %v4761
      %v4858 = vadd.f32 %v4857, %v4762
      %v4859 = vadd.f32 %v4858, %v4763
      %v4860 = vadd.f32 %v4859, %v4764
      %v4861 = vadd.f32 %v4860, %v4765
      %v4862 = vadd.f32 %v4861, %v4766
      %v4863 = vadd.f32 %v4862, %v4767
      %v4864 = vadd.f32 %v4863, %v4768
      %v4865 = vadd.f32 %v4864, %v4769
      %v4866 = vadd.f32 %v4865, %v4770
      %v4867 = vadd.f32 %v4866, %v4771
      %v4868 = vadd.f32 %v4867, %v4772
      %v4869 = vadd.f32 %v4868, %v4773
      %v4870 = vadd.f32 %v4869, %v4774
      %v4871 = vadd.f32 %v4870, %v4775
      %v4872 = vadd.f32 %v4871, %v4776
      %v4873 = vrot.slane %v4872, 4
      %v4874 = vadd.f32 %v4872, %v4873
      %v4875 = vrot.slane %v4874, 2
      %v4876 = vadd.f32 %v4874, %v4875
      %v4877 = vrot.slane %v4876, 1
      %v4878 = vadd.f32 %v4876, %v4877
      %4879 = vst [vmem:[%s275] sm:$0x1] %v4878
      %v4880 = vmul.f32 %v4745, %v4745
      %v4881 = vmul.f32 %v4746, %v4746
      %v4882 = vmul.f32 %v4747, %v4747
      %v4883 = vmul.f32 %v4748, %v4748
      %v4884 = vmul.f32 %v4749, %v4749
      %v4885 = vmul.f32 %v4750, %v4750
      %v4886 = vmul.f32 %v4751, %v4751
      %v4887 = vmul.f32 %v4752, %v4752
      %v4888 = vmul.f32 %v4753, %v4753
      %v4889 = vmul.f32 %v4754, %v4754
      %v4890 = vmul.f32 %v4755, %v4755
      %v4891 = vmul.f32 %v4756, %v4756
      %v4892 = vmul.f32 %v4757, %v4757
      %v4893 = vmul.f32 %v4758, %v4758
      %v4894 = vmul.f32 %v4759, %v4759
      %v4895 = vmul.f32 %v4760, %v4760
      %v4896 = vmul.f32 %v4761, %v4761
      %v4897 = vmul.f32 %v4762, %v4762
      %v4898 = vmul.f32 %v4763, %v4763
      %v4899 = vmul.f32 %v4764, %v4764
      %v4900 = vmul.f32 %v4765, %v4765
      %v4901 = vmul.f32 %v4766, %v4766
      %v4902 = vmul.f32 %v4767, %v4767
      %v4903 = vmul.f32 %v4768, %v4768
      %v4904 = vmul.f32 %v4769, %v4769
      %v4905 = vmul.f32 %v4770, %v4770
      %v4906 = vmul.f32 %v4771, %v4771
      %v4907 = vmul.f32 %v4772, %v4772
      %v4908 = vmul.f32 %v4773, %v4773
      %v4909 = vmul.f32 %v4774, %v4774
      %v4910 = vmul.f32 %v4775, %v4775
      %v4911 = vmul.f32 %v4776, %v4776
      %v4912 = vadd.f32 %v4880, %v4881
      %v4913 = vadd.f32 %v4912, %v4882
      %v4914 = vadd.f32 %v4913, %v4883
      %v4915 = vadd.f32 %v4914, %v4884
      %v4916 = vadd.f32 %v4915, %v4885
      %v4917 = vadd.f32 %v4916, %v4886
      %v4918 = vadd.f32 %v4917, %v4887
      %v4919 = vadd.f32 %v4918, %v4888
      %v4920 = vadd.f32 %v4919, %v4889
      %v4921 = vadd.f32 %v4920, %v4890
      %v4922 = vadd.f32 %v4921, %v4891
      %v4923 = vadd.f32 %v4922, %v4892
      %v4924 = vadd.f32 %v4923, %v4893
      %v4925 = vadd.f32 %v4924, %v4894
      %v4926 = vadd.f32 %v4925, %v4895
      %v4927 = vadd.f32 %v4926, %v4896
      %v4928 = vadd.f32 %v4927, %v4897
      %v4929 = vadd.f32 %v4928, %v4898
      %v4930 = vadd.f32 %v4929, %v4899
      %v4931 = vadd.f32 %v4930, %v4900
      %v4932 = vadd.f32 %v4931, %v4901
      %v4933 = vadd.f32 %v4932, %v4902
      %v4934 = vadd.f32 %v4933, %v4903
      %v4935 = vadd.f32 %v4934, %v4904
      %v4936 = vadd.f32 %v4935, %v4905
      %v4937 = vadd.f32 %v4936, %v4906
      %v4938 = vadd.f32 %v4937, %v4907
      %v4939 = vadd.f32 %v4938, %v4908
      %v4940 = vadd.f32 %v4939, %v4909
      %v4941 = vadd.f32 %v4940, %v4910
      %v4942 = vadd.f32 %v4941, %v4911
      %v4943 = vrot.slane %v4942, 4
      %v4944 = vadd.f32 %v4942, %v4943
      %v4945 = vrot.slane %v4944, 2
      %v4946 = vadd.f32 %v4944, %v4945
      %v4947 = vrot.slane %v4946, 1
      %v4948 = vadd.f32 %v4946, %v4947
      %4949 = vst [vmem:[%s275 + $0x1] sm:$0x1] %v4948
      %s4950 = sadd.s32 %s20, %s21
      %p4951 = scmp.lt.s32.totalorder %s4950, 1
      %s4952 = scalar_select %p4951, %s4950, 1
      %s4953 = smul.addr %s4952, 32
      %s4954 = smul.addr %s4953, 4
      %s4955 = scalar_lea.vmem %s3, %s4954
      %s4956 = sadd.s32 %s20, %s21
      %p4957 = scmp.lt.s32.totalorder %s4956, 1
      %s4958 = scalar_select %p4957, %s4956, 1
      %s4959 = smul.addr %s4958, 8
      %s4960 = scalar_lea.vmem %s4, %s4959
      // Predicated region
      $region33: #{conv2d_bn_forward.3} parent=31 // pred_check
        %p4961 = pneg %p125
      $region34: #{conv2d_bn_forward.3} parent=31 // pred_check_branch
        %4963 = sbr.rel (%p4961) target = $region36
      $region35: #{conv2d_bn_forward.3} parent=31 // pred_region
        %s4964 = sadd.s32 %s20, %s21
      $region36: #{conv2d_bn_forward.3} parent=31 // pred_fallthru
        _
      // Predicated region
      $region37: #{conv2d_bn_forward.3} parent=31 // pred_check
        %p4965 = pneg %p153
      $region38: #{conv2d_bn_forward.3} parent=31 // pred_check_branch
        %4967 = sbr.rel (%p4965) target = $region40
      $region39: #{conv2d_bn_forward.3} parent=31 // pred_region
        %s4968 = sadd.s32 %s20, %s21
      $region40: #{conv2d_bn_forward.3} parent=31 // pred_fallthru
        _
    $region32: #{conv2d_bn_forward.3} parent=5 // pred_fallthru
      _
    %p4969 = scmp.le.s32.totalorder 2, %s11
    // Predicated region
    $region41: #{conv2d_bn_forward.3} parent=5 // pred_check
      %p4970 = pneg %p4969
    $region42: #{conv2d_bn_forward.3} parent=5 // pred_check_branch
      %4972 = sbr.rel (%p4970) target = $region44
    $region43: #{conv2d_bn_forward.3} parent=5 // pred_region
      %s4973 = ssub.s32 %s11, 2
      // Predicated region
      $region45: #{conv2d_bn_forward.3} parent=43 // pred_check
        %p4974 = pneg %p131
      $region46: #{conv2d_bn_forward.3} parent=43 // pred_check_branch
        %4976 = sbr.rel (%p4974) target = $region48
      $region47: #{conv2d_bn_forward.3} parent=43 // pred_region
        %s4977 = sadd.s32 %s22, %s23
        %p4978 = scmp.lt.s32.totalorder %s4977, 1
        %s4979 = scalar_select %p4978, %s4977, 1
        %s4980 = smul.addr %s4979, 32
        %s4981 = smul.addr %s4980, 4
        %s4982 = scalar_lea.vmem %s3, %s4981
      $region48: #{conv2d_bn_forward.3} parent=43 // pred_fallthru
        _
      // Predicated region
      $region49: #{conv2d_bn_forward.3} parent=43 // pred_check
        %p4983 = pneg %p159
      $region50: #{conv2d_bn_forward.3} parent=43 // pred_check_branch
        %4985 = sbr.rel (%p4983) target = $region52
      $region51: #{conv2d_bn_forward.3} parent=43 // pred_region
        %s4986 = sadd.s32 %s22, %s23
        %p4987 = scmp.lt.s32.totalorder %s4986, 1
        %s4988 = scalar_select %p4987, %s4986, 1
        %s4989 = smul.addr %s4988, 8
        %s4990 = scalar_lea.vmem %s4, %s4989
      $region52: #{conv2d_bn_forward.3} parent=43 // pred_fallthru
        _
    $region44: #{conv2d_bn_forward.3} parent=5 // pred_fallthru
      _
  $region6: #{conv2d_bn_forward.3} parent=0 // loop_footer
    %s15 = sadd.s32 1, %s11
  $region7: #{conv2d_bn_forward.3} parent=0 // loop_footer_branch
    %10 = sbr.rel target = $region3
  $region8: #{conv2d_bn_forward.3} parent=0 // loop_exit
    _

// kernel: conv2d_bn_forward.4
$region0: #{conv2d_bn_forward.4}
  #allocation0 [shape = 'u32[]', space=smem, size = 0x4, offset = 0x4, fixed_abs, tag = 'smem constant byte address 0x4 - core index']
  #allocation1 [shape = 'u32[72,128]{1,0:T(1,128)}', space=vmem, size = 0x9000, scoped, tag = 'internal scratch']
  #allocation2 [shape = 'bf16[18,18,128]{2,1,0:T(8,128)(2,1)}', space=vmem, size = 0x1b000, scoped, tag = 'scratch operand']
  %s0 = inlined_call_operand.vmem [shape: f32[8,128], index: 0, kind: input, shape index: {}]
  %s1 = inlined_call_operand.vmem [shape: bf16[2,16,16,128], index: 1, kind: input, shape index: {}]
  %s2 = inlined_call_operand.vmem [shape: bf16[2,2,16,128], index: 2, kind: input, shape index: {}]
  %s3 = inlined_call_operand.vmem [shape: bf16[9,128,128], index: 3, kind: input, shape index: {}]
  %s4 = inlined_call_operand.vmem [shape: bf16[2,256,128], index: 4, kind: output, shape index: {0}]
  %s5 = inlined_call_operand.vmem [shape: f32[2,8,128], index: 5, kind: output, shape index: {1}]
  %6 = xla_tuple %s4, %s5
  %s7 = sld [smem:[#allocation0]]
  $region57: #{conv2d_bn_forward.4} parent=0
    _
  %s9 = ssub.s32 1, %s7
  %s10 = scalar_select 0, %s9, %s7
  loop: start=0, step=1, limit=4
  $region2: #{conv2d_bn_forward.4} parent=0 // loop_pre_header
    _
  $region3: #{conv2d_bn_forward.4} parent=0 // loop_header
    %s12 = sphi 0, %s16
    %p13 = scmp.ge.s32.totalorder %s12, 4
    %s19 = sphi 0, %s31
    %s20 = sphi 0, %s27
    %s21 = sphi 0, %s19
    %s22 = sphi 0, %s20
    %s23 = sphi 0, %s21
    %s24 = sphi 0, %s22
    %s32 = sphi 0, %s32
    %s34 = sphi 0, %s32
    %s35 = sphi 0, %s34
    %s49 = sphi 0, %s35
    %s57 = sphi 0, %s59
    %s60 = sphi 0, %s57
    %s61 = sphi 0, %s60
    %s77 = sphi 0, %s61
    %s85 = sphi 0, %s87
    %s88 = sphi 0, %s85
    %s89 = sphi 0, %s88
    %s105 = sphi 0, %s89
    %s109 = sphi 0, %s109
    %s111 = sphi 0, %s109
    %s112 = sphi 0, %s111
    %s126 = sphi 0, %s112
    %s134 = sphi 0, %s136
    %s137 = sphi 0, %s134
    %s138 = sphi 0, %s137
    %s154 = sphi 0, %s138
    %s162 = sphi 0, %s164
    %s165 = sphi 0, %s162
    %s166 = sphi 0, %s165
    %s182 = sphi 0, %s166
  $region4: #{conv2d_bn_forward.4} parent=0 // loop_header_branch
    %15 = sbr.rel (%p13) target = $region8
  $region5: #{conv2d_bn_forward.4} parent=0 // loop_body
    %s17 = ssub.s32 %s12, 1
    %s18 = ssub.s32 %s12, 2
    %s25 = sadd.s32 1, %s20
    %p26 = scmp.ge.s32.totalorder %s25, 1
    %s27 = scalar_select %p26, 0, %s25
    %s28 = sadd.s32 1, %s19
    %s29 = scalar_select %p26, %s28, %s19
    %p30 = scmp.ge.s32.totalorder %s29, 2
    %s31 = scalar_select %p30, 0, %s29
    %s33 = sadd.s32 %s32, 1
    %p36 = scmp.eq.s32.totalorder %s12, 1
    %p37 = scmp.ne.s32.totalorder %s32, %s34
    %p38 = scmp.eq.s32.totalorder %s12, 0
    %p39 = por %p37, %p38
    %p40 = scmp.ne.s32.totalorder %s32, %s34
    %p41 = scmp.eq.s32.totalorder %s17, 1
    %p42 = por %p40, %p41
    %p43 = scmp.ne.s32.totalorder %s34, %s35
    %p44 = scmp.eq.s32.totalorder %s17, 0
    %p45 = por %p43, %p44
    %p46 = scmp.ne.s32.totalorder %s34, %s35
    %p47 = scmp.eq.s32.totalorder %s18, 1
    %p48 = por %p46, %p47
    %p50 = scmp.ne.s32.totalorder %s35, %s49
    %p51 = scmp.eq.s32.totalorder %s18, 0
    %p52 = por %p50, %p51
    %s53 = ssub.s32 %s19, %s31
    %s54 = ssub.s32 %s20, %s27
    %s55 = sor.u32 %s53, %s54
    %p56 = scmp.eq.s32.totalorder %s55, 0
    %s58 = sadd.s32 %s57, 1
    %s59 = scalar_select %p56, %s57, %s58
    %p62 = pneg %p56
    %p63 = scmp.eq.s32.totalorder %s12, 1
    %p64 = por %p62, %p63
    %p65 = scmp.ne.s32.totalorder %s57, %s60
    %p66 = scmp.eq.s32.totalorder %s12, 0
    %p67 = por %p65, %p66
    %p68 = scmp.ne.s32.totalorder %s57, %s60
    %p69 = scmp.eq.s32.totalorder %s17, 1
    %p70 = por %p68, %p69
    %p71 = scmp.ne.s32.totalorder %s60, %s61
    %p72 = scmp.eq.s32.totalorder %s17, 0
    %p73 = por %p71, %p72
    %p74 = scmp.ne.s32.totalorder %s60, %s61
    %p75 = scmp.eq.s32.totalorder %s18, 1
    %p76 = por %p74, %p75
    %p78 = scmp.ne.s32.totalorder %s61, %s77
    %p79 = scmp.eq.s32.totalorder %s18, 0
    %p80 = por %p78, %p79
    %s81 = sadd.s32 %s19, %s20
    %s82 = sadd.s32 %s31, %s27
    %s83 = ssub.s32 %s81, %s82
    %p84 = scmp.eq.s32.totalorder %s83, 0
    %s86 = sadd.s32 %s85, 1
    %s87 = scalar_select %p84, %s85, %s86
    %p90 = pneg %p84
    %p91 = scmp.eq.s32.totalorder %s12, 1
    %p92 = por %p90, %p91
    %p93 = scmp.ne.s32.totalorder %s85, %s88
    %p94 = scmp.eq.s32.totalorder %s12, 0
    %p95 = por %p93, %p94
    %p96 = scmp.ne.s32.totalorder %s85, %s88
    %p97 = scmp.eq.s32.totalorder %s17, 1
    %p98 = por %p96, %p97
    %p99 = scmp.ne.s32.totalorder %s88, %s89
    %p100 = scmp.eq.s32.totalorder %s17, 0
    %p101 = por %p99, %p100
    %p102 = scmp.ne.s32.totalorder %s88, %s89
    %p103 = scmp.eq.s32.totalorder %s18, 1
    %p104 = por %p102, %p103
    %p106 = scmp.ne.s32.totalorder %s89, %s105
    %p107 = scmp.eq.s32.totalorder %s18, 0
    %p108 = por %p106, %p107
    %s110 = sadd.s32 %s109, 1
    %p113 = scmp.eq.s32.totalorder %s12, 1
    %p114 = scmp.ne.s32.totalorder %s109, %s111
    %p115 = scmp.eq.s32.totalorder %s12, 0
    %p116 = por %p114, %p115
    %p117 = scmp.ne.s32.totalorder %s109, %s111
    %p118 = scmp.eq.s32.totalorder %s17, 1
    %p119 = por %p117, %p118
    %p120 = scmp.ne.s32.totalorder %s111, %s112
    %p121 = scmp.eq.s32.totalorder %s17, 0
    %p122 = por %p120, %p121
    %p123 = scmp.ne.s32.totalorder %s111, %s112
    %p124 = scmp.eq.s32.totalorder %s18, 1
    %p125 = por %p123, %p124
    %p127 = scmp.ne.s32.totalorder %s112, %s126
    %p128 = scmp.eq.s32.totalorder %s18, 0
    %p129 = por %p127, %p128
    %s130 = sadd.s32 %s19, %s20
    %s131 = sadd.s32 %s31, %s27
    %s132 = ssub.s32 %s130, %s131
    %p133 = scmp.eq.s32.totalorder %s132, 0
    %s135 = sadd.s32 %s134, 1
    %s136 = scalar_select %p133, %s134, %s135
    %p139 = pneg %p133
    %p140 = scmp.eq.s32.totalorder %s12, 1
    %p141 = por %p139, %p140
    %p142 = scmp.ne.s32.totalorder %s134, %s137
    %p143 = scmp.eq.s32.totalorder %s12, 0
    %p144 = por %p142, %p143
    %p145 = scmp.ne.s32.totalorder %s134, %s137
    %p146 = scmp.eq.s32.totalorder %s17, 1
    %p147 = por %p145, %p146
    %p148 = scmp.ne.s32.totalorder %s137, %s138
    %p149 = scmp.eq.s32.totalorder %s17, 0
    %p150 = por %p148, %p149
    %p151 = scmp.ne.s32.totalorder %s137, %s138
    %p152 = scmp.eq.s32.totalorder %s18, 1
    %p153 = por %p151, %p152
    %p155 = scmp.ne.s32.totalorder %s138, %s154
    %p156 = scmp.eq.s32.totalorder %s18, 0
    %p157 = por %p155, %p156
    %s158 = sadd.s32 %s19, %s20
    %s159 = sadd.s32 %s31, %s27
    %s160 = ssub.s32 %s158, %s159
    %p161 = scmp.eq.s32.totalorder %s160, 0
    %s163 = sadd.s32 %s162, 1
    %s164 = scalar_select %p161, %s162, %s163
    %p167 = pneg %p161
    %p168 = scmp.eq.s32.totalorder %s12, 1
    %p169 = por %p167, %p168
    %p170 = scmp.ne.s32.totalorder %s162, %s165
    %p171 = scmp.eq.s32.totalorder %s12, 0
    %p172 = por %p170, %p171
    %p173 = scmp.ne.s32.totalorder %s162, %s165
    %p174 = scmp.eq.s32.totalorder %s17, 1
    %p175 = por %p173, %p174
    %p176 = scmp.ne.s32.totalorder %s165, %s166
    %p177 = scmp.eq.s32.totalorder %s17, 0
    %p178 = por %p176, %p177
    %p179 = scmp.ne.s32.totalorder %s165, %s166
    %p180 = scmp.eq.s32.totalorder %s18, 1
    %p181 = por %p179, %p180
    %p183 = scmp.ne.s32.totalorder %s166, %s182
    %p184 = scmp.eq.s32.totalorder %s18, 0
    %p185 = por %p183, %p184
    %p186 = scmp.le.s32.totalorder 1, %s12
    %p187 = scmp.lt.s32.totalorder %s12, 3
    %p188 = pnand %p186, %p187
    %p189 = pneg %p188
    // Predicated region
    $region9: #{conv2d_bn_forward.4} parent=5 // pred_check
      _
    $region10: #{conv2d_bn_forward.4} parent=5 // pred_check_branch
      %191 = sbr.rel (%p188) target = $region12
    $region11: #{conv2d_bn_forward.4} parent=5 // pred_region
      %s192 = ssub.s32 %s12, 1
      // Predicated region
      $region13: #{conv2d_bn_forward.4} parent=11 // pred_check
        %p193 = pneg %p45
      $region14: #{conv2d_bn_forward.4} parent=11 // pred_check_branch
        %195 = sbr.rel (%p193) target = $region16
      $region15: #{conv2d_bn_forward.4} parent=11 // pred_region
        _
      $region16: #{conv2d_bn_forward.4} parent=11 // pred_fallthru
        _
      // Predicated region
      $region17: #{conv2d_bn_forward.4} parent=11 // pred_check
        %p196 = pneg %p122
      $region18: #{conv2d_bn_forward.4} parent=11 // pred_check_branch
        %198 = sbr.rel (%p196) target = $region20
      $region19: #{conv2d_bn_forward.4} parent=11 // pred_region
        _
      $region20: #{conv2d_bn_forward.4} parent=11 // pred_fallthru
        _
    $region12: #{conv2d_bn_forward.4} parent=5 // pred_fallthru
      _
    %p199 = scmp.lt.s32.totalorder %s12, 2
    // Predicated region
    $region21: #{conv2d_bn_forward.4} parent=5 // pred_check
      %p200 = pneg %p199
    $region22: #{conv2d_bn_forward.4} parent=5 // pred_check_branch
      %202 = sbr.rel (%p200) target = $region24
    $region23: #{conv2d_bn_forward.4} parent=5 // pred_region
      // Predicated region
      $region25: #{conv2d_bn_forward.4} parent=23 // pred_check
        %p203 = pneg %p67
      $region26: #{conv2d_bn_forward.4} parent=23 // pred_check_branch
        %205 = sbr.rel (%p203) target = $region28
      $region27: #{conv2d_bn_forward.4} parent=23 // pred_region
        %s206 = smul.u32 16, %s20
        %p207 = scmp.lt.s32.totalorder %s19, 1
        %s208 = scalar_select %p207, %s19, 1
        %p209 = scmp.lt.s32.totalorder %s206, 15
        %s210 = scalar_select %p209, %s206, 15
        %s211 = smul.addr %s210, 2
        %s212 = smul.addr %s208, 32
        %s213 = sadd.s32 %s211, %s212
        %s214 = smul.addr %s213, 4
        %s215 = scalar_lea.vmem %s1, %s214
        %s216 = smul.u32 16, %s20
      $region28: #{conv2d_bn_forward.4} parent=23 // pred_fallthru
        _
      // Predicated region
      $region29: #{conv2d_bn_forward.4} parent=23 // pred_check
        %p217 = pneg %p95
      $region30: #{conv2d_bn_forward.4} parent=23 // pred_check_branch
        %219 = sbr.rel (%p217) target = $region32
      $region31: #{conv2d_bn_forward.4} parent=23 // pred_region
        %s220 = sadd.s32 %s19, %s20
        %p221 = scmp.lt.s32.totalorder %s220, 1
        %s222 = scalar_select %p221, %s220, 1
        %s223 = smul.addr %s222, 4
        %s224 = smul.addr %s223, 4
        %s225 = scalar_lea.vmem %s2, %s224
        %s226 = sadd.s32 %s19, %s20
      $region32: #{conv2d_bn_forward.4} parent=23 // pred_fallthru
        _
    $region24: #{conv2d_bn_forward.4} parent=5 // pred_fallthru
      _
    %p227 = scmp.le.s32.totalorder 1, %s12
    %p228 = scmp.lt.s32.totalorder %s12, 3
    %p229 = pnand %p227, %p228
    %p230 = pneg %p229
    // Predicated region
    $region33: #{conv2d_bn_forward.4} parent=5 // pred_check
      _
    $region34: #{conv2d_bn_forward.4} parent=5 // pred_check_branch
      %232 = sbr.rel (%p229) target = $region36
    $region35: #{conv2d_bn_forward.4} parent=5 // pred_region
      %s233 = ssub.s32 %s12, 1
      %p234 = pneg %p45
      %p235 = pneg %p42
      %s236 = smul.u32 16, %s22
      %p237 = scmp.lt.s32.totalorder %s21, 1
      %s238 = scalar_select %p237, %s21, 1
      %p239 = scmp.lt.s32.totalorder %s236, 15
      %s240 = scalar_select %p239, %s236, 15
      %s241 = smul.addr %s240, 2
      %s242 = smul.addr %s238, 32
      %s243 = sadd.s32 %s241, %s242
      %s244 = smul.addr %s243, 4
      %s245 = scalar_lea.vmem %s1, %s244
      %p246 = pneg %p73
      %p247 = pneg %p70
      %s248 = sadd.s32 %s21, %s22
      %p249 = scmp.lt.s32.totalorder %s248, 1
      %s250 = scalar_select %p249, %s248, 1
      %s251 = smul.addr %s250, 4
      %s252 = smul.addr %s251, 4
      %s253 = scalar_lea.vmem %s2, %s252
      %p254 = pneg %p101
      %p255 = pneg %p98
      %p256 = pneg %p122
      %p257 = pneg %p119
      %p258 = pneg %p150
      %p259 = pneg %p147
      %s260 = sadd.s32 %s21, %s22
      %p261 = scmp.lt.s32.totalorder %s260, 1
      %s262 = scalar_select %p261, %s260, 1
      %s263 = smul.addr %s262, 32
      %s264 = smul.addr %s263, 4
      %s265 = scalar_lea.vmem %s4, %s264
      %p266 = pneg %p178
      %p267 = pneg %p175
      %s268 = sadd.s32 %s21, %s22
      %p269 = scmp.lt.s32.totalorder %s268, 1
      %s270 = scalar_select %p269, %s268, 1
      %s271 = smul.addr %s270, 8
      %s272 = scalar_lea.vmem %s5, %s271
      %s273 = smul.u32 16, %s22
      %p274 = scmp.lt.s32.totalorder %s21, 1
      %s275 = scalar_select %p274, %s21, 1
      %p276 = scmp.lt.s32.totalorder %s273, 15
      %s277 = scalar_select %p276, %s273, 15
      %s278 = smul.addr %s277, 2
      %s279 = smul.addr %s275, 32
      %s280 = sadd.s32 %s278, %s279
      %s281 = smul.addr %s280, 4
      %s282 = scalar_lea.vmem %s1, %s281
      %s283 = smul.u32 16, %s22
      %s284 = sadd.s32 %s21, %s22
      %p285 = scmp.lt.s32.totalorder %s284, 1
      %s286 = scalar_select %p285, %s284, 1
      %s287 = smul.addr %s286, 4
      %s288 = smul.addr %s287, 4
      %s289 = scalar_lea.vmem %s2, %s288
      %s290 = sadd.s32 %s21, %s22
      %s291 = sadd.s32 %s21, %s22
      %p292 = scmp.lt.s32.totalorder %s291, 1
      %s293 = scalar_select %p292, %s291, 1
      %s294 = smul.addr %s293, 32
      %s295 = smul.addr %s294, 4
      %s296 = scalar_lea.vmem %s4, %s295
      %s297 = sadd.s32 %s21, %s22
      %s298 = sadd.s32 %s21, %s22
      %p299 = scmp.lt.s32.totalorder %s298, 1
      %s300 = scalar_select %p299, %s298, 1
      %s301 = smul.addr %s300, 8
      %s302 = scalar_lea.vmem %s5, %s301
      %s303 = sadd.s32 %s21, %s22
      %v305 = vld [vmem:[%s282] sm:$0xf]
      %v306 = vld [vmem:[%s282 + $0x4] sm:$0xf]
      %v307 = vld [vmem:[%s282 + $0x8] sm:$0xf]
      %v308 = vld [vmem:[%s282 + $0xc] sm:$0xf]
      %v309 = vld [vmem:[%s282 + $0x10] sm:$0xf]
      %v310 = vld [vmem:[%s282 + $0x14] sm:$0xf]
      %v311 = vld [vmem:[%s282 + $0x18] sm:$0xf]
      %v312 = vld [vmem:[%s282 + $0x1c] sm:$0xf]
      %v313 = vld [vmem:[%s282 + $0x20] sm:$0xf]
      %v314 = vld [vmem:[%s282 + $0x24] sm:$0xf]
      %v315 = vld [vmem:[%s282 + $0x28] sm:$0xf]
      %v316 = vld [vmem:[%s282 + $0x2c] sm:$0xf]
      %v317 = vld [vmem:[%s282 + $0x30] sm:$0xf]
      %v318 = vld [vmem:[%s282 + $0x34] sm:$0xf]
      %v319 = vld [vmem:[%s282 + $0x38] sm:$0xf]
      %v320 = vld [vmem:[%s282 + $0x3c] sm:$0xf]
      %v321 = vld [vmem:[%s282 + $0x40] sm:$0xf]
      %v322 = vld [vmem:[%s282 + $0x44] sm:$0xf]
      %v323 = vld [vmem:[%s282 + $0x48] sm:$0xf]
      %v324 = vld [vmem:[%s282 + $0x4c] sm:$0xf]
      %v325 = vld [vmem:[%s282 + $0x50] sm:$0xf]
      %v326 = vld [vmem:[%s282 + $0x54] sm:$0xf]
      %v327 = vld [vmem:[%s282 + $0x58] sm:$0xf]
      %v328 = vld [vmem:[%s282 + $0x5c] sm:$0xf]
      %v329 = vld [vmem:[%s282 + $0x60] sm:$0xf]
      %v330 = vld [vmem:[%s282 + $0x64] sm:$0xf]
      %v331 = vld [vmem:[%s282 + $0x68] sm:$0xf]
      %v332 = vld [vmem:[%s282 + $0x6c] sm:$0xf]
      %v333 = vld [vmem:[%s282 + $0x70] sm:$0xf]
      %v334 = vld [vmem:[%s282 + $0x74] sm:$0xf]
      %v335 = vld [vmem:[%s282 + $0x78] sm:$0xf]
      %v336 = vld [vmem:[%s282 + $0x7c] sm:$0xf]
      %v337 = vld [vmem:[%s289] sm:$0xf]
      %v338 = vld [vmem:[%s289 + $0x4] sm:$0xf]
      %s339 = scalar_lea.vmem %s289, 8
      %v340 = vld [vmem:[%s339] sm:$0xf]
      %v341 = vld [vmem:[%s339 + $0x4] sm:$0xf]
      %v342 = vld [vmem:[%s0] sm:$0x1]
      %v343 = vld [vmem:[%s0 + $0x1] sm:$0x1]
      %v344 = vunpack.c.l.bf16 %v305
      %v345 = vunpack.c.l.bf16 %v306
      %v346 = vunpack.c.l.bf16 %v307
      %v347 = vunpack.c.l.bf16 %v308
      %v348 = vunpack.c.l.bf16 %v309
      %v349 = vunpack.c.l.bf16 %v310
      %v350 = vunpack.c.l.bf16 %v311
      %v351 = vunpack.c.l.bf16 %v312
      %v352 = vunpack.c.l.bf16 %v313
      %v353 = vunpack.c.l.bf16 %v314
      %v354 = vunpack.c.l.bf16 %v315
      %v355 = vunpack.c.l.bf16 %v316
      %v356 = vunpack.c.l.bf16 %v317
      %v357 = vunpack.c.l.bf16 %v318
      %v358 = vunpack.c.l.bf16 %v319
      %v359 = vunpack.c.l.bf16 %v320
      %v360 = vunpack.c.l.bf16 %v321
      %v361 = vunpack.c.l.bf16 %v322
      %v362 = vunpack.c.l.bf16 %v323
      %v363 = vunpack.c.l.bf16 %v324
      %v364 = vunpack.c.l.bf16 %v325
      %v365 = vunpack.c.l.bf16 %v326
      %v366 = vunpack.c.l.bf16 %v327
      %v367 = vunpack.c.l.bf16 %v328
      %v368 = vunpack.c.l.bf16 %v329
      %v369 = vunpack.c.l.bf16 %v330
      %v370 = vunpack.c.l.bf16 %v331
      %v371 = vunpack.c.l.bf16 %v332
      %v372 = vunpack.c.l.bf16 %v333
      %v373 = vunpack.c.l.bf16 %v334
      %v374 = vunpack.c.l.bf16 %v335
      %v375 = vunpack.c.l.bf16 %v336
      %v376 = vperm.slane %v342, 0
      %v377 = vmul.f32 %v344, %v376
      %v378 = vmul.f32 %v345, %v376
      %v379 = vmul.f32 %v346, %v376
      %v380 = vmul.f32 %v347, %v376
      %v381 = vmul.f32 %v348, %v376
      %v382 = vmul.f32 %v349, %v376
      %v383 = vmul.f32 %v350, %v376
      %v384 = vmul.f32 %v351, %v376
      %v385 = vmul.f32 %v352, %v376
      %v386 = vmul.f32 %v353, %v376
      %v387 = vmul.f32 %v354, %v376
      %v388 = vmul.f32 %v355, %v376
      %v389 = vmul.f32 %v356, %v376
      %v390 = vmul.f32 %v357, %v376
      %v391 = vmul.f32 %v358, %v376
      %v392 = vmul.f32 %v359, %v376
      %v393 = vmul.f32 %v360, %v376
      %v394 = vmul.f32 %v361, %v376
      %v395 = vmul.f32 %v362, %v376
      %v396 = vmul.f32 %v363, %v376
      %v397 = vmul.f32 %v364, %v376
      %v398 = vmul.f32 %v365, %v376
      %v399 = vmul.f32 %v366, %v376
      %v400 = vmul.f32 %v367, %v376
      %v401 = vmul.f32 %v368, %v376
      %v402 = vmul.f32 %v369, %v376
      %v403 = vmul.f32 %v370, %v376
      %v404 = vmul.f32 %v371, %v376
      %v405 = vmul.f32 %v372, %v376
      %v406 = vmul.f32 %v373, %v376
      %v407 = vmul.f32 %v374, %v376
      %v408 = vmul.f32 %v375, %v376
      %v409 = vperm.slane %v343, 0
      %v410 = vadd.f32 %v377, %v409
      %v411 = vadd.f32 %v378, %v409
      %v412 = vadd.f32 %v379, %v409
      %v413 = vadd.f32 %v380, %v409
      %v414 = vadd.f32 %v381, %v409
      %v415 = vadd.f32 %v382, %v409
      %v416 = vadd.f32 %v383, %v409
      %v417 = vadd.f32 %v384, %v409
      %v418 = vadd.f32 %v385, %v409
      %v419 = vadd.f32 %v386, %v409
      %v420 = vadd.f32 %v387, %v409
      %v421 = vadd.f32 %v388, %v409
      %v422 = vadd.f32 %v389, %v409
      %v423 = vadd.f32 %v390, %v409
      %v424 = vadd.f32 %v391, %v409
      %v425 = vadd.f32 %v392, %v409
      %v426 = vadd.f32 %v393, %v409
      %v427 = vadd.f32 %v394, %v409
      %v428 = vadd.f32 %v395, %v409
      %v429 = vadd.f32 %v396, %v409
      %v430 = vadd.f32 %v397, %v409
      %v431 = vadd.f32 %v398, %v409
      %v432 = vadd.f32 %v399, %v409
      %v433 = vadd.f32 %v400, %v409
      %v434 = vadd.f32 %v401, %v409
      %v435 = vadd.f32 %v402, %v409
      %v436 = vadd.f32 %v403, %v409
      %v437 = vadd.f32 %v404, %v409
      %v438 = vadd.f32 %v405, %v409
      %v439 = vadd.f32 %v406, %v409
      %v440 = vadd.f32 %v407, %v409
      %v441 = vadd.f32 %v408, %v409
      %v442 = vmax.f32 %v410, 0.0
      %v443 = vmax.f32 %v411, 0.0
      %v444 = vmax.f32 %v412, 0.0
      %v445 = vmax.f32 %v413, 0.0
      %v446 = vmax.f32 %v414, 0.0
      %v447 = vmax.f32 %v415, 0.0
      %v448 = vmax.f32 %v416, 0.0
      %v449 = vmax.f32 %v417, 0.0
      %v450 = vmax.f32 %v418, 0.0
      %v451 = vmax.f32 %v419, 0.0
      %v452 = vmax.f32 %v420, 0.0
      %v453 = vmax.f32 %v421, 0.0
      %v454 = vmax.f32 %v422, 0.0
      %v455 = vmax.f32 %v423, 0.0
      %v456 = vmax.f32 %v424, 0.0
      %v457 = vmax.f32 %v425, 0.0
      %v458 = vmax.f32 %v426, 0.0
      %v459 = vmax.f32 %v427, 0.0
      %v460 = vmax.f32 %v428, 0.0
      %v461 = vmax.f32 %v429, 0.0
      %v462 = vmax.f32 %v430, 0.0
      %v463 = vmax.f32 %v431, 0.0
      %v464 = vmax.f32 %v432, 0.0
      %v465 = vmax.f32 %v433, 0.0
      %v466 = vmax.f32 %v434, 0.0
      %v467 = vmax.f32 %v435, 0.0
      %v468 = vmax.f32 %v436, 0.0
      %v469 = vmax.f32 %v437, 0.0
      %v470 = vmax.f32 %v438, 0.0
      %v471 = vmax.f32 %v439, 0.0
      %v472 = vmax.f32 %v440, 0.0
      %v473 = vmax.f32 %v441, 0.0
      %v474 = vpack.c.bf16 %v442, %v442
      %v475 = vpack.c.bf16 %v443, %v443
      %v476 = vpack.c.bf16 %v444, %v444
      %v477 = vpack.c.bf16 %v445, %v445
      %v478 = vpack.c.bf16 %v446, %v446
      %v479 = vpack.c.bf16 %v447, %v447
      %v480 = vpack.c.bf16 %v448, %v448
      %v481 = vpack.c.bf16 %v449, %v449
      %v482 = vpack.c.bf16 %v450, %v450
      %v483 = vpack.c.bf16 %v451, %v451
      %v484 = vpack.c.bf16 %v452, %v452
      %v485 = vpack.c.bf16 %v453, %v453
      %v486 = vpack.c.bf16 %v454, %v454
      %v487 = vpack.c.bf16 %v455, %v455
      %v488 = vpack.c.bf16 %v456, %v456
      %v489 = vpack.c.bf16 %v457, %v457
      %v490 = vpack.c.bf16 %v458, %v458
      %v491 = vpack.c.bf16 %v459, %v459
      %v492 = vpack.c.bf16 %v460, %v460
      %v493 = vpack.c.bf16 %v461, %v461
      %v494 = vpack.c.bf16 %v462, %v462
      %v495 = vpack.c.bf16 %v463, %v463
      %v496 = vpack.c.bf16 %v464, %v464
      %v497 = vpack.c.bf16 %v465, %v465
      %v498 = vpack.c.bf16 %v466, %v466
      %v499 = vpack.c.bf16 %v467, %v467
      %v500 = vpack.c.bf16 %v468, %v468
      %v501 = vpack.c.bf16 %v469, %v469
      %v502 = vpack.c.bf16 %v470, %v470
      %v503 = vpack.c.bf16 %v471, %v471
      %v504 = vpack.c.bf16 %v472, %v472
      %v505 = vpack.c.bf16 %v473, %v473
      %506 = vst [vmem:[#allocation2] sm:$0xf] 0
      %507 = vst [vmem:[#allocation2 + $0x4] sm:$0xf] 0
      %508 = vst [vmem:[#allocation2 + $0x8] sm:$0x1] 0
      %509 = vst [vmem:[#allocation2 + $0xc] sm:$0xf] 0
      %510 = vst [vmem:[#allocation2 + $0x10] sm:$0xf] 0
      %511 = vst [vmem:[#allocation2 + $0x14] sm:$0x1] 0
      %512 = vst [vmem:[#allocation2 + $0x18] sm:$0xf] 0
      %513 = vst [vmem:[#allocation2 + $0x1c] sm:$0xf] 0
      %514 = vst [vmem:[#allocation2 + $0x20] sm:$0x1] 0
      %515 = vst [vmem:[#allocation2 + $0x24] sm:$0xf] 0
      %516 = vst [vmem:[#allocation2 + $0x28] sm:$0xf] 0
      %517 = vst [vmem:[#allocation2 + $0x2c] sm:$0x1] 0
      %518 = vst [vmem:[#allocation2 + $0x30] sm:$0xf] 0
      %519 = vst [vmem:[#allocation2 + $0x34] sm:$0xf] 0
      %520 = vst [vmem:[#allocation2 + $0x38] sm:$0x1] 0
      %521 = vst [vmem:[#allocation2 + $0x3c] sm:$0xf] 0
      %522 = vst [vmem:[#allocation2 + $0x40] sm:$0xf] 0
      %523 = vst [vmem:[#allocation2 + $0x44] sm:$0x1] 0
      %524 = vst [vmem:[#allocation2 + $0x48] sm:$0xf] 0
      %525 = vst [vmem:[#allocation2 + $0x4c] sm:$0xf] 0
      %526 = vst [vmem:[#allocation2 + $0x50] sm:$0x1] 0
      %527 = vst [vmem:[#allocation2 + $0x54] sm:$0xf] 0
      %528 = vst [vmem:[#allocation2 + $0x58] sm:$0xf] 0
      %529 = vst [vmem:[#allocation2 + $0x5c] sm:$0x1] 0
      %530 = vst [vmem:[#allocation2 + $0x60] sm:$0xf] 0
      %531 = vst [vmem:[#allocation2 + $0x64] sm:$0xf] 0
      %532 = vst [vmem:[#allocation2 + $0x68] sm:$0x1] 0
      %533 = vst [vmem:[#allocation2 + $0x6c] sm:$0xf] 0
      %534 = vst [vmem:[#allocation2 + $0x70] sm:$0xf] 0
      %535 = vst [vmem:[#allocation2 + $0x74] sm:$0x1] 0
      %536 = vst [vmem:[#allocation2 + $0x78] sm:$0xf] 0
      %537 = vst [vmem:[#allocation2 + $0x7c] sm:$0xf] 0
      %538 = vst [vmem:[#allocation2 + $0x80] sm:$0x1] 0
      %539 = vst [vmem:[#allocation2 + $0x84] sm:$0xf] 0
      %540 = vst [vmem:[#allocation2 + $0x88] sm:$0xf] 0
      %541 = vst [vmem:[#allocation2 + $0x8c] sm:$0x1] 0
      %542 = vst [vmem:[#allocation2 + $0x90] sm:$0xf] 0
      %543 = vst [vmem:[#allocation2 + $0x94] sm:$0xf] 0
      %544 = vst [vmem:[#allocation2 + $0x98] sm:$0x1] 0
      %545 = vst [vmem:[#allocation2 + $0x9c] sm:$0xf] 0
      %546 = vst [vmem:[#allocation2 + $0xa0] sm:$0xf] 0
      %547 = vst [vmem:[#allocation2 + $0xa4] sm:$0x1] 0
      %548 = vst [vmem:[#allocation2 + $0xa8] sm:$0xf] 0
      %549 = vst [vmem:[#allocation2 + $0xac] sm:$0xf] 0
      %550 = vst [vmem:[#allocation2 + $0xb0] sm:$0x1] 0
      %551 = vst [vmem:[#allocation2 + $0xb4] sm:$0xf] 0
      %552 = vst [vmem:[#allocation2 + $0xb8] sm:$0xf] 0
      %553 = vst [vmem:[#allocation2 + $0xbc] sm:$0x1] 0
      %554 = vst [vmem:[#allocation2 + $0xc0] sm:$0xf] 0
      %555 = vst [vmem:[#allocation2 + $0xc4] sm:$0xf] 0
      %556 = vst [vmem:[#allocation2 + $0xc8] sm:$0x1] 0
      %557 = vst [vmem:[#allocation2 + $0xcc] sm:$0xf] 0
      %558 = vst [vmem:[#allocation2 + $0xd0] sm:$0xf] 0
      %559 = vst [vmem:[#allocation2 + $0xd4] sm:$0x1] 0
      %vm560 = vsmask.f32 256
      %vm561 = vsmask.f32 4368
      %vm562 = vmor %vm560, %vm561
      %v564 = vshrl.u32 %v337, 16
      %v566 = vrot.slane %v564, 7
      %v567 = vshll.u32 %v337, 16
      %v569 = vor.u32 %v566, %v567
      %v570 = vrot.slane %v566, 4
      %v572 = vshrl.u32 %v338, 16
      %v574 = vrot.slane %v572, 7
      %v575 = vshll.u32 %v338, 16
      %v577 = vor.u32 %v574, %v575
      %v578 = vsel %vm562, %v570, %v577
      %v579 = vrot.slane %v574, 4
      %vm583 = vcmask 1043456
      %vm584 = vsmask.f32 7938
      %vm585 = vmand %vm583, %vm584
      %v586 = vld [vmem:[#allocation2] sm:$0xf]
      %v587 = vsel %vm585, %v569, %v586
      %588 = vst [vmem:[#allocation2] sm:$0xf] %v587
      %589 = vst [vmem:[#allocation2 + $0x4] sm:$0xf] %v578
      %vm590 = vcmask 1040384
      %vm591 = vmand %vm590, %vm560
      %v592 = vld [vmem:[#allocation2 + $0x8] sm:$0x1]
      %v593 = vsel %vm591, %v579, %v592
      %594 = vst [vmem:[#allocation2 + $0x8] sm:$0x1] %v593
      %v596 = vshrl.u32 %v474, 16
      %v598 = vrot.slane %v596, 7
      %v599 = vshll.u32 %v474, 16
      %v601 = vor.u32 %v598, %v599
      %v602 = vrot.slane %v598, 4
      %v604 = vshrl.u32 %v475, 16
      %v606 = vrot.slane %v604, 7
      %v607 = vshll.u32 %v475, 16
      %v609 = vor.u32 %v606, %v607
      %v610 = vsel %vm562, %v602, %v609
      %v611 = vrot.slane %v606, 4
      %v613 = vshrl.u32 %v476, 16
      %v615 = vrot.slane %v613, 7
      %v616 = vshll.u32 %v476, 16
      %v618 = vor.u32 %v615, %v616
      %v619 = vrot.slane %v615, 4
      %v621 = vshrl.u32 %v477, 16
      %v623 = vrot.slane %v621, 7
      %v624 = vshll.u32 %v477, 16
      %v626 = vor.u32 %v623, %v624
      %v627 = vsel %vm562, %v619, %v626
      %v628 = vrot.slane %v623, 4
      %v630 = vshrl.u32 %v478, 16
      %v632 = vrot.slane %v630, 7
      %v633 = vshll.u32 %v478, 16
      %v635 = vor.u32 %v632, %v633
      %v636 = vrot.slane %v632, 4
      %v638 = vshrl.u32 %v479, 16
      %v640 = vrot.slane %v638, 7
      %v641 = vshll.u32 %v479, 16
      %v643 = vor.u32 %v640, %v641
      %v644 = vsel %vm562, %v636, %v643
      %v645 = vrot.slane %v640, 4
      %v647 = vshrl.u32 %v480, 16
      %v649 = vrot.slane %v647, 7
      %v650 = vshll.u32 %v480, 16
      %v652 = vor.u32 %v649, %v650
      %v653 = vrot.slane %v649, 4
      %v655 = vshrl.u32 %v481, 16
      %v657 = vrot.slane %v655, 7
      %v658 = vshll.u32 %v481, 16
      %v660 = vor.u32 %v657, %v658
      %v661 = vsel %vm562, %v653, %v660
      %v662 = vrot.slane %v657, 4
      %v664 = vshrl.u32 %v482, 16
      %v666 = vrot.slane %v664, 7
      %v667 = vshll.u32 %v482, 16
      %v669 = vor.u32 %v666, %v667
      %v670 = vrot.slane %v666, 4
      %v672 = vshrl.u32 %v483, 16
      %v674 = vrot.slane %v672, 7
      %v675 = vshll.u32 %v483, 16
      %v677 = vor.u32 %v674, %v675
      %v678 = vsel %vm562, %v670, %v677
      %v679 = vrot.slane %v674, 4
      %v681 = vshrl.u32 %v484, 16
      %v683 = vrot.slane %v681, 7
      %v684 = vshll.u32 %v484, 16
      %v686 = vor.u32 %v683, %v684
      %v687 = vrot.slane %v683, 4
      %v689 = vshrl.u32 %v485, 16
      %v691 = vrot.slane %v689, 7
      %v692 = vshll.u32 %v485, 16
      %v694 = vor.u32 %v691, %v692
      %v695 = vsel %vm562, %v687, %v694
      %v696 = vrot.slane %v691, 4
      %v698 = vshrl.u32 %v486, 16
      %v700 = vrot.slane %v698, 7
      %v701 = vshll.u32 %v486, 16
      %v703 = vor.u32 %v700, %v701
      %v704 = vrot.slane %v700, 4
      %v706 = vshrl.u32 %v487, 16
      %v708 = vrot.slane %v706, 7
      %v709 = vshll.u32 %v487, 16
      %v711 = vor.u32 %v708, %v709
      %v712 = vsel %vm562, %v704, %v711
      %v713 = vrot.slane %v708, 4
      %v715 = vshrl.u32 %v488, 16
      %v717 = vrot.slane %v715, 7
      %v718 = vshll.u32 %v488, 16
      %v720 = vor.u32 %v717, %v718
      %v721 = vrot.slane %v717, 4
      %v723 = vshrl.u32 %v489, 16
      %v725 = vrot.slane %v723, 7
      %v726 = vshll.u32 %v489, 16
      %v728 = vor.u32 %v725, %v726
      %v729 = vsel %vm562, %v721, %v728
      %v730 = vrot.slane %v725, 4
      %v732 = vshrl.u32 %v490, 16
      %v734 = vrot.slane %v732, 7
      %v735 = vshll.u32 %v490, 16
      %v737 = vor.u32 %v734, %v735
      %v738 = vrot.slane %v734, 4
      %v740 = vshrl.u32 %v491, 16
      %v742 = vrot.slane %v740, 7
      %v743 = vshll.u32 %v491, 16
      %v745 = vor.u32 %v742, %v743
      %v746 = vsel %vm562, %v738, %v745
      %v747 = vrot.slane %v742, 4
      %v749 = vshrl.u32 %v492, 16
      %v751 = vrot.slane %v749, 7
      %v752 = vshll.u32 %v492, 16
      %v754 = vor.u32 %v751, %v752
      %v755 = vrot.slane %v751, 4
      %v757 = vshrl.u32 %v493, 16
      %v759 = vrot.slane %v757, 7
      %v760 = vshll.u32 %v493, 16
      %v762 = vor.u32 %v759, %v760
      %v763 = vsel %vm562, %v755, %v762
      %v764 = vrot.slane %v759, 4
      %v766 = vshrl.u32 %v494, 16
      %v768 = vrot.slane %v766, 7
      %v769 = vshll.u32 %v494, 16
      %v771 = vor.u32 %v768, %v769
      %v772 = vrot.slane %v768, 4
      %v774 = vshrl.u32 %v495, 16
      %v776 = vrot.slane %v774, 7
      %v777 = vshll.u32 %v495, 16
      %v779 = vor.u32 %v776, %v777
      %v780 = vsel %vm562, %v772, %v779
      %v781 = vrot.slane %v776, 4
      %v783 = vshrl.u32 %v496, 16
      %v785 = vrot.slane %v783, 7
      %v786 = vshll.u32 %v496, 16
      %v788 = vor.u32 %v785, %v786
      %v789 = vrot.slane %v785, 4
      %v791 = vshrl.u32 %v497, 16
      %v793 = vrot.slane %v791, 7
      %v794 = vshll.u32 %v497, 16
      %v796 = vor.u32 %v793, %v794
      %v797 = vsel %vm562, %v789, %v796
      %v798 = vrot.slane %v793, 4
      %v800 = vshrl.u32 %v498, 16
      %v802 = vrot.slane %v800, 7
      %v803 = vshll.u32 %v498, 16
      %v805 = vor.u32 %v802, %v803
      %v806 = vrot.slane %v802, 4
      %v808 = vshrl.u32 %v499, 16
      %v810 = vrot.slane %v808, 7
      %v811 = vshll.u32 %v499, 16
      %v813 = vor.u32 %v810, %v811
      %v814 = vsel %vm562, %v806, %v813
      %v815 = vrot.slane %v810, 4
      %v817 = vshrl.u32 %v500, 16
      %v819 = vrot.slane %v817, 7
      %v820 = vshll.u32 %v500, 16
      %v822 = vor.u32 %v819, %v820
      %v823 = vrot.slane %v819, 4
      %v825 = vshrl.u32 %v501, 16
      %v827 = vrot.slane %v825, 7
      %v828 = vshll.u32 %v501, 16
      %v830 = vor.u32 %v827, %v828
      %v831 = vsel %vm562, %v823, %v830
      %v832 = vrot.slane %v827, 4
      %v834 = vshrl.u32 %v502, 16
      %v836 = vrot.slane %v834, 7
      %v837 = vshll.u32 %v502, 16
      %v839 = vor.u32 %v836, %v837
      %v840 = vrot.slane %v836, 4
      %v842 = vshrl.u32 %v503, 16
      %v844 = vrot.slane %v842, 7
      %v845 = vshll.u32 %v503, 16
      %v847 = vor.u32 %v844, %v845
      %v848 = vsel %vm562, %v840, %v847
      %v849 = vrot.slane %v844, 4
      %v851 = vshrl.u32 %v504, 16
      %v853 = vrot.slane %v851, 7
      %v854 = vshll.u32 %v504, 16
      %v856 = vor.u32 %v853, %v854
      %v857 = vrot.slane %v853, 4
      %v859 = vshrl.u32 %v505, 16
      %v861 = vrot.slane %v859, 7
      %v862 = vshll.u32 %v505, 16
      %v864 = vor.u32 %v861, %v862
      %v865 = vsel %vm562, %v857, %v864
      %v866 = vrot.slane %v861, 4
      %s915 = scalar_lea.vmem [#allocation2], 12
      %v916 = vld [vmem:[%s915] sm:$0xf]
      %v917 = vsel %vm585, %v601, %v916
      %918 = vst [vmem:[%s915] sm:$0xf] %v917
      %919 = vst [vmem:[%s915 + $0x4] sm:$0xf] %v610
      %v920 = vld [vmem:[%s915 + $0x8] sm:$0x1]
      %v921 = vsel %vm591, %v611, %v920
      %922 = vst [vmem:[%s915 + $0x8] sm:$0x1] %v921
      %v923 = vld [vmem:[%s915 + $0xc] sm:$0xf]
      %v924 = vsel %vm585, %v618, %v923
      %925 = vst [vmem:[%s915 + $0xc] sm:$0xf] %v924
      %926 = vst [vmem:[%s915 + $0x10] sm:$0xf] %v627
      %v927 = vld [vmem:[%s915 + $0x14] sm:$0x1]
      %v928 = vsel %vm591, %v628, %v927
      %929 = vst [vmem:[%s915 + $0x14] sm:$0x1] %v928
      %v930 = vld [vmem:[%s915 + $0x18] sm:$0xf]
      %v931 = vsel %vm585, %v635, %v930
      %932 = vst [vmem:[%s915 + $0x18] sm:$0xf] %v931
      %933 = vst [vmem:[%s915 + $0x1c] sm:$0xf] %v644
      %v934 = vld [vmem:[%s915 + $0x20] sm:$0x1]
      %v935 = vsel %vm591, %v645, %v934
      %936 = vst [vmem:[%s915 + $0x20] sm:$0x1] %v935
      %v937 = vld [vmem:[%s915 + $0x24] sm:$0xf]
      %v938 = vsel %vm585, %v652, %v937
      %939 = vst [vmem:[%s915 + $0x24] sm:$0xf] %v938
      %940 = vst [vmem:[%s915 + $0x28] sm:$0xf] %v661
      %v941 = vld [vmem:[%s915 + $0x2c] sm:$0x1]
      %v942 = vsel %vm591, %v662, %v941
      %943 = vst [vmem:[%s915 + $0x2c] sm:$0x1] %v942
      %v944 = vld [vmem:[%s915 + $0x30] sm:$0xf]
      %v945 = vsel %vm585, %v669, %v944
      %946 = vst [vmem:[%s915 + $0x30] sm:$0xf] %v945
      %947 = vst [vmem:[%s915 + $0x34] sm:$0xf] %v678
      %v948 = vld [vmem:[%s915 + $0x38] sm:$0x1]
      %v949 = vsel %vm591, %v679, %v948
      %950 = vst [vmem:[%s915 + $0x38] sm:$0x1] %v949
      %v951 = vld [vmem:[%s915 + $0x3c] sm:$0xf]
      %v952 = vsel %vm585, %v686, %v951
      %953 = vst [vmem:[%s915 + $0x3c] sm:$0xf] %v952
      %954 = vst [vmem:[%s915 + $0x40] sm:$0xf] %v695
      %v955 = vld [vmem:[%s915 + $0x44] sm:$0x1]
      %v956 = vsel %vm591, %v696, %v955
      %957 = vst [vmem:[%s915 + $0x44] sm:$0x1] %v956
      %v958 = vld [vmem:[%s915 + $0x48] sm:$0xf]
      %v959 = vsel %vm585, %v703, %v958
      %960 = vst [vmem:[%s915 + $0x48] sm:$0xf] %v959
      %961 = vst [vmem:[%s915 + $0x4c] sm:$0xf] %v712
      %v962 = vld [vmem:[%s915 + $0x50] sm:$0x1]
      %v963 = vsel %vm591, %v713, %v962
      %964 = vst [vmem:[%s915 + $0x50] sm:$0x1] %v963
      %v965 = vld [vmem:[%s915 + $0x54] sm:$0xf]
      %v966 = vsel %vm585, %v720, %v965
      %967 = vst [vmem:[%s915 + $0x54] sm:$0xf] %v966
      %968 = vst [vmem:[%s915 + $0x58] sm:$0xf] %v729
      %v969 = vld [vmem:[%s915 + $0x5c] sm:$0x1]
      %v970 = vsel %vm591, %v730, %v969
      %971 = vst [vmem:[%s915 + $0x5c] sm:$0x1] %v970
      %v972 = vld [vmem:[%s915 + $0x60] sm:$0xf]
      %v973 = vsel %vm585, %v737, %v972
      %974 = vst [vmem:[%s915 + $0x60] sm:$0xf] %v973
      %975 = vst [vmem:[%s915 + $0x64] sm:$0xf] %v746
      %v976 = vld [vmem:[%s915 + $0x68] sm:$0x1]
      %v977 = vsel %vm591, %v747, %v976
      %978 = vst [vmem:[%s915 + $0x68] sm:$0x1] %v977
      %v979 = vld [vmem:[%s915 + $0x6c] sm:$0xf]
      %v980 = vsel %vm585, %v754, %v979
      %981 = vst [vmem:[%s915 + $0x6c] sm:$0xf] %v980
      %982 = vst [vmem:[%s915 + $0x70] sm:$0xf] %v763
      %v983 = vld [vmem:[%s915 + $0x74] sm:$0x1]
      %v984 = vsel %vm591, %v764, %v983
      %985 = vst [vmem:[%s915 + $0x74] sm:$0x1] %v984
      %v986 = vld [vmem:[%s915 + $0x78] sm:$0xf]
      %v987 = vsel %vm585, %v771, %v986
      %988 = vst [vmem:[%s915 + $0x78] sm:$0xf] %v987
      %989 = vst [vmem:[%s915 + $0x7c] sm:$0xf] %v780
      %v990 = vld [vmem:[%s915 + $0x80] sm:$0x1]
      %v991 = vsel %vm591, %v781, %v990
      %992 = vst [vmem:[%s915 + $0x80] sm:$0x1] %v991
      %v993 = vld [vmem:[%s915 + $0x84] sm:$0xf]
      %v994 = vsel %vm585, %v788, %v993
      %995 = vst [vmem:[%s915 + $0x84] sm:$0xf] %v994
      %996 = vst [vmem:[%s915 + $0x88] sm:$0xf] %v797
      %v997 = vld [vmem:[%s915 + $0x8c] sm:$0x1]
      %v998 = vsel %vm591, %v798, %v997
      %999 = vst [vmem:[%s915 + $0x8c] sm:$0x1] %v998
      %v1000 = vld [vmem:[%s915 + $0x90] sm:$0xf]
      %v1001 = vsel %vm585, %v805, %v1000
      %1002 = vst [vmem:[%s915 + $0x90] sm:$0xf] %v1001
      %1003 = vst [vmem:[%s915 + $0x94] sm:$0xf] %v814
      %v1004 = vld [vmem:[%s915 + $0x98] sm:$0x1]
      %v1005 = vsel %vm591, %v815, %v1004
      %1006 = vst [vmem:[%s915 + $0x98] sm:$0x1] %v1005
      %v1007 = vld [vmem:[%s915 + $0x9c] sm:$0xf]
      %v1008 = vsel %vm585, %v822, %v1007
      %1009 = vst [vmem:[%s915 + $0x9c] sm:$0xf] %v1008
      %1010 = vst [vmem:[%s915 + $0xa0] sm:$0xf] %v831
      %v1011 = vld [vmem:[%s915 + $0xa4] sm:$0x1]
      %v1012 = vsel %vm591, %v832, %v1011
      %1013 = vst [vmem:[%s915 + $0xa4] sm:$0x1] %v1012
      %v1014 = vld [vmem:[%s915 + $0xa8] sm:$0xf]
      %v1015 = vsel %vm585, %v839, %v1014
      %1016 = vst [vmem:[%s915 + $0xa8] sm:$0xf] %v1015
      %1017 = vst [vmem:[%s915 + $0xac] sm:$0xf] %v848
      %v1018 = vld [vmem:[%s915 + $0xb0] sm:$0x1]
      %v1019 = vsel %vm591, %v849, %v1018
      %1020 = vst [vmem:[%s915 + $0xb0] sm:$0x1] %v1019
      %v1021 = vld [vmem:[%s915 + $0xb4] sm:$0xf]
      %v1022 = vsel %vm585, %v856, %v1021
      %1023 = vst [vmem:[%s915 + $0xb4] sm:$0xf] %v1022
      %1024 = vst [vmem:[%s915 + $0xb8] sm:$0xf] %v865
      %v1025 = vld [vmem:[%s915 + $0xbc] sm:$0x1]
      %v1026 = vsel %vm591, %v866, %v1025
      %1027 = vst [vmem:[%s915 + $0xbc] sm:$0x1] %v1026
      %v1029 = vshrl.u32 %v340, 16
      %v1031 = vrot.slane %v1029, 7
      %v1032 = vshll.u32 %v340, 16
      %v1034 = vor.u32 %v1031, %v1032
      %v1035 = vrot.slane %v1031, 4
      %v1037 = vshrl.u32 %v341, 16
      %v1039 = vrot.slane %v1037, 7
      %v1040 = vshll.u32 %v341, 16
      %v1042 = vor.u32 %v1039, %v1040
      %v1043 = vsel %vm562, %v1035, %v1042
      %v1044 = vrot.slane %v1039, 4
      %s1048 = scalar_lea.vmem [#allocation2], 204
      %v1049 = vld [vmem:[%s1048] sm:$0xf]
      %v1050 = vsel %vm585, %v1034, %v1049
      %1051 = vst [vmem:[%s1048] sm:$0xf] %v1050
      %1052 = vst [vmem:[%s1048 + $0x4] sm:$0xf] %v1043
      %v1053 = vld [vmem:[%s1048 + $0x8] sm:$0x1]
      %v1054 = vsel %vm591, %v1044, %v1053
      %1055 = vst [vmem:[%s1048 + $0x8] sm:$0x1] %v1054
      %v1056 = vld [vmem:[#allocation2] sm:$0xf]
      %v1057 = vld [vmem:[#allocation2 + $0x4] sm:$0xf]
      %v1058 = vld [vmem:[#allocation2 + $0xc] sm:$0xf]
      %v1059 = vld [vmem:[#allocation2 + $0x10] sm:$0xf]
      %v1060 = vld [vmem:[#allocation2 + $0x18] sm:$0xf]
      %v1061 = vld [vmem:[#allocation2 + $0x1c] sm:$0xf]
      %v1062 = vld [vmem:[#allocation2 + $0x24] sm:$0xf]
      %v1063 = vld [vmem:[#allocation2 + $0x28] sm:$0xf]
      %v1064 = vld [vmem:[#allocation2 + $0x30] sm:$0xf]
      %v1065 = vld [vmem:[#allocation2 + $0x34] sm:$0xf]
      %v1066 = vld [vmem:[#allocation2 + $0x3c] sm:$0xf]
      %v1067 = vld [vmem:[#allocation2 + $0x40] sm:$0xf]
      %v1068 = vld [vmem:[#allocation2 + $0x48] sm:$0xf]
      %v1069 = vld [vmem:[#allocation2 + $0x4c] sm:$0xf]
      %v1070 = vld [vmem:[#allocation2 + $0x54] sm:$0xf]
      %v1071 = vld [vmem:[#allocation2 + $0x58] sm:$0xf]
      %v1072 = vld [vmem:[#allocation2 + $0x60] sm:$0xf]
      %v1073 = vld [vmem:[#allocation2 + $0x64] sm:$0xf]
      %v1074 = vld [vmem:[#allocation2 + $0x6c] sm:$0xf]
      %v1075 = vld [vmem:[#allocation2 + $0x70] sm:$0xf]
      %v1076 = vld [vmem:[#allocation2 + $0x78] sm:$0xf]
      %v1077 = vld [vmem:[#allocation2 + $0x7c] sm:$0xf]
      %v1078 = vld [vmem:[#allocation2 + $0x84] sm:$0xf]
      %v1079 = vld [vmem:[#allocation2 + $0x88] sm:$0xf]
      %v1080 = vld [vmem:[#allocation2 + $0x90] sm:$0xf]
      %v1081 = vld [vmem:[#allocation2 + $0x94] sm:$0xf]
      %v1082 = vld [vmem:[#allocation2 + $0x9c] sm:$0xf]
      %v1083 = vld [vmem:[#allocation2 + $0xa0] sm:$0xf]
      %v1084 = vld [vmem:[#allocation2 + $0xa8] sm:$0xf]
      %v1085 = vld [vmem:[#allocation2 + $0xac] sm:$0xf]
      %v1086 = vld [vmem:[#allocation2 + $0xb4] sm:$0xf]
      %v1087 = vld [vmem:[#allocation2 + $0xb8] sm:$0xf]
      %v1088 = vld [vmem:[%s3] sm:$0xf]
      %v1089 = vld [vmem:[%s3 + $0x4] sm:$0xf]
      %v1090 = vld [vmem:[%s3 + $0x8] sm:$0xf]
      %v1091 = vld [vmem:[%s3 + $0xc] sm:$0xf]
      %v1092 = vld [vmem:[%s3 + $0x10] sm:$0xf]
      %v1093 = vld [vmem:[%s3 + $0x14] sm:$0xf]
      %v1094 = vld [vmem:[%s3 + $0x18] sm:$0xf]
      %v1095 = vld [vmem:[%s3 + $0x1c] sm:$0xf]
      %v1096 = vld [vmem:[%s3 + $0x20] sm:$0xf]
      %v1097 = vld [vmem:[%s3 + $0x24] sm:$0xf]
      %v1098 = vld [vmem:[%s3 + $0x28] sm:$0xf]
      %v1099 = vld [vmem:[%s3 + $0x2c] sm:$0xf]
      %v1100 = vld [vmem:[%s3 + $0x30] sm:$0xf]
      %v1101 = vld [vmem:[%s3 + $0x34] sm:$0xf]
      %v1102 = vld [vmem:[%s3 + $0x38] sm:$0xf]
      %v1103 = vld [vmem:[%s3 + $0x3c] sm:$0xf]
      %v1104 = vld [vmem:[#allocation2 + $0x8] sm:$0x1]
      %v1105 = vld [vmem:[#allocation2 + $0x14] sm:$0x1]
      %v1106 = vld [vmem:[#allocation2 + $0x20] sm:$0x1]
      %v1107 = vld [vmem:[#allocation2 + $0x2c] sm:$0x1]
      %v1108 = vld [vmem:[#allocation2 + $0x38] sm:$0x1]
      %v1109 = vld [vmem:[#allocation2 + $0x44] sm:$0x1]
      %v1110 = vld [vmem:[#allocation2 + $0x50] sm:$0x1]
      %v1111 = vld [vmem:[#allocation2 + $0x5c] sm:$0x1]
      %v1112 = vld [vmem:[#allocation2 + $0x68] sm:$0x1]
      %v1113 = vld [vmem:[#allocation2 + $0x74] sm:$0x1]
      %v1114 = vld [vmem:[#allocation2 + $0x80] sm:$0x1]
      %v1115 = vld [vmem:[#allocation2 + $0x8c] sm:$0x1]
      %v1116 = vld [vmem:[#allocation2 + $0x98] sm:$0x1]
      %v1117 = vld [vmem:[#allocation2 + $0xa4] sm:$0x1]
      %v1118 = vld [vmem:[#allocation2 + $0xb0] sm:$0x1]
      %v1119 = vld [vmem:[#allocation2 + $0xbc] sm:$0x1]
      %vm1120 = vsmask.f32 3328
      %vm1121 = vsmask.f32 7440
      %vm1122 = vmor %vm1120, %vm1121
      %v1124 = vshrl.u32 %v1056, 16
      %v1126 = vrot.slane %v1124, 4
      %v1127 = vshll.u32 %v1056, 16
      %v1129 = vrot.slane %v1127, 5
      %v1130 = vor.u32 %v1126, %v1129
      %v1131 = vrot.slane %v1130, 4
      %v1133 = vshll.u32 %v1057, 16
      %v1135 = vrot.slane %v1133, 5
      %v1136 = vsel %vm1122, %v1131, %v1135
      %v1137 = vshrl.u32 %v1057, 16
      %v1139 = vrot.slane %v1137, 4
      %v1140 = vor.u32 %v1139, %v1135
      %v1141 = vrot.slane %v1140, 4
      %v1143 = vshll.u32 %v1104, 16
      %v1145 = vrot.slane %v1143, 5
      %v1146 = vsel %vm1122, %v1141, %v1145
      %v1148 = vshrl.u32 %v1058, 16
      %v1150 = vrot.slane %v1148, 4
      %v1151 = vshll.u32 %v1058, 16
      %v1153 = vrot.slane %v1151, 5
      %v1154 = vor.u32 %v1150, %v1153
      %v1155 = vrot.slane %v1154, 4
      %v1157 = vshll.u32 %v1059, 16
      %v1159 = vrot.slane %v1157, 5
      %v1160 = vsel %vm1122, %v1155, %v1159
      %v1161 = vshrl.u32 %v1059, 16
      %v1163 = vrot.slane %v1161, 4
      %v1164 = vor.u32 %v1163, %v1159
      %v1165 = vrot.slane %v1164, 4
      %v1167 = vshll.u32 %v1105, 16
      %v1169 = vrot.slane %v1167, 5
      %v1170 = vsel %vm1122, %v1165, %v1169
      %v1172 = vshrl.u32 %v1060, 16
      %v1174 = vrot.slane %v1172, 4
      %v1175 = vshll.u32 %v1060, 16
      %v1177 = vrot.slane %v1175, 5
      %v1178 = vor.u32 %v1174, %v1177
      %v1179 = vrot.slane %v1178, 4
      %v1181 = vshll.u32 %v1061, 16
      %v1183 = vrot.slane %v1181, 5
      %v1184 = vsel %vm1122, %v1179, %v1183
      %v1185 = vshrl.u32 %v1061, 16
      %v1187 = vrot.slane %v1185, 4
      %v1188 = vor.u32 %v1187, %v1183
      %v1189 = vrot.slane %v1188, 4
      %v1191 = vshll.u32 %v1106, 16
      %v1193 = vrot.slane %v1191, 5
      %v1194 = vsel %vm1122, %v1189, %v1193
      %v1196 = vshrl.u32 %v1062, 16
      %v1198 = vrot.slane %v1196, 4
      %v1199 = vshll.u32 %v1062, 16
      %v1201 = vrot.slane %v1199, 5
      %v1202 = vor.u32 %v1198, %v1201
      %v1203 = vrot.slane %v1202, 4
      %v1205 = vshll.u32 %v1063, 16
      %v1207 = vrot.slane %v1205, 5
      %v1208 = vsel %vm1122, %v1203, %v1207
      %v1209 = vshrl.u32 %v1063, 16
      %v1211 = vrot.slane %v1209, 4
      %v1212 = vor.u32 %v1211, %v1207
      %v1213 = vrot.slane %v1212, 4
      %v1215 = vshll.u32 %v1107, 16
      %v1217 = vrot.slane %v1215, 5
      %v1218 = vsel %vm1122, %v1213, %v1217
      %v1220 = vshrl.u32 %v1064, 16
      %v1222 = vrot.slane %v1220, 4
      %v1223 = vshll.u32 %v1064, 16
      %v1225 = vrot.slane %v1223, 5
      %v1226 = vor.u32 %v1222, %v1225
      %v1227 = vrot.slane %v1226, 4
      %v1229 = vshll.u32 %v1065, 16
      %v1231 = vrot.slane %v1229, 5
      %v1232 = vsel %vm1122, %v1227, %v1231
      %v1233 = vshrl.u32 %v1065, 16
      %v1235 = vrot.slane %v1233, 4
      %v1236 = vor.u32 %v1235, %v1231
      %v1237 = vrot.slane %v1236, 4
      %v1239 = vshll.u32 %v1108, 16
      %v1241 = vrot.slane %v1239, 5
      %v1242 = vsel %vm1122, %v1237, %v1241
      %v1244 = vshrl.u32 %v1066, 16
      %v1246 = vrot.slane %v1244, 4
      %v1247 = vshll.u32 %v1066, 16
      %v1249 = vrot.slane %v1247, 5
      %v1250 = vor.u32 %v1246, %v1249
      %v1251 = vrot.slane %v1250, 4
      %v1253 = vshll.u32 %v1067, 16
      %v1255 = vrot.slane %v1253, 5
      %v1256 = vsel %vm1122, %v1251, %v1255
      %v1257 = vshrl.u32 %v1067, 16
      %v1259 = vrot.slane %v1257, 4
      %v1260 = vor.u32 %v1259, %v1255
      %v1261 = vrot.slane %v1260, 4
      %v1263 = vshll.u32 %v1109, 16
      %v1265 = vrot.slane %v1263, 5
      %v1266 = vsel %vm1122, %v1261, %v1265
      %v1268 = vshrl.u32 %v1068, 16
      %v1270 = vrot.slane %v1268, 4
      %v1271 = vshll.u32 %v1068, 16
      %v1273 = vrot.slane %v1271, 5
      %v1274 = vor.u32 %v1270, %v1273
      %v1275 = vrot.slane %v1274, 4
      %v1277 = vshll.u32 %v1069, 16
      %v1279 = vrot.slane %v1277, 5
      %v1280 = vsel %vm1122, %v1275, %v1279
      %v1281 = vshrl.u32 %v1069, 16
      %v1283 = vrot.slane %v1281, 4
      %v1284 = vor.u32 %v1283, %v1279
      %v1285 = vrot.slane %v1284, 4
      %v1287 = vshll.u32 %v1110, 16
      %v1289 = vrot.slane %v1287, 5
      %v1290 = vsel %vm1122, %v1285, %v1289
      %v1292 = vshrl.u32 %v1070, 16
      %v1294 = vrot.slane %v1292, 4
      %v1295 = vshll.u32 %v1070, 16
      %v1297 = vrot.slane %v1295, 5
      %v1298 = vor.u32 %v1294, %v1297
      %v1299 = vrot.slane %v1298, 4
      %v1301 = vshll.u32 %v1071, 16
      %v1303 = vrot.slane %v1301, 5
      %v1304 = vsel %vm1122, %v1299, %v1303
      %v1305 = vshrl.u32 %v1071, 16
      %v1307 = vrot.slane %v1305, 4
      %v1308 = vor.u32 %v1307, %v1303
      %v1309 = vrot.slane %v1308, 4
      %v1311 = vshll.u32 %v1111, 16
      %v1313 = vrot.slane %v1311, 5
      %v1314 = vsel %vm1122, %v1309, %v1313
      %v1316 = vshrl.u32 %v1072, 16
      %v1318 = vrot.slane %v1316, 4
      %v1319 = vshll.u32 %v1072, 16
      %v1321 = vrot.slane %v1319, 5
      %v1322 = vor.u32 %v1318, %v1321
      %v1323 = vrot.slane %v1322, 4
      %v1325 = vshll.u32 %v1073, 16
      %v1327 = vrot.slane %v1325, 5
      %v1328 = vsel %vm1122, %v1323, %v1327
      %v1329 = vshrl.u32 %v1073, 16
      %v1331 = vrot.slane %v1329, 4
      %v1332 = vor.u32 %v1331, %v1327
      %v1333 = vrot.slane %v1332, 4
      %v1335 = vshll.u32 %v1112, 16
      %v1337 = vrot.slane %v1335, 5
      %v1338 = vsel %vm1122, %v1333, %v1337
      %v1340 = vshrl.u32 %v1074, 16
      %v1342 = vrot.slane %v1340, 4
      %v1343 = vshll.u32 %v1074, 16
      %v1345 = vrot.slane %v1343, 5
      %v1346 = vor.u32 %v1342, %v1345
      %v1347 = vrot.slane %v1346, 4
      %v1349 = vshll.u32 %v1075, 16
      %v1351 = vrot.slane %v1349, 5
      %v1352 = vsel %vm1122, %v1347, %v1351
      %v1353 = vshrl.u32 %v1075, 16
      %v1355 = vrot.slane %v1353, 4
      %v1356 = vor.u32 %v1355, %v1351
      %v1357 = vrot.slane %v1356, 4
      %v1359 = vshll.u32 %v1113, 16
      %v1361 = vrot.slane %v1359, 5
      %v1362 = vsel %vm1122, %v1357, %v1361
      %v1364 = vshrl.u32 %v1076, 16
      %v1366 = vrot.slane %v1364, 4
      %v1367 = vshll.u32 %v1076, 16
      %v1369 = vrot.slane %v1367, 5
      %v1370 = vor.u32 %v1366, %v1369
      %v1371 = vrot.slane %v1370, 4
      %v1373 = vshll.u32 %v1077, 16
      %v1375 = vrot.slane %v1373, 5
      %v1376 = vsel %vm1122, %v1371, %v1375
      %v1377 = vshrl.u32 %v1077, 16
      %v1379 = vrot.slane %v1377, 4
      %v1380 = vor.u32 %v1379, %v1375
      %v1381 = vrot.slane %v1380, 4
      %v1383 = vshll.u32 %v1114, 16
      %v1385 = vrot.slane %v1383, 5
      %v1386 = vsel %vm1122, %v1381, %v1385
      %v1388 = vshrl.u32 %v1078, 16
      %v1390 = vrot.slane %v1388, 4
      %v1391 = vshll.u32 %v1078, 16
      %v1393 = vrot.slane %v1391, 5
      %v1394 = vor.u32 %v1390, %v1393
      %v1395 = vrot.slane %v1394, 4
      %v1397 = vshll.u32 %v1079, 16
      %v1399 = vrot.slane %v1397, 5
      %v1400 = vsel %vm1122, %v1395, %v1399
      %v1401 = vshrl.u32 %v1079, 16
      %v1403 = vrot.slane %v1401, 4
      %v1404 = vor.u32 %v1403, %v1399
      %v1405 = vrot.slane %v1404, 4
      %v1407 = vshll.u32 %v1115, 16
      %v1409 = vrot.slane %v1407, 5
      %v1410 = vsel %vm1122, %v1405, %v1409
      %v1412 = vshrl.u32 %v1080, 16
      %v1414 = vrot.slane %v1412, 4
      %v1415 = vshll.u32 %v1080, 16
      %v1417 = vrot.slane %v1415, 5
      %v1418 = vor.u32 %v1414, %v1417
      %v1419 = vrot.slane %v1418, 4
      %v1421 = vshll.u32 %v1081, 16
      %v1423 = vrot.slane %v1421, 5
      %v1424 = vsel %vm1122, %v1419, %v1423
      %v1425 = vshrl.u32 %v1081, 16
      %v1427 = vrot.slane %v1425, 4
      %v1428 = vor.u32 %v1427, %v1423
      %v1429 = vrot.slane %v1428, 4
      %v1431 = vshll.u32 %v1116, 16
      %v1433 = vrot.slane %v1431, 5
      %v1434 = vsel %vm1122, %v1429, %v1433
      %v1436 = vshrl.u32 %v1082, 16
      %v1438 = vrot.slane %v1436, 4
      %v1439 = vshll.u32 %v1082, 16
      %v1441 = vrot.slane %v1439, 5
      %v1442 = vor.u32 %v1438, %v1441
      %v1443 = vrot.slane %v1442, 4
      %v1445 = vshll.u32 %v1083, 16
      %v1447 = vrot.slane %v1445, 5
      %v1448 = vsel %vm1122, %v1443, %v1447
      %v1449 = vshrl.u32 %v1083, 16
      %v1451 = vrot.slane %v1449, 4
      %v1452 = vor.u32 %v1451, %v1447
      %v1453 = vrot.slane %v1452, 4
      %v1455 = vshll.u32 %v1117, 16
      %v1457 = vrot.slane %v1455, 5
      %v1458 = vsel %vm1122, %v1453, %v1457
      %v1460 = vshrl.u32 %v1084, 16
      %v1462 = vrot.slane %v1460, 4
      %v1463 = vshll.u32 %v1084, 16
      %v1465 = vrot.slane %v1463, 5
      %v1466 = vor.u32 %v1462, %v1465
      %v1467 = vrot.slane %v1466, 4
      %v1469 = vshll.u32 %v1085, 16
      %v1471 = vrot.slane %v1469, 5
      %v1472 = vsel %vm1122, %v1467, %v1471
      %v1473 = vshrl.u32 %v1085, 16
      %v1475 = vrot.slane %v1473, 4
      %v1476 = vor.u32 %v1475, %v1471
      %v1477 = vrot.slane %v1476, 4
      %v1479 = vshll.u32 %v1118, 16
      %v1481 = vrot.slane %v1479, 5
      %v1482 = vsel %vm1122, %v1477, %v1481
      %v1484 = vshrl.u32 %v1086, 16
      %v1486 = vrot.slane %v1484, 4
      %v1487 = vshll.u32 %v1086, 16
      %v1489 = vrot.slane %v1487, 5
      %v1490 = vor.u32 %v1486, %v1489
      %v1491 = vrot.slane %v1490, 4
      %v1493 = vshll.u32 %v1087, 16
      %v1495 = vrot.slane %v1493, 5
      %v1496 = vsel %vm1122, %v1491, %v1495
      %v1497 = vshrl.u32 %v1087, 16
      %v1499 = vrot.slane %v1497, 4
      %v1500 = vor.u32 %v1499, %v1495
      %v1501 = vrot.slane %v1500, 4
      %v1503 = vshll.u32 %v1119, 16
      %v1505 = vrot.slane %v1503, 5
      %v1506 = vsel %vm1122, %v1501, %v1505
      %s1507 = scalar_lea.vmem %s3, 64
      %v1508 = vld [vmem:[%s1507] sm:$0xf]
      %v1509 = vld [vmem:[%s1507 + $0x4] sm:$0xf]
      %v1510 = vld [vmem:[%s1507 + $0x8] sm:$0xf]
      %v1511 = vld [vmem:[%s1507 + $0xc] sm:$0xf]
      %v1512 = vld [vmem:[%s1507 + $0x10] sm:$0xf]
      %v1513 = vld [vmem:[%s1507 + $0x14] sm:$0xf]
      %v1514 = vld [vmem:[%s1507 + $0x18] sm:$0xf]
      %v1515 = vld [vmem:[%s1507 + $0x1c] sm:$0xf]
      %v1516 = vld [vmem:[%s1507 + $0x20] sm:$0xf]
      %v1517 = vld [vmem:[%s1507 + $0x24] sm:$0xf]
      %v1518 = vld [vmem:[%s1507 + $0x28] sm:$0xf]
      %v1519 = vld [vmem:[%s1507 + $0x2c] sm:$0xf]
      %v1520 = vld [vmem:[%s1507 + $0x30] sm:$0xf]
      %v1521 = vld [vmem:[%s1507 + $0x34] sm:$0xf]
      %v1522 = vld [vmem:[%s1507 + $0x38] sm:$0xf]
      %v1523 = vld [vmem:[%s1507 + $0x3c] sm:$0xf]
      %v1524 = vunpack.c.l.b16 %v1136
      %v1525 = vunpack.c.l.b16 %v1146
      %v1526 = vunpack.c.l.b16 %v1160
      %v1527 = vunpack.c.l.b16 %v1170
      %v1528 = vunpack.c.l.b16 %v1184
      %v1529 = vunpack.c.l.b16 %v1194
      %v1530 = vunpack.c.l.b16 %v1208
      %v1531 = vunpack.c.l.b16 %v1218
      %v1532 = vunpack.c.l.b16 %v1232
      %v1533 = vunpack.c.l.b16 %v1242
      %v1534 = vunpack.c.l.b16 %v1256
      %v1535 = vunpack.c.l.b16 %v1266
      %v1536 = vunpack.c.l.b16 %v1280
      %v1537 = vunpack.c.l.b16 %v1290
      %v1538 = vunpack.c.l.b16 %v1304
      %v1539 = vunpack.c.l.b16 %v1314
      %v1540 = vunpack.c.l.b16 %v1328
      %v1541 = vunpack.c.l.b16 %v1338
      %v1542 = vunpack.c.l.b16 %v1352
      %v1543 = vunpack.c.l.b16 %v1362
      %v1544 = vunpack.c.l.b16 %v1376
      %v1545 = vunpack.c.l.b16 %v1386
      %v1546 = vunpack.c.l.b16 %v1400
      %v1547 = vunpack.c.l.b16 %v1410
      %v1548 = vunpack.c.l.b16 %v1424
      %v1549 = vunpack.c.l.b16 %v1434
      %v1550 = vunpack.c.l.b16 %v1448
      %v1551 = vunpack.c.l.b16 %v1458
      %v1552 = vunpack.c.l.b16 %v1472
      %v1553 = vunpack.c.l.b16 %v1482
      %v1554 = vunpack.c.l.b16 %v1496
      %v1555 = vunpack.c.l.b16 %v1506
      %v1556 = vpack.c.b16 %v1525, %v1524
      %v1557 = vpack.c.b16 %v1527, %v1526
      %v1558 = vpack.c.b16 %v1529, %v1528
      %v1559 = vpack.c.b16 %v1531, %v1530
      %v1560 = vpack.c.b16 %v1533, %v1532
      %v1561 = vpack.c.b16 %v1535, %v1534
      %v1562 = vpack.c.b16 %v1537, %v1536
      %v1563 = vpack.c.b16 %v1539, %v1538
      %v1564 = vpack.c.b16 %v1541, %v1540
      %v1565 = vpack.c.b16 %v1543, %v1542
      %v1566 = vpack.c.b16 %v1545, %v1544
      %v1567 = vpack.c.b16 %v1547, %v1546
      %v1568 = vpack.c.b16 %v1549, %v1548
      %v1569 = vpack.c.b16 %v1551, %v1550
      %v1570 = vpack.c.b16 %v1553, %v1552
      %v1571 = vpack.c.b16 %v1555, %v1554
      %v1604 = vunpack.c.l.b16 %v1508
      %v1605 = vunpack.c.l.b16 %v1509
      %v1606 = vunpack.c.l.b16 %v1510
      %v1607 = vunpack.c.l.b16 %v1511
      %v1608 = vunpack.c.l.b16 %v1512
      %v1609 = vunpack.c.l.b16 %v1513
      %v1610 = vunpack.c.l.b16 %v1514
      %v1611 = vunpack.c.l.b16 %v1515
      %v1612 = vunpack.c.l.b16 %v1516
      %v1613 = vunpack.c.l.b16 %v1517
      %v1614 = vunpack.c.l.b16 %v1518
      %v1615 = vunpack.c.l.b16 %v1519
      %v1616 = vunpack.c.l.b16 %v1520
      %v1617 = vunpack.c.l.b16 %v1521
      %v1618 = vunpack.c.l.b16 %v1522
      %v1619 = vunpack.c.l.b16 %v1523
      %v1620 = vpack.c.b16 %v1605, %v1604
      %v1621 = vpack.c.b16 %v1607, %v1606
      %v1622 = vpack.c.b16 %v1609, %v1608
      %v1623 = vpack.c.b16 %v1611, %v1610
      %v1624 = vpack.c.b16 %v1613, %v1612
      %v1625 = vpack.c.b16 %v1615, %v1614
      %v1626 = vpack.c.b16 %v1617, %v1616
      %v1627 = vpack.c.b16 %v1619, %v1618
      %1636 = vmatpush.bf16.msra.mxu0 %v1627
      %1637 = vmatpush.bf16.msra.mxu0 %v1626
      %1638 = vmatpush.bf16.msra.mxu0 %v1625
      %1639 = vmatpush.bf16.msra.mxu0 %v1624
      %1640 = vmatpush.bf16.msra.mxu0 %v1623
      %1641 = vmatpush.bf16.msra.mxu0 %v1622
      %1642 = vmatpush.bf16.msra.mxu0 %v1621
      %1643 = vmatpush.bf16.msra.mxu0 %v1620
      %1644 = vmatmul.bf16.gmra.mxu0 %v1556
      %v1645 = vpop.f32.mrf.mxu0
      %v1646 = vadd.f32 0.0, %v1645
      %v1647 = vpop.f32.mrf.mxu0
      %v1648 = vadd.f32 0.0, %v1647
      %1649 = vmatmul.bf16.gmra.mxu0 %v1557
      %v1650 = vpop.f32.mrf.mxu0
      %v1651 = vadd.f32 0.0, %v1650
      %v1652 = vpop.f32.mrf.mxu0
      %v1653 = vadd.f32 0.0, %v1652
      %1654 = vmatmul.bf16.gmra.mxu0 %v1558
      %v1655 = vpop.f32.mrf.mxu0
      %v1656 = vadd.f32 0.0, %v1655
      %v1657 = vpop.f32.mrf.mxu0
      %v1658 = vadd.f32 0.0, %v1657
      %1659 = vmatmul.bf16.gmra.mxu0 %v1559
      %v1660 = vpop.f32.mrf.mxu0
      %v1661 = vadd.f32 0.0, %v1660
      %v1662 = vpop.f32.mrf.mxu0
      %v1663 = vadd.f32 0.0, %v1662
      %1664 = vmatmul.bf16.gmra.mxu0 %v1560
      %v1665 = vpop.f32.mrf.mxu0
      %v1666 = vadd.f32 0.0, %v1665
      %v1667 = vpop.f32.mrf.mxu0
      %v1668 = vadd.f32 0.0, %v1667
      %1669 = vmatmul.bf16.gmra.mxu0 %v1561
      %v1670 = vpop.f32.mrf.mxu0
      %v1671 = vadd.f32 0.0, %v1670
      %v1672 = vpop.f32.mrf.mxu0
      %v1673 = vadd.f32 0.0, %v1672
      %1674 = vmatmul.bf16.gmra.mxu0 %v1562
      %v1675 = vpop.f32.mrf.mxu0
      %v1676 = vadd.f32 0.0, %v1675
      %v1677 = vpop.f32.mrf.mxu0
      %v1678 = vadd.f32 0.0, %v1677
      %1679 = vmatmul.bf16.gmra.mxu0 %v1563
      %v1680 = vpop.f32.mrf.mxu0
      %v1681 = vadd.f32 0.0, %v1680
      %v1682 = vpop.f32.mrf.mxu0
      %v1683 = vadd.f32 0.0, %v1682
      %1684 = vmatmul.bf16.gmra.mxu0 %v1564
      %v1685 = vpop.f32.mrf.mxu0
      %v1686 = vadd.f32 0.0, %v1685
      %v1687 = vpop.f32.mrf.mxu0
      %v1688 = vadd.f32 0.0, %v1687
      %1689 = vmatmul.bf16.gmra.mxu0 %v1565
      %v1690 = vpop.f32.mrf.mxu0
      %v1691 = vadd.f32 0.0, %v1690
      %v1692 = vpop.f32.mrf.mxu0
      %v1693 = vadd.f32 0.0, %v1692
      %1694 = vmatmul.bf16.gmra.mxu0 %v1566
      %v1695 = vpop.f32.mrf.mxu0
      %v1696 = vadd.f32 0.0, %v1695
      %v1697 = vpop.f32.mrf.mxu0
      %v1698 = vadd.f32 0.0, %v1697
      %1699 = vmatmul.bf16.gmra.mxu0 %v1567
      %v1700 = vpop.f32.mrf.mxu0
      %v1701 = vadd.f32 0.0, %v1700
      %v1702 = vpop.f32.mrf.mxu0
      %v1703 = vadd.f32 0.0, %v1702
      %1704 = vmatmul.bf16.gmra.mxu0 %v1568
      %v1705 = vpop.f32.mrf.mxu0
      %v1706 = vadd.f32 0.0, %v1705
      %v1707 = vpop.f32.mrf.mxu0
      %v1708 = vadd.f32 0.0, %v1707
      %1709 = vmatmul.bf16.gmra.mxu0 %v1569
      %v1710 = vpop.f32.mrf.mxu0
      %v1711 = vadd.f32 0.0, %v1710
      %v1712 = vpop.f32.mrf.mxu0
      %v1713 = vadd.f32 0.0, %v1712
      %1714 = vmatmul.bf16.gmra.mxu0 %v1570
      %v1715 = vpop.f32.mrf.mxu0
      %v1716 = vadd.f32 0.0, %v1715
      %v1717 = vpop.f32.mrf.mxu0
      %v1718 = vadd.f32 0.0, %v1717
      %1719 = vmatmul.bf16.gmra.mxu0 %v1571
      %v1720 = vpop.f32.mrf.mxu0
      %v1721 = vadd.f32 0.0, %v1720
      %v1722 = vpop.f32.mrf.mxu0
      %v1723 = vadd.f32 0.0, %v1722
      %1724 = vdwg.mxu0
      %v1757 = vunpack.c.l.b16 %v1056
      %v1758 = vunpack.c.l.b16 %v1057
      %v1759 = vunpack.c.l.b16 %v1058
      %v1760 = vunpack.c.l.b16 %v1059
      %v1761 = vunpack.c.l.b16 %v1060
      %v1762 = vunpack.c.l.b16 %v1061
      %v1763 = vunpack.c.l.b16 %v1062
      %v1764 = vunpack.c.l.b16 %v1063
      %v1765 = vunpack.c.l.b16 %v1064
      %v1766 = vunpack.c.l.b16 %v1065
      %v1767 = vunpack.c.l.b16 %v1066
      %v1768 = vunpack.c.l.b16 %v1067
      %v1769 = vunpack.c.l.b16 %v1068
      %v1770 = vunpack.c.l.b16 %v1069
      %v1771 = vunpack.c.l.b16 %v1070
      %v1772 = vunpack.c.l.b16 %v1071
      %v1773 = vunpack.c.l.b16 %v1072
      %v1774 = vunpack.c.l.b16 %v1073
      %v1775 = vunpack.c.l.b16 %v1074
      %v1776 = vunpack.c.l.b16 %v1075
      %v1777 = vunpack.c.l.b16 %v1076
      %v1778 = vunpack.c.l.b16 %v1077
      %v1779 = vunpack.c.l.b16 %v1078
      %v1780 = vunpack.c.l.b16 %v1079
      %v1781 = vunpack.c.l.b16 %v1080
      %v1782 = vunpack.c.l.b16 %v1081
      %v1783 = vunpack.c.l.b16 %v1082
      %v1784 = vunpack.c.l.b16 %v1083
      %v1785 = vunpack.c.l.b16 %v1084
      %v1786 = vunpack.c.l.b16 %v1085
      %v1787 = vunpack.c.l.b16 %v1086
      %v1788 = vunpack.c.l.b16 %v1087
      %v1789 = vpack.c.b16 %v1758, %v1757
      %v1790 = vpack.c.b16 %v1760, %v1759
      %v1791 = vpack.c.b16 %v1762, %v1761
      %v1792 = vpack.c.b16 %v1764, %v1763
      %v1793 = vpack.c.b16 %v1766, %v1765
      %v1794 = vpack.c.b16 %v1768, %v1767
      %v1795 = vpack.c.b16 %v1770, %v1769
      %v1796 = vpack.c.b16 %v1772, %v1771
      %v1797 = vpack.c.b16 %v1774, %v1773
      %v1798 = vpack.c.b16 %v1776, %v1775
      %v1799 = vpack.c.b16 %v1778, %v1777
      %v1800 = vpack.c.b16 %v1780, %v1779
      %v1801 = vpack.c.b16 %v1782, %v1781
      %v1802 = vpack.c.b16 %v1784, %v1783
      %v1803 = vpack.c.b16 %v1786, %v1785
      %v1804 = vpack.c.b16 %v1788, %v1787
      %v1837 = vunpack.c.l.b16 %v1088
      %v1838 = vunpack.c.l.b16 %v1089
      %v1839 = vunpack.c.l.b16 %v1090
      %v1840 = vunpack.c.l.b16 %v1091
      %v1841 = vunpack.c.l.b16 %v1092
      %v1842 = vunpack.c.l.b16 %v1093
      %v1843 = vunpack.c.l.b16 %v1094
      %v1844 = vunpack.c.l.b16 %v1095
      %v1845 = vunpack.c.l.b16 %v1096
      %v1846 = vunpack.c.l.b16 %v1097
      %v1847 = vunpack.c.l.b16 %v1098
      %v1848 = vunpack.c.l.b16 %v1099
      %v1849 = vunpack.c.l.b16 %v1100
      %v1850 = vunpack.c.l.b16 %v1101
      %v1851 = vunpack.c.l.b16 %v1102
      %v1852 = vunpack.c.l.b16 %v1103
      %v1853 = vpack.c.b16 %v1838, %v1837
      %v1854 = vpack.c.b16 %v1840, %v1839
      %v1855 = vpack.c.b16 %v1842, %v1841
      %v1856 = vpack.c.b16 %v1844, %v1843
      %v1857 = vpack.c.b16 %v1846, %v1845
      %v1858 = vpack.c.b16 %v1848, %v1847
      %v1859 = vpack.c.b16 %v1850, %v1849
      %v1860 = vpack.c.b16 %v1852, %v1851
      %1869 = vmatpush.bf16.msra.mxu0 %v1860
      %1870 = vmatpush.bf16.msra.mxu0 %v1859
      %1871 = vmatpush.bf16.msra.mxu0 %v1858
      %1872 = vmatpush.bf16.msra.mxu0 %v1857
      %1873 = vmatpush.bf16.msra.mxu0 %v1856
      %1874 = vmatpush.bf16.msra.mxu0 %v1855
      %1875 = vmatpush.bf16.msra.mxu0 %v1854
      %1876 = vmatpush.bf16.msra.mxu0 %v1853
      %1877 = vmatmul.bf16.gmra.mxu0 %v1789
      %v1878 = vpop.f32.mrf.mxu0
      %v1879 = vadd.f32 %v1646, %v1878
      %v1880 = vpop.f32.mrf.mxu0
      %v1881 = vadd.f32 %v1648, %v1880
      %1882 = vmatmul.bf16.gmra.mxu0 %v1790
      %v1883 = vpop.f32.mrf.mxu0
      %v1884 = vadd.f32 %v1651, %v1883
      %v1885 = vpop.f32.mrf.mxu0
      %v1886 = vadd.f32 %v1653, %v1885
      %1887 = vmatmul.bf16.gmra.mxu0 %v1791
      %v1888 = vpop.f32.mrf.mxu0
      %v1889 = vadd.f32 %v1656, %v1888
      %v1890 = vpop.f32.mrf.mxu0
      %v1891 = vadd.f32 %v1658, %v1890
      %1892 = vmatmul.bf16.gmra.mxu0 %v1792
      %v1893 = vpop.f32.mrf.mxu0
      %v1894 = vadd.f32 %v1661, %v1893
      %v1895 = vpop.f32.mrf.mxu0
      %v1896 = vadd.f32 %v1663, %v1895
      %1897 = vmatmul.bf16.gmra.mxu0 %v1793
      %v1898 = vpop.f32.mrf.mxu0
      %v1899 = vadd.f32 %v1666, %v1898
      %v1900 = vpop.f32.mrf.mxu0
      %v1901 = vadd.f32 %v1668, %v1900
      %1902 = vmatmul.bf16.gmra.mxu0 %v1794
      %v1903 = vpop.f32.mrf.mxu0
      %v1904 = vadd.f32 %v1671, %v1903
      %v1905 = vpop.f32.mrf.mxu0
      %v1906 = vadd.f32 %v1673, %v1905
      %1907 = vmatmul.bf16.gmra.mxu0 %v1795
      %v1908 = vpop.f32.mrf.mxu0
      %v1909 = vadd.f32 %v1676, %v1908
      %v1910 = vpop.f32.mrf.mxu0
      %v1911 = vadd.f32 %v1678, %v1910
      %1912 = vmatmul.bf16.gmra.mxu0 %v1796
      %v1913 = vpop.f32.mrf.mxu0
      %v1914 = vadd.f32 %v1681, %v1913
      %v1915 = vpop.f32.mrf.mxu0
      %v1916 = vadd.f32 %v1683, %v1915
      %1917 = vmatmul.bf16.gmra.mxu0 %v1797
      %v1918 = vpop.f32.mrf.mxu0
      %v1919 = vadd.f32 %v1686, %v1918
      %v1920 = vpop.f32.mrf.mxu0
      %v1921 = vadd.f32 %v1688, %v1920
      %1922 = vmatmul.bf16.gmra.mxu0 %v1798
      %v1923 = vpop.f32.mrf.mxu0
      %v1924 = vadd.f32 %v1691, %v1923
      %v1925 = vpop.f32.mrf.mxu0
      %v1926 = vadd.f32 %v1693, %v1925
      %1927 = vmatmul.bf16.gmra.mxu0 %v1799
      %v1928 = vpop.f32.mrf.mxu0
      %v1929 = vadd.f32 %v1696, %v1928
      %v1930 = vpop.f32.mrf.mxu0
      %v1931 = vadd.f32 %v1698, %v1930
      %1932 = vmatmul.bf16.gmra.mxu0 %v1800
      %v1933 = vpop.f32.mrf.mxu0
      %v1934 = vadd.f32 %v1701, %v1933
      %v1935 = vpop.f32.mrf.mxu0
      %v1936 = vadd.f32 %v1703, %v1935
      %1937 = vmatmul.bf16.gmra.mxu0 %v1801
      %v1938 = vpop.f32.mrf.mxu0
      %v1939 = vadd.f32 %v1706, %v1938
      %v1940 = vpop.f32.mrf.mxu0
      %v1941 = vadd.f32 %v1708, %v1940
      %1942 = vmatmul.bf16.gmra.mxu0 %v1802
      %v1943 = vpop.f32.mrf.mxu0
      %v1944 = vadd.f32 %v1711, %v1943
      %v1945 = vpop.f32.mrf.mxu0
      %v1946 = vadd.f32 %v1713, %v1945
      %1947 = vmatmul.bf16.gmra.mxu0 %v1803
      %v1948 = vpop.f32.mrf.mxu0
      %v1949 = vadd.f32 %v1716, %v1948
      %v1950 = vpop.f32.mrf.mxu0
      %v1951 = vadd.f32 %v1718, %v1950
      %1952 = vmatmul.bf16.gmra.mxu0 %v1804
      %v1953 = vpop.f32.mrf.mxu0
      %v1954 = vadd.f32 %v1721, %v1953
      %v1955 = vpop.f32.mrf.mxu0
      %v1956 = vadd.f32 %v1723, %v1955
      %1957 = vdwg.mxu0
      %v1958 = vld [vmem:[#allocation2] sm:$0xe]
      %v1959 = vld [vmem:[#allocation2 + $0xc] sm:$0xe]
      %v1960 = vld [vmem:[#allocation2 + $0x18] sm:$0xe]
      %v1961 = vld [vmem:[#allocation2 + $0x24] sm:$0xe]
      %v1962 = vld [vmem:[#allocation2 + $0x30] sm:$0xe]
      %v1963 = vld [vmem:[#allocation2 + $0x3c] sm:$0xe]
      %v1964 = vld [vmem:[#allocation2 + $0x48] sm:$0xe]
      %v1965 = vld [vmem:[#allocation2 + $0x54] sm:$0xe]
      %v1966 = vld [vmem:[#allocation2 + $0x60] sm:$0xe]
      %v1967 = vld [vmem:[#allocation2 + $0x6c] sm:$0xe]
      %v1968 = vld [vmem:[#allocation2 + $0x78] sm:$0xe]
      %v1969 = vld [vmem:[#allocation2 + $0x84] sm:$0xe]
      %v1970 = vld [vmem:[#allocation2 + $0x90] sm:$0xe]
      %v1971 = vld [vmem:[#allocation2 + $0x9c] sm:$0xe]
      %v1972 = vld [vmem:[#allocation2 + $0xa8] sm:$0xe]
      %v1973 = vld [vmem:[#allocation2 + $0xb4] sm:$0xe]
      %vm2006 = vcmask 1042432
      %vm2007 = vcmask 1046532
      %vm2008 = vmor %vm2006, %vm2007
      %v2009 = vrot.slane %v1958, 5
      %v2010 = vrot.slane %v2009, 4
      %v2011 = vrot.slane %v1057, 5
      %v2012 = vsel %vm2008, %v2010, %v2011
      %v2013 = vrot.slane %v2011, 4
      %v2014 = vrot.slane %v1104, 5
      %v2015 = vsel %vm2008, %v2013, %v2014
      %v2016 = vrot.slane %v1959, 5
      %v2017 = vrot.slane %v2016, 4
      %v2018 = vrot.slane %v1059, 5
      %v2019 = vsel %vm2008, %v2017, %v2018
      %v2020 = vrot.slane %v2018, 4
      %v2021 = vrot.slane %v1105, 5
      %v2022 = vsel %vm2008, %v2020, %v2021
      %v2023 = vrot.slane %v1960, 5
      %v2024 = vrot.slane %v2023, 4
      %v2025 = vrot.slane %v1061, 5
      %v2026 = vsel %vm2008, %v2024, %v2025
      %v2027 = vrot.slane %v2025, 4
      %v2028 = vrot.slane %v1106, 5
      %v2029 = vsel %vm2008, %v2027, %v2028
      %v2030 = vrot.slane %v1961, 5
      %v2031 = vrot.slane %v2030, 4
      %v2032 = vrot.slane %v1063, 5
      %v2033 = vsel %vm2008, %v2031, %v2032
      %v2034 = vrot.slane %v2032, 4
      %v2035 = vrot.slane %v1107, 5
      %v2036 = vsel %vm2008, %v2034, %v2035
      %v2037 = vrot.slane %v1962, 5
      %v2038 = vrot.slane %v2037, 4
      %v2039 = vrot.slane %v1065, 5
      %v2040 = vsel %vm2008, %v2038, %v2039
      %v2041 = vrot.slane %v2039, 4
      %v2042 = vrot.slane %v1108, 5
      %v2043 = vsel %vm2008, %v2041, %v2042
      %v2044 = vrot.slane %v1963, 5
      %v2045 = vrot.slane %v2044, 4
      %v2046 = vrot.slane %v1067, 5
      %v2047 = vsel %vm2008, %v2045, %v2046
      %v2048 = vrot.slane %v2046, 4
      %v2049 = vrot.slane %v1109, 5
      %v2050 = vsel %vm2008, %v2048, %v2049
      %v2051 = vrot.slane %v1964, 5
      %v2052 = vrot.slane %v2051, 4
      %v2053 = vrot.slane %v1069, 5
      %v2054 = vsel %vm2008, %v2052, %v2053
      %v2055 = vrot.slane %v2053, 4
      %v2056 = vrot.slane %v1110, 5
      %v2057 = vsel %vm2008, %v2055, %v2056
      %v2058 = vrot.slane %v1965, 5
      %v2059 = vrot.slane %v2058, 4
      %v2060 = vrot.slane %v1071, 5
      %v2061 = vsel %vm2008, %v2059, %v2060
      %v2062 = vrot.slane %v2060, 4
      %v2063 = vrot.slane %v1111, 5
      %v2064 = vsel %vm2008, %v2062, %v2063
      %v2065 = vrot.slane %v1966, 5
      %v2066 = vrot.slane %v2065, 4
      %v2067 = vrot.slane %v1073, 5
      %v2068 = vsel %vm2008, %v2066, %v2067
      %v2069 = vrot.slane %v2067, 4
      %v2070 = vrot.slane %v1112, 5
      %v2071 = vsel %vm2008, %v2069, %v2070
      %v2072 = vrot.slane %v1967, 5
      %v2073 = vrot.slane %v2072, 4
      %v2074 = vrot.slane %v1075, 5
      %v2075 = vsel %vm2008, %v2073, %v2074
      %v2076 = vrot.slane %v2074, 4
      %v2077 = vrot.slane %v1113, 5
      %v2078 = vsel %vm2008, %v2076, %v2077
      %v2079 = vrot.slane %v1968, 5
      %v2080 = vrot.slane %v2079, 4
      %v2081 = vrot.slane %v1077, 5
      %v2082 = vsel %vm2008, %v2080, %v2081
      %v2083 = vrot.slane %v2081, 4
      %v2084 = vrot.slane %v1114, 5
      %v2085 = vsel %vm2008, %v2083, %v2084
      %v2086 = vrot.slane %v1969, 5
      %v2087 = vrot.slane %v2086, 4
      %v2088 = vrot.slane %v1079, 5
      %v2089 = vsel %vm2008, %v2087, %v2088
      %v2090 = vrot.slane %v2088, 4
      %v2091 = vrot.slane %v1115, 5
      %v2092 = vsel %vm2008, %v2090, %v2091
      %v2093 = vrot.slane %v1970, 5
      %v2094 = vrot.slane %v2093, 4
      %v2095 = vrot.slane %v1081, 5
      %v2096 = vsel %vm2008, %v2094, %v2095
      %v2097 = vrot.slane %v2095, 4
      %v2098 = vrot.slane %v1116, 5
      %v2099 = vsel %vm2008, %v2097, %v2098
      %v2100 = vrot.slane %v1971, 5
      %v2101 = vrot.slane %v2100, 4
      %v2102 = vrot.slane %v1083, 5
      %v2103 = vsel %vm2008, %v2101, %v2102
      %v2104 = vrot.slane %v2102, 4
      %v2105 = vrot.slane %v1117, 5
      %v2106 = vsel %vm2008, %v2104, %v2105
      %v2107 = vrot.slane %v1972, 5
      %v2108 = vrot.slane %v2107, 4
      %v2109 = vrot.slane %v1085, 5
      %v2110 = vsel %vm2008, %v2108, %v2109
      %v2111 = vrot.slane %v2109, 4
      %v2112 = vrot.slane %v1118, 5
      %v2113 = vsel %vm2008, %v2111, %v2112
      %v2114 = vrot.slane %v1973, 5
      %v2115 = vrot.slane %v2114, 4
      %v2116 = vrot.slane %v1087, 5
      %v2117 = vsel %vm2008, %v2115, %v2116
      %v2118 = vrot.slane %v2116, 4
      %v2119 = vrot.slane %v1119, 5
      %v2120 = vsel %vm2008, %v2118, %v2119
      %s2121 = scalar_lea.vmem %s3, 128
      %v2122 = vld [vmem:[%s2121] sm:$0xf]
      %v2123 = vld [vmem:[%s2121 + $0x4] sm:$0xf]
      %v2124 = vld [vmem:[%s2121 + $0x8] sm:$0xf]
      %v2125 = vld [vmem:[%s2121 + $0xc] sm:$0xf]
      %v2126 = vld [vmem:[%s2121 + $0x10] sm:$0xf]
      %v2127 = vld [vmem:[%s2121 + $0x14] sm:$0xf]
      %v2128 = vld [vmem:[%s2121 + $0x18] sm:$0xf]
      %v2129 = vld [vmem:[%s2121 + $0x1c] sm:$0xf]
      %v2130 = vld [vmem:[%s2121 + $0x20] sm:$0xf]
      %v2131 = vld [vmem:[%s2121 + $0x24] sm:$0xf]
      %v2132 = vld [vmem:[%s2121 + $0x28] sm:$0xf]
      %v2133 = vld [vmem:[%s2121 + $0x2c] sm:$0xf]
      %v2134 = vld [vmem:[%s2121 + $0x30] sm:$0xf]
      %v2135 = vld [vmem:[%s2121 + $0x34] sm:$0xf]
      %v2136 = vld [vmem:[%s2121 + $0x38] sm:$0xf]
      %v2137 = vld [vmem:[%s2121 + $0x3c] sm:$0xf]
      %v2138 = vunpack.c.l.b16 %v2012
      %v2139 = vunpack.c.l.b16 %v2015
      %v2140 = vunpack.c.l.b16 %v2019
      %v2141 = vunpack.c.l.b16 %v2022
      %v2142 = vunpack.c.l.b16 %v2026
      %v2143 = vunpack.c.l.b16 %v2029
      %v2144 = vunpack.c.l.b16 %v2033
      %v2145 = vunpack.c.l.b16 %v2036
      %v2146 = vunpack.c.l.b16 %v2040
      %v2147 = vunpack.c.l.b16 %v2043
      %v2148 = vunpack.c.l.b16 %v2047
      %v2149 = vunpack.c.l.b16 %v2050
      %v2150 = vunpack.c.l.b16 %v2054
      %v2151 = vunpack.c.l.b16 %v2057
      %v2152 = vunpack.c.l.b16 %v2061
      %v2153 = vunpack.c.l.b16 %v2064
      %v2154 = vunpack.c.l.b16 %v2068
      %v2155 = vunpack.c.l.b16 %v2071
      %v2156 = vunpack.c.l.b16 %v2075
      %v2157 = vunpack.c.l.b16 %v2078
      %v2158 = vunpack.c.l.b16 %v2082
      %v2159 = vunpack.c.l.b16 %v2085
      %v2160 = vunpack.c.l.b16 %v2089
      %v2161 = vunpack.c.l.b16 %v2092
      %v2162 = vunpack.c.l.b16 %v2096
      %v2163 = vunpack.c.l.b16 %v2099
      %v2164 = vunpack.c.l.b16 %v2103
      %v2165 = vunpack.c.l.b16 %v2106
      %v2166 = vunpack.c.l.b16 %v2110
      %v2167 = vunpack.c.l.b16 %v2113
      %v2168 = vunpack.c.l.b16 %v2117
      %v2169 = vunpack.c.l.b16 %v2120
      %v2170 = vpack.c.b16 %v2139, %v2138
      %v2171 = vpack.c.b16 %v2141, %v2140
      %v2172 = vpack.c.b16 %v2143, %v2142
      %v2173 = vpack.c.b16 %v2145, %v2144
      %v2174 = vpack.c.b16 %v2147, %v2146
      %v2175 = vpack.c.b16 %v2149, %v2148
      %v2176 = vpack.c.b16 %v2151, %v2150
      %v2177 = vpack.c.b16 %v2153, %v2152
      %v2178 = vpack.c.b16 %v2155, %v2154
      %v2179 = vpack.c.b16 %v2157, %v2156
      %v2180 = vpack.c.b16 %v2159, %v2158
      %v2181 = vpack.c.b16 %v2161, %v2160
      %v2182 = vpack.c.b16 %v2163, %v2162
      %v2183 = vpack.c.b16 %v2165, %v2164
      %v2184 = vpack.c.b16 %v2167, %v2166
      %v2185 = vpack.c.b16 %v2169, %v2168
      %v2218 = vunpack.c.l.b16 %v2122
      %v2219 = vunpack.c.l.b16 %v2123
      %v2220 = vunpack.c.l.b16 %v2124
      %v2221 = vunpack.c.l.b16 %v2125
      %v2222 = vunpack.c.l.b16 %v2126
      %v2223 = vunpack.c.l.b16 %v2127
      %v2224 = vunpack.c.l.b16 %v2128
      %v2225 = vunpack.c.l.b16 %v2129
      %v2226 = vunpack.c.l.b16 %v2130
      %v2227 = vunpack.c.l.b16 %v2131
      %v2228 = vunpack.c.l.b16 %v2132
      %v2229 = vunpack.c.l.b16 %v2133
      %v2230 = vunpack.c.l.b16 %v2134
      %v2231 = vunpack.c.l.b16 %v2135
      %v2232 = vunpack.c.l.b16 %v2136
      %v2233 = vunpack.c.l.b16 %v2137
      %v2234 = vpack.c.b16 %v2219, %v2218
      %v2235 = vpack.c.b16 %v2221, %v2220
      %v2236 = vpack.c.b16 %v2223, %v2222
      %v2237 = vpack.c.b16 %v2225, %v2224
      %v2238 = vpack.c.b16 %v2227, %v2226
      %v2239 = vpack.c.b16 %v2229, %v2228
      %v2240 = vpack.c.b16 %v2231, %v2230
      %v2241 = vpack.c.b16 %v2233, %v2232
      %2250 = vmatpush.bf16.msra.mxu0 %v2241
      %2251 = vmatpush.bf16.msra.mxu0 %v2240
      %2252 = vmatpush.bf16.msra.mxu0 %v2239
      %2253 = vmatpush.bf16.msra.mxu0 %v2238
      %2254 = vmatpush.bf16.msra.mxu0 %v2237
      %2255 = vmatpush.bf16.msra.mxu0 %v2236
      %2256 = vmatpush.bf16.msra.mxu0 %v2235
      %2257 = vmatpush.bf16.msra.mxu0 %v2234
      %2258 = vmatmul.bf16.gmra.mxu0 %v2170
      %v2259 = vpop.f32.mrf.mxu0
      %v2260 = vadd.f32 0.0, %v2259
      %v2261 = vpop.f32.mrf.mxu0
      %v2262 = vadd.f32 0.0, %v2261
      %2263 = vmatmul.bf16.gmra.mxu0 %v2171
      %v2264 = vpop.f32.mrf.mxu0
      %v2265 = vadd.f32 0.0, %v2264
      %v2266 = vpop.f32.mrf.mxu0
      %v2267 = vadd.f32 0.0, %v2266
      %2268 = vmatmul.bf16.gmra.mxu0 %v2172
      %v2269 = vpop.f32.mrf.mxu0
      %v2270 = vadd.f32 0.0, %v2269
      %v2271 = vpop.f32.mrf.mxu0
      %v2272 = vadd.f32 0.0, %v2271
      %2273 = vmatmul.bf16.gmra.mxu0 %v2173
      %v2274 = vpop.f32.mrf.mxu0
      %v2275 = vadd.f32 0.0, %v2274
      %v2276 = vpop.f32.mrf.mxu0
      %v2277 = vadd.f32 0.0, %v2276
      %2278 = vmatmul.bf16.gmra.mxu0 %v2174
      %v2279 = vpop.f32.mrf.mxu0
      %v2280 = vadd.f32 0.0, %v2279
      %v2281 = vpop.f32.mrf.mxu0
      %v2282 = vadd.f32 0.0, %v2281
      %2283 = vmatmul.bf16.gmra.mxu0 %v2175
      %v2284 = vpop.f32.mrf.mxu0
      %v2285 = vadd.f32 0.0, %v2284
      %v2286 = vpop.f32.mrf.mxu0
      %v2287 = vadd.f32 0.0, %v2286
      %2288 = vmatmul.bf16.gmra.mxu0 %v2176
      %v2289 = vpop.f32.mrf.mxu0
      %v2290 = vadd.f32 0.0, %v2289
      %v2291 = vpop.f32.mrf.mxu0
      %v2292 = vadd.f32 0.0, %v2291
      %2293 = vmatmul.bf16.gmra.mxu0 %v2177
      %v2294 = vpop.f32.mrf.mxu0
      %v2295 = vadd.f32 0.0, %v2294
      %v2296 = vpop.f32.mrf.mxu0
      %v2297 = vadd.f32 0.0, %v2296
      %2298 = vmatmul.bf16.gmra.mxu0 %v2178
      %v2299 = vpop.f32.mrf.mxu0
      %v2300 = vadd.f32 0.0, %v2299
      %v2301 = vpop.f32.mrf.mxu0
      %v2302 = vadd.f32 0.0, %v2301
      %2303 = vmatmul.bf16.gmra.mxu0 %v2179
      %v2304 = vpop.f32.mrf.mxu0
      %v2305 = vadd.f32 0.0, %v2304
      %v2306 = vpop.f32.mrf.mxu0
      %v2307 = vadd.f32 0.0, %v2306
      %2308 = vmatmul.bf16.gmra.mxu0 %v2180
      %v2309 = vpop.f32.mrf.mxu0
      %v2310 = vadd.f32 0.0, %v2309
      %v2311 = vpop.f32.mrf.mxu0
      %v2312 = vadd.f32 0.0, %v2311
      %2313 = vmatmul.bf16.gmra.mxu0 %v2181
      %v2314 = vpop.f32.mrf.mxu0
      %v2315 = vadd.f32 0.0, %v2314
      %v2316 = vpop.f32.mrf.mxu0
      %v2317 = vadd.f32 0.0, %v2316
      %2318 = vmatmul.bf16.gmra.mxu0 %v2182
      %v2319 = vpop.f32.mrf.mxu0
      %v2320 = vadd.f32 0.0, %v2319
      %v2321 = vpop.f32.mrf.mxu0
      %v2322 = vadd.f32 0.0, %v2321
      %2323 = vmatmul.bf16.gmra.mxu0 %v2183
      %v2324 = vpop.f32.mrf.mxu0
      %v2325 = vadd.f32 0.0, %v2324
      %v2326 = vpop.f32.mrf.mxu0
      %v2327 = vadd.f32 0.0, %v2326
      %2328 = vmatmul.bf16.gmra.mxu0 %v2184
      %v2329 = vpop.f32.mrf.mxu0
      %v2330 = vadd.f32 0.0, %v2329
      %v2331 = vpop.f32.mrf.mxu0
      %v2332 = vadd.f32 0.0, %v2331
      %2333 = vmatmul.bf16.gmra.mxu0 %v2185
      %v2334 = vpop.f32.mrf.mxu0
      %v2335 = vadd.f32 0.0, %v2334
      %v2336 = vpop.f32.mrf.mxu0
      %v2337 = vadd.f32 0.0, %v2336
      %2338 = vdwg.mxu0
      %v2339 = vadd.f32 %v1879, %v2260
      %v2340 = vadd.f32 %v1881, %v2262
      %v2341 = vadd.f32 %v1884, %v2265
      %v2342 = vadd.f32 %v1886, %v2267
      %v2343 = vadd.f32 %v1889, %v2270
      %v2344 = vadd.f32 %v1891, %v2272
      %v2345 = vadd.f32 %v1894, %v2275
      %v2346 = vadd.f32 %v1896, %v2277
      %v2347 = vadd.f32 %v1899, %v2280
      %v2348 = vadd.f32 %v1901, %v2282
      %v2349 = vadd.f32 %v1904, %v2285
      %v2350 = vadd.f32 %v1906, %v2287
      %v2351 = vadd.f32 %v1909, %v2290
      %v2352 = vadd.f32 %v1911, %v2292
      %v2353 = vadd.f32 %v1914, %v2295
      %v2354 = vadd.f32 %v1916, %v2297
      %v2355 = vadd.f32 %v1919, %v2300
      %v2356 = vadd.f32 %v1921, %v2302
      %v2357 = vadd.f32 %v1924, %v2305
      %v2358 = vadd.f32 %v1926, %v2307
      %v2359 = vadd.f32 %v1929, %v2310
      %v2360 = vadd.f32 %v1931, %v2312
      %v2361 = vadd.f32 %v1934, %v2315
      %v2362 = vadd.f32 %v1936, %v2317
      %v2363 = vadd.f32 %v1939, %v2320
      %v2364 = vadd.f32 %v1941, %v2322
      %v2365 = vadd.f32 %v1944, %v2325
      %v2366 = vadd.f32 %v1946, %v2327
      %v2367 = vadd.f32 %v1949, %v2330
      %v2368 = vadd.f32 %v1951, %v2332
      %v2369 = vadd.f32 %v1954, %v2335
      %v2370 = vadd.f32 %v1956, %v2337
      %v2371 = vld [vmem:[%s915] sm:$0xf]
      %v2372 = vld [vmem:[%s915 + $0x4] sm:$0xf]
      %v2373 = vld [vmem:[%s915 + $0xc] sm:$0xf]
      %v2374 = vld [vmem:[%s915 + $0x10] sm:$0xf]
      %v2375 = vld [vmem:[%s915 + $0x18] sm:$0xf]
      %v2376 = vld [vmem:[%s915 + $0x1c] sm:$0xf]
      %v2377 = vld [vmem:[%s915 + $0x24] sm:$0xf]
      %v2378 = vld [vmem:[%s915 + $0x28] sm:$0xf]
      %v2379 = vld [vmem:[%s915 + $0x30] sm:$0xf]
      %v2380 = vld [vmem:[%s915 + $0x34] sm:$0xf]
      %v2381 = vld [vmem:[%s915 + $0x3c] sm:$0xf]
      %v2382 = vld [vmem:[%s915 + $0x40] sm:$0xf]
      %v2383 = vld [vmem:[%s915 + $0x48] sm:$0xf]
      %v2384 = vld [vmem:[%s915 + $0x4c] sm:$0xf]
      %v2385 = vld [vmem:[%s915 + $0x54] sm:$0xf]
      %v2386 = vld [vmem:[%s915 + $0x58] sm:$0xf]
      %v2387 = vld [vmem:[%s915 + $0x60] sm:$0xf]
      %v2388 = vld [vmem:[%s915 + $0x64] sm:$0xf]
      %v2389 = vld [vmem:[%s915 + $0x6c] sm:$0xf]
      %v2390 = vld [vmem:[%s915 + $0x70] sm:$0xf]
      %v2391 = vld [vmem:[%s915 + $0x78] sm:$0xf]
      %v2392 = vld [vmem:[%s915 + $0x7c] sm:$0xf]
      %v2393 = vld [vmem:[%s915 + $0x84] sm:$0xf]
      %v2394 = vld [vmem:[%s915 + $0x88] sm:$0xf]
      %v2395 = vld [vmem:[%s915 + $0x90] sm:$0xf]
      %v2396 = vld [vmem:[%s915 + $0x94] sm:$0xf]
      %v2397 = vld [vmem:[%s915 + $0x9c] sm:$0xf]
      %v2398 = vld [vmem:[%s915 + $0xa0] sm:$0xf]
      %v2399 = vld [vmem:[%s915 + $0xa8] sm:$0xf]
      %v2400 = vld [vmem:[%s915 + $0xac] sm:$0xf]
      %v2401 = vld [vmem:[%s915 + $0xb4] sm:$0xf]
      %v2402 = vld [vmem:[%s915 + $0xb8] sm:$0xf]
      %s2403 = scalar_lea.vmem %s3, 192
      %v2404 = vld [vmem:[%s2403] sm:$0xf]
      %v2405 = vld [vmem:[%s2403 + $0x4] sm:$0xf]
      %v2406 = vld [vmem:[%s2403 + $0x8] sm:$0xf]
      %v2407 = vld [vmem:[%s2403 + $0xc] sm:$0xf]
      %v2408 = vld [vmem:[%s2403 + $0x10] sm:$0xf]
      %v2409 = vld [vmem:[%s2403 + $0x14] sm:$0xf]
      %v2410 = vld [vmem:[%s2403 + $0x18] sm:$0xf]
      %v2411 = vld [vmem:[%s2403 + $0x1c] sm:$0xf]
      %v2412 = vld [vmem:[%s2403 + $0x20] sm:$0xf]
      %v2413 = vld [vmem:[%s2403 + $0x24] sm:$0xf]
      %v2414 = vld [vmem:[%s2403 + $0x28] sm:$0xf]
      %v2415 = vld [vmem:[%s2403 + $0x2c] sm:$0xf]
      %v2416 = vld [vmem:[%s2403 + $0x30] sm:$0xf]
      %v2417 = vld [vmem:[%s2403 + $0x34] sm:$0xf]
      %v2418 = vld [vmem:[%s2403 + $0x38] sm:$0xf]
      %v2419 = vld [vmem:[%s2403 + $0x3c] sm:$0xf]
      %v2452 = vunpack.c.l.b16 %v2371
      %v2453 = vunpack.c.l.b16 %v2372
      %v2454 = vunpack.c.l.b16 %v2373
      %v2455 = vunpack.c.l.b16 %v2374
      %v2456 = vunpack.c.l.b16 %v2375
      %v2457 = vunpack.c.l.b16 %v2376
      %v2458 = vunpack.c.l.b16 %v2377
      %v2459 = vunpack.c.l.b16 %v2378
      %v2460 = vunpack.c.l.b16 %v2379
      %v2461 = vunpack.c.l.b16 %v2380
      %v2462 = vunpack.c.l.b16 %v2381
      %v2463 = vunpack.c.l.b16 %v2382
      %v2464 = vunpack.c.l.b16 %v2383
      %v2465 = vunpack.c.l.b16 %v2384
      %v2466 = vunpack.c.l.b16 %v2385
      %v2467 = vunpack.c.l.b16 %v2386
      %v2468 = vunpack.c.l.b16 %v2387
      %v2469 = vunpack.c.l.b16 %v2388
      %v2470 = vunpack.c.l.b16 %v2389
      %v2471 = vunpack.c.l.b16 %v2390
      %v2472 = vunpack.c.l.b16 %v2391
      %v2473 = vunpack.c.l.b16 %v2392
      %v2474 = vunpack.c.l.b16 %v2393
      %v2475 = vunpack.c.l.b16 %v2394
      %v2476 = vunpack.c.l.b16 %v2395
      %v2477 = vunpack.c.l.b16 %v2396
      %v2478 = vunpack.c.l.b16 %v2397
      %v2479 = vunpack.c.l.b16 %v2398
      %v2480 = vunpack.c.l.b16 %v2399
      %v2481 = vunpack.c.l.b16 %v2400
      %v2482 = vunpack.c.l.b16 %v2401
      %v2483 = vunpack.c.l.b16 %v2402
      %v2484 = vpack.c.b16 %v2453, %v2452
      %v2485 = vpack.c.b16 %v2455, %v2454
      %v2486 = vpack.c.b16 %v2457, %v2456
      %v2487 = vpack.c.b16 %v2459, %v2458
      %v2488 = vpack.c.b16 %v2461, %v2460
      %v2489 = vpack.c.b16 %v2463, %v2462
      %v2490 = vpack.c.b16 %v2465, %v2464
      %v2491 = vpack.c.b16 %v2467, %v2466
      %v2492 = vpack.c.b16 %v2469, %v2468
      %v2493 = vpack.c.b16 %v2471, %v2470
      %v2494 = vpack.c.b16 %v2473, %v2472
      %v2495 = vpack.c.b16 %v2475, %v2474
      %v2496 = vpack.c.b16 %v2477, %v2476
      %v2497 = vpack.c.b16 %v2479, %v2478
      %v2498 = vpack.c.b16 %v2481, %v2480
      %v2499 = vpack.c.b16 %v2483, %v2482
      %v2532 = vunpack.c.l.b16 %v2404
      %v2533 = vunpack.c.l.b16 %v2405
      %v2534 = vunpack.c.l.b16 %v2406
      %v2535 = vunpack.c.l.b16 %v2407
      %v2536 = vunpack.c.l.b16 %v2408
      %v2537 = vunpack.c.l.b16 %v2409
      %v2538 = vunpack.c.l.b16 %v2410
      %v2539 = vunpack.c.l.b16 %v2411
      %v2540 = vunpack.c.l.b16 %v2412
      %v2541 = vunpack.c.l.b16 %v2413
      %v2542 = vunpack.c.l.b16 %v2414
      %v2543 = vunpack.c.l.b16 %v2415
      %v2544 = vunpack.c.l.b16 %v2416
      %v2545 = vunpack.c.l.b16 %v2417
      %v2546 = vunpack.c.l.b16 %v2418
      %v2547 = vunpack.c.l.b16 %v2419
      %v2548 = vpack.c.b16 %v2533, %v2532
      %v2549 = vpack.c.b16 %v2535, %v2534
      %v2550 = vpack.c.b16 %v2537, %v2536
      %v2551 = vpack.c.b16 %v2539, %v2538
      %v2552 = vpack.c.b16 %v2541, %v2540
      %v2553 = vpack.c.b16 %v2543, %v2542
      %v2554 = vpack.c.b16 %v2545, %v2544
      %v2555 = vpack.c.b16 %v2547, %v2546
      %2564 = vmatpush.bf16.msra.mxu0 %v2555
      %2565 = vmatpush.bf16.msra.mxu0 %v2554
      %2566 = vmatpush.bf16.msra.mxu0 %v2553
      %2567 = vmatpush.bf16.msra.mxu0 %v2552
      %2568 = vmatpush.bf16.msra.mxu0 %v2551
      %2569 = vmatpush.bf16.msra.mxu0 %v2550
      %2570 = vmatpush.bf16.msra.mxu0 %v2549
      %2571 = vmatpush.bf16.msra.mxu0 %v2548
      %2572 = vmatmul.bf16.gmra.mxu0 %v2484
      %v2573 = vpop.f32.mrf.mxu0
      %v2574 = vadd.f32 0.0, %v2573
      %v2575 = vpop.f32.mrf.mxu0
      %v2576 = vadd.f32 0.0, %v2575
      %2577 = vmatmul.bf16.gmra.mxu0 %v2485
      %v2578 = vpop.f32.mrf.mxu0
      %v2579 = vadd.f32 0.0, %v2578
      %v2580 = vpop.f32.mrf.mxu0
      %v2581 = vadd.f32 0.0, %v2580
      %2582 = vmatmul.bf16.gmra.mxu0 %v2486
      %v2583 = vpop.f32.mrf.mxu0
      %v2584 = vadd.f32 0.0, %v2583
      %v2585 = vpop.f32.mrf.mxu0
      %v2586 = vadd.f32 0.0, %v2585
      %2587 = vmatmul.bf16.gmra.mxu0 %v2487
      %v2588 = vpop.f32.mrf.mxu0
      %v2589 = vadd.f32 0.0, %v2588
      %v2590 = vpop.f32.mrf.mxu0
      %v2591 = vadd.f32 0.0, %v2590
      %2592 = vmatmul.bf16.gmra.mxu0 %v2488
      %v2593 = vpop.f32.mrf.mxu0
      %v2594 = vadd.f32 0.0, %v2593
      %v2595 = vpop.f32.mrf.mxu0
      %v2596 = vadd.f32 0.0, %v2595
      %2597 = vmatmul.bf16.gmra.mxu0 %v2489
      %v2598 = vpop.f32.mrf.mxu0
      %v2599 = vadd.f32 0.0, %v2598
      %v2600 = vpop.f32.mrf.mxu0
      %v2601 = vadd.f32 0.0, %v2600
      %2602 = vmatmul.bf16.gmra.mxu0 %v2490
      %v2603 = vpop.f32.mrf.mxu0
      %v2604 = vadd.f32 0.0, %v2603
      %v2605 = vpop.f32.mrf.mxu0
      %v2606 = vadd.f32 0.0, %v2605
      %2607 = vmatmul.bf16.gmra.mxu0 %v2491
      %v2608 = vpop.f32.mrf.mxu0
      %v2609 = vadd.f32 0.0, %v2608
      %v2610 = vpop.f32.mrf.mxu0
      %v2611 = vadd.f32 0.0, %v2610
      %2612 = vmatmul.bf16.gmra.mxu0 %v2492
      %v2613 = vpop.f32.mrf.mxu0
      %v2614 = vadd.f32 0.0, %v2613
      %v2615 = vpop.f32.mrf.mxu0
      %v2616 = vadd.f32 0.0, %v2615
      %2617 = vmatmul.bf16.gmra.mxu0 %v2493
      %v2618 = vpop.f32.mrf.mxu0
      %v2619 = vadd.f32 0.0, %v2618
      %v2620 = vpop.f32.mrf.mxu0
      %v2621 = vadd.f32 0.0, %v2620
      %2622 = vmatmul.bf16.gmra.mxu0 %v2494
      %v2623 = vpop.f32.mrf.mxu0
      %v2624 = vadd.f32 0.0, %v2623
      %v2625 = vpop.f32.mrf.mxu0
      %v2626 = vadd.f32 0.0, %v2625
      %2627 = vmatmul.bf16.gmra.mxu0 %v2495
      %v2628 = vpop.f32.mrf.mxu0
      %v2629 = vadd.f32 0.0, %v2628
      %v2630 = vpop.f32.mrf.mxu0
      %v2631 = vadd.f32 0.0, %v2630
      %2632 = vmatmul.bf16.gmra.mxu0 %v2496
      %v2633 = vpop.f32.mrf.mxu0
      %v2634 = vadd.f32 0.0, %v2633
      %v2635 = vpop.f32.mrf.mxu0
      %v2636 = vadd.f32 0.0, %v2635
      %2637 = vmatmul.bf16.gmra.mxu0 %v2497
      %v2638 = vpop.f32.mrf.mxu0
      %v2639 = vadd.f32 0.0, %v2638
      %v2640 = vpop.f32.mrf.mxu0
      %v2641 = vadd.f32 0.0, %v2640
      %2642 = vmatmul.bf16.gmra.mxu0 %v2498
      %v2643 = vpop.f32.mrf.mxu0
      %v2644 = vadd.f32 0.0, %v2643
      %v2645 = vpop.f32.mrf.mxu0
      %v2646 = vadd.f32 0.0, %v2645
      %2647 = vmatmul.bf16.gmra.mxu0 %v2499
      %v2648 = vpop.f32.mrf.mxu0
      %v2649 = vadd.f32 0.0, %v2648
      %v2650 = vpop.f32.mrf.mxu0
      %v2651 = vadd.f32 0.0, %v2650
      %2652 = vdwg.mxu0
      %v2653 = vadd.f32 %v2339, %v2574
      %v2654 = vadd.f32 %v2340, %v2576
      %v2655 = vadd.f32 %v2341, %v2579
      %v2656 = vadd.f32 %v2342, %v2581
      %v2657 = vadd.f32 %v2343, %v2584
      %v2658 = vadd.f32 %v2344, %v2586
      %v2659 = vadd.f32 %v2345, %v2589
      %v2660 = vadd.f32 %v2346, %v2591
      %v2661 = vadd.f32 %v2347, %v2594
      %v2662 = vadd.f32 %v2348, %v2596
      %v2663 = vadd.f32 %v2349, %v2599
      %v2664 = vadd.f32 %v2350, %v2601
      %v2665 = vadd.f32 %v2351, %v2604
      %v2666 = vadd.f32 %v2352, %v2606
      %v2667 = vadd.f32 %v2353, %v2609
      %v2668 = vadd.f32 %v2354, %v2611
      %v2669 = vadd.f32 %v2355, %v2614
      %v2670 = vadd.f32 %v2356, %v2616
      %v2671 = vadd.f32 %v2357, %v2619
      %v2672 = vadd.f32 %v2358, %v2621
      %v2673 = vadd.f32 %v2359, %v2624
      %v2674 = vadd.f32 %v2360, %v2626
      %v2675 = vadd.f32 %v2361, %v2629
      %v2676 = vadd.f32 %v2362, %v2631
      %v2677 = vadd.f32 %v2363, %v2634
      %v2678 = vadd.f32 %v2364, %v2636
      %v2679 = vadd.f32 %v2365, %v2639
      %v2680 = vadd.f32 %v2366, %v2641
      %v2681 = vadd.f32 %v2367, %v2644
      %v2682 = vadd.f32 %v2368, %v2646
      %v2683 = vadd.f32 %v2369, %v2649
      %v2684 = vadd.f32 %v2370, %v2651
      %v2685 = vld [vmem:[%s915] sm:$0xf]
      %v2686 = vld [vmem:[%s915 + $0x4] sm:$0xf]
      %v2687 = vld [vmem:[%s915 + $0x8] sm:$0x1]
      %v2688 = vld [vmem:[%s915 + $0xc] sm:$0xf]
      %v2689 = vld [vmem:[%s915 + $0x10] sm:$0xf]
      %v2690 = vld [vmem:[%s915 + $0x14] sm:$0x1]
      %v2691 = vld [vmem:[%s915 + $0x18] sm:$0xf]
      %v2692 = vld [vmem:[%s915 + $0x1c] sm:$0xf]
      %v2693 = vld [vmem:[%s915 + $0x20] sm:$0x1]
      %v2694 = vld [vmem:[%s915 + $0x24] sm:$0xf]
      %v2695 = vld [vmem:[%s915 + $0x28] sm:$0xf]
      %v2696 = vld [vmem:[%s915 + $0x2c] sm:$0x1]
      %v2697 = vld [vmem:[%s915 + $0x30] sm:$0xf]
      %v2698 = vld [vmem:[%s915 + $0x34] sm:$0xf]
      %v2699 = vld [vmem:[%s915 + $0x38] sm:$0x1]
      %v2700 = vld [vmem:[%s915 + $0x3c] sm:$0xf]
      %v2701 = vld [vmem:[%s915 + $0x40] sm:$0xf]
      %v2702 = vld [vmem:[%s915 + $0x44] sm:$0x1]
      %v2703 = vld [vmem:[%s915 + $0x48] sm:$0xf]
      %v2704 = vld [vmem:[%s915 + $0x4c] sm:$0xf]
      %v2705 = vld [vmem:[%s915 + $0x50] sm:$0x1]
      %v2706 = vld [vmem:[%s915 + $0x54] sm:$0xf]
      %v2707 = vld [vmem:[%s915 + $0x58] sm:$0xf]
      %v2708 = vld [vmem:[%s915 + $0x5c] sm:$0x1]
      %v2709 = vld [vmem:[%s915 + $0x60] sm:$0xf]
      %v2710 = vld [vmem:[%s915 + $0x64] sm:$0xf]
      %v2711 = vld [vmem:[%s915 + $0x68] sm:$0x1]
      %v2712 = vld [vmem:[%s915 + $0x6c] sm:$0xf]
      %v2713 = vld [vmem:[%s915 + $0x70] sm:$0xf]
      %v2714 = vld [vmem:[%s915 + $0x74] sm:$0x1]
      %v2715 = vld [vmem:[%s915 + $0x78] sm:$0xf]
      %v2716 = vld [vmem:[%s915 + $0x7c] sm:$0xf]
      %v2717 = vld [vmem:[%s915 + $0x80] sm:$0x1]
      %v2718 = vld [vmem:[%s915 + $0x84] sm:$0xf]
      %v2719 = vld [vmem:[%s915 + $0x88] sm:$0xf]
      %v2720 = vld [vmem:[%s915 + $0x8c] sm:$0x1]
      %v2721 = vld [vmem:[%s915 + $0x90] sm:$0xf]
      %v2722 = vld [vmem:[%s915 + $0x94] sm:$0xf]
      %v2723 = vld [vmem:[%s915 + $0x98] sm:$0x1]
      %v2724 = vld [vmem:[%s915 + $0x9c] sm:$0xf]
      %v2725 = vld [vmem:[%s915 + $0xa0] sm:$0xf]
      %v2726 = vld [vmem:[%s915 + $0xa4] sm:$0x1]
      %v2727 = vld [vmem:[%s915 + $0xa8] sm:$0xf]
      %v2728 = vld [vmem:[%s915 + $0xac] sm:$0xf]
      %v2729 = vld [vmem:[%s915 + $0xb0] sm:$0x1]
      %v2730 = vld [vmem:[%s915 + $0xb4] sm:$0xf]
      %v2731 = vld [vmem:[%s915 + $0xb8] sm:$0xf]
      %v2732 = vld [vmem:[%s915 + $0xbc] sm:$0x1]
      %v2734 = vshrl.u32 %v2685, 16
      %v2736 = vrot.slane %v2734, 4
      %v2737 = vshll.u32 %v2685, 16
      %v2739 = vrot.slane %v2737, 5
      %v2740 = vor.u32 %v2736, %v2739
      %v2741 = vrot.slane %v2740, 4
      %v2743 = vshll.u32 %v2686, 16
      %v2745 = vrot.slane %v2743, 5
      %v2746 = vsel %vm1122, %v2741, %v2745
      %v2747 = vshrl.u32 %v2686, 16
      %v2749 = vrot.slane %v2747, 4
      %v2750 = vor.u32 %v2749, %v2745
      %v2751 = vrot.slane %v2750, 4
      %v2753 = vshll.u32 %v2687, 16
      %v2755 = vrot.slane %v2753, 5
      %v2756 = vsel %vm1122, %v2751, %v2755
      %v2758 = vshrl.u32 %v2688, 16
      %v2760 = vrot.slane %v2758, 4
      %v2761 = vshll.u32 %v2688, 16
      %v2763 = vrot.slane %v2761, 5
      %v2764 = vor.u32 %v2760, %v2763
      %v2765 = vrot.slane %v2764, 4
      %v2767 = vshll.u32 %v2689, 16
      %v2769 = vrot.slane %v2767, 5
      %v2770 = vsel %vm1122, %v2765, %v2769
      %v2771 = vshrl.u32 %v2689, 16
      %v2773 = vrot.slane %v2771, 4
      %v2774 = vor.u32 %v2773, %v2769
      %v2775 = vrot.slane %v2774, 4
      %v2777 = vshll.u32 %v2690, 16
      %v2779 = vrot.slane %v2777, 5
      %v2780 = vsel %vm1122, %v2775, %v2779
      %v2782 = vshrl.u32 %v2691, 16
      %v2784 = vrot.slane %v2782, 4
      %v2785 = vshll.u32 %v2691, 16
      %v2787 = vrot.slane %v2785, 5
      %v2788 = vor.u32 %v2784, %v2787
      %v2789 = vrot.slane %v2788, 4
      %v2791 = vshll.u32 %v2692, 16
      %v2793 = vrot.slane %v2791, 5
      %v2794 = vsel %vm1122, %v2789, %v2793
      %v2795 = vshrl.u32 %v2692, 16
      %v2797 = vrot.slane %v2795, 4
      %v2798 = vor.u32 %v2797, %v2793
      %v2799 = vrot.slane %v2798, 4
      %v2801 = vshll.u32 %v2693, 16
      %v2803 = vrot.slane %v2801, 5
      %v2804 = vsel %vm1122, %v2799, %v2803
      %v2806 = vshrl.u32 %v2694, 16
      %v2808 = vrot.slane %v2806, 4
      %v2809 = vshll.u32 %v2694, 16
      %v2811 = vrot.slane %v2809, 5
      %v2812 = vor.u32 %v2808, %v2811
      %v2813 = vrot.slane %v2812, 4
      %v2815 = vshll.u32 %v2695, 16
      %v2817 = vrot.slane %v2815, 5
      %v2818 = vsel %vm1122, %v2813, %v2817
      %v2819 = vshrl.u32 %v2695, 16
      %v2821 = vrot.slane %v2819, 4
      %v2822 = vor.u32 %v2821, %v2817
      %v2823 = vrot.slane %v2822, 4
      %v2825 = vshll.u32 %v2696, 16
      %v2827 = vrot.slane %v2825, 5
      %v2828 = vsel %vm1122, %v2823, %v2827
      %v2830 = vshrl.u32 %v2697, 16
      %v2832 = vrot.slane %v2830, 4
      %v2833 = vshll.u32 %v2697, 16
      %v2835 = vrot.slane %v2833, 5
      %v2836 = vor.u32 %v2832, %v2835
      %v2837 = vrot.slane %v2836, 4
      %v2839 = vshll.u32 %v2698, 16
      %v2841 = vrot.slane %v2839, 5
      %v2842 = vsel %vm1122, %v2837, %v2841
      %v2843 = vshrl.u32 %v2698, 16
      %v2845 = vrot.slane %v2843, 4
      %v2846 = vor.u32 %v2845, %v2841
      %v2847 = vrot.slane %v2846, 4
      %v2849 = vshll.u32 %v2699, 16
      %v2851 = vrot.slane %v2849, 5
      %v2852 = vsel %vm1122, %v2847, %v2851
      %v2854 = vshrl.u32 %v2700, 16
      %v2856 = vrot.slane %v2854, 4
      %v2857 = vshll.u32 %v2700, 16
      %v2859 = vrot.slane %v2857, 5
      %v2860 = vor.u32 %v2856, %v2859
      %v2861 = vrot.slane %v2860, 4
      %v2863 = vshll.u32 %v2701, 16
      %v2865 = vrot.slane %v2863, 5
      %v2866 = vsel %vm1122, %v2861, %v2865
      %v2867 = vshrl.u32 %v2701, 16
      %v2869 = vrot.slane %v2867, 4
      %v2870 = vor.u32 %v2869, %v2865
      %v2871 = vrot.slane %v2870, 4
      %v2873 = vshll.u32 %v2702, 16
      %v2875 = vrot.slane %v2873, 5
      %v2876 = vsel %vm1122, %v2871, %v2875
      %v2878 = vshrl.u32 %v2703, 16
      %v2880 = vrot.slane %v2878, 4
      %v2881 = vshll.u32 %v2703, 16
      %v2883 = vrot.slane %v2881, 5
      %v2884 = vor.u32 %v2880, %v2883
      %v2885 = vrot.slane %v2884, 4
      %v2887 = vshll.u32 %v2704, 16
      %v2889 = vrot.slane %v2887, 5
      %v2890 = vsel %vm1122, %v2885, %v2889
      %v2891 = vshrl.u32 %v2704, 16
      %v2893 = vrot.slane %v2891, 4
      %v2894 = vor.u32 %v2893, %v2889
      %v2895 = vrot.slane %v2894, 4
      %v2897 = vshll.u32 %v2705, 16
      %v2899 = vrot.slane %v2897, 5
      %v2900 = vsel %vm1122, %v2895, %v2899
      %v2902 = vshrl.u32 %v2706, 16
      %v2904 = vrot.slane %v2902, 4
      %v2905 = vshll.u32 %v2706, 16
      %v2907 = vrot.slane %v2905, 5
      %v2908 = vor.u32 %v2904, %v2907
      %v2909 = vrot.slane %v2908, 4
      %v2911 = vshll.u32 %v2707, 16
      %v2913 = vrot.slane %v2911, 5
      %v2914 = vsel %vm1122, %v2909, %v2913
      %v2915 = vshrl.u32 %v2707, 16
      %v2917 = vrot.slane %v2915, 4
      %v2918 = vor.u32 %v2917, %v2913
      %v2919 = vrot.slane %v2918, 4
      %v2921 = vshll.u32 %v2708, 16
      %v2923 = vrot.slane %v2921, 5
      %v2924 = vsel %vm1122, %v2919, %v2923
      %v2926 = vshrl.u32 %v2709, 16
      %v2928 = vrot.slane %v2926, 4
      %v2929 = vshll.u32 %v2709, 16
      %v2931 = vrot.slane %v2929, 5
      %v2932 = vor.u32 %v2928, %v2931
      %v2933 = vrot.slane %v2932, 4
      %v2935 = vshll.u32 %v2710, 16
      %v2937 = vrot.slane %v2935, 5
      %v2938 = vsel %vm1122, %v2933, %v2937
      %v2939 = vshrl.u32 %v2710, 16
      %v2941 = vrot.slane %v2939, 4
      %v2942 = vor.u32 %v2941, %v2937
      %v2943 = vrot.slane %v2942, 4
      %v2945 = vshll.u32 %v2711, 16
      %v2947 = vrot.slane %v2945, 5
      %v2948 = vsel %vm1122, %v2943, %v2947
      %v2950 = vshrl.u32 %v2712, 16
      %v2952 = vrot.slane %v2950, 4
      %v2953 = vshll.u32 %v2712, 16
      %v2955 = vrot.slane %v2953, 5
      %v2956 = vor.u32 %v2952, %v2955
      %v2957 = vrot.slane %v2956, 4
      %v2959 = vshll.u32 %v2713, 16
      %v2961 = vrot.slane %v2959, 5
      %v2962 = vsel %vm1122, %v2957, %v2961
      %v2963 = vshrl.u32 %v2713, 16
      %v2965 = vrot.slane %v2963, 4
      %v2966 = vor.u32 %v2965, %v2961
      %v2967 = vrot.slane %v2966, 4
      %v2969 = vshll.u32 %v2714, 16
      %v2971 = vrot.slane %v2969, 5
      %v2972 = vsel %vm1122, %v2967, %v2971
      %v2974 = vshrl.u32 %v2715, 16
      %v2976 = vrot.slane %v2974, 4
      %v2977 = vshll.u32 %v2715, 16
      %v2979 = vrot.slane %v2977, 5
      %v2980 = vor.u32 %v2976, %v2979
      %v2981 = vrot.slane %v2980, 4
      %v2983 = vshll.u32 %v2716, 16
      %v2985 = vrot.slane %v2983, 5
      %v2986 = vsel %vm1122, %v2981, %v2985
      %v2987 = vshrl.u32 %v2716, 16
      %v2989 = vrot.slane %v2987, 4
      %v2990 = vor.u32 %v2989, %v2985
      %v2991 = vrot.slane %v2990, 4
      %v2993 = vshll.u32 %v2717, 16
      %v2995 = vrot.slane %v2993, 5
      %v2996 = vsel %vm1122, %v2991, %v2995
      %v2998 = vshrl.u32 %v2718, 16
      %v3000 = vrot.slane %v2998, 4
      %v3001 = vshll.u32 %v2718, 16
      %v3003 = vrot.slane %v3001, 5
      %v3004 = vor.u32 %v3000, %v3003
      %v3005 = vrot.slane %v3004, 4
      %v3007 = vshll.u32 %v2719, 16
      %v3009 = vrot.slane %v3007, 5
      %v3010 = vsel %vm1122, %v3005, %v3009
      %v3011 = vshrl.u32 %v2719, 16
      %v3013 = vrot.slane %v3011, 4
      %v3014 = vor.u32 %v3013, %v3009
      %v3015 = vrot.slane %v3014, 4
      %v3017 = vshll.u32 %v2720, 16
      %v3019 = vrot.slane %v3017, 5
      %v3020 = vsel %vm1122, %v3015, %v3019
      %v3022 = vshrl.u32 %v2721, 16
      %v3024 = vrot.slane %v3022, 4
      %v3025 = vshll.u32 %v2721, 16
      %v3027 = vrot.slane %v3025, 5
      %v3028 = vor.u32 %v3024, %v3027
      %v3029 = vrot.slane %v3028, 4
      %v3031 = vshll.u32 %v2722, 16
      %v3033 = vrot.slane %v3031, 5
      %v3034 = vsel %vm1122, %v3029, %v3033
      %v3035 = vshrl.u32 %v2722, 16
      %v3037 = vrot.slane %v3035, 4
      %v3038 = vor.u32 %v3037, %v3033
      %v3039 = vrot.slane %v3038, 4
      %v3041 = vshll.u32 %v2723, 16
      %v3043 = vrot.slane %v3041, 5
      %v3044 = vsel %vm1122, %v3039, %v3043
      %v3046 = vshrl.u32 %v2724, 16
      %v3048 = vrot.slane %v3046, 4
      %v3049 = vshll.u32 %v2724, 16
      %v3051 = vrot.slane %v3049, 5
      %v3052 = vor.u32 %v3048, %v3051
      %v3053 = vrot.slane %v3052, 4
      %v3055 = vshll.u32 %v2725, 16
      %v3057 = vrot.slane %v3055, 5
      %v3058 = vsel %vm1122, %v3053, %v3057
      %v3059 = vshrl.u32 %v2725, 16
      %v3061 = vrot.slane %v3059, 4
      %v3062 = vor.u32 %v3061, %v3057
      %v3063 = vrot.slane %v3062, 4
      %v3065 = vshll.u32 %v2726, 16
      %v3067 = vrot.slane %v3065, 5
      %v3068 = vsel %vm1122, %v3063, %v3067
      %v3070 = vshrl.u32 %v2727, 16
      %v3072 = vrot.slane %v3070, 4
      %v3073 = vshll.u32 %v2727, 16
      %v3075 = vrot.slane %v3073, 5
      %v3076 = vor.u32 %v3072, %v3075
      %v3077 = vrot.slane %v3076, 4
      %v3079 = vshll.u32 %v2728, 16
      %v3081 = vrot.slane %v3079, 5
      %v3082 = vsel %vm1122, %v3077, %v3081
      %v3083 = vshrl.u32 %v2728, 16
      %v3085 = vrot.slane %v3083, 4
      %v3086 = vor.u32 %v3085, %v3081
      %v3087 = vrot.slane %v3086, 4
      %v3089 = vshll.u32 %v2729, 16
      %v3091 = vrot.slane %v3089, 5
      %v3092 = vsel %vm1122, %v3087, %v3091
      %v3094 = vshrl.u32 %v2730, 16
      %v3096 = vrot.slane %v3094, 4
      %v3097 = vshll.u32 %v2730, 16
      %v3099 = vrot.slane %v3097, 5
      %v3100 = vor.u32 %v3096, %v3099
      %v3101 = vrot.slane %v3100, 4
      %v3103 = vshll.u32 %v2731, 16
      %v3105 = vrot.slane %v3103, 5
      %v3106 = vsel %vm1122, %v3101, %v3105
      %v3107 = vshrl.u32 %v2731, 16
      %v3109 = vrot.slane %v3107, 4
      %v3110 = vor.u32 %v3109, %v3105
      %v3111 = vrot.slane %v3110, 4
      %v3113 = vshll.u32 %v2732, 16
      %v3115 = vrot.slane %v3113, 5
      %v3116 = vsel %vm1122, %v3111, %v3115
      %s3117 = scalar_lea.vmem %s3, 256
      %v3118 = vld [vmem:[%s3117] sm:$0xf]
      %v3119 = vld [vmem:[%s3117 + $0x4] sm:$0xf]
      %v3120 = vld [vmem:[%s3117 + $0x8] sm:$0xf]
      %v3121 = vld [vmem:[%s3117 + $0xc] sm:$0xf]
      %v3122 = vld [vmem:[%s3117 + $0x10] sm:$0xf]
      %v3123 = vld [vmem:[%s3117 + $0x14] sm:$0xf]
      %v3124 = vld [vmem:[%s3117 + $0x18] sm:$0xf]
      %v3125 = vld [vmem:[%s3117 + $0x1c] sm:$0xf]
      %v3126 = vld [vmem:[%s3117 + $0x20] sm:$0xf]
      %v3127 = vld [vmem:[%s3117 + $0x24] sm:$0xf]
      %v3128 = vld [vmem:[%s3117 + $0x28] sm:$0xf]
      %v3129 = vld [vmem:[%s3117 + $0x2c] sm:$0xf]
      %v3130 = vld [vmem:[%s3117 + $0x30] sm:$0xf]
      %v3131 = vld [vmem:[%s3117 + $0x34] sm:$0xf]
      %v3132 = vld [vmem:[%s3117 + $0x38] sm:$0xf]
      %v3133 = vld [vmem:[%s3117 + $0x3c] sm:$0xf]
      %v3134 = vunpack.c.l.b16 %v2746
      %v3135 = vunpack.c.l.b16 %v2756
      %v3136 = vunpack.c.l.b16 %v2770
      %v3137 = vunpack.c.l.b16 %v2780
      %v3138 = vunpack.c.l.b16 %v2794
      %v3139 = vunpack.c.l.b16 %v2804
      %v3140 = vunpack.c.l.b16 %v2818
      %v3141 = vunpack.c.l.b16 %v2828
      %v3142 = vunpack.c.l.b16 %v2842
      %v3143 = vunpack.c.l.b16 %v2852
      %v3144 = vunpack.c.l.b16 %v2866
      %v3145 = vunpack.c.l.b16 %v2876
      %v3146 = vunpack.c.l.b16 %v2890
      %v3147 = vunpack.c.l.b16 %v2900
      %v3148 = vunpack.c.l.b16 %v2914
      %v3149 = vunpack.c.l.b16 %v2924
      %v3150 = vunpack.c.l.b16 %v2938
      %v3151 = vunpack.c.l.b16 %v2948
      %v3152 = vunpack.c.l.b16 %v2962
      %v3153 = vunpack.c.l.b16 %v2972
      %v3154 = vunpack.c.l.b16 %v2986
      %v3155 = vunpack.c.l.b16 %v2996
      %v3156 = vunpack.c.l.b16 %v3010
      %v3157 = vunpack.c.l.b16 %v3020
      %v3158 = vunpack.c.l.b16 %v3034
      %v3159 = vunpack.c.l.b16 %v3044
      %v3160 = vunpack.c.l.b16 %v3058
      %v3161 = vunpack.c.l.b16 %v3068
      %v3162 = vunpack.c.l.b16 %v3082
      %v3163 = vunpack.c.l.b16 %v3092
      %v3164 = vunpack.c.l.b16 %v3106
      %v3165 = vunpack.c.l.b16 %v3116
      %v3166 = vpack.c.b16 %v3135, %v3134
      %v3167 = vpack.c.b16 %v3137, %v3136
      %v3168 = vpack.c.b16 %v3139, %v3138
      %v3169 = vpack.c.b16 %v3141, %v3140
      %v3170 = vpack.c.b16 %v3143, %v3142
      %v3171 = vpack.c.b16 %v3145, %v3144
      %v3172 = vpack.c.b16 %v3147, %v3146
      %v3173 = vpack.c.b16 %v3149, %v3148
      %v3174 = vpack.c.b16 %v3151, %v3150
      %v3175 = vpack.c.b16 %v3153, %v3152
      %v3176 = vpack.c.b16 %v3155, %v3154
      %v3177 = vpack.c.b16 %v3157, %v3156
      %v3178 = vpack.c.b16 %v3159, %v3158
      %v3179 = vpack.c.b16 %v3161, %v3160
      %v3180 = vpack.c.b16 %v3163, %v3162
      %v3181 = vpack.c.b16 %v3165, %v3164
      %v3214 = vunpack.c.l.b16 %v3118
      %v3215 = vunpack.c.l.b16 %v3119
      %v3216 = vunpack.c.l.b16 %v3120
      %v3217 = vunpack.c.l.b16 %v3121
      %v3218 = vunpack.c.l.b16 %v3122
      %v3219 = vunpack.c.l.b16 %v3123
      %v3220 = vunpack.c.l.b16 %v3124
      %v3221 = vunpack.c.l.b16 %v3125
      %v3222 = vunpack.c.l.b16 %v3126
      %v3223 = vunpack.c.l.b16 %v3127
      %v3224 = vunpack.c.l.b16 %v3128
      %v3225 = vunpack.c.l.b16 %v3129
      %v3226 = vunpack.c.l.b16 %v3130
      %v3227 = vunpack.c.l.b16 %v3131
      %v3228 = vunpack.c.l.b16 %v3132
      %v3229 = vunpack.c.l.b16 %v3133
      %v3230 = vpack.c.b16 %v3215, %v3214
      %v3231 = vpack.c.b16 %v3217, %v3216
      %v3232 = vpack.c.b16 %v3219, %v3218
      %v3233 = vpack.c.b16 %v3221, %v3220
      %v3234 = vpack.c.b16 %v3223, %v3222
      %v3235 = vpack.c.b16 %v3225, %v3224
      %v3236 = vpack.c.b16 %v3227, %v3226
      %v3237 = vpack.c.b16 %v3229, %v3228
      %3246 = vmatpush.bf16.msra.mxu0 %v3237
      %3247 = vmatpush.bf16.msra.mxu0 %v3236
      %3248 = vmatpush.bf16.msra.mxu0 %v3235
      %3249 = vmatpush.bf16.msra.mxu0 %v3234
      %3250 = vmatpush.bf16.msra.mxu0 %v3233
      %3251 = vmatpush.bf16.msra.mxu0 %v3232
      %3252 = vmatpush.bf16.msra.mxu0 %v3231
      %3253 = vmatpush.bf16.msra.mxu0 %v3230
      %3254 = vmatmul.bf16.gmra.mxu0 %v3166
      %v3255 = vpop.f32.mrf.mxu0
      %v3256 = vadd.f32 0.0, %v3255
      %v3257 = vpop.f32.mrf.mxu0
      %v3258 = vadd.f32 0.0, %v3257
      %3259 = vmatmul.bf16.gmra.mxu0 %v3167
      %v3260 = vpop.f32.mrf.mxu0
      %v3261 = vadd.f32 0.0, %v3260
      %v3262 = vpop.f32.mrf.mxu0
      %v3263 = vadd.f32 0.0, %v3262
      %3264 = vmatmul.bf16.gmra.mxu0 %v3168
      %v3265 = vpop.f32.mrf.mxu0
      %v3266 = vadd.f32 0.0, %v3265
      %v3267 = vpop.f32.mrf.mxu0
      %v3268 = vadd.f32 0.0, %v3267
      %3269 = vmatmul.bf16.gmra.mxu0 %v3169
      %v3270 = vpop.f32.mrf.mxu0
      %v3271 = vadd.f32 0.0, %v3270
      %v3272 = vpop.f32.mrf.mxu0
      %v3273 = vadd.f32 0.0, %v3272
      %3274 = vmatmul.bf16.gmra.mxu0 %v3170
      %v3275 = vpop.f32.mrf.mxu0
      %v3276 = vadd.f32 0.0, %v3275
      %v3277 = vpop.f32.mrf.mxu0
      %v3278 = vadd.f32 0.0, %v3277
      %3279 = vmatmul.bf16.gmra.mxu0 %v3171
      %v3280 = vpop.f32.mrf.mxu0
      %v3281 = vadd.f32 0.0, %v3280
      %v3282 = vpop.f32.mrf.mxu0
      %v3283 = vadd.f32 0.0, %v3282
      %3284 = vmatmul.bf16.gmra.mxu0 %v3172
      %v3285 = vpop.f32.mrf.mxu0
      %v3286 = vadd.f32 0.0, %v3285
      %v3287 = vpop.f32.mrf.mxu0
      %v3288 = vadd.f32 0.0, %v3287
      %3289 = vmatmul.bf16.gmra.mxu0 %v3173
      %v3290 = vpop.f32.mrf.mxu0
      %v3291 = vadd.f32 0.0, %v3290
      %v3292 = vpop.f32.mrf.mxu0
      %v3293 = vadd.f32 0.0, %v3292
      %3294 = vmatmul.bf16.gmra.mxu0 %v3174
      %v3295 = vpop.f32.mrf.mxu0
      %v3296 = vadd.f32 0.0, %v3295
      %v3297 = vpop.f32.mrf.mxu0
      %v3298 = vadd.f32 0.0, %v3297
      %3299 = vmatmul.bf16.gmra.mxu0 %v3175
      %v3300 = vpop.f32.mrf.mxu0
      %v3301 = vadd.f32 0.0, %v3300
      %v3302 = vpop.f32.mrf.mxu0
      %v3303 = vadd.f32 0.0, %v3302
      %3304 = vmatmul.bf16.gmra.mxu0 %v3176
      %v3305 = vpop.f32.mrf.mxu0
      %v3306 = vadd.f32 0.0, %v3305
      %v3307 = vpop.f32.mrf.mxu0
      %v3308 = vadd.f32 0.0, %v3307
      %3309 = vmatmul.bf16.gmra.mxu0 %v3177
      %v3310 = vpop.f32.mrf.mxu0
      %v3311 = vadd.f32 0.0, %v3310
      %v3312 = vpop.f32.mrf.mxu0
      %v3313 = vadd.f32 0.0, %v3312
      %3314 = vmatmul.bf16.gmra.mxu0 %v3178
      %v3315 = vpop.f32.mrf.mxu0
      %v3316 = vadd.f32 0.0, %v3315
      %v3317 = vpop.f32.mrf.mxu0
      %v3318 = vadd.f32 0.0, %v3317
      %3319 = vmatmul.bf16.gmra.mxu0 %v3179
      %v3320 = vpop.f32.mrf.mxu0
      %v3321 = vadd.f32 0.0, %v3320
      %v3322 = vpop.f32.mrf.mxu0
      %v3323 = vadd.f32 0.0, %v3322
      %3324 = vmatmul.bf16.gmra.mxu0 %v3180
      %v3325 = vpop.f32.mrf.mxu0
      %v3326 = vadd.f32 0.0, %v3325
      %v3327 = vpop.f32.mrf.mxu0
      %v3328 = vadd.f32 0.0, %v3327
      %3329 = vmatmul.bf16.gmra.mxu0 %v3181
      %v3330 = vpop.f32.mrf.mxu0
      %v3331 = vadd.f32 0.0, %v3330
      %v3332 = vpop.f32.mrf.mxu0
      %v3333 = vadd.f32 0.0, %v3332
      %3334 = vdwg.mxu0
      %v3335 = vadd.f32 %v2653, %v3256
      %v3336 = vadd.f32 %v2654, %v3258
      %v3337 = vadd.f32 %v2655, %v3261
      %v3338 = vadd.f32 %v2656, %v3263
      %v3339 = vadd.f32 %v2657, %v3266
      %v3340 = vadd.f32 %v2658, %v3268
      %v3341 = vadd.f32 %v2659, %v3271
      %v3342 = vadd.f32 %v2660, %v3273
      %v3343 = vadd.f32 %v2661, %v3276
      %v3344 = vadd.f32 %v2662, %v3278
      %v3345 = vadd.f32 %v2663, %v3281
      %v3346 = vadd.f32 %v2664, %v3283
      %v3347 = vadd.f32 %v2665, %v3286
      %v3348 = vadd.f32 %v2666, %v3288
      %v3349 = vadd.f32 %v2667, %v3291
      %v3350 = vadd.f32 %v2668, %v3293
      %v3351 = vadd.f32 %v2669, %v3296
      %v3352 = vadd.f32 %v2670, %v3298
      %v3353 = vadd.f32 %v2671, %v3301
      %v3354 = vadd.f32 %v2672, %v3303
      %v3355 = vadd.f32 %v2673, %v3306
      %v3356 = vadd.f32 %v2674, %v3308
      %v3357 = vadd.f32 %v2675, %v3311
      %v3358 = vadd.f32 %v2676, %v3313
      %v3359 = vadd.f32 %v2677, %v3316
      %v3360 = vadd.f32 %v2678, %v3318
      %v3361 = vadd.f32 %v2679, %v3321
      %v3362 = vadd.f32 %v2680, %v3323
      %v3363 = vadd.f32 %v2681, %v3326
      %v3364 = vadd.f32 %v2682, %v3328
      %v3365 = vadd.f32 %v2683, %v3331
      %v3366 = vadd.f32 %v2684, %v3333
      %v3367 = vld [vmem:[%s915] sm:$0xe]
      %v3368 = vld [vmem:[%s915 + $0xc] sm:$0xe]
      %v3369 = vld [vmem:[%s915 + $0x18] sm:$0xe]
      %v3370 = vld [vmem:[%s915 + $0x24] sm:$0xe]
      %v3371 = vld [vmem:[%s915 + $0x30] sm:$0xe]
      %v3372 = vld [vmem:[%s915 + $0x3c] sm:$0xe]
      %v3373 = vld [vmem:[%s915 + $0x48] sm:$0xe]
      %v3374 = vld [vmem:[%s915 + $0x54] sm:$0xe]
      %v3375 = vld [vmem:[%s915 + $0x60] sm:$0xe]
      %v3376 = vld [vmem:[%s915 + $0x6c] sm:$0xe]
      %v3377 = vld [vmem:[%s915 + $0x78] sm:$0xe]
      %v3378 = vld [vmem:[%s915 + $0x84] sm:$0xe]
      %v3379 = vld [vmem:[%s915 + $0x90] sm:$0xe]
      %v3380 = vld [vmem:[%s915 + $0x9c] sm:$0xe]
      %v3381 = vld [vmem:[%s915 + $0xa8] sm:$0xe]
      %v3382 = vld [vmem:[%s915 + $0xb4] sm:$0xe]
      %v3431 = vrot.slane %v3367, 5
      %v3432 = vrot.slane %v3431, 4
      %v3433 = vrot.slane %v2686, 5
      %v3434 = vsel %vm2008, %v3432, %v3433
      %v3435 = vrot.slane %v3433, 4
      %v3436 = vrot.slane %v2687, 5
      %v3437 = vsel %vm2008, %v3435, %v3436
      %v3438 = vrot.slane %v3368, 5
      %v3439 = vrot.slane %v3438, 4
      %v3440 = vrot.slane %v2689, 5
      %v3441 = vsel %vm2008, %v3439, %v3440
      %v3442 = vrot.slane %v3440, 4
      %v3443 = vrot.slane %v2690, 5
      %v3444 = vsel %vm2008, %v3442, %v3443
      %v3445 = vrot.slane %v3369, 5
      %v3446 = vrot.slane %v3445, 4
      %v3447 = vrot.slane %v2692, 5
      %v3448 = vsel %vm2008, %v3446, %v3447
      %v3449 = vrot.slane %v3447, 4
      %v3450 = vrot.slane %v2693, 5
      %v3451 = vsel %vm2008, %v3449, %v3450
      %v3452 = vrot.slane %v3370, 5
      %v3453 = vrot.slane %v3452, 4
      %v3454 = vrot.slane %v2695, 5
      %v3455 = vsel %vm2008, %v3453, %v3454
      %v3456 = vrot.slane %v3454, 4
      %v3457 = vrot.slane %v2696, 5
      %v3458 = vsel %vm2008, %v3456, %v3457
      %v3459 = vrot.slane %v3371, 5
      %v3460 = vrot.slane %v3459, 4
      %v3461 = vrot.slane %v2698, 5
      %v3462 = vsel %vm2008, %v3460, %v3461
      %v3463 = vrot.slane %v3461, 4
      %v3464 = vrot.slane %v2699, 5
      %v3465 = vsel %vm2008, %v3463, %v3464
      %v3466 = vrot.slane %v3372, 5
      %v3467 = vrot.slane %v3466, 4
      %v3468 = vrot.slane %v2701, 5
      %v3469 = vsel %vm2008, %v3467, %v3468
      %v3470 = vrot.slane %v3468, 4
      %v3471 = vrot.slane %v2702, 5
      %v3472 = vsel %vm2008, %v3470, %v3471
      %v3473 = vrot.slane %v3373, 5
      %v3474 = vrot.slane %v3473, 4
      %v3475 = vrot.slane %v2704, 5
      %v3476 = vsel %vm2008, %v3474, %v3475
      %v3477 = vrot.slane %v3475, 4
      %v3478 = vrot.slane %v2705, 5
      %v3479 = vsel %vm2008, %v3477, %v3478
      %v3480 = vrot.slane %v3374, 5
      %v3481 = vrot.slane %v3480, 4
      %v3482 = vrot.slane %v2707, 5
      %v3483 = vsel %vm2008, %v3481, %v3482
      %v3484 = vrot.slane %v3482, 4
      %v3485 = vrot.slane %v2708, 5
      %v3486 = vsel %vm2008, %v3484, %v3485
      %v3487 = vrot.slane %v3375, 5
      %v3488 = vrot.slane %v3487, 4
      %v3489 = vrot.slane %v2710, 5
      %v3490 = vsel %vm2008, %v3488, %v3489
      %v3491 = vrot.slane %v3489, 4
      %v3492 = vrot.slane %v2711, 5
      %v3493 = vsel %vm2008, %v3491, %v3492
      %v3494 = vrot.slane %v3376, 5
      %v3495 = vrot.slane %v3494, 4
      %v3496 = vrot.slane %v2713, 5
      %v3497 = vsel %vm2008, %v3495, %v3496
      %v3498 = vrot.slane %v3496, 4
      %v3499 = vrot.slane %v2714, 5
      %v3500 = vsel %vm2008, %v3498, %v3499
      %v3501 = vrot.slane %v3377, 5
      %v3502 = vrot.slane %v3501, 4
      %v3503 = vrot.slane %v2716, 5
      %v3504 = vsel %vm2008, %v3502, %v3503
      %v3505 = vrot.slane %v3503, 4
      %v3506 = vrot.slane %v2717, 5
      %v3507 = vsel %vm2008, %v3505, %v3506
      %v3508 = vrot.slane %v3378, 5
      %v3509 = vrot.slane %v3508, 4
      %v3510 = vrot.slane %v2719, 5
      %v3511 = vsel %vm2008, %v3509, %v3510
      %v3512 = vrot.slane %v3510, 4
      %v3513 = vrot.slane %v2720, 5
      %v3514 = vsel %vm2008, %v3512, %v3513
      %v3515 = vrot.slane %v3379, 5
      %v3516 = vrot.slane %v3515, 4
      %v3517 = vrot.slane %v2722, 5
      %v3518 = vsel %vm2008, %v3516, %v3517
      %v3519 = vrot.slane %v3517, 4
      %v3520 = vrot.slane %v2723, 5
      %v3521 = vsel %vm2008, %v3519, %v3520
      %v3522 = vrot.slane %v3380, 5
      %v3523 = vrot.slane %v3522, 4
      %v3524 = vrot.slane %v2725, 5
      %v3525 = vsel %vm2008, %v3523, %v3524
      %v3526 = vrot.slane %v3524, 4
      %v3527 = vrot.slane %v2726, 5
      %v3528 = vsel %vm2008, %v3526, %v3527
      %v3529 = vrot.slane %v3381, 5
      %v3530 = vrot.slane %v3529, 4
      %v3531 = vrot.slane %v2728, 5
      %v3532 = vsel %vm2008, %v3530, %v3531
      %v3533 = vrot.slane %v3531, 4
      %v3534 = vrot.slane %v2729, 5
      %v3535 = vsel %vm2008, %v3533, %v3534
      %v3536 = vrot.slane %v3382, 5
      %v3537 = vrot.slane %v3536, 4
      %v3538 = vrot.slane %v2731, 5
      %v3539 = vsel %vm2008, %v3537, %v3538
      %v3540 = vrot.slane %v3538, 4
      %v3541 = vrot.slane %v2732, 5
      %v3542 = vsel %vm2008, %v3540, %v3541
      %s3543 = scalar_lea.vmem %s3, 320
      %v3544 = vld [vmem:[%s3543] sm:$0xf]
      %v3545 = vld [vmem:[%s3543 + $0x4] sm:$0xf]
      %v3546 = vld [vmem:[%s3543 + $0x8] sm:$0xf]
      %v3547 = vld [vmem:[%s3543 + $0xc] sm:$0xf]
      %v3548 = vld [vmem:[%s3543 + $0x10] sm:$0xf]
      %v3549 = vld [vmem:[%s3543 + $0x14] sm:$0xf]
      %v3550 = vld [vmem:[%s3543 + $0x18] sm:$0xf]
      %v3551 = vld [vmem:[%s3543 + $0x1c] sm:$0xf]
      %v3552 = vld [vmem:[%s3543 + $0x20] sm:$0xf]
      %v3553 = vld [vmem:[%s3543 + $0x24] sm:$0xf]
      %v3554 = vld [vmem:[%s3543 + $0x28] sm:$0xf]
      %v3555 = vld [vmem:[%s3543 + $0x2c] sm:$0xf]
      %v3556 = vld [vmem:[%s3543 + $0x30] sm:$0xf]
      %v3557 = vld [vmem:[%s3543 + $0x34] sm:$0xf]
      %v3558 = vld [vmem:[%s3543 + $0x38] sm:$0xf]
      %v3559 = vld [vmem:[%s3543 + $0x3c] sm:$0xf]
      %v3560 = vunpack.c.l.b16 %v3434
      %v3561 = vunpack.c.l.b16 %v3437
      %v3562 = vunpack.c.l.b16 %v3441
      %v3563 = vunpack.c.l.b16 %v3444
      %v3564 = vunpack.c.l.b16 %v3448
      %v3565 = vunpack.c.l.b16 %v3451
      %v3566 = vunpack.c.l.b16 %v3455
      %v3567 = vunpack.c.l.b16 %v3458
      %v3568 = vunpack.c.l.b16 %v3462
      %v3569 = vunpack.c.l.b16 %v3465
      %v3570 = vunpack.c.l.b16 %v3469
      %v3571 = vunpack.c.l.b16 %v3472
      %v3572 = vunpack.c.l.b16 %v3476
      %v3573 = vunpack.c.l.b16 %v3479
      %v3574 = vunpack.c.l.b16 %v3483
      %v3575 = vunpack.c.l.b16 %v3486
      %v3576 = vunpack.c.l.b16 %v3490
      %v3577 = vunpack.c.l.b16 %v3493
      %v3578 = vunpack.c.l.b16 %v3497
      %v3579 = vunpack.c.l.b16 %v3500
      %v3580 = vunpack.c.l.b16 %v3504
      %v3581 = vunpack.c.l.b16 %v3507
      %v3582 = vunpack.c.l.b16 %v3511
      %v3583 = vunpack.c.l.b16 %v3514
      %v3584 = vunpack.c.l.b16 %v3518
      %v3585 = vunpack.c.l.b16 %v3521
      %v3586 = vunpack.c.l.b16 %v3525
      %v3587 = vunpack.c.l.b16 %v3528
      %v3588 = vunpack.c.l.b16 %v3532
      %v3589 = vunpack.c.l.b16 %v3535
      %v3590 = vunpack.c.l.b16 %v3539
      %v3591 = vunpack.c.l.b16 %v3542
      %v3592 = vpack.c.b16 %v3561, %v3560
      %v3593 = vpack.c.b16 %v3563, %v3562
      %v3594 = vpack.c.b16 %v3565, %v3564
      %v3595 = vpack.c.b16 %v3567, %v3566
      %v3596 = vpack.c.b16 %v3569, %v3568
      %v3597 = vpack.c.b16 %v3571, %v3570
      %v3598 = vpack.c.b16 %v3573, %v3572
      %v3599 = vpack.c.b16 %v3575, %v3574
      %v3600 = vpack.c.b16 %v3577, %v3576
      %v3601 = vpack.c.b16 %v3579, %v3578
      %v3602 = vpack.c.b16 %v3581, %v3580
      %v3603 = vpack.c.b16 %v3583, %v3582
      %v3604 = vpack.c.b16 %v3585, %v3584
      %v3605 = vpack.c.b16 %v3587, %v3586
      %v3606 = vpack.c.b16 %v3589, %v3588
      %v3607 = vpack.c.b16 %v3591, %v3590
      %v3640 = vunpack.c.l.b16 %v3544
      %v3641 = vunpack.c.l.b16 %v3545
      %v3642 = vunpack.c.l.b16 %v3546
      %v3643 = vunpack.c.l.b16 %v3547
      %v3644 = vunpack.c.l.b16 %v3548
      %v3645 = vunpack.c.l.b16 %v3549
      %v3646 = vunpack.c.l.b16 %v3550
      %v3647 = vunpack.c.l.b16 %v3551
      %v3648 = vunpack.c.l.b16 %v3552
      %v3649 = vunpack.c.l.b16 %v3553
      %v3650 = vunpack.c.l.b16 %v3554
      %v3651 = vunpack.c.l.b16 %v3555
      %v3652 = vunpack.c.l.b16 %v3556
      %v3653 = vunpack.c.l.b16 %v3557
      %v3654 = vunpack.c.l.b16 %v3558
      %v3655 = vunpack.c.l.b16 %v3559
      %v3656 = vpack.c.b16 %v3641, %v3640
      %v3657 = vpack.c.b16 %v3643, %v3642
      %v3658 = vpack.c.b16 %v3645, %v3644
      %v3659 = vpack.c.b16 %v3647, %v3646
      %v3660 = vpack.c.b16 %v3649, %v3648
      %v3661 = vpack.c.b16 %v3651, %v3650
      %v3662 = vpack.c.b16 %v3653, %v3652
      %v3663 = vpack.c.b16 %v3655, %v3654
      %3672 = vmatpush.bf16.msra.mxu0 %v3663
      %3673 = vmatpush.bf16.msra.mxu0 %v3662
      %3674 = vmatpush.bf16.msra.mxu0 %v3661
      %3675 = vmatpush.bf16.msra.mxu0 %v3660
      %3676 = vmatpush.bf16.msra.mxu0 %v3659
      %3677 = vmatpush.bf16.msra.mxu0 %v3658
      %3678 = vmatpush.bf16.msra.mxu0 %v3657
      %3679 = vmatpush.bf16.msra.mxu0 %v3656
      %3680 = vmatmul.bf16.gmra.mxu0 %v3592
      %v3681 = vpop.f32.mrf.mxu0
      %v3682 = vadd.f32 0.0, %v3681
      %v3683 = vpop.f32.mrf.mxu0
      %v3684 = vadd.f32 0.0, %v3683
      %3685 = vmatmul.bf16.gmra.mxu0 %v3593
      %v3686 = vpop.f32.mrf.mxu0
      %v3687 = vadd.f32 0.0, %v3686
      %v3688 = vpop.f32.mrf.mxu0
      %v3689 = vadd.f32 0.0, %v3688
      %3690 = vmatmul.bf16.gmra.mxu0 %v3594
      %v3691 = vpop.f32.mrf.mxu0
      %v3692 = vadd.f32 0.0, %v3691
      %v3693 = vpop.f32.mrf.mxu0
      %v3694 = vadd.f32 0.0, %v3693
      %3695 = vmatmul.bf16.gmra.mxu0 %v3595
      %v3696 = vpop.f32.mrf.mxu0
      %v3697 = vadd.f32 0.0, %v3696
      %v3698 = vpop.f32.mrf.mxu0
      %v3699 = vadd.f32 0.0, %v3698
      %3700 = vmatmul.bf16.gmra.mxu0 %v3596
      %v3701 = vpop.f32.mrf.mxu0
      %v3702 = vadd.f32 0.0, %v3701
      %v3703 = vpop.f32.mrf.mxu0
      %v3704 = vadd.f32 0.0, %v3703
      %3705 = vmatmul.bf16.gmra.mxu0 %v3597
      %v3706 = vpop.f32.mrf.mxu0
      %v3707 = vadd.f32 0.0, %v3706
      %v3708 = vpop.f32.mrf.mxu0
      %v3709 = vadd.f32 0.0, %v3708
      %3710 = vmatmul.bf16.gmra.mxu0 %v3598
      %v3711 = vpop.f32.mrf.mxu0
      %v3712 = vadd.f32 0.0, %v3711
      %v3713 = vpop.f32.mrf.mxu0
      %v3714 = vadd.f32 0.0, %v3713
      %3715 = vmatmul.bf16.gmra.mxu0 %v3599
      %v3716 = vpop.f32.mrf.mxu0
      %v3717 = vadd.f32 0.0, %v3716
      %v3718 = vpop.f32.mrf.mxu0
      %v3719 = vadd.f32 0.0, %v3718
      %3720 = vmatmul.bf16.gmra.mxu0 %v3600
      %v3721 = vpop.f32.mrf.mxu0
      %v3722 = vadd.f32 0.0, %v3721
      %v3723 = vpop.f32.mrf.mxu0
      %v3724 = vadd.f32 0.0, %v3723
      %3725 = vmatmul.bf16.gmra.mxu0 %v3601
      %v3726 = vpop.f32.mrf.mxu0
      %v3727 = vadd.f32 0.0, %v3726
      %v3728 = vpop.f32.mrf.mxu0
      %v3729 = vadd.f32 0.0, %v3728
      %3730 = vmatmul.bf16.gmra.mxu0 %v3602
      %v3731 = vpop.f32.mrf.mxu0
      %v3732 = vadd.f32 0.0, %v3731
      %v3733 = vpop.f32.mrf.mxu0
      %v3734 = vadd.f32 0.0, %v3733
      %3735 = vmatmul.bf16.gmra.mxu0 %v3603
      %v3736 = vpop.f32.mrf.mxu0
      %v3737 = vadd.f32 0.0, %v3736
      %v3738 = vpop.f32.mrf.mxu0
      %v3739 = vadd.f32 0.0, %v3738
      %3740 = vmatmul.bf16.gmra.mxu0 %v3604
      %v3741 = vpop.f32.mrf.mxu0
      %v3742 = vadd.f32 0.0, %v3741
      %v3743 = vpop.f32.mrf.mxu0
      %v3744 = vadd.f32 0.0, %v3743
      %3745 = vmatmul.bf16.gmra.mxu0 %v3605
      %v3746 = vpop.f32.mrf.mxu0
      %v3747 = vadd.f32 0.0, %v3746
      %v3748 = vpop.f32.mrf.mxu0
      %v3749 = vadd.f32 0.0, %v3748
      %3750 = vmatmul.bf16.gmra.mxu0 %v3606
      %v3751 = vpop.f32.mrf.mxu0
      %v3752 = vadd.f32 0.0, %v3751
      %v3753 = vpop.f32.mrf.mxu0
      %v3754 = vadd.f32 0.0, %v3753
      %3755 = vmatmul.bf16.gmra.mxu0 %v3607
      %v3756 = vpop.f32.mrf.mxu0
      %v3757 = vadd.f32 0.0, %v3756
      %v3758 = vpop.f32.mrf.mxu0
      %v3759 = vadd.f32 0.0, %v3758
      %3760 = vdwg.mxu0
      %v3761 = vadd.f32 %v3335, %v3682
      %v3762 = vadd.f32 %v3336, %v3684
      %v3763 = vadd.f32 %v3337, %v3687
      %v3764 = vadd.f32 %v3338, %v3689
      %v3765 = vadd.f32 %v3339, %v3692
      %v3766 = vadd.f32 %v3340, %v3694
      %v3767 = vadd.f32 %v3341, %v3697
      %v3768 = vadd.f32 %v3342, %v3699
      %v3769 = vadd.f32 %v3343, %v3702
      %v3770 = vadd.f32 %v3344, %v3704
      %v3771 = vadd.f32 %v3345, %v3707
      %v3772 = vadd.f32 %v3346, %v3709
      %v3773 = vadd.f32 %v3347, %v3712
      %v3774 = vadd.f32 %v3348, %v3714
      %v3775 = vadd.f32 %v3349, %v3717
      %v3776 = vadd.f32 %v3350, %v3719
      %v3777 = vadd.f32 %v3351, %v3722
      %v3778 = vadd.f32 %v3352, %v3724
      %v3779 = vadd.f32 %v3353, %v3727
      %v3780 = vadd.f32 %v3354, %v3729
      %v3781 = vadd.f32 %v3355, %v3732
      %v3782 = vadd.f32 %v3356, %v3734
      %v3783 = vadd.f32 %v3357, %v3737
      %v3784 = vadd.f32 %v3358, %v3739
      %v3785 = vadd.f32 %v3359, %v3742
      %v3786 = vadd.f32 %v3360, %v3744
      %v3787 = vadd.f32 %v3361, %v3747
      %v3788 = vadd.f32 %v3362, %v3749
      %v3789 = vadd.f32 %v3363, %v3752
      %v3790 = vadd.f32 %v3364, %v3754
      %v3791 = vadd.f32 %v3365, %v3757
      %v3792 = vadd.f32 %v3366, %v3759
      %s3793 = scalar_lea.vmem [#allocation2], 24
      %v3794 = vld [vmem:[%s3793] sm:$0xf]
      %v3795 = vld [vmem:[%s3793 + $0x4] sm:$0xf]
      %v3796 = vld [vmem:[%s3793 + $0xc] sm:$0xf]
      %v3797 = vld [vmem:[%s3793 + $0x10] sm:$0xf]
      %v3798 = vld [vmem:[%s3793 + $0x18] sm:$0xf]
      %v3799 = vld [vmem:[%s3793 + $0x1c] sm:$0xf]
      %v3800 = vld [vmem:[%s3793 + $0x24] sm:$0xf]
      %v3801 = vld [vmem:[%s3793 + $0x28] sm:$0xf]
      %v3802 = vld [vmem:[%s3793 + $0x30] sm:$0xf]
      %v3803 = vld [vmem:[%s3793 + $0x34] sm:$0xf]
      %v3804 = vld [vmem:[%s3793 + $0x3c] sm:$0xf]
      %v3805 = vld [vmem:[%s3793 + $0x40] sm:$0xf]
      %v3806 = vld [vmem:[%s3793 + $0x48] sm:$0xf]
      %v3807 = vld [vmem:[%s3793 + $0x4c] sm:$0xf]
      %v3808 = vld [vmem:[%s3793 + $0x54] sm:$0xf]
      %v3809 = vld [vmem:[%s3793 + $0x58] sm:$0xf]
      %v3810 = vld [vmem:[%s3793 + $0x60] sm:$0xf]
      %v3811 = vld [vmem:[%s3793 + $0x64] sm:$0xf]
      %v3812 = vld [vmem:[%s3793 + $0x6c] sm:$0xf]
      %v3813 = vld [vmem:[%s3793 + $0x70] sm:$0xf]
      %v3814 = vld [vmem:[%s3793 + $0x78] sm:$0xf]
      %v3815 = vld [vmem:[%s3793 + $0x7c] sm:$0xf]
      %v3816 = vld [vmem:[%s3793 + $0x84] sm:$0xf]
      %v3817 = vld [vmem:[%s3793 + $0x88] sm:$0xf]
      %v3818 = vld [vmem:[%s3793 + $0x90] sm:$0xf]
      %v3819 = vld [vmem:[%s3793 + $0x94] sm:$0xf]
      %v3820 = vld [vmem:[%s3793 + $0x9c] sm:$0xf]
      %v3821 = vld [vmem:[%s3793 + $0xa0] sm:$0xf]
      %v3822 = vld [vmem:[%s3793 + $0xa8] sm:$0xf]
      %v3823 = vld [vmem:[%s3793 + $0xac] sm:$0xf]
      %v3824 = vld [vmem:[%s3793 + $0xb4] sm:$0xf]
      %v3825 = vld [vmem:[%s3793 + $0xb8] sm:$0xf]
      %s3826 = scalar_lea.vmem %s3, 384
      %v3827 = vld [vmem:[%s3826] sm:$0xf]
      %v3828 = vld [vmem:[%s3826 + $0x4] sm:$0xf]
      %v3829 = vld [vmem:[%s3826 + $0x8] sm:$0xf]
      %v3830 = vld [vmem:[%s3826 + $0xc] sm:$0xf]
      %v3831 = vld [vmem:[%s3826 + $0x10] sm:$0xf]
      %v3832 = vld [vmem:[%s3826 + $0x14] sm:$0xf]
      %v3833 = vld [vmem:[%s3826 + $0x18] sm:$0xf]
      %v3834 = vld [vmem:[%s3826 + $0x1c] sm:$0xf]
      %v3835 = vld [vmem:[%s3826 + $0x20] sm:$0xf]
      %v3836 = vld [vmem:[%s3826 + $0x24] sm:$0xf]
      %v3837 = vld [vmem:[%s3826 + $0x28] sm:$0xf]
      %v3838 = vld [vmem:[%s3826 + $0x2c] sm:$0xf]
      %v3839 = vld [vmem:[%s3826 + $0x30] sm:$0xf]
      %v3840 = vld [vmem:[%s3826 + $0x34] sm:$0xf]
      %v3841 = vld [vmem:[%s3826 + $0x38] sm:$0xf]
      %v3842 = vld [vmem:[%s3826 + $0x3c] sm:$0xf]
      %v3875 = vunpack.c.l.b16 %v3794
      %v3876 = vunpack.c.l.b16 %v3795
      %v3877 = vunpack.c.l.b16 %v3796
      %v3878 = vunpack.c.l.b16 %v3797
      %v3879 = vunpack.c.l.b16 %v3798
      %v3880 = vunpack.c.l.b16 %v3799
      %v3881 = vunpack.c.l.b16 %v3800
      %v3882 = vunpack.c.l.b16 %v3801
      %v3883 = vunpack.c.l.b16 %v3802
      %v3884 = vunpack.c.l.b16 %v3803
      %v3885 = vunpack.c.l.b16 %v3804
      %v3886 = vunpack.c.l.b16 %v3805
      %v3887 = vunpack.c.l.b16 %v3806
      %v3888 = vunpack.c.l.b16 %v3807
      %v3889 = vunpack.c.l.b16 %v3808
      %v3890 = vunpack.c.l.b16 %v3809
      %v3891 = vunpack.c.l.b16 %v3810
      %v3892 = vunpack.c.l.b16 %v3811
      %v3893 = vunpack.c.l.b16 %v3812
      %v3894 = vunpack.c.l.b16 %v3813
      %v3895 = vunpack.c.l.b16 %v3814
      %v3896 = vunpack.c.l.b16 %v3815
      %v3897 = vunpack.c.l.b16 %v3816
      %v3898 = vunpack.c.l.b16 %v3817
      %v3899 = vunpack.c.l.b16 %v3818
      %v3900 = vunpack.c.l.b16 %v3819
      %v3901 = vunpack.c.l.b16 %v3820
      %v3902 = vunpack.c.l.b16 %v3821
      %v3903 = vunpack.c.l.b16 %v3822
      %v3904 = vunpack.c.l.b16 %v3823
      %v3905 = vunpack.c.l.b16 %v3824
      %v3906 = vunpack.c.l.b16 %v3825
      %v3907 = vpack.c.b16 %v3876, %v3875
      %v3908 = vpack.c.b16 %v3878, %v3877
      %v3909 = vpack.c.b16 %v3880, %v3879
      %v3910 = vpack.c.b16 %v3882, %v3881
      %v3911 = vpack.c.b16 %v3884, %v3883
      %v3912 = vpack.c.b16 %v3886, %v3885
      %v3913 = vpack.c.b16 %v3888, %v3887
      %v3914 = vpack.c.b16 %v3890, %v3889
      %v3915 = vpack.c.b16 %v3892, %v3891
      %v3916 = vpack.c.b16 %v3894, %v3893
      %v3917 = vpack.c.b16 %v3896, %v3895
      %v3918 = vpack.c.b16 %v3898, %v3897
      %v3919 = vpack.c.b16 %v3900, %v3899
      %v3920 = vpack.c.b16 %v3902, %v3901
      %v3921 = vpack.c.b16 %v3904, %v3903
      %v3922 = vpack.c.b16 %v3906, %v3905
      %v3955 = vunpack.c.l.b16 %v3827
      %v3956 = vunpack.c.l.b16 %v3828
      %v3957 = vunpack.c.l.b16 %v3829
      %v3958 = vunpack.c.l.b16 %v3830
      %v3959 = vunpack.c.l.b16 %v3831
      %v3960 = vunpack.c.l.b16 %v3832
      %v3961 = vunpack.c.l.b16 %v3833
      %v3962 = vunpack.c.l.b16 %v3834
      %v3963 = vunpack.c.l.b16 %v3835
      %v3964 = vunpack.c.l.b16 %v3836
      %v3965 = vunpack.c.l.b16 %v3837
      %v3966 = vunpack.c.l.b16 %v3838
      %v3967 = vunpack.c.l.b16 %v3839
      %v3968 = vunpack.c.l.b16 %v3840
      %v3969 = vunpack.c.l.b16 %v3841
      %v3970 = vunpack.c.l.b16 %v3842
      %v3971 = vpack.c.b16 %v3956, %v3955
      %v3972 = vpack.c.b16 %v3958, %v3957
      %v3973 = vpack.c.b16 %v3960, %v3959
      %v3974 = vpack.c.b16 %v3962, %v3961
      %v3975 = vpack.c.b16 %v3964, %v3963
      %v3976 = vpack.c.b16 %v3966, %v3965
      %v3977 = vpack.c.b16 %v3968, %v3967
      %v3978 = vpack.c.b16 %v3970, %v3969
      %3987 = vmatpush.bf16.msra.mxu0 %v3978
      %3988 = vmatpush.bf16.msra.mxu0 %v3977
      %3989 = vmatpush.bf16.msra.mxu0 %v3976
      %3990 = vmatpush.bf16.msra.mxu0 %v3975
      %3991 = vmatpush.bf16.msra.mxu0 %v3974
      %3992 = vmatpush.bf16.msra.mxu0 %v3973
      %3993 = vmatpush.bf16.msra.mxu0 %v3972
      %3994 = vmatpush.bf16.msra.mxu0 %v3971
      %3995 = vmatmul.bf16.gmra.mxu0 %v3907
      %v3996 = vpop.f32.mrf.mxu0
      %v3997 = vadd.f32 0.0, %v3996
      %v3998 = vpop.f32.mrf.mxu0
      %v3999 = vadd.f32 0.0, %v3998
      %4000 = vmatmul.bf16.gmra.mxu0 %v3908
      %v4001 = vpop.f32.mrf.mxu0
      %v4002 = vadd.f32 0.0, %v4001
      %v4003 = vpop.f32.mrf.mxu0
      %v4004 = vadd.f32 0.0, %v4003
      %4005 = vmatmul.bf16.gmra.mxu0 %v3909
      %v4006 = vpop.f32.mrf.mxu0
      %v4007 = vadd.f32 0.0, %v4006
      %v4008 = vpop.f32.mrf.mxu0
      %v4009 = vadd.f32 0.0, %v4008
      %4010 = vmatmul.bf16.gmra.mxu0 %v3910
      %v4011 = vpop.f32.mrf.mxu0
      %v4012 = vadd.f32 0.0, %v4011
      %v4013 = vpop.f32.mrf.mxu0
      %v4014 = vadd.f32 0.0, %v4013
      %4015 = vmatmul.bf16.gmra.mxu0 %v3911
      %v4016 = vpop.f32.mrf.mxu0
      %v4017 = vadd.f32 0.0, %v4016
      %v4018 = vpop.f32.mrf.mxu0
      %v4019 = vadd.f32 0.0, %v4018
      %4020 = vmatmul.bf16.gmra.mxu0 %v3912
      %v4021 = vpop.f32.mrf.mxu0
      %v4022 = vadd.f32 0.0, %v4021
      %v4023 = vpop.f32.mrf.mxu0
      %v4024 = vadd.f32 0.0, %v4023
      %4025 = vmatmul.bf16.gmra.mxu0 %v3913
      %v4026 = vpop.f32.mrf.mxu0
      %v4027 = vadd.f32 0.0, %v4026
      %v4028 = vpop.f32.mrf.mxu0
      %v4029 = vadd.f32 0.0, %v4028
      %4030 = vmatmul.bf16.gmra.mxu0 %v3914
      %v4031 = vpop.f32.mrf.mxu0
      %v4032 = vadd.f32 0.0, %v4031
      %v4033 = vpop.f32.mrf.mxu0
      %v4034 = vadd.f32 0.0, %v4033
      %4035 = vmatmul.bf16.gmra.mxu0 %v3915
      %v4036 = vpop.f32.mrf.mxu0
      %v4037 = vadd.f32 0.0, %v4036
      %v4038 = vpop.f32.mrf.mxu0
      %v4039 = vadd.f32 0.0, %v4038
      %4040 = vmatmul.bf16.gmra.mxu0 %v3916
      %v4041 = vpop.f32.mrf.mxu0
      %v4042 = vadd.f32 0.0, %v4041
      %v4043 = vpop.f32.mrf.mxu0
      %v4044 = vadd.f32 0.0, %v4043
      %4045 = vmatmul.bf16.gmra.mxu0 %v3917
      %v4046 = vpop.f32.mrf.mxu0
      %v4047 = vadd.f32 0.0, %v4046
      %v4048 = vpop.f32.mrf.mxu0
      %v4049 = vadd.f32 0.0, %v4048
      %4050 = vmatmul.bf16.gmra.mxu0 %v3918
      %v4051 = vpop.f32.mrf.mxu0
      %v4052 = vadd.f32 0.0, %v4051
      %v4053 = vpop.f32.mrf.mxu0
      %v4054 = vadd.f32 0.0, %v4053
      %4055 = vmatmul.bf16.gmra.mxu0 %v3919
      %v4056 = vpop.f32.mrf.mxu0
      %v4057 = vadd.f32 0.0, %v4056
      %v4058 = vpop.f32.mrf.mxu0
      %v4059 = vadd.f32 0.0, %v4058
      %4060 = vmatmul.bf16.gmra.mxu0 %v3920
      %v4061 = vpop.f32.mrf.mxu0
      %v4062 = vadd.f32 0.0, %v4061
      %v4063 = vpop.f32.mrf.mxu0
      %v4064 = vadd.f32 0.0, %v4063
      %4065 = vmatmul.bf16.gmra.mxu0 %v3921
      %v4066 = vpop.f32.mrf.mxu0
      %v4067 = vadd.f32 0.0, %v4066
      %v4068 = vpop.f32.mrf.mxu0
      %v4069 = vadd.f32 0.0, %v4068
      %4070 = vmatmul.bf16.gmra.mxu0 %v3922
      %v4071 = vpop.f32.mrf.mxu0
      %v4072 = vadd.f32 0.0, %v4071
      %v4073 = vpop.f32.mrf.mxu0
      %v4074 = vadd.f32 0.0, %v4073
      %4075 = vdwg.mxu0
      %v4076 = vadd.f32 %v3761, %v3997
      %v4077 = vadd.f32 %v3762, %v3999
      %v4078 = vadd.f32 %v3763, %v4002
      %v4079 = vadd.f32 %v3764, %v4004
      %v4080 = vadd.f32 %v3765, %v4007
      %v4081 = vadd.f32 %v3766, %v4009
      %v4082 = vadd.f32 %v3767, %v4012
      %v4083 = vadd.f32 %v3768, %v4014
      %v4084 = vadd.f32 %v3769, %v4017
      %v4085 = vadd.f32 %v3770, %v4019
      %v4086 = vadd.f32 %v3771, %v4022
      %v4087 = vadd.f32 %v3772, %v4024
      %v4088 = vadd.f32 %v3773, %v4027
      %v4089 = vadd.f32 %v3774, %v4029
      %v4090 = vadd.f32 %v3775, %v4032
      %v4091 = vadd.f32 %v3776, %v4034
      %v4092 = vadd.f32 %v3777, %v4037
      %v4093 = vadd.f32 %v3778, %v4039
      %v4094 = vadd.f32 %v3779, %v4042
      %v4095 = vadd.f32 %v3780, %v4044
      %v4096 = vadd.f32 %v3781, %v4047
      %v4097 = vadd.f32 %v3782, %v4049
      %v4098 = vadd.f32 %v3783, %v4052
      %v4099 = vadd.f32 %v3784, %v4054
      %v4100 = vadd.f32 %v3785, %v4057
      %v4101 = vadd.f32 %v3786, %v4059
      %v4102 = vadd.f32 %v3787, %v4062
      %v4103 = vadd.f32 %v3788, %v4064
      %v4104 = vadd.f32 %v3789, %v4067
      %v4105 = vadd.f32 %v3790, %v4069
      %v4106 = vadd.f32 %v3791, %v4072
      %v4107 = vadd.f32 %v3792, %v4074
      %v4108 = vld [vmem:[%s3793] sm:$0xf]
      %v4109 = vld [vmem:[%s3793 + $0x4] sm:$0xf]
      %v4110 = vld [vmem:[%s3793 + $0x8] sm:$0x1]
      %v4111 = vld [vmem:[%s3793 + $0xc] sm:$0xf]
      %v4112 = vld [vmem:[%s3793 + $0x10] sm:$0xf]
      %v4113 = vld [vmem:[%s3793 + $0x14] sm:$0x1]
      %v4114 = vld [vmem:[%s3793 + $0x18] sm:$0xf]
      %v4115 = vld [vmem:[%s3793 + $0x1c] sm:$0xf]
      %v4116 = vld [vmem:[%s3793 + $0x20] sm:$0x1]
      %v4117 = vld [vmem:[%s3793 + $0x24] sm:$0xf]
      %v4118 = vld [vmem:[%s3793 + $0x28] sm:$0xf]
      %v4119 = vld [vmem:[%s3793 + $0x2c] sm:$0x1]
      %v4120 = vld [vmem:[%s3793 + $0x30] sm:$0xf]
      %v4121 = vld [vmem:[%s3793 + $0x34] sm:$0xf]
      %v4122 = vld [vmem:[%s3793 + $0x38] sm:$0x1]
      %v4123 = vld [vmem:[%s3793 + $0x3c] sm:$0xf]
      %v4124 = vld [vmem:[%s3793 + $0x40] sm:$0xf]
      %v4125 = vld [vmem:[%s3793 + $0x44] sm:$0x1]
      %v4126 = vld [vmem:[%s3793 + $0x48] sm:$0xf]
      %v4127 = vld [vmem:[%s3793 + $0x4c] sm:$0xf]
      %v4128 = vld [vmem:[%s3793 + $0x50] sm:$0x1]
      %v4129 = vld [vmem:[%s3793 + $0x54] sm:$0xf]
      %v4130 = vld [vmem:[%s3793 + $0x58] sm:$0xf]
      %v4131 = vld [vmem:[%s3793 + $0x5c] sm:$0x1]
      %v4132 = vld [vmem:[%s3793 + $0x60] sm:$0xf]
      %v4133 = vld [vmem:[%s3793 + $0x64] sm:$0xf]
      %v4134 = vld [vmem:[%s3793 + $0x68] sm:$0x1]
      %v4135 = vld [vmem:[%s3793 + $0x6c] sm:$0xf]
      %v4136 = vld [vmem:[%s3793 + $0x70] sm:$0xf]
      %v4137 = vld [vmem:[%s3793 + $0x74] sm:$0x1]
      %v4138 = vld [vmem:[%s3793 + $0x78] sm:$0xf]
      %v4139 = vld [vmem:[%s3793 + $0x7c] sm:$0xf]
      %v4140 = vld [vmem:[%s3793 + $0x80] sm:$0x1]
      %v4141 = vld [vmem:[%s3793 + $0x84] sm:$0xf]
      %v4142 = vld [vmem:[%s3793 + $0x88] sm:$0xf]
      %v4143 = vld [vmem:[%s3793 + $0x8c] sm:$0x1]
      %v4144 = vld [vmem:[%s3793 + $0x90] sm:$0xf]
      %v4145 = vld [vmem:[%s3793 + $0x94] sm:$0xf]
      %v4146 = vld [vmem:[%s3793 + $0x98] sm:$0x1]
      %v4147 = vld [vmem:[%s3793 + $0x9c] sm:$0xf]
      %v4148 = vld [vmem:[%s3793 + $0xa0] sm:$0xf]
      %v4149 = vld [vmem:[%s3793 + $0xa4] sm:$0x1]
      %v4150 = vld [vmem:[%s3793 + $0xa8] sm:$0xf]
      %v4151 = vld [vmem:[%s3793 + $0xac] sm:$0xf]
      %v4152 = vld [vmem:[%s3793 + $0xb0] sm:$0x1]
      %v4153 = vld [vmem:[%s3793 + $0xb4] sm:$0xf]
      %v4154 = vld [vmem:[%s3793 + $0xb8] sm:$0xf]
      %v4155 = vld [vmem:[%s3793 + $0xbc] sm:$0x1]
      %v4157 = vshrl.u32 %v4108, 16
      %v4159 = vrot.slane %v4157, 4
      %v4160 = vshll.u32 %v4108, 16
      %v4162 = vrot.slane %v4160, 5
      %v4163 = vor.u32 %v4159, %v4162
      %v4164 = vrot.slane %v4163, 4
      %v4166 = vshll.u32 %v4109, 16
      %v4168 = vrot.slane %v4166, 5
      %v4169 = vsel %vm1122, %v4164, %v4168
      %v4170 = vshrl.u32 %v4109, 16
      %v4172 = vrot.slane %v4170, 4
      %v4173 = vor.u32 %v4172, %v4168
      %v4174 = vrot.slane %v4173, 4
      %v4176 = vshll.u32 %v4110, 16
      %v4178 = vrot.slane %v4176, 5
      %v4179 = vsel %vm1122, %v4174, %v4178
      %v4181 = vshrl.u32 %v4111, 16
      %v4183 = vrot.slane %v4181, 4
      %v4184 = vshll.u32 %v4111, 16
      %v4186 = vrot.slane %v4184, 5
      %v4187 = vor.u32 %v4183, %v4186
      %v4188 = vrot.slane %v4187, 4
      %v4190 = vshll.u32 %v4112, 16
      %v4192 = vrot.slane %v4190, 5
      %v4193 = vsel %vm1122, %v4188, %v4192
      %v4194 = vshrl.u32 %v4112, 16
      %v4196 = vrot.slane %v4194, 4
      %v4197 = vor.u32 %v4196, %v4192
      %v4198 = vrot.slane %v4197, 4
      %v4200 = vshll.u32 %v4113, 16
      %v4202 = vrot.slane %v4200, 5
      %v4203 = vsel %vm1122, %v4198, %v4202
      %v4205 = vshrl.u32 %v4114, 16
      %v4207 = vrot.slane %v4205, 4
      %v4208 = vshll.u32 %v4114, 16
      %v4210 = vrot.slane %v4208, 5
      %v4211 = vor.u32 %v4207, %v4210
      %v4212 = vrot.slane %v4211, 4
      %v4214 = vshll.u32 %v4115, 16
      %v4216 = vrot.slane %v4214, 5
      %v4217 = vsel %vm1122, %v4212, %v4216
      %v4218 = vshrl.u32 %v4115, 16
      %v4220 = vrot.slane %v4218, 4
      %v4221 = vor.u32 %v4220, %v4216
      %v4222 = vrot.slane %v4221, 4
      %v4224 = vshll.u32 %v4116, 16
      %v4226 = vrot.slane %v4224, 5
      %v4227 = vsel %vm1122, %v4222, %v4226
      %v4229 = vshrl.u32 %v4117, 16
      %v4231 = vrot.slane %v4229, 4
      %v4232 = vshll.u32 %v4117, 16
      %v4234 = vrot.slane %v4232, 5
      %v4235 = vor.u32 %v4231, %v4234
      %v4236 = vrot.slane %v4235, 4
      %v4238 = vshll.u32 %v4118, 16
      %v4240 = vrot.slane %v4238, 5
      %v4241 = vsel %vm1122, %v4236, %v4240
      %v4242 = vshrl.u32 %v4118, 16
      %v4244 = vrot.slane %v4242, 4
      %v4245 = vor.u32 %v4244, %v4240
      %v4246 = vrot.slane %v4245, 4
      %v4248 = vshll.u32 %v4119, 16
      %v4250 = vrot.slane %v4248, 5
      %v4251 = vsel %vm1122, %v4246, %v4250
      %v4253 = vshrl.u32 %v4120, 16
      %v4255 = vrot.slane %v4253, 4
      %v4256 = vshll.u32 %v4120, 16
      %v4258 = vrot.slane %v4256, 5
      %v4259 = vor.u32 %v4255, %v4258
      %v4260 = vrot.slane %v4259, 4
      %v4262 = vshll.u32 %v4121, 16
      %v4264 = vrot.slane %v4262, 5
      %v4265 = vsel %vm1122, %v4260, %v4264
      %v4266 = vshrl.u32 %v4121, 16
      %v4268 = vrot.slane %v4266, 4
      %v4269 = vor.u32 %v4268, %v4264
      %v4270 = vrot.slane %v4269, 4
      %v4272 = vshll.u32 %v4122, 16
      %v4274 = vrot.slane %v4272, 5
      %v4275 = vsel %vm1122, %v4270, %v4274
      %v4277 = vshrl.u32 %v4123, 16
      %v4279 = vrot.slane %v4277, 4
      %v4280 = vshll.u32 %v4123, 16
      %v4282 = vrot.slane %v4280, 5
      %v4283 = vor.u32 %v4279, %v4282
      %v4284 = vrot.slane %v4283, 4
      %v4286 = vshll.u32 %v4124, 16
      %v4288 = vrot.slane %v4286, 5
      %v4289 = vsel %vm1122, %v4284, %v4288
      %v4290 = vshrl.u32 %v4124, 16
      %v4292 = vrot.slane %v4290, 4
      %v4293 = vor.u32 %v4292, %v4288
      %v4294 = vrot.slane %v4293, 4
      %v4296 = vshll.u32 %v4125, 16
      %v4298 = vrot.slane %v4296, 5
      %v4299 = vsel %vm1122, %v4294, %v4298
      %v4301 = vshrl.u32 %v4126, 16
      %v4303 = vrot.slane %v4301, 4
      %v4304 = vshll.u32 %v4126, 16
      %v4306 = vrot.slane %v4304, 5
      %v4307 = vor.u32 %v4303, %v4306
      %v4308 = vrot.slane %v4307, 4
      %v4310 = vshll.u32 %v4127, 16
      %v4312 = vrot.slane %v4310, 5
      %v4313 = vsel %vm1122, %v4308, %v4312
      %v4314 = vshrl.u32 %v4127, 16
      %v4316 = vrot.slane %v4314, 4
      %v4317 = vor.u32 %v4316, %v4312
      %v4318 = vrot.slane %v4317, 4
      %v4320 = vshll.u32 %v4128, 16
      %v4322 = vrot.slane %v4320, 5
      %v4323 = vsel %vm1122, %v4318, %v4322
      %v4325 = vshrl.u32 %v4129, 16
      %v4327 = vrot.slane %v4325, 4
      %v4328 = vshll.u32 %v4129, 16
      %v4330 = vrot.slane %v4328, 5
      %v4331 = vor.u32 %v4327, %v4330
      %v4332 = vrot.slane %v4331, 4
      %v4334 = vshll.u32 %v4130, 16
      %v4336 = vrot.slane %v4334, 5
      %v4337 = vsel %vm1122, %v4332, %v4336
      %v4338 = vshrl.u32 %v4130, 16
      %v4340 = vrot.slane %v4338, 4
      %v4341 = vor.u32 %v4340, %v4336
      %v4342 = vrot.slane %v4341, 4
      %v4344 = vshll.u32 %v4131, 16
      %v4346 = vrot.slane %v4344, 5
      %v4347 = vsel %vm1122, %v4342, %v4346
      %v4349 = vshrl.u32 %v4132, 16
      %v4351 = vrot.slane %v4349, 4
      %v4352 = vshll.u32 %v4132, 16
      %v4354 = vrot.slane %v4352, 5
      %v4355 = vor.u32 %v4351, %v4354
      %v4356 = vrot.slane %v4355, 4
      %v4358 = vshll.u32 %v4133, 16
      %v4360 = vrot.slane %v4358, 5
      %v4361 = vsel %vm1122, %v4356, %v4360
      %v4362 = vshrl.u32 %v4133, 16
      %v4364 = vrot.slane %v4362, 4
      %v4365 = vor.u32 %v4364, %v4360
      %v4366 = vrot.slane %v4365, 4
      %v4368 = vshll.u32 %v4134, 16
      %v4370 = vrot.slane %v4368, 5
      %v4371 = vsel %vm1122, %v4366, %v4370
      %v4373 = vshrl.u32 %v4135, 16
      %v4375 = vrot.slane %v4373, 4
      %v4376 = vshll.u32 %v4135, 16
      %v4378 = vrot.slane %v4376, 5
      %v4379 = vor.u32 %v4375, %v4378
      %v4380 = vrot.slane %v4379, 4
      %v4382 = vshll.u32 %v4136, 16
      %v4384 = vrot.slane %v4382, 5
      %v4385 = vsel %vm1122, %v4380, %v4384
      %v4386 = vshrl.u32 %v4136, 16
      %v4388 = vrot.slane %v4386, 4
      %v4389 = vor.u32 %v4388, %v4384
      %v4390 = vrot.slane %v4389, 4
      %v4392 = vshll.u32 %v4137, 16
      %v4394 = vrot.slane %v4392, 5
      %v4395 = vsel %vm1122, %v4390, %v4394
      %v4397 = vshrl.u32 %v4138, 16
      %v4399 = vrot.slane %v4397, 4
      %v4400 = vshll.u32 %v4138, 16
      %v4402 = vrot.slane %v4400, 5
      %v4403 = vor.u32 %v4399, %v4402
      %v4404 = vrot.slane %v4403, 4
      %v4406 = vshll.u32 %v4139, 16
      %v4408 = vrot.slane %v4406, 5
      %v4409 = vsel %vm1122, %v4404, %v4408
      %v4410 = vshrl.u32 %v4139, 16
      %v4412 = vrot.slane %v4410, 4
      %v4413 = vor.u32 %v4412, %v4408
      %v4414 = vrot.slane %v4413, 4
      %v4416 = vshll.u32 %v4140, 16
      %v4418 = vrot.slane %v4416, 5
      %v4419 = vsel %vm1122, %v4414, %v4418
      %v4421 = vshrl.u32 %v4141, 16
      %v4423 = vrot.slane %v4421, 4
      %v4424 = vshll.u32 %v4141, 16
      %v4426 = vrot.slane %v4424, 5
      %v4427 = vor.u32 %v4423, %v4426
      %v4428 = vrot.slane %v4427, 4
      %v4430 = vshll.u32 %v4142, 16
      %v4432 = vrot.slane %v4430, 5
      %v4433 = vsel %vm1122, %v4428, %v4432
      %v4434 = vshrl.u32 %v4142, 16
      %v4436 = vrot.slane %v4434, 4
      %v4437 = vor.u32 %v4436, %v4432
      %v4438 = vrot.slane %v4437, 4
      %v4440 = vshll.u32 %v4143, 16
      %v4442 = vrot.slane %v4440, 5
      %v4443 = vsel %vm1122, %v4438, %v4442
      %v4445 = vshrl.u32 %v4144, 16
      %v4447 = vrot.slane %v4445, 4
      %v4448 = vshll.u32 %v4144, 16
      %v4450 = vrot.slane %v4448, 5
      %v4451 = vor.u32 %v4447, %v4450
      %v4452 = vrot.slane %v4451, 4
      %v4454 = vshll.u32 %v4145, 16
      %v4456 = vrot.slane %v4454, 5
      %v4457 = vsel %vm1122, %v4452, %v4456
      %v4458 = vshrl.u32 %v4145, 16
      %v4460 = vrot.slane %v4458, 4
      %v4461 = vor.u32 %v4460, %v4456
      %v4462 = vrot.slane %v4461, 4
      %v4464 = vshll.u32 %v4146, 16
      %v4466 = vrot.slane %v4464, 5
      %v4467 = vsel %vm1122, %v4462, %v4466
      %v4469 = vshrl.u32 %v4147, 16
      %v4471 = vrot.slane %v4469, 4
      %v4472 = vshll.u32 %v4147, 16
      %v4474 = vrot.slane %v4472, 5
      %v4475 = vor.u32 %v4471, %v4474
      %v4476 = vrot.slane %v4475, 4
      %v4478 = vshll.u32 %v4148, 16
      %v4480 = vrot.slane %v4478, 5
      %v4481 = vsel %vm1122, %v4476, %v4480
      %v4482 = vshrl.u32 %v4148, 16
      %v4484 = vrot.slane %v4482, 4
      %v4485 = vor.u32 %v4484, %v4480
      %v4486 = vrot.slane %v4485, 4
      %v4488 = vshll.u32 %v4149, 16
      %v4490 = vrot.slane %v4488, 5
      %v4491 = vsel %vm1122, %v4486, %v4490
      %v4493 = vshrl.u32 %v4150, 16
      %v4495 = vrot.slane %v4493, 4
      %v4496 = vshll.u32 %v4150, 16
      %v4498 = vrot.slane %v4496, 5
      %v4499 = vor.u32 %v4495, %v4498
      %v4500 = vrot.slane %v4499, 4
      %v4502 = vshll.u32 %v4151, 16
      %v4504 = vrot.slane %v4502, 5
      %v4505 = vsel %vm1122, %v4500, %v4504
      %v4506 = vshrl.u32 %v4151, 16
      %v4508 = vrot.slane %v4506, 4
      %v4509 = vor.u32 %v4508, %v4504
      %v4510 = vrot.slane %v4509, 4
      %v4512 = vshll.u32 %v4152, 16
      %v4514 = vrot.slane %v4512, 5
      %v4515 = vsel %vm1122, %v4510, %v4514
      %v4517 = vshrl.u32 %v4153, 16
      %v4519 = vrot.slane %v4517, 4
      %v4520 = vshll.u32 %v4153, 16
      %v4522 = vrot.slane %v4520, 5
      %v4523 = vor.u32 %v4519, %v4522
      %v4524 = vrot.slane %v4523, 4
      %v4526 = vshll.u32 %v4154, 16
      %v4528 = vrot.slane %v4526, 5
      %v4529 = vsel %vm1122, %v4524, %v4528
      %v4530 = vshrl.u32 %v4154, 16
      %v4532 = vrot.slane %v4530, 4
      %v4533 = vor.u32 %v4532, %v4528
      %v4534 = vrot.slane %v4533, 4
      %v4536 = vshll.u32 %v4155, 16
      %v4538 = vrot.slane %v4536, 5
      %v4539 = vsel %vm1122, %v4534, %v4538
      %s4540 = scalar_lea.vmem %s3, 448
      %v4541 = vld [vmem:[%s4540] sm:$0xf]
      %v4542 = vld [vmem:[%s4540 + $0x4] sm:$0xf]
      %v4543 = vld [vmem:[%s4540 + $0x8] sm:$0xf]
      %v4544 = vld [vmem:[%s4540 + $0xc] sm:$0xf]
      %v4545 = vld [vmem:[%s4540 + $0x10] sm:$0xf]
      %v4546 = vld [vmem:[%s4540 + $0x14] sm:$0xf]
      %v4547 = vld [vmem:[%s4540 + $0x18] sm:$0xf]
      %v4548 = vld [vmem:[%s4540 + $0x1c] sm:$0xf]
      %v4549 = vld [vmem:[%s4540 + $0x20] sm:$0xf]
      %v4550 = vld [vmem:[%s4540 + $0x24] sm:$0xf]
      %v4551 = vld [vmem:[%s4540 + $0x28] sm:$0xf]
      %v4552 = vld [vmem:[%s4540 + $0x2c] sm:$0xf]
      %v4553 = vld [vmem:[%s4540 + $0x30] sm:$0xf]
      %v4554 = vld [vmem:[%s4540 + $0x34] sm:$0xf]
      %v4555 = vld [vmem:[%s4540 + $0x38] sm:$0xf]
      %v4556 = vld [vmem:[%s4540 + $0x3c] sm:$0xf]
      %v4557 = vunpack.c.l.b16 %v4169
      %v4558 = vunpack.c.l.b16 %v4179
      %v4559 = vunpack.c.l.b16 %v4193
      %v4560 = vunpack.c.l.b16 %v4203
      %v4561 = vunpack.c.l.b16 %v4217
      %v4562 = vunpack.c.l.b16 %v4227
      %v4563 = vunpack.c.l.b16 %v4241
      %v4564 = vunpack.c.l.b16 %v4251
      %v4565 = vunpack.c.l.b16 %v4265
      %v4566 = vunpack.c.l.b16 %v4275
      %v4567 = vunpack.c.l.b16 %v4289
      %v4568 = vunpack.c.l.b16 %v4299
      %v4569 = vunpack.c.l.b16 %v4313
      %v4570 = vunpack.c.l.b16 %v4323
      %v4571 = vunpack.c.l.b16 %v4337
      %v4572 = vunpack.c.l.b16 %v4347
      %v4573 = vunpack.c.l.b16 %v4361
      %v4574 = vunpack.c.l.b16 %v4371
      %v4575 = vunpack.c.l.b16 %v4385
      %v4576 = vunpack.c.l.b16 %v4395
      %v4577 = vunpack.c.l.b16 %v4409
      %v4578 = vunpack.c.l.b16 %v4419
      %v4579 = vunpack.c.l.b16 %v4433
      %v4580 = vunpack.c.l.b16 %v4443
      %v4581 = vunpack.c.l.b16 %v4457
      %v4582 = vunpack.c.l.b16 %v4467
      %v4583 = vunpack.c.l.b16 %v4481
      %v4584 = vunpack.c.l.b16 %v4491
      %v4585 = vunpack.c.l.b16 %v4505
      %v4586 = vunpack.c.l.b16 %v4515
      %v4587 = vunpack.c.l.b16 %v4529
      %v4588 = vunpack.c.l.b16 %v4539
      %v4589 = vpack.c.b16 %v4558, %v4557
      %v4590 = vpack.c.b16 %v4560, %v4559
      %v4591 = vpack.c.b16 %v4562, %v4561
      %v4592 = vpack.c.b16 %v4564, %v4563
      %v4593 = vpack.c.b16 %v4566, %v4565
      %v4594 = vpack.c.b16 %v4568, %v4567
      %v4595 = vpack.c.b16 %v4570, %v4569
      %v4596 = vpack.c.b16 %v4572, %v4571
      %v4597 = vpack.c.b16 %v4574, %v4573
      %v4598 = vpack.c.b16 %v4576, %v4575
      %v4599 = vpack.c.b16 %v4578, %v4577
      %v4600 = vpack.c.b16 %v4580, %v4579
      %v4601 = vpack.c.b16 %v4582, %v4581
      %v4602 = vpack.c.b16 %v4584, %v4583
      %v4603 = vpack.c.b16 %v4586, %v4585
      %v4604 = vpack.c.b16 %v4588, %v4587
      %v4637 = vunpack.c.l.b16 %v4541
      %v4638 = vunpack.c.l.b16 %v4542
      %v4639 = vunpack.c.l.b16 %v4543
      %v4640 = vunpack.c.l.b16 %v4544
      %v4641 = vunpack.c.l.b16 %v4545
      %v4642 = vunpack.c.l.b16 %v4546
      %v4643 = vunpack.c.l.b16 %v4547
      %v4644 = vunpack.c.l.b16 %v4548
      %v4645 = vunpack.c.l.b16 %v4549
      %v4646 = vunpack.c.l.b16 %v4550
      %v4647 = vunpack.c.l.b16 %v4551
      %v4648 = vunpack.c.l.b16 %v4552
      %v4649 = vunpack.c.l.b16 %v4553
      %v4650 = vunpack.c.l.b16 %v4554
      %v4651 = vunpack.c.l.b16 %v4555
      %v4652 = vunpack.c.l.b16 %v4556
      %v4653 = vpack.c.b16 %v4638, %v4637
      %v4654 = vpack.c.b16 %v4640, %v4639
      %v4655 = vpack.c.b16 %v4642, %v4641
      %v4656 = vpack.c.b16 %v4644, %v4643
      %v4657 = vpack.c.b16 %v4646, %v4645
      %v4658 = vpack.c.b16 %v4648, %v4647
      %v4659 = vpack.c.b16 %v4650, %v4649
      %v4660 = vpack.c.b16 %v4652, %v4651
      %4669 = vmatpush.bf16.msra.mxu0 %v4660
      %4670 = vmatpush.bf16.msra.mxu0 %v4659
      %4671 = vmatpush.bf16.msra.mxu0 %v4658
      %4672 = vmatpush.bf16.msra.mxu0 %v4657
      %4673 = vmatpush.bf16.msra.mxu0 %v4656
      %4674 = vmatpush.bf16.msra.mxu0 %v4655
      %4675 = vmatpush.bf16.msra.mxu0 %v4654
      %4676 = vmatpush.bf16.msra.mxu0 %v4653
      %4677 = vmatmul.bf16.gmra.mxu0 %v4589
      %v4678 = vpop.f32.mrf.mxu0
      %v4679 = vadd.f32 0.0, %v4678
      %v4680 = vpop.f32.mrf.mxu0
      %v4681 = vadd.f32 0.0, %v4680
      %4682 = vmatmul.bf16.gmra.mxu0 %v4590
      %v4683 = vpop.f32.mrf.mxu0
      %v4684 = vadd.f32 0.0, %v4683
      %v4685 = vpop.f32.mrf.mxu0
      %v4686 = vadd.f32 0.0, %v4685
      %4687 = vmatmul.bf16.gmra.mxu0 %v4591
      %v4688 = vpop.f32.mrf.mxu0
      %v4689 = vadd.f32 0.0, %v4688
      %v4690 = vpop.f32.mrf.mxu0
      %v4691 = vadd.f32 0.0, %v4690
      %4692 = vmatmul.bf16.gmra.mxu0 %v4592
      %v4693 = vpop.f32.mrf.mxu0
      %v4694 = vadd.f32 0.0, %v4693
      %v4695 = vpop.f32.mrf.mxu0
      %v4696 = vadd.f32 0.0, %v4695
      %4697 = vmatmul.bf16.gmra.mxu0 %v4593
      %v4698 = vpop.f32.mrf.mxu0
      %v4699 = vadd.f32 0.0, %v4698
      %v4700 = vpop.f32.mrf.mxu0
      %v4701 = vadd.f32 0.0, %v4700
      %4702 = vmatmul.bf16.gmra.mxu0 %v4594
      %v4703 = vpop.f32.mrf.mxu0
      %v4704 = vadd.f32 0.0, %v4703
      %v4705 = vpop.f32.mrf.mxu0
      %v4706 = vadd.f32 0.0, %v4705
      %4707 = vmatmul.bf16.gmra.mxu0 %v4595
      %v4708 = vpop.f32.mrf.mxu0
      %v4709 = vadd.f32 0.0, %v4708
      %v4710 = vpop.f32.mrf.mxu0
      %v4711 = vadd.f32 0.0, %v4710
      %4712 = vmatmul.bf16.gmra.mxu0 %v4596
      %v4713 = vpop.f32.mrf.mxu0
      %v4714 = vadd.f32 0.0, %v4713
      %v4715 = vpop.f32.mrf.mxu0
      %v4716 = vadd.f32 0.0, %v4715
      %4717 = vmatmul.bf16.gmra.mxu0 %v4597
      %v4718 = vpop.f32.mrf.mxu0
      %v4719 = vadd.f32 0.0, %v4718
      %v4720 = vpop.f32.mrf.mxu0
      %v4721 = vadd.f32 0.0, %v4720
      %4722 = vmatmul.bf16.gmra.mxu0 %v4598
      %v4723 = vpop.f32.mrf.mxu0
      %v4724 = vadd.f32 0.0, %v4723
      %v4725 = vpop.f32.mrf.mxu0
      %v4726 = vadd.f32 0.0, %v4725
      %4727 = vmatmul.bf16.gmra.mxu0 %v4599
      %v4728 = vpop.f32.mrf.mxu0
      %v4729 = vadd.f32 0.0, %v4728
      %v4730 = vpop.f32.mrf.mxu0
      %v4731 = vadd.f32 0.0, %v4730
      %4732 = vmatmul.bf16.gmra.mxu0 %v4600
      %v4733 = vpop.f32.mrf.mxu0
      %v4734 = vadd.f32 0.0, %v4733
      %v4735 = vpop.f32.mrf.mxu0
      %v4736 = vadd.f32 0.0, %v4735
      %4737 = vmatmul.bf16.gmra.mxu0 %v4601
      %v4738 = vpop.f32.mrf.mxu0
      %v4739 = vadd.f32 0.0, %v4738
      %v4740 = vpop.f32.mrf.mxu0
      %v4741 = vadd.f32 0.0, %v4740
      %4742 = vmatmul.bf16.gmra.mxu0 %v4602
      %v4743 = vpop.f32.mrf.mxu0
      %v4744 = vadd.f32 0.0, %v4743
      %v4745 = vpop.f32.mrf.mxu0
      %v4746 = vadd.f32 0.0, %v4745
      %4747 = vmatmul.bf16.gmra.mxu0 %v4603
      %v4748 = vpop.f32.mrf.mxu0
      %v4749 = vadd.f32 0.0, %v4748
      %v4750 = vpop.f32.mrf.mxu0
      %v4751 = vadd.f32 0.0, %v4750
      %4752 = vmatmul.bf16.gmra.mxu0 %v4604
      %v4753 = vpop.f32.mrf.mxu0
      %v4754 = vadd.f32 0.0, %v4753
      %v4755 = vpop.f32.mrf.mxu0
      %v4756 = vadd.f32 0.0, %v4755
      %4757 = vdwg.mxu0
      %v4758 = vadd.f32 %v4076, %v4679
      %v4759 = vadd.f32 %v4077, %v4681
      %v4760 = vadd.f32 %v4078, %v4684
      %v4761 = vadd.f32 %v4079, %v4686
      %v4762 = vadd.f32 %v4080, %v4689
      %v4763 = vadd.f32 %v4081, %v4691
      %v4764 = vadd.f32 %v4082, %v4694
      %v4765 = vadd.f32 %v4083, %v4696
      %v4766 = vadd.f32 %v4084, %v4699
      %v4767 = vadd.f32 %v4085, %v4701
      %v4768 = vadd.f32 %v4086, %v4704
      %v4769 = vadd.f32 %v4087, %v4706
      %v4770 = vadd.f32 %v4088, %v4709
      %v4771 = vadd.f32 %v4089, %v4711
      %v4772 = vadd.f32 %v4090, %v4714
      %v4773 = vadd.f32 %v4091, %v4716
      %v4774 = vadd.f32 %v4092, %v4719
      %v4775 = vadd.f32 %v4093, %v4721
      %v4776 = vadd.f32 %v4094, %v4724
      %v4777 = vadd.f32 %v4095, %v4726
      %v4778 = vadd.f32 %v4096, %v4729
      %v4779 = vadd.f32 %v4097, %v4731
      %v4780 = vadd.f32 %v4098, %v4734
      %v4781 = vadd.f32 %v4099, %v4736
      %v4782 = vadd.f32 %v4100, %v4739
      %v4783 = vadd.f32 %v4101, %v4741
      %v4784 = vadd.f32 %v4102, %v4744
      %v4785 = vadd.f32 %v4103, %v4746
      %v4786 = vadd.f32 %v4104, %v4749
      %v4787 = vadd.f32 %v4105, %v4751
      %v4788 = vadd.f32 %v4106, %v4754
      %v4789 = vadd.f32 %v4107, %v4756
      %v4790 = vld [vmem:[%s3793] sm:$0xe]
      %v4791 = vld [vmem:[%s3793 + $0xc] sm:$0xe]
      %v4792 = vld [vmem:[%s3793 + $0x18] sm:$0xe]
      %v4793 = vld [vmem:[%s3793 + $0x24] sm:$0xe]
      %v4794 = vld [vmem:[%s3793 + $0x30] sm:$0xe]
      %v4795 = vld [vmem:[%s3793 + $0x3c] sm:$0xe]
      %v4796 = vld [vmem:[%s3793 + $0x48] sm:$0xe]
      %v4797 = vld [vmem:[%s3793 + $0x54] sm:$0xe]
      %v4798 = vld [vmem:[%s3793 + $0x60] sm:$0xe]
      %v4799 = vld [vmem:[%s3793 + $0x6c] sm:$0xe]
      %v4800 = vld [vmem:[%s3793 + $0x78] sm:$0xe]
      %v4801 = vld [vmem:[%s3793 + $0x84] sm:$0xe]
      %v4802 = vld [vmem:[%s3793 + $0x90] sm:$0xe]
      %v4803 = vld [vmem:[%s3793 + $0x9c] sm:$0xe]
      %v4804 = vld [vmem:[%s3793 + $0xa8] sm:$0xe]
      %v4805 = vld [vmem:[%s3793 + $0xb4] sm:$0xe]
      %v4854 = vrot.slane %v4790, 5
      %v4855 = vrot.slane %v4854, 4
      %v4856 = vrot.slane %v4109, 5
      %v4857 = vsel %vm2008, %v4855, %v4856
      %v4858 = vrot.slane %v4856, 4
      %v4859 = vrot.slane %v4110, 5
      %v4860 = vsel %vm2008, %v4858, %v4859
      %v4861 = vrot.slane %v4791, 5
      %v4862 = vrot.slane %v4861, 4
      %v4863 = vrot.slane %v4112, 5
      %v4864 = vsel %vm2008, %v4862, %v4863
      %v4865 = vrot.slane %v4863, 4
      %v4866 = vrot.slane %v4113, 5
      %v4867 = vsel %vm2008, %v4865, %v4866
      %v4868 = vrot.slane %v4792, 5
      %v4869 = vrot.slane %v4868, 4
      %v4870 = vrot.slane %v4115, 5
      %v4871 = vsel %vm2008, %v4869, %v4870
      %v4872 = vrot.slane %v4870, 4
      %v4873 = vrot.slane %v4116, 5
      %v4874 = vsel %vm2008, %v4872, %v4873
      %v4875 = vrot.slane %v4793, 5
      %v4876 = vrot.slane %v4875, 4
      %v4877 = vrot.slane %v4118, 5
      %v4878 = vsel %vm2008, %v4876, %v4877
      %v4879 = vrot.slane %v4877, 4
      %v4880 = vrot.slane %v4119, 5
      %v4881 = vsel %vm2008, %v4879, %v4880
      %v4882 = vrot.slane %v4794, 5
      %v4883 = vrot.slane %v4882, 4
      %v4884 = vrot.slane %v4121, 5
      %v4885 = vsel %vm2008, %v4883, %v4884
      %v4886 = vrot.slane %v4884, 4
      %v4887 = vrot.slane %v4122, 5
      %v4888 = vsel %vm2008, %v4886, %v4887
      %v4889 = vrot.slane %v4795, 5
      %v4890 = vrot.slane %v4889, 4
      %v4891 = vrot.slane %v4124, 5
      %v4892 = vsel %vm2008, %v4890, %v4891
      %v4893 = vrot.slane %v4891, 4
      %v4894 = vrot.slane %v4125, 5
      %v4895 = vsel %vm2008, %v4893, %v4894
      %v4896 = vrot.slane %v4796, 5
      %v4897 = vrot.slane %v4896, 4
      %v4898 = vrot.slane %v4127, 5
      %v4899 = vsel %vm2008, %v4897, %v4898
      %v4900 = vrot.slane %v4898, 4
      %v4901 = vrot.slane %v4128, 5
      %v4902 = vsel %vm2008, %v4900, %v4901
      %v4903 = vrot.slane %v4797, 5
      %v4904 = vrot.slane %v4903, 4
      %v4905 = vrot.slane %v4130, 5
      %v4906 = vsel %vm2008, %v4904, %v4905
      %v4907 = vrot.slane %v4905, 4
      %v4908 = vrot.slane %v4131, 5
      %v4909 = vsel %vm2008, %v4907, %v4908
      %v4910 = vrot.slane %v4798, 5
      %v4911 = vrot.slane %v4910, 4
      %v4912 = vrot.slane %v4133, 5
      %v4913 = vsel %vm2008, %v4911, %v4912
      %v4914 = vrot.slane %v4912, 4
      %v4915 = vrot.slane %v4134, 5
      %v4916 = vsel %vm2008, %v4914, %v4915
      %v4917 = vrot.slane %v4799, 5
      %v4918 = vrot.slane %v4917, 4
      %v4919 = vrot.slane %v4136, 5
      %v4920 = vsel %vm2008, %v4918, %v4919
      %v4921 = vrot.slane %v4919, 4
      %v4922 = vrot.slane %v4137, 5
      %v4923 = vsel %vm2008, %v4921, %v4922
      %v4924 = vrot.slane %v4800, 5
      %v4925 = vrot.slane %v4924, 4
      %v4926 = vrot.slane %v4139, 5
      %v4927 = vsel %vm2008, %v4925, %v4926
      %v4928 = vrot.slane %v4926, 4
      %v4929 = vrot.slane %v4140, 5
      %v4930 = vsel %vm2008, %v4928, %v4929
      %v4931 = vrot.slane %v4801, 5
      %v4932 = vrot.slane %v4931, 4
      %v4933 = vrot.slane %v4142, 5
      %v4934 = vsel %vm2008, %v4932, %v4933
      %v4935 = vrot.slane %v4933, 4
      %v4936 = vrot.slane %v4143, 5
      %v4937 = vsel %vm2008, %v4935, %v4936
      %v4938 = vrot.slane %v4802, 5
      %v4939 = vrot.slane %v4938, 4
      %v4940 = vrot.slane %v4145, 5
      %v4941 = vsel %vm2008, %v4939, %v4940
      %v4942 = vrot.slane %v4940, 4
      %v4943 = vrot.slane %v4146, 5
      %v4944 = vsel %vm2008, %v4942, %v4943
      %v4945 = vrot.slane %v4803, 5
      %v4946 = vrot.slane %v4945, 4
      %v4947 = vrot.slane %v4148, 5
      %v4948 = vsel %vm2008, %v4946, %v4947
      %v4949 = vrot.slane %v4947, 4
      %v4950 = vrot.slane %v4149, 5
      %v4951 = vsel %vm2008, %v4949, %v4950
      %v4952 = vrot.slane %v4804, 5
      %v4953 = vrot.slane %v4952, 4
      %v4954 = vrot.slane %v4151, 5
      %v4955 = vsel %vm2008, %v4953, %v4954
      %v4956 = vrot.slane %v4954, 4
      %v4957 = vrot.slane %v4152, 5
      %v4958 = vsel %vm2008, %v4956, %v4957
      %v4959 = vrot.slane %v4805, 5
      %v4960 = vrot.slane %v4959, 4
      %v4961 = vrot.slane %v4154, 5
      %v4962 = vsel %vm2008, %v4960, %v4961
      %v4963 = vrot.slane %v4961, 4
      %v4964 = vrot.slane %v4155, 5
      %v4965 = vsel %vm2008, %v4963, %v4964
      %s4966 = scalar_lea.vmem %s3, 512
      %v4967 = vld [vmem:[%s4966] sm:$0xf]
      %v4968 = vld [vmem:[%s4966 + $0x4] sm:$0xf]
      %v4969 = vld [vmem:[%s4966 + $0x8] sm:$0xf]
      %v4970 = vld [vmem:[%s4966 + $0xc] sm:$0xf]
      %v4971 = vld [vmem:[%s4966 + $0x10] sm:$0xf]
      %v4972 = vld [vmem:[%s4966 + $0x14] sm:$0xf]
      %v4973 = vld [vmem:[%s4966 + $0x18] sm:$0xf]
      %v4974 = vld [vmem:[%s4966 + $0x1c] sm:$0xf]
      %v4975 = vld [vmem:[%s4966 + $0x20] sm:$0xf]
      %v4976 = vld [vmem:[%s4966 + $0x24] sm:$0xf]
      %v4977 = vld [vmem:[%s4966 + $0x28] sm:$0xf]
      %v4978 = vld [vmem:[%s4966 + $0x2c] sm:$0xf]
      %v4979 = vld [vmem:[%s4966 + $0x30] sm:$0xf]
      %v4980 = vld [vmem:[%s4966 + $0x34] sm:$0xf]
      %v4981 = vld [vmem:[%s4966 + $0x38] sm:$0xf]
      %v4982 = vld [vmem:[%s4966 + $0x3c] sm:$0xf]
      %v4983 = vunpack.c.l.b16 %v4857
      %v4984 = vunpack.c.l.b16 %v4860
      %v4985 = vunpack.c.l.b16 %v4864
      %v4986 = vunpack.c.l.b16 %v4867
      %v4987 = vunpack.c.l.b16 %v4871
      %v4988 = vunpack.c.l.b16 %v4874
      %v4989 = vunpack.c.l.b16 %v4878
      %v4990 = vunpack.c.l.b16 %v4881
      %v4991 = vunpack.c.l.b16 %v4885
      %v4992 = vunpack.c.l.b16 %v4888
      %v4993 = vunpack.c.l.b16 %v4892
      %v4994 = vunpack.c.l.b16 %v4895
      %v4995 = vunpack.c.l.b16 %v4899
      %v4996 = vunpack.c.l.b16 %v4902
      %v4997 = vunpack.c.l.b16 %v4906
      %v4998 = vunpack.c.l.b16 %v4909
      %v4999 = vunpack.c.l.b16 %v4913
      %v5000 = vunpack.c.l.b16 %v4916
      %v5001 = vunpack.c.l.b16 %v4920
      %v5002 = vunpack.c.l.b16 %v4923
      %v5003 = vunpack.c.l.b16 %v4927
      %v5004 = vunpack.c.l.b16 %v4930
      %v5005 = vunpack.c.l.b16 %v4934
      %v5006 = vunpack.c.l.b16 %v4937
      %v5007 = vunpack.c.l.b16 %v4941
      %v5008 = vunpack.c.l.b16 %v4944
      %v5009 = vunpack.c.l.b16 %v4948
      %v5010 = vunpack.c.l.b16 %v4951
      %v5011 = vunpack.c.l.b16 %v4955
      %v5012 = vunpack.c.l.b16 %v4958
      %v5013 = vunpack.c.l.b16 %v4962
      %v5014 = vunpack.c.l.b16 %v4965
      %v5015 = vpack.c.b16 %v4984, %v4983
      %v5016 = vpack.c.b16 %v4986, %v4985
      %v5017 = vpack.c.b16 %v4988, %v4987
      %v5018 = vpack.c.b16 %v4990, %v4989
      %v5019 = vpack.c.b16 %v4992, %v4991
      %v5020 = vpack.c.b16 %v4994, %v4993
      %v5021 = vpack.c.b16 %v4996, %v4995
      %v5022 = vpack.c.b16 %v4998, %v4997
      %v5023 = vpack.c.b16 %v5000, %v4999
      %v5024 = vpack.c.b16 %v5002, %v5001
      %v5025 = vpack.c.b16 %v5004, %v5003
      %v5026 = vpack.c.b16 %v5006, %v5005
      %v5027 = vpack.c.b16 %v5008, %v5007
      %v5028 = vpack.c.b16 %v5010, %v5009
      %v5029 = vpack.c.b16 %v5012, %v5011
      %v5030 = vpack.c.b16 %v5014, %v5013
      %v5063 = vunpack.c.l.b16 %v4967
      %v5064 = vunpack.c.l.b16 %v4968
      %v5065 = vunpack.c.l.b16 %v4969
      %v5066 = vunpack.c.l.b16 %v4970
      %v5067 = vunpack.c.l.b16 %v4971
      %v5068 = vunpack.c.l.b16 %v4972
      %v5069 = vunpack.c.l.b16 %v4973
      %v5070 = vunpack.c.l.b16 %v4974
      %v5071 = vunpack.c.l.b16 %v4975
      %v5072 = vunpack.c.l.b16 %v4976
      %v5073 = vunpack.c.l.b16 %v4977
      %v5074 = vunpack.c.l.b16 %v4978
      %v5075 = vunpack.c.l.b16 %v4979
      %v5076 = vunpack.c.l.b16 %v4980
      %v5077 = vunpack.c.l.b16 %v4981
      %v5078 = vunpack.c.l.b16 %v4982
      %v5079 = vpack.c.b16 %v5064, %v5063
      %v5080 = vpack.c.b16 %v5066, %v5065
      %v5081 = vpack.c.b16 %v5068, %v5067
      %v5082 = vpack.c.b16 %v5070, %v5069
      %v5083 = vpack.c.b16 %v5072, %v5071
      %v5084 = vpack.c.b16 %v5074, %v5073
      %v5085 = vpack.c.b16 %v5076, %v5075
      %v5086 = vpack.c.b16 %v5078, %v5077
      %5095 = vmatpush.bf16.msra.mxu0 %v5086
      %5096 = vmatpush.bf16.msra.mxu0 %v5085
      %5097 = vmatpush.bf16.msra.mxu0 %v5084
      %5098 = vmatpush.bf16.msra.mxu0 %v5083
      %5099 = vmatpush.bf16.msra.mxu0 %v5082
      %5100 = vmatpush.bf16.msra.mxu0 %v5081
      %5101 = vmatpush.bf16.msra.mxu0 %v5080
      %5102 = vmatpush.bf16.msra.mxu0 %v5079
      %5103 = vmatmul.bf16.gmra.mxu0 %v5015
      %v5104 = vpop.f32.mrf.mxu0
      %v5105 = vadd.f32 0.0, %v5104
      %v5106 = vpop.f32.mrf.mxu0
      %v5107 = vadd.f32 0.0, %v5106
      %5108 = vmatmul.bf16.gmra.mxu0 %v5016
      %v5109 = vpop.f32.mrf.mxu0
      %v5110 = vadd.f32 0.0, %v5109
      %v5111 = vpop.f32.mrf.mxu0
      %v5112 = vadd.f32 0.0, %v5111
      %5113 = vmatmul.bf16.gmra.mxu0 %v5017
      %v5114 = vpop.f32.mrf.mxu0
      %v5115 = vadd.f32 0.0, %v5114
      %v5116 = vpop.f32.mrf.mxu0
      %v5117 = vadd.f32 0.0, %v5116
      %5118 = vmatmul.bf16.gmra.mxu0 %v5018
      %v5119 = vpop.f32.mrf.mxu0
      %v5120 = vadd.f32 0.0, %v5119
      %v5121 = vpop.f32.mrf.mxu0
      %v5122 = vadd.f32 0.0, %v5121
      %5123 = vmatmul.bf16.gmra.mxu0 %v5019
      %v5124 = vpop.f32.mrf.mxu0
      %v5125 = vadd.f32 0.0, %v5124
      %v5126 = vpop.f32.mrf.mxu0
      %v5127 = vadd.f32 0.0, %v5126
      %5128 = vmatmul.bf16.gmra.mxu0 %v5020
      %v5129 = vpop.f32.mrf.mxu0
      %v5130 = vadd.f32 0.0, %v5129
      %v5131 = vpop.f32.mrf.mxu0
      %v5132 = vadd.f32 0.0, %v5131
      %5133 = vmatmul.bf16.gmra.mxu0 %v5021
      %v5134 = vpop.f32.mrf.mxu0
      %v5135 = vadd.f32 0.0, %v5134
      %v5136 = vpop.f32.mrf.mxu0
      %v5137 = vadd.f32 0.0, %v5136
      %5138 = vmatmul.bf16.gmra.mxu0 %v5022
      %v5139 = vpop.f32.mrf.mxu0
      %v5140 = vadd.f32 0.0, %v5139
      %v5141 = vpop.f32.mrf.mxu0
      %v5142 = vadd.f32 0.0, %v5141
      %5143 = vmatmul.bf16.gmra.mxu0 %v5023
      %v5144 = vpop.f32.mrf.mxu0
      %v5145 = vadd.f32 0.0, %v5144
      %v5146 = vpop.f32.mrf.mxu0
      %v5147 = vadd.f32 0.0, %v5146
      %5148 = vmatmul.bf16.gmra.mxu0 %v5024
      %v5149 = vpop.f32.mrf.mxu0
      %v5150 = vadd.f32 0.0, %v5149
      %v5151 = vpop.f32.mrf.mxu0
      %v5152 = vadd.f32 0.0, %v5151
      %5153 = vmatmul.bf16.gmra.mxu0 %v5025
      %v5154 = vpop.f32.mrf.mxu0
      %v5155 = vadd.f32 0.0, %v5154
      %v5156 = vpop.f32.mrf.mxu0
      %v5157 = vadd.f32 0.0, %v5156
      %5158 = vmatmul.bf16.gmra.mxu0 %v5026
      %v5159 = vpop.f32.mrf.mxu0
      %v5160 = vadd.f32 0.0, %v5159
      %v5161 = vpop.f32.mrf.mxu0
      %v5162 = vadd.f32 0.0, %v5161
      %5163 = vmatmul.bf16.gmra.mxu0 %v5027
      %v5164 = vpop.f32.mrf.mxu0
      %v5165 = vadd.f32 0.0, %v5164
      %v5166 = vpop.f32.mrf.mxu0
      %v5167 = vadd.f32 0.0, %v5166
      %5168 = vmatmul.bf16.gmra.mxu0 %v5028
      %v5169 = vpop.f32.mrf.mxu0
      %v5170 = vadd.f32 0.0, %v5169
      %v5171 = vpop.f32.mrf.mxu0
      %v5172 = vadd.f32 0.0, %v5171
      %5173 = vmatmul.bf16.gmra.mxu0 %v5029
      %v5174 = vpop.f32.mrf.mxu0
      %v5175 = vadd.f32 0.0, %v5174
      %v5176 = vpop.f32.mrf.mxu0
      %v5177 = vadd.f32 0.0, %v5176
      %5178 = vmatmul.bf16.gmra.mxu0 %v5030
      %v5179 = vpop.f32.mrf.mxu0
      %v5180 = vadd.f32 0.0, %v5179
      %v5181 = vpop.f32.mrf.mxu0
      %v5182 = vadd.f32 0.0, %v5181
      %5183 = vdwg.mxu0
      %v5184 = vadd.f32 %v4758, %v5105
      %v5185 = vadd.f32 %v4759, %v5107
      %v5186 = vadd.f32 %v4760, %v5110
      %v5187 = vadd.f32 %v4761, %v5112
      %v5188 = vadd.f32 %v4762, %v5115
      %v5189 = vadd.f32 %v4763, %v5117
      %v5190 = vadd.f32 %v4764, %v5120
      %v5191 = vadd.f32 %v4765, %v5122
      %v5192 = vadd.f32 %v4766, %v5125
      %v5193 = vadd.f32 %v4767, %v5127
      %v5194 = vadd.f32 %v4768, %v5130
      %v5195 = vadd.f32 %v4769, %v5132
      %v5196 = vadd.f32 %v4770, %v5135
      %v5197 = vadd.f32 %v4771, %v5137
      %v5198 = vadd.f32 %v4772, %v5140
      %v5199 = vadd.f32 %v4773, %v5142
      %v5200 = vadd.f32 %v4774, %v5145
      %v5201 = vadd.f32 %v4775, %v5147
      %v5202 = vadd.f32 %v4776, %v5150
      %v5203 = vadd.f32 %v4777, %v5152
      %v5204 = vadd.f32 %v4778, %v5155
      %v5205 = vadd.f32 %v4779, %v5157
      %v5206 = vadd.f32 %v4780, %v5160
      %v5207 = vadd.f32 %v4781, %v5162
      %v5208 = vadd.f32 %v4782, %v5165
      %v5209 = vadd.f32 %v4783, %v5167
      %v5210 = vadd.f32 %v4784, %v5170
      %v5211 = vadd.f32 %v4785, %v5172
      %v5212 = vadd.f32 %v4786, %v5175
      %v5213 = vadd.f32 %v4787, %v5177
      %v5214 = vadd.f32 %v4788, %v5180
      %v5215 = vadd.f32 %v4789, %v5182
      %v5216 = vpack.c.bf16 %v5184, %v5184
      %v5217 = vpack.c.bf16 %v5185, %v5185
      %v5218 = vpack.c.bf16 %v5186, %v5186
      %v5219 = vpack.c.bf16 %v5187, %v5187
      %v5220 = vpack.c.bf16 %v5188, %v5188
      %v5221 = vpack.c.bf16 %v5189, %v5189
      %v5222 = vpack.c.bf16 %v5190, %v5190
      %v5223 = vpack.c.bf16 %v5191, %v5191
      %v5224 = vpack.c.bf16 %v5192, %v5192
      %v5225 = vpack.c.bf16 %v5193, %v5193
      %v5226 = vpack.c.bf16 %v5194, %v5194
      %v5227 = vpack.c.bf16 %v5195, %v5195
      %v5228 = vpack.c.bf16 %v5196, %v5196
      %v5229 = vpack.c.bf16 %v5197, %v5197
      %v5230 = vpack.c.bf16 %v5198, %v5198
      %v5231 = vpack.c.bf16 %v5199, %v5199
      %v5232 = vpack.c.bf16 %v5200, %v5200
      %v5233 = vpack.c.bf16 %v5201, %v5201
      %v5234 = vpack.c.bf16 %v5202, %v5202
      %v5235 = vpack.c.bf16 %v5203, %v5203
      %v5236 = vpack.c.bf16 %v5204, %v5204
      %v5237 = vpack.c.bf16 %v5205, %v5205
      %v5238 = vpack.c.bf16 %v5206, %v5206
      %v5239 = vpack.c.bf16 %v5207, %v5207
      %v5240 = vpack.c.bf16 %v5208, %v5208
      %v5241 = vpack.c.bf16 %v5209, %v5209
      %v5242 = vpack.c.bf16 %v5210, %v5210
      %v5243 = vpack.c.bf16 %v5211, %v5211
      %v5244 = vpack.c.bf16 %v5212, %v5212
      %v5245 = vpack.c.bf16 %v5213, %v5213
      %v5246 = vpack.c.bf16 %v5214, %v5214
      %v5247 = vpack.c.bf16 %v5215, %v5215
      %5248 = vst [vmem:[%s296] sm:$0xf] %v5216
      %5249 = vst [vmem:[%s296 + $0x4] sm:$0xf] %v5217
      %5250 = vst [vmem:[%s296 + $0x8] sm:$0xf] %v5218
      %5251 = vst [vmem:[%s296 + $0xc] sm:$0xf] %v5219
      %5252 = vst [vmem:[%s296 + $0x10] sm:$0xf] %v5220
      %5253 = vst [vmem:[%s296 + $0x14] sm:$0xf] %v5221
      %5254 = vst [vmem:[%s296 + $0x18] sm:$0xf] %v5222
      %5255 = vst [vmem:[%s296 + $0x1c] sm:$0xf] %v5223
      %5256 = vst [vmem:[%s296 + $0x20] sm:$0xf] %v5224
      %5257 = vst [vmem:[%s296 + $0x24] sm:$0xf] %v5225
      %5258 = vst [vmem:[%s296 + $0x28] sm:$0xf] %v5226
      %5259 = vst [vmem:[%s296 + $0x2c] sm:$0xf] %v5227
      %5260 = vst [vmem:[%s296 + $0x30] sm:$0xf] %v5228
      %5261 = vst [vmem:[%s296 + $0x34] sm:$0xf] %v5229
      %5262 = vst [vmem:[%s296 + $0x38] sm:$0xf] %v5230
      %5263 = vst [vmem:[%s296 + $0x3c] sm:$0xf] %v5231
      %5264 = vst [vmem:[%s296 + $0x40] sm:$0xf] %v5232
      %5265 = vst [vmem:[%s296 + $0x44] sm:$0xf] %v5233
      %5266 = vst [vmem:[%s296 + $0x48] sm:$0xf] %v5234
      %5267 = vst [vmem:[%s296 + $0x4c] sm:$0xf] %v5235
      %5268 = vst [vmem:[%s296 + $0x50] sm:$0xf] %v5236
      %5269 = vst [vmem:[%s296 + $0x54] sm:$0xf] %v5237
      %5270 = vst [vmem:[%s296 + $0x58] sm:$0xf] %v5238
      %5271 = vst [vmem:[%s296 + $0x5c] sm:$0xf] %v5239
      %5272 = vst [vmem:[%s296 + $0x60] sm:$0xf] %v5240
      %5273 = vst [vmem:[%s296 + $0x64] sm:$0xf] %v5241
      %5274 = vst [vmem:[%s296 + $0x68] sm:$0xf] %v5242
      %5275 = vst [vmem:[%s296 + $0x6c] sm:$0xf] %v5243
      %5276 = vst [vmem:[%s296 + $0x70] sm:$0xf] %v5244
      %5277 = vst [vmem:[%s296 + $0x74] sm:$0xf] %v5245
      %5278 = vst [vmem:[%s296 + $0x78] sm:$0xf] %v5246
      %5279 = vst [vmem:[%s296 + $0x7c] sm:$0xf] %v5247
      %5280 = vst [vmem:[%s302] sm:$0xff] 0.0
      %v5281 = vadd.f32 %v5184, %v5185
      %v5282 = vadd.f32 %v5281, %v5186
      %v5283 = vadd.f32 %v5282, %v5187
      %v5284 = vadd.f32 %v5283, %v5188
      %v5285 = vadd.f32 %v5284, %v5189
      %v5286 = vadd.f32 %v5285, %v5190
      %v5287 = vadd.f32 %v5286, %v5191
      %v5288 = vadd.f32 %v5287, %v5192
      %v5289 = vadd.f32 %v5288, %v5193
      %v5290 = vadd.f32 %v5289, %v5194
      %v5291 = vadd.f32 %v5290, %v5195
      %v5292 = vadd.f32 %v5291, %v5196
      %v5293 = vadd.f32 %v5292, %v5197
      %v5294 = vadd.f32 %v5293, %v5198
      %v5295 = vadd.f32 %v5294, %v5199
      %v5296 = vadd.f32 %v5295, %v5200
      %v5297 = vadd.f32 %v5296, %v5201
      %v5298 = vadd.f32 %v5297, %v5202
      %v5299 = vadd.f32 %v5298, %v5203
      %v5300 = vadd.f32 %v5299, %v5204
      %v5301 = vadd.f32 %v5300, %v5205
      %v5302 = vadd.f32 %v5301, %v5206
      %v5303 = vadd.f32 %v5302, %v5207
      %v5304 = vadd.f32 %v5303, %v5208
      %v5305 = vadd.f32 %v5304, %v5209
      %v5306 = vadd.f32 %v5305, %v5210
      %v5307 = vadd.f32 %v5306, %v5211
      %v5308 = vadd.f32 %v5307, %v5212
      %v5309 = vadd.f32 %v5308, %v5213
      %v5310 = vadd.f32 %v5309, %v5214
      %v5311 = vadd.f32 %v5310, %v5215
      %v5312 = vrot.slane %v5311, 4
      %v5313 = vadd.f32 %v5311, %v5312
      %v5314 = vrot.slane %v5313, 2
      %v5315 = vadd.f32 %v5313, %v5314
      %v5316 = vrot.slane %v5315, 1
      %v5317 = vadd.f32 %v5315, %v5316
      %5318 = vst [vmem:[%s302] sm:$0x1] %v5317
      %v5319 = vmul.f32 %v5184, %v5184
      %v5320 = vmul.f32 %v5185, %v5185
      %v5321 = vmul.f32 %v5186, %v5186
      %v5322 = vmul.f32 %v5187, %v5187
      %v5323 = vmul.f32 %v5188, %v5188
      %v5324 = vmul.f32 %v5189, %v5189
      %v5325 = vmul.f32 %v5190, %v5190
      %v5326 = vmul.f32 %v5191, %v5191
      %v5327 = vmul.f32 %v5192, %v5192
      %v5328 = vmul.f32 %v5193, %v5193
      %v5329 = vmul.f32 %v5194, %v5194
      %v5330 = vmul.f32 %v5195, %v5195
      %v5331 = vmul.f32 %v5196, %v5196
      %v5332 = vmul.f32 %v5197, %v5197
      %v5333 = vmul.f32 %v5198, %v5198
      %v5334 = vmul.f32 %v5199, %v5199
      %v5335 = vmul.f32 %v5200, %v5200
      %v5336 = vmul.f32 %v5201, %v5201
      %v5337 = vmul.f32 %v5202, %v5202
      %v5338 = vmul.f32 %v5203, %v5203
      %v5339 = vmul.f32 %v5204, %v5204
      %v5340 = vmul.f32 %v5205, %v5205
      %v5341 = vmul.f32 %v5206, %v5206
      %v5342 = vmul.f32 %v5207, %v5207
      %v5343 = vmul.f32 %v5208, %v5208
      %v5344 = vmul.f32 %v5209, %v5209
      %v5345 = vmul.f32 %v5210, %v5210
      %v5346 = vmul.f32 %v5211, %v5211
      %v5347 = vmul.f32 %v5212, %v5212
      %v5348 = vmul.f32 %v5213, %v5213
      %v5349 = vmul.f32 %v5214, %v5214
      %v5350 = vmul.f32 %v5215, %v5215
      %v5351 = vadd.f32 %v5319, %v5320
      %v5352 = vadd.f32 %v5351, %v5321
      %v5353 = vadd.f32 %v5352, %v5322
      %v5354 = vadd.f32 %v5353, %v5323
      %v5355 = vadd.f32 %v5354, %v5324
      %v5356 = vadd.f32 %v5355, %v5325
      %v5357 = vadd.f32 %v5356, %v5326
      %v5358 = vadd.f32 %v5357, %v5327
      %v5359 = vadd.f32 %v5358, %v5328
      %v5360 = vadd.f32 %v5359, %v5329
      %v5361 = vadd.f32 %v5360, %v5330
      %v5362 = vadd.f32 %v5361, %v5331
      %v5363 = vadd.f32 %v5362, %v5332
      %v5364 = vadd.f32 %v5363, %v5333
      %v5365 = vadd.f32 %v5364, %v5334
      %v5366 = vadd.f32 %v5365, %v5335
      %v5367 = vadd.f32 %v5366, %v5336
      %v5368 = vadd.f32 %v5367, %v5337
      %v5369 = vadd.f32 %v5368, %v5338
      %v5370 = vadd.f32 %v5369, %v5339
      %v5371 = vadd.f32 %v5370, %v5340
      %v5372 = vadd.f32 %v5371, %v5341
      %v5373 = vadd.f32 %v5372, %v5342
      %v5374 = vadd.f32 %v5373, %v5343
      %v5375 = vadd.f32 %v5374, %v5344
      %v5376 = vadd.f32 %v5375, %v5345
      %v5377 = vadd.f32 %v5376, %v5346
      %v5378 = vadd.f32 %v5377, %v5347
      %v5379 = vadd.f32 %v5378, %v5348
      %v5380 = vadd.f32 %v5379, %v5349
      %v5381 = vadd.f32 %v5380, %v5350
      %v5382 = vrot.slane %v5381, 4
      %v5383 = vadd.f32 %v5381, %v5382
      %v5384 = vrot.slane %v5383, 2
      %v5385 = vadd.f32 %v5383, %v5384
      %v5386 = vrot.slane %v5385, 1
      %v5387 = vadd.f32 %v5385, %v5386
      %5388 = vst [vmem:[%s302 + $0x1] sm:$0x1] %v5387
      %s5389 = sadd.s32 %s21, %s22
      %p5390 = scmp.lt.s32.totalorder %s5389, 1
      %s5391 = scalar_select %p5390, %s5389, 1
      %s5392 = smul.addr %s5391, 32
      %s5393 = smul.addr %s5392, 4
      %s5394 = scalar_lea.vmem %s4, %s5393
      %s5395 = sadd.s32 %s21, %s22
      %p5396 = scmp.lt.s32.totalorder %s5395, 1
      %s5397 = scalar_select %p5396, %s5395, 1
      %s5398 = smul.addr %s5397, 8
      %s5399 = scalar_lea.vmem %s5, %s5398
      // Predicated region
      $region37: #{conv2d_bn_forward.4} parent=35 // pred_check
        %p5400 = pneg %p147
      $region38: #{conv2d_bn_forward.4} parent=35 // pred_check_branch
        %5402 = sbr.rel (%p5400) target = $region40
      $region39: #{conv2d_bn_forward.4} parent=35 // pred_region
        %s5403 = sadd.s32 %s21, %s22
      $region40: #{conv2d_bn_forward.4} parent=35 // pred_fallthru
        _
      // Predicated region
      $region41: #{conv2d_bn_forward.4} parent=35 // pred_check
        %p5404 = pneg %p175
      $region42: #{conv2d_bn_forward.4} parent=35 // pred_check_branch
        %5406 = sbr.rel (%p5404) target = $region44
      $region43: #{conv2d_bn_forward.4} parent=35 // pred_region
        %s5407 = sadd.s32 %s21, %s22
      $region44: #{conv2d_bn_forward.4} parent=35 // pred_fallthru
        _
    $region36: #{conv2d_bn_forward.4} parent=5 // pred_fallthru
      _
    %p5408 = scmp.le.s32.totalorder 2, %s12
    // Predicated region
    $region45: #{conv2d_bn_forward.4} parent=5 // pred_check
      %p5409 = pneg %p5408
    $region46: #{conv2d_bn_forward.4} parent=5 // pred_check_branch
      %5411 = sbr.rel (%p5409) target = $region48
    $region47: #{conv2d_bn_forward.4} parent=5 // pred_region
      %s5412 = ssub.s32 %s12, 2
      // Predicated region
      $region49: #{conv2d_bn_forward.4} parent=47 // pred_check
        %p5413 = pneg %p153
      $region50: #{conv2d_bn_forward.4} parent=47 // pred_check_branch
        %5415 = sbr.rel (%p5413) target = $region52
      $region51: #{conv2d_bn_forward.4} parent=47 // pred_region
        %s5416 = sadd.s32 %s23, %s24
        %p5417 = scmp.lt.s32.totalorder %s5416, 1
        %s5418 = scalar_select %p5417, %s5416, 1
        %s5419 = smul.addr %s5418, 32
        %s5420 = smul.addr %s5419, 4
        %s5421 = scalar_lea.vmem %s4, %s5420
      $region52: #{conv2d_bn_forward.4} parent=47 // pred_fallthru
        _
      // Predicated region
      $region53: #{conv2d_bn_forward.4} parent=47 // pred_check
        %p5422 = pneg %p181
      $region54: #{conv2d_bn_forward.4} parent=47 // pred_check_branch
        %5424 = sbr.rel (%p5422) target = $region56
      $region55: #{conv2d_bn_forward.4} parent=47 // pred_region
        %s5425 = sadd.s32 %s23, %s24
        %p5426 = scmp.lt.s32.totalorder %s5425, 1
        %s5427 = scalar_select %p5426, %s5425, 1
        %s5428 = smul.addr %s5427, 8
        %s5429 = scalar_lea.vmem %s5, %s5428
      $region56: #{conv2d_bn_forward.4} parent=47 // pred_fallthru
        _
    $region48: #{conv2d_bn_forward.4} parent=5 // pred_fallthru
      _
  $region6: #{conv2d_bn_forward.4} parent=0 // loop_footer
    %s16 = sadd.s32 1, %s12
  $region7: #{conv2d_bn_forward.4} parent=0 // loop_footer_branch
    %11 = sbr.rel target = $region3
  $region8: #{conv2d_bn_forward.4} parent=0 // loop_exit
    _

</llo_original>
